<compile_context>
chip_gen: v7x
topology: tpu7x:2x2x1
jax: 0.10.0
libtpu: 0.0.40
codegen_flags: <defaults>
</compile_context>

<pallas_src>
import functools

import jax
import jax.numpy as jnp
from jax.experimental import pallas as pl
from jax.experimental.pallas import tpu as pltpu


def critical_transformer_kernel(x_ref,
                                wqkv_ref, bqkv_ref, wo_ref, bo_ref,
                                w1_ref, b1_ref, w2_ref, b2_ref, w3_ref, b3_ref,
                                out_ref, *, num_heads, exact_gelu=True):
    bt, S, D = x_ref.shape
    hd = D // num_heads
    M = bt * S

    def gelu(t):
        # nn.GELU() default is the exact (erf-based) GELU.
        return jax.nn.gelu(t, approximate=not exact_gelu)

    # Residual path stays in f32; only MXU operands are cast to bf16.
    x = x_ref[...].reshape(M, D)
    x_bf = x.astype(jnp.bfloat16)

    # Bias loads hoisted once per grid step (JAX does not CSE broadcasts).
    b_qkv = bqkv_ref[...]          # (1, 3D), Q columns pre-scaled host-side
    b_o = bo_ref[...]              # (1, D)
    b_1 = b1_ref[...]              # (1, 4D)
    b_2 = b2_ref[...]              # (1, 2D)
    b_3 = b3_ref[...]              # (1, D)

    # ---------------- Self-attention ----------------
    # Fused QKV projection: one (M, D) @ (D, 3D) MXU matmul, f32 accumulation.
    # The 1/sqrt(hd) softmax scale is already folded into the Q weight columns.
    qkv = jnp.dot(x_bf, wqkv_ref[...], preferred_element_type=jnp.float32) + b_qkv
    qkv_bf = qkv.astype(jnp.bfloat16)      # one cast instead of 24 slice-casts

    # Per-head attention (static unrolled loop) with the output projection
    # folded into the loop: attn += ctx_h @ w_o[h].  No bf16 ctx scratch, no
    # 16-lane masked stores; ctx stays f32 until the MXU cast of the out-proj.
    attn = jnp.zeros((M, D), jnp.float32)
    for h in range(num_heads):
        q_h = qkv_bf[:, h * hd:(h + 1) * hd].reshape(bt, S, hd)
        k_h = qkv_bf[:, D + h * hd:D + (h + 1) * hd].reshape(bt, S, hd)
        v_h = qkv_bf[:, 2 * D + h * hd:2 * D + (h + 1) * hd].reshape(bt, S, hd)

        s = jnp.einsum("bqd,bkd->bqk", q_h, k_h,
                       preferred_element_type=jnp.float32)         # (bt, S, S)
        m = jnp.max(s, axis=-1, keepdims=True)
        e = jnp.exp(s - m)
        p = e * pl.reciprocal(jnp.sum(e, axis=-1, keepdims=True), approx=False)
        ctx_h = jnp.einsum("bqk,bkd->bqd", p.astype(jnp.bfloat16), v_h,
                           preferred_element_type=jnp.float32)      # (bt, S, hd)
        attn = attn + jnp.dot(ctx_h.reshape(M, hd).astype(jnp.bfloat16),
                              wo_ref[h], preferred_element_type=jnp.float32)
    attn = attn + b_o
    # TODO(synk): for much larger S, tile the attention over KV blocks with an
    # online softmax instead of materializing the (bt, S, S) scores per head.

    # ---------------- critical_mlp ----------------
    h1 = gelu(jnp.dot(attn.astype(jnp.bfloat16), w1_ref[...],
                      preferred_element_type=jnp.float32) + b_1)    # (M, 4D)
    h2 = gelu(jnp.dot(h1.astype(jnp.bfloat16), w2_ref[...],
                      preferred_element_type=jnp.float32) + b_2)    # (M, 2D)
    h3 = jnp.dot(h2.astype(jnp.bfloat16), w3_ref[...],
                 preferred_element_type=jnp.float32) + b_3          # (M, D)

    # Residual with the ORIGINAL input (per the PyTorch forward).
    out_ref[...] = (h3 + x).reshape(bt, S, D)


WEIGHT_ORDER = ("w_qkv", "b_qkv", "w_o", "b_o", "w1", "b1", "w2", "b2", "w3", "b3")


def _prep_weights(params, num_heads):
    """Fold the softmax scale into Q, reshape w_o head-major, cast W's to bf16."""
    D = params["w_qkv"].shape[0]
    hd = D // num_heads
    scale = 1.0 / float(hd) ** 0.5

    w_qkv = params["w_qkv"].astype(jnp.float32).at[:, :D].multiply(scale)
    b_qkv = params["b_qkv"].astype(jnp.float32).at[:, :D].multiply(scale)
    w_o = params["w_o"].astype(jnp.float32).reshape(num_heads, hd, D)

    prepped = {"w_qkv": w_qkv, "b_qkv": b_qkv, "w_o": w_o, "b_o": params["b_o"],
               "w1": params["w1"], "b1": params["b1"],
               "w2": params["w2"], "b2": params["b2"],
               "w3": params["w3"], "b3": params["b3"]}
    out = []
    for name in WEIGHT_ORDER:
        w = prepped[name]
        # Matrices go to the MXU in bf16; biases stay f32 (added to f32 accumulators).
        out.append(w.astype(jnp.bfloat16) if name.startswith("w")
                   else w.astype(jnp.float32))
    return out


def _tpu_budget():
    """(VMEM capacity bytes, #TensorCores) with conservative fallbacks."""
    vmem = 64 << 20    # v7x per-TC VMEM; conservative lower bound across gens
    cores = 1
    try:
        info = pltpu.get_tpu_info()
        for attr in ("vmem_capacity_bytes", "vmem_bytes", "vmem_size_bytes"):
            v = getattr(info, attr, None)
            if v:
                vmem = int(v)
                break
        for attr in ("num_cores", "core_count", "num_tensorcores",
                     "tensorcores_per_chip"):
            c = getattr(info, attr, None)
            if c:
                cores = max(1, int(c))
                break
    except Exception:
        pass
    return vmem, cores


def _vmem_estimate(bt, S, D):
    """Rough per-grid-step VMEM residency in bytes."""
    M = bt * S
    xo_blocks = 2 * (2 * bt * S * D * 4)              # x + out blocks, double-buffered
    weights = 18 * D * D * 2                          # bf16 weight residency
    inter = M * 4 * (3 * D + 4 * D + 2 * D + 2 * D)   # qkv, h1, h2, attn/h3 (f32)
    inter += 2 * bt * S * S * 4                       # per-head scores + exp
    return xo_blocks + weights + inter + (2 << 20)    # slack


def _pick_block_batch(B, S, D, vmem_bytes, cores):
    budget = int(0.45 * vmem_bytes)
    divisors = [d for d in range(1, B + 1) if B % d == 0]
    fits = [d for d in divisors if _vmem_estimate(d, S, D) <= budget] or [1]
    bt = max(fits)                                    # maximize rows per matmul
    if cores > 1:                                     # only split for real parallelism
        multi = [d for d in fits if B // d >= cores]
        if multi:
            bt = max(multi)
    return bt


def _cost_estimate(B, S, D, H):
    M = B * S
    hd = D // H
    flops = 2 * M * D * (3 * D)                                   # fused QKV
    flops += 2 * 2 * B * H * S * S * hd                           # scores + ctx
    flops += 2 * M * D * D                                        # out projection
    flops += 2 * M * (D * 4 * D + 4 * D * 2 * D + 2 * D * D)      # MLP
    trans = B * H * S * S + B * H * S + M * (4 * D + 2 * D)       # exp, recip, gelu
    bytes_accessed = 2 * M * D * 4 + 18 * D * D * 2 + 11 * D * 4
    return pl.CostEstimate(flops=int(flops), transcendentals=int(trans),
                           bytes_accessed=int(bytes_accessed))


def _invoke(x, weights, bt, num_heads, vmem_limit_bytes, cost,
            single_buffer_weights, exact_gelu):
    B, S, D = x.shape
    grid = (B // bt,)
    x_spec = pl.BlockSpec((bt, S, D), lambda b: (b, 0, 0))

    def w_spec(w):
        zeros = (0,) * w.ndim
        if single_buffer_weights:
            # Constant index_map -> the block is never re-fetched across grid
            # steps; a single VMEM buffer halves weight residency.
            return pl.BlockSpec(w.shape, lambda b, _z=zeros: _z,
                                pipeline_mode=pl.Buffered(1))
        return pl.BlockSpec(w.shape, lambda b, _z=zeros: _z)

    return pl.pallas_call(
        functools.partial(critical_transformer_kernel,
                          num_heads=num_heads, exact_gelu=exact_gelu),
        out_shape=jax.ShapeDtypeStruct((B, S, D), jnp.float32),
        grid_spec=pltpu.PrefetchScalarGridSpec(
            num_scalar_prefetch=0,
            grid=grid,
            in_specs=[x_spec] + [w_spec(w) for w in weights],
            out_specs=x_spec,
        ),
        compiler_params=pltpu.CompilerParams(
            dimension_semantics=("parallel",),
            vmem_limit_bytes=vmem_limit_bytes),
        cost_estimate=cost,
    )(x, *weights)


def critical_transformer(x, params, *, num_heads=8, block_batch=None):
    B, S, D = x.shape
    assert D % num_heads == 0, "dim must be divisible by num_heads"
    x = x.astype(jnp.float32)

    vmem_bytes, cores = _tpu_budget()
    if block_batch is None:
        bt = _pick_block_batch(B, S, D, vmem_bytes, cores)
    else:
        bt = block_batch
        assert B % bt == 0

    weights = _prep_weights(params, num_heads)
    est = _vmem_estimate(bt, S, D)
    vmem_limit = int(min(max(32 << 20, 2 * est), int(0.75 * vmem_bytes)))
    cost = _cost_estimate(B, S, D, num_heads)

    # Preferred config first; fall back gracefully if this jax version rejects
    # single-buffered weight blocks or the erf-based exact GELU lowering.
    last_err = None
    for single_buf, exact in ((True, True), (False, True), (False, False)):
        try:
            return _invoke(x, weights, bt, num_heads, vmem_limit, cost,
                           single_buffer_weights=single_buf, exact_gelu=exact)
        except Exception as e:   # noqa: BLE001 - retry with a safer config
            last_err = e
    raise last_err


def reference(x, p, *, num_heads=8):
    """Pure-JAX f32 reference replicating the PyTorch forward."""
    B, S, D = x.shape
    hd = D // num_heads
    qkv = x @ p["w_qkv"] + p["b_qkv"][0]
    q, k, v = qkv[..., :D], qkv[..., D:2 * D], qkv[..., 2 * D:]
    q = q.reshape(B, S, num_heads, hd).transpose(0, 2, 1, 3)
    k = k.reshape(B, S, num_heads, hd).transpose(0, 2, 1, 3)
    v = v.reshape(B, S, num_heads, hd).transpose(0, 2, 1, 3)
    s = jnp.einsum("bhqd,bhkd->bhqk", q, k) / hd ** 0.5
    w = jax.nn.softmax(s, axis=-1)
    ctx = jnp.einsum("bhqk,bhkd->bhqd", w, v).transpose(0, 2, 1, 3).reshape(B, S, D)
    attn = ctx @ p["w_o"] + p["b_o"][0]
    h = jax.nn.gelu(attn @ p["w1"] + p["b1"][0], approximate=False)
    h = jax.nn.gelu(h @ p["w2"] + p["b2"][0], approximate=False)
    h = h @ p["w3"] + p["b3"][0]
    return h + x


def init_params(key, dim):
    """Deterministic synthetic parameters (math layout: (in, out) matrices, (1, out) biases).

    w_qkv is the fused in_proj weight (= torch in_proj_weight.T), column blocks [Q|K|V].
    """
    ks = jax.random.split(key, 10)
    n = lambda k, shape: (0.02 * jax.random.normal(k, shape)).astype(jnp.float32)
    return {
        "w_qkv": n(ks[0], (dim, 3 * dim)), "b_qkv": n(ks[1], (1, 3 * dim)),
        "w_o":   n(ks[2], (dim, dim)),     "b_o":   n(ks[3], (1, dim)),
        "w1":    n(ks[4], (dim, 4 * dim)), "b1":    n(ks[5], (1, 4 * dim)),
        "w2":    n(ks[6], (4 * dim, 2 * dim)), "b2": n(ks[7], (1, 2 * dim)),
        "w3":    n(ks[8], (2 * dim, dim)), "b3":    n(ks[9], (1, dim)),
    }


if __name__ == "__main__":
    B, S, D = 4, 16, 128          # batch, seq, dim (8 heads -> head_dim 16)
    num_heads = 8
    key = jax.random.PRNGKey(0)
    kx, kp = jax.random.split(key)
    x = jax.random.normal(kx, (B, S, D), jnp.float32)
    params = init_params(kp, D)

    out = critical_transformer(x, params, num_heads=num_heads)
    out = jax.block_until_ready(out)

    ref = reference(x, params, num_heads=num_heads)
    assert out.shape == (B, S, D)
    max_err = float(jnp.max(jnp.abs(out - ref)))
    # bf16 MXU operands vs f32 reference -> modest tolerance.
    assert jnp.allclose(out, ref, rtol=1e-2, atol=1e-2), f"mismatch, max abs err={max_err}"

    print("KERNEL_OK")
</pallas_src>

<mosaic_0001>
module attributes {stable_mosaic.version = 11 : i64} {
  func.func @critical_transformer_kernel(%arg0: i32, %arg1: memref<4x16x128xf32, #tpu.memory_space<vmem>>, %arg2: memref<128x384xbf16, #tpu.memory_space<vmem>>, %arg3: memref<1x384xf32, #tpu.memory_space<vmem>>, %arg4: memref<8x16x128xbf16, #tpu.memory_space<vmem>>, %arg5: memref<1x128xf32, #tpu.memory_space<vmem>>, %arg6: memref<128x512xbf16, #tpu.memory_space<vmem>>, %arg7: memref<1x512xf32, #tpu.memory_space<vmem>>, %arg8: memref<512x256xbf16, #tpu.memory_space<vmem>>, %arg9: memref<1x256xf32, #tpu.memory_space<vmem>>, %arg10: memref<256x128xbf16, #tpu.memory_space<vmem>>, %arg11: memref<1x128xf32, #tpu.memory_space<vmem>>, %arg12: memref<4x16x128xf32, #tpu.memory_space<vmem>>) attributes {dimension_semantics = [#tpu.dimension_semantics<parallel>], iteration_bounds = array<i64: 1>, scalar_prefetch = 0 : i64, scratch_operands = 0 : i64, tpu.core_type = #tpu.core_type<tc>, window_params = [{transform_indices = @transform_0, window_bounds = array<i64: 4, 16, 128>}, {pipeline_mode = #tpu.pipeline_mode<synchronous>, transform_indices = @transform_1, window_bounds = array<i64: 128, 384>}, {pipeline_mode = #tpu.pipeline_mode<synchronous>, transform_indices = @transform_2, window_bounds = array<i64: 1, 384>}, {pipeline_mode = #tpu.pipeline_mode<synchronous>, transform_indices = @transform_3, window_bounds = array<i64: 8, 16, 128>}, {pipeline_mode = #tpu.pipeline_mode<synchronous>, transform_indices = @transform_4, window_bounds = array<i64: 1, 128>}, {pipeline_mode = #tpu.pipeline_mode<synchronous>, transform_indices = @transform_5, window_bounds = array<i64: 128, 512>}, {pipeline_mode = #tpu.pipeline_mode<synchronous>, transform_indices = @transform_6, window_bounds = array<i64: 1, 512>}, {pipeline_mode = #tpu.pipeline_mode<synchronous>, transform_indices = @transform_7, window_bounds = array<i64: 512, 256>}, {pipeline_mode = #tpu.pipeline_mode<synchronous>, transform_indices = @transform_8, window_bounds = array<i64: 1, 256>}, {pipeline_mode = #tpu.pipeline_mode<synchronous>, transform_indices = @transform_9, window_bounds = array<i64: 256, 128>}, {pipeline_mode = #tpu.pipeline_mode<synchronous>, transform_indices = @transform_10, window_bounds = array<i64: 1, 128>}, {transform_indices = @transform_11, window_bounds = array<i64: 4, 16, 128>}]} {
    %c0 = arith.constant 0 : index
    %c0_0 = arith.constant 0 : index
    %c0_1 = arith.constant 0 : index
    %0 = vector.load %arg1[%c0, %c0_0, %c0_1] : memref<4x16x128xf32, #tpu.memory_space<vmem>>, vector<4x16x128xf32>
    %1 = vector.shape_cast %0 : vector<4x16x128xf32> to vector<64x128xf32>
    %2 = arith.truncf %1 : vector<64x128xf32> to vector<64x128xbf16>
    %c0_2 = arith.constant 0 : index
    %c0_3 = arith.constant 0 : index
    %3 = vector.load %arg3[%c0_2, %c0_3] : memref<1x384xf32, #tpu.memory_space<vmem>>, vector<1x384xf32>
    %c0_4 = arith.constant 0 : index
    %c0_5 = arith.constant 0 : index
    %4 = vector.load %arg5[%c0_4, %c0_5] : memref<1x128xf32, #tpu.memory_space<vmem>>, vector<1x128xf32>
    %c0_6 = arith.constant 0 : index
    %c0_7 = arith.constant 0 : index
    %5 = vector.load %arg7[%c0_6, %c0_7] : memref<1x512xf32, #tpu.memory_space<vmem>>, vector<1x512xf32>
    %c0_8 = arith.constant 0 : index
    %c0_9 = arith.constant 0 : index
    %6 = vector.load %arg9[%c0_8, %c0_9] : memref<1x256xf32, #tpu.memory_space<vmem>>, vector<1x256xf32>
    %c0_10 = arith.constant 0 : index
    %c0_11 = arith.constant 0 : index
    %7 = vector.load %arg11[%c0_10, %c0_11] : memref<1x128xf32, #tpu.memory_space<vmem>>, vector<1x128xf32>
    %c0_12 = arith.constant 0 : index
    %c0_13 = arith.constant 0 : index
    %8 = vector.load %arg2[%c0_12, %c0_13] : memref<128x384xbf16, #tpu.memory_space<vmem>>, vector<128x384xbf16>
    %cst = arith.constant dense<0.000000e+00> : vector<64x384xf32>
    %9 = tpu.matmul %2, %8, %cst {dimension_numbers = #tpu.dot_dimension_numbers<[1], [0], [0], [1], [0, 0, 1, 1], [], []>} : vector<64x128xbf16>, vector<128x384xbf16>, vector<64x384xf32> -> vector<64x384xf32>
    %10 = vector.broadcast %3 : vector<1x384xf32> to vector<64x384xf32>
    %11 = arith.addf %9, %10 : vector<64x384xf32>
    %12 = arith.truncf %11 : vector<64x384xf32> to vector<64x384xbf16>
    %cst_14 = arith.constant 0.000000e+00 : f32
    %13 = vector.broadcast %cst_14 : f32 to vector<64x128xf32>
    %14 = vector.extract_strided_slice %12 {offsets = [0, 0], sizes = [64, 16], strides = [1, 1]} : vector<64x384xbf16> to vector<64x16xbf16>
    %15 = vector.shape_cast %14 : vector<64x16xbf16> to vector<4x16x16xbf16>
    %16 = vector.extract_strided_slice %12 {offsets = [0, 128], sizes = [64, 16], strides = [1, 1]} : vector<64x384xbf16> to vector<64x16xbf16>
    %17 = vector.shape_cast %16 : vector<64x16xbf16> to vector<4x16x16xbf16>
    %18 = vector.extract_strided_slice %12 {offsets = [0, 256], sizes = [64, 16], strides = [1, 1]} : vector<64x384xbf16> to vector<64x16xbf16>
    %19 = vector.shape_cast %18 : vector<64x16xbf16> to vector<4x16x16xbf16>
    "tpu.trace_start"() <{level = 10 : i32, message = "bqd,bkd->bqk"}> : () -> ()
    %cst_15 = arith.constant dense<0.000000e+00> : vector<4x16x16xf32>
    %20 = tpu.matmul %15, %17, %cst_15 {dimension_numbers = #tpu.dot_dimension_numbers<[2], [2], [1], [1], [0, 0, 0, 1, 1, 1], [0], [0]>} : vector<4x16x16xbf16>, vector<4x16x16xbf16>, vector<4x16x16xf32> -> vector<4x16x16xf32>
    "tpu.trace_stop"() : () -> ()
    %cst_16 = arith.constant dense<0xFF800000> : vector<4x16xf32>
    %21 = vector.multi_reduction <maximumf>, %20, %cst_16 [2] : vector<4x16x16xf32> to vector<4x16xf32>
    %22 = vector.shape_cast %21 : vector<4x16xf32> to vector<4x16x1xf32>
    %23 = vector.broadcast %22 : vector<4x16x1xf32> to vector<4x16x16xf32>
    %24 = arith.subf %20, %23 : vector<4x16x16xf32>
    %25 = math.exp %24 : vector<4x16x16xf32>
    %cst_17 = arith.constant dense<0.000000e+00> : vector<4x16xf32>
    %26 = vector.multi_reduction <add>, %25, %cst_17 [2] : vector<4x16x16xf32> to vector<4x16xf32>
    %27 = vector.shape_cast %26 : vector<4x16xf32> to vector<4x16x1xf32>
    %28 = tpu.reciprocal %27 : vector<4x16x1xf32> -> vector<4x16x1xf32>
    %29 = vector.broadcast %28 : vector<4x16x1xf32> to vector<4x16x16xf32>
    %30 = arith.mulf %25, %29 : vector<4x16x16xf32>
    %31 = arith.truncf %30 : vector<4x16x16xf32> to vector<4x16x16xbf16>
    "tpu.trace_start"() <{level = 10 : i32, message = "bqk,bkd->bqd"}> : () -> ()
    %cst_18 = arith.constant dense<0.000000e+00> : vector<4x16x16xf32>
    %32 = tpu.matmul %31, %19, %cst_18 {dimension_numbers = #tpu.dot_dimension_numbers<[2], [1], [1], [2], [0, 0, 0, 1, 1, 2], [0], [0]>} : vector<4x16x16xbf16>, vector<4x16x16xbf16>, vector<4x16x16xf32> -> vector<4x16x16xf32>
    "tpu.trace_stop"() : () -> ()
    %33 = vector.shape_cast %32 : vector<4x16x16xf32> to vector<64x16xf32>
    %34 = arith.truncf %33 : vector<64x16xf32> to vector<64x16xbf16>
    %c0_19 = arith.constant 0 : index
    %c0_20 = arith.constant 0 : index
    %c0_21 = arith.constant 0 : index
    %35 = vector.load %arg4[%c0_19, %c0_20, %c0_21] : memref<8x16x128xbf16, #tpu.memory_space<vmem>>, vector<1x16x128xbf16>
    %36 = vector.shape_cast %35 : vector<1x16x128xbf16> to vector<16x128xbf16>
    %cst_22 = arith.constant dense<0.000000e+00> : vector<64x128xf32>
    %37 = tpu.matmul %34, %36, %cst_22 {dimension_numbers = #tpu.dot_dimension_numbers<[1], [0], [0], [1], [0, 0, 1, 1], [], []>} : vector<64x16xbf16>, vector<16x128xbf16>, vector<64x128xf32> -> vector<64x128xf32>
    %38 = arith.addf %13, %37 : vector<64x128xf32>
    %39 = vector.extract_strided_slice %12 {offsets = [0, 16], sizes = [64, 16], strides = [1, 1]} : vector<64x384xbf16> to vector<64x16xbf16>
    %40 = vector.shape_cast %39 : vector<64x16xbf16> to vector<4x16x16xbf16>
    %41 = vector.extract_strided_slice %12 {offsets = [0, 144], sizes = [64, 16], strides = [1, 1]} : vector<64x384xbf16> to vector<64x16xbf16>
    %42 = vector.shape_cast %41 : vector<64x16xbf16> to vector<4x16x16xbf16>
    %43 = vector.extract_strided_slice %12 {offsets = [0, 272], sizes = [64, 16], strides = [1, 1]} : vector<64x384xbf16> to vector<64x16xbf16>
    %44 = vector.shape_cast %43 : vector<64x16xbf16> to vector<4x16x16xbf16>
    "tpu.trace_start"() <{level = 10 : i32, message = "bqd,bkd->bqk"}> : () -> ()
    %cst_23 = arith.constant dense<0.000000e+00> : vector<4x16x16xf32>
    %45 = tpu.matmul %40, %42, %cst_23 {dimension_numbers = #tpu.dot_dimension_numbers<[2], [2], [1], [1], [0, 0, 0, 1, 1, 1], [0], [0]>} : vector<4x16x16xbf16>, vector<4x16x16xbf16>, vector<4x16x16xf32> -> vector<4x16x16xf32>
    "tpu.trace_stop"() : () -> ()
    %cst_24 = arith.constant dense<0xFF800000> : vector<4x16xf32>
    %46 = vector.multi_reduction <maximumf>, %45, %cst_24 [2] : vector<4x16x16xf32> to vector<4x16xf32>
    %47 = vector.shape_cast %46 : vector<4x16xf32> to vector<4x16x1xf32>
    %48 = vector.broadcast %47 : vector<4x16x1xf32> to vector<4x16x16xf32>
    %49 = arith.subf %45, %48 : vector<4x16x16xf32>
    %50 = math.exp %49 : vector<4x16x16xf32>
    %cst_25 = arith.constant dense<0.000000e+00> : vector<4x16xf32>
    %51 = vector.multi_reduction <add>, %50, %cst_25 [2] : vector<4x16x16xf32> to vector<4x16xf32>
    %52 = vector.shape_cast %51 : vector<4x16xf32> to vector<4x16x1xf32>
    %53 = tpu.reciprocal %52 : vector<4x16x1xf32> -> vector<4x16x1xf32>
    %54 = vector.broadcast %53 : vector<4x16x1xf32> to vector<4x16x16xf32>
    %55 = arith.mulf %50, %54 : vector<4x16x16xf32>
    %56 = arith.truncf %55 : vector<4x16x16xf32> to vector<4x16x16xbf16>
    "tpu.trace_start"() <{level = 10 : i32, message = "bqk,bkd->bqd"}> : () -> ()
    %cst_26 = arith.constant dense<0.000000e+00> : vector<4x16x16xf32>
    %57 = tpu.matmul %56, %44, %cst_26 {dimension_numbers = #tpu.dot_dimension_numbers<[2], [1], [1], [2], [0, 0, 0, 1, 1, 2], [0], [0]>} : vector<4x16x16xbf16>, vector<4x16x16xbf16>, vector<4x16x16xf32> -> vector<4x16x16xf32>
    "tpu.trace_stop"() : () -> ()
    %58 = vector.shape_cast %57 : vector<4x16x16xf32> to vector<64x16xf32>
    %59 = arith.truncf %58 : vector<64x16xf32> to vector<64x16xbf16>
    %c1 = arith.constant 1 : index
    %c0_27 = arith.constant 0 : index
    %c0_28 = arith.constant 0 : index
    %60 = vector.load %arg4[%c1, %c0_27, %c0_28] : memref<8x16x128xbf16, #tpu.memory_space<vmem>>, vector<1x16x128xbf16>
    %61 = vector.shape_cast %60 : vector<1x16x128xbf16> to vector<16x128xbf16>
    %cst_29 = arith.constant dense<0.000000e+00> : vector<64x128xf32>
    %62 = tpu.matmul %59, %61, %cst_29 {dimension_numbers = #tpu.dot_dimension_numbers<[1], [0], [0], [1], [0, 0, 1, 1], [], []>} : vector<64x16xbf16>, vector<16x128xbf16>, vector<64x128xf32> -> vector<64x128xf32>
    %63 = arith.addf %38, %62 : vector<64x128xf32>
    %64 = vector.extract_strided_slice %12 {offsets = [0, 32], sizes = [64, 16], strides = [1, 1]} : vector<64x384xbf16> to vector<64x16xbf16>
    %65 = vector.shape_cast %64 : vector<64x16xbf16> to vector<4x16x16xbf16>
    %66 = vector.extract_strided_slice %12 {offsets = [0, 160], sizes = [64, 16], strides = [1, 1]} : vector<64x384xbf16> to vector<64x16xbf16>
    %67 = vector.shape_cast %66 : vector<64x16xbf16> to vector<4x16x16xbf16>
    %68 = vector.extract_strided_slice %12 {offsets = [0, 288], sizes = [64, 16], strides = [1, 1]} : vector<64x384xbf16> to vector<64x16xbf16>
    %69 = vector.shape_cast %68 : vector<64x16xbf16> to vector<4x16x16xbf16>
    "tpu.trace_start"() <{level = 10 : i32, message = "bqd,bkd->bqk"}> : () -> ()
    %cst_30 = arith.constant dense<0.000000e+00> : vector<4x16x16xf32>
    %70 = tpu.matmul %65, %67, %cst_30 {dimension_numbers = #tpu.dot_dimension_numbers<[2], [2], [1], [1], [0, 0, 0, 1, 1, 1], [0], [0]>} : vector<4x16x16xbf16>, vector<4x16x16xbf16>, vector<4x16x16xf32> -> vector<4x16x16xf32>
    "tpu.trace_stop"() : () -> ()
    %cst_31 = arith.constant dense<0xFF800000> : vector<4x16xf32>
    %71 = vector.multi_reduction <maximumf>, %70, %cst_31 [2] : vector<4x16x16xf32> to vector<4x16xf32>
    %72 = vector.shape_cast %71 : vector<4x16xf32> to vector<4x16x1xf32>
    %73 = vector.broadcast %72 : vector<4x16x1xf32> to vector<4x16x16xf32>
    %74 = arith.subf %70, %73 : vector<4x16x16xf32>
    %75 = math.exp %74 : vector<4x16x16xf32>
    %cst_32 = arith.constant dense<0.000000e+00> : vector<4x16xf32>
    %76 = vector.multi_reduction <add>, %75, %cst_32 [2] : vector<4x16x16xf32> to vector<4x16xf32>
    %77 = vector.shape_cast %76 : vector<4x16xf32> to vector<4x16x1xf32>
    %78 = tpu.reciprocal %77 : vector<4x16x1xf32> -> vector<4x16x1xf32>
    %79 = vector.broadcast %78 : vector<4x16x1xf32> to vector<4x16x16xf32>
    %80 = arith.mulf %75, %79 : vector<4x16x16xf32>
    %81 = arith.truncf %80 : vector<4x16x16xf32> to vector<4x16x16xbf16>
    "tpu.trace_start"() <{level = 10 : i32, message = "bqk,bkd->bqd"}> : () -> ()
    %cst_33 = arith.constant dense<0.000000e+00> : vector<4x16x16xf32>
    %82 = tpu.matmul %81, %69, %cst_33 {dimension_numbers = #tpu.dot_dimension_numbers<[2], [1], [1], [2], [0, 0, 0, 1, 1, 2], [0], [0]>} : vector<4x16x16xbf16>, vector<4x16x16xbf16>, vector<4x16x16xf32> -> vector<4x16x16xf32>
    "tpu.trace_stop"() : () -> ()
    %83 = vector.shape_cast %82 : vector<4x16x16xf32> to vector<64x16xf32>
    %84 = arith.truncf %83 : vector<64x16xf32> to vector<64x16xbf16>
    %c2 = arith.constant 2 : index
    %c0_34 = arith.constant 0 : index
    %c0_35 = arith.constant 0 : index
    %85 = vector.load %arg4[%c2, %c0_34, %c0_35] : memref<8x16x128xbf16, #tpu.memory_space<vmem>>, vector<1x16x128xbf16>
    %86 = vector.shape_cast %85 : vector<1x16x128xbf16> to vector<16x128xbf16>
    %cst_36 = arith.constant dense<0.000000e+00> : vector<64x128xf32>
    %87 = tpu.matmul %84, %86, %cst_36 {dimension_numbers = #tpu.dot_dimension_numbers<[1], [0], [0], [1], [0, 0, 1, 1], [], []>} : vector<64x16xbf16>, vector<16x128xbf16>, vector<64x128xf32> -> vector<64x128xf32>
    %88 = arith.addf %63, %87 : vector<64x128xf32>
    %89 = vector.extract_strided_slice %12 {offsets = [0, 48], sizes = [64, 16], strides = [1, 1]} : vector<64x384xbf16> to vector<64x16xbf16>
    %90 = vector.shape_cast %89 : vector<64x16xbf16> to vector<4x16x16xbf16>
    %91 = vector.extract_strided_slice %12 {offsets = [0, 176], sizes = [64, 16], strides = [1, 1]} : vector<64x384xbf16> to vector<64x16xbf16>
    %92 = vector.shape_cast %91 : vector<64x16xbf16> to vector<4x16x16xbf16>
    %93 = vector.extract_strided_slice %12 {offsets = [0, 304], sizes = [64, 16], strides = [1, 1]} : vector<64x384xbf16> to vector<64x16xbf16>
    %94 = vector.shape_cast %93 : vector<64x16xbf16> to vector<4x16x16xbf16>
    "tpu.trace_start"() <{level = 10 : i32, message = "bqd,bkd->bqk"}> : () -> ()
    %cst_37 = arith.constant dense<0.000000e+00> : vector<4x16x16xf32>
    %95 = tpu.matmul %90, %92, %cst_37 {dimension_numbers = #tpu.dot_dimension_numbers<[2], [2], [1], [1], [0, 0, 0, 1, 1, 1], [0], [0]>} : vector<4x16x16xbf16>, vector<4x16x16xbf16>, vector<4x16x16xf32> -> vector<4x16x16xf32>
    "tpu.trace_stop"() : () -> ()
    %cst_38 = arith.constant dense<0xFF800000> : vector<4x16xf32>
    %96 = vector.multi_reduction <maximumf>, %95, %cst_38 [2] : vector<4x16x16xf32> to vector<4x16xf32>
    %97 = vector.shape_cast %96 : vector<4x16xf32> to vector<4x16x1xf32>
    %98 = vector.broadcast %97 : vector<4x16x1xf32> to vector<4x16x16xf32>
    %99 = arith.subf %95, %98 : vector<4x16x16xf32>
    %100 = math.exp %99 : vector<4x16x16xf32>
    %cst_39 = arith.constant dense<0.000000e+00> : vector<4x16xf32>
    %101 = vector.multi_reduction <add>, %100, %cst_39 [2] : vector<4x16x16xf32> to vector<4x16xf32>
    %102 = vector.shape_cast %101 : vector<4x16xf32> to vector<4x16x1xf32>
    %103 = tpu.reciprocal %102 : vector<4x16x1xf32> -> vector<4x16x1xf32>
    %104 = vector.broadcast %103 : vector<4x16x1xf32> to vector<4x16x16xf32>
    %105 = arith.mulf %100, %104 : vector<4x16x16xf32>
    %106 = arith.truncf %105 : vector<4x16x16xf32> to vector<4x16x16xbf16>
    "tpu.trace_start"() <{level = 10 : i32, message = "bqk,bkd->bqd"}> : () -> ()
    %cst_40 = arith.constant dense<0.000000e+00> : vector<4x16x16xf32>
    %107 = tpu.matmul %106, %94, %cst_40 {dimension_numbers = #tpu.dot_dimension_numbers<[2], [1], [1], [2], [0, 0, 0, 1, 1, 2], [0], [0]>} : vector<4x16x16xbf16>, vector<4x16x16xbf16>, vector<4x16x16xf32> -> vector<4x16x16xf32>
    "tpu.trace_stop"() : () -> ()
    %108 = vector.shape_cast %107 : vector<4x16x16xf32> to vector<64x16xf32>
    %109 = arith.truncf %108 : vector<64x16xf32> to vector<64x16xbf16>
    %c3 = arith.constant 3 : index
    %c0_41 = arith.constant 0 : index
    %c0_42 = arith.constant 0 : index
    %110 = vector.load %arg4[%c3, %c0_41, %c0_42] : memref<8x16x128xbf16, #tpu.memory_space<vmem>>, vector<1x16x128xbf16>
    %111 = vector.shape_cast %110 : vector<1x16x128xbf16> to vector<16x128xbf16>
    %cst_43 = arith.constant dense<0.000000e+00> : vector<64x128xf32>
    %112 = tpu.matmul %109, %111, %cst_43 {dimension_numbers = #tpu.dot_dimension_numbers<[1], [0], [0], [1], [0, 0, 1, 1], [], []>} : vector<64x16xbf16>, vector<16x128xbf16>, vector<64x128xf32> -> vector<64x128xf32>
    %113 = arith.addf %88, %112 : vector<64x128xf32>
    %114 = vector.extract_strided_slice %12 {offsets = [0, 64], sizes = [64, 16], strides = [1, 1]} : vector<64x384xbf16> to vector<64x16xbf16>
    %115 = vector.shape_cast %114 : vector<64x16xbf16> to vector<4x16x16xbf16>
    %116 = vector.extract_strided_slice %12 {offsets = [0, 192], sizes = [64, 16], strides = [1, 1]} : vector<64x384xbf16> to vector<64x16xbf16>
    %117 = vector.shape_cast %116 : vector<64x16xbf16> to vector<4x16x16xbf16>
    %118 = vector.extract_strided_slice %12 {offsets = [0, 320], sizes = [64, 16], strides = [1, 1]} : vector<64x384xbf16> to vector<64x16xbf16>
    %119 = vector.shape_cast %118 : vector<64x16xbf16> to vector<4x16x16xbf16>
    "tpu.trace_start"() <{level = 10 : i32, message = "bqd,bkd->bqk"}> : () -> ()
    %cst_44 = arith.constant dense<0.000000e+00> : vector<4x16x16xf32>
    %120 = tpu.matmul %115, %117, %cst_44 {dimension_numbers = #tpu.dot_dimension_numbers<[2], [2], [1], [1], [0, 0, 0, 1, 1, 1], [0], [0]>} : vector<4x16x16xbf16>, vector<4x16x16xbf16>, vector<4x16x16xf32> -> vector<4x16x16xf32>
    "tpu.trace_stop"() : () -> ()
    %cst_45 = arith.constant dense<0xFF800000> : vector<4x16xf32>
    %121 = vector.multi_reduction <maximumf>, %120, %cst_45 [2] : vector<4x16x16xf32> to vector<4x16xf32>
    %122 = vector.shape_cast %121 : vector<4x16xf32> to vector<4x16x1xf32>
    %123 = vector.broadcast %122 : vector<4x16x1xf32> to vector<4x16x16xf32>
    %124 = arith.subf %120, %123 : vector<4x16x16xf32>
    %125 = math.exp %124 : vector<4x16x16xf32>
    %cst_46 = arith.constant dense<0.000000e+00> : vector<4x16xf32>
    %126 = vector.multi_reduction <add>, %125, %cst_46 [2] : vector<4x16x16xf32> to vector<4x16xf32>
    %127 = vector.shape_cast %126 : vector<4x16xf32> to vector<4x16x1xf32>
    %128 = tpu.reciprocal %127 : vector<4x16x1xf32> -> vector<4x16x1xf32>
    %129 = vector.broadcast %128 : vector<4x16x1xf32> to vector<4x16x16xf32>
    %130 = arith.mulf %125, %129 : vector<4x16x16xf32>
    %131 = arith.truncf %130 : vector<4x16x16xf32> to vector<4x16x16xbf16>
    "tpu.trace_start"() <{level = 10 : i32, message = "bqk,bkd->bqd"}> : () -> ()
    %cst_47 = arith.constant dense<0.000000e+00> : vector<4x16x16xf32>
    %132 = tpu.matmul %131, %119, %cst_47 {dimension_numbers = #tpu.dot_dimension_numbers<[2], [1], [1], [2], [0, 0, 0, 1, 1, 2], [0], [0]>} : vector<4x16x16xbf16>, vector<4x16x16xbf16>, vector<4x16x16xf32> -> vector<4x16x16xf32>
    "tpu.trace_stop"() : () -> ()
    %133 = vector.shape_cast %132 : vector<4x16x16xf32> to vector<64x16xf32>
    %134 = arith.truncf %133 : vector<64x16xf32> to vector<64x16xbf16>
    %c4 = arith.constant 4 : index
    %c0_48 = arith.constant 0 : index
    %c0_49 = arith.constant 0 : index
    %135 = vector.load %arg4[%c4, %c0_48, %c0_49] : memref<8x16x128xbf16, #tpu.memory_space<vmem>>, vector<1x16x128xbf16>
    %136 = vector.shape_cast %135 : vector<1x16x128xbf16> to vector<16x128xbf16>
    %cst_50 = arith.constant dense<0.000000e+00> : vector<64x128xf32>
    %137 = tpu.matmul %134, %136, %cst_50 {dimension_numbers = #tpu.dot_dimension_numbers<[1], [0], [0], [1], [0, 0, 1, 1], [], []>} : vector<64x16xbf16>, vector<16x128xbf16>, vector<64x128xf32> -> vector<64x128xf32>
    %138 = arith.addf %113, %137 : vector<64x128xf32>
    %139 = vector.extract_strided_slice %12 {offsets = [0, 80], sizes = [64, 16], strides = [1, 1]} : vector<64x384xbf16> to vector<64x16xbf16>
    %140 = vector.shape_cast %139 : vector<64x16xbf16> to vector<4x16x16xbf16>
    %141 = vector.extract_strided_slice %12 {offsets = [0, 208], sizes = [64, 16], strides = [1, 1]} : vector<64x384xbf16> to vector<64x16xbf16>
    %142 = vector.shape_cast %141 : vector<64x16xbf16> to vector<4x16x16xbf16>
    %143 = vector.extract_strided_slice %12 {offsets = [0, 336], sizes = [64, 16], strides = [1, 1]} : vector<64x384xbf16> to vector<64x16xbf16>
    %144 = vector.shape_cast %143 : vector<64x16xbf16> to vector<4x16x16xbf16>
    "tpu.trace_start"() <{level = 10 : i32, message = "bqd,bkd->bqk"}> : () -> ()
    %cst_51 = arith.constant dense<0.000000e+00> : vector<4x16x16xf32>
    %145 = tpu.matmul %140, %142, %cst_51 {dimension_numbers = #tpu.dot_dimension_numbers<[2], [2], [1], [1], [0, 0, 0, 1, 1, 1], [0], [0]>} : vector<4x16x16xbf16>, vector<4x16x16xbf16>, vector<4x16x16xf32> -> vector<4x16x16xf32>
    "tpu.trace_stop"() : () -> ()
    %cst_52 = arith.constant dense<0xFF800000> : vector<4x16xf32>
    %146 = vector.multi_reduction <maximumf>, %145, %cst_52 [2] : vector<4x16x16xf32> to vector<4x16xf32>
    %147 = vector.shape_cast %146 : vector<4x16xf32> to vector<4x16x1xf32>
    %148 = vector.broadcast %147 : vector<4x16x1xf32> to vector<4x16x16xf32>
    %149 = arith.subf %145, %148 : vector<4x16x16xf32>
    %150 = math.exp %149 : vector<4x16x16xf32>
    %cst_53 = arith.constant dense<0.000000e+00> : vector<4x16xf32>
    %151 = vector.multi_reduction <add>, %150, %cst_53 [2] : vector<4x16x16xf32> to vector<4x16xf32>
    %152 = vector.shape_cast %151 : vector<4x16xf32> to vector<4x16x1xf32>
    %153 = tpu.reciprocal %152 : vector<4x16x1xf32> -> vector<4x16x1xf32>
    %154 = vector.broadcast %153 : vector<4x16x1xf32> to vector<4x16x16xf32>
    %155 = arith.mulf %150, %154 : vector<4x16x16xf32>
    %156 = arith.truncf %155 : vector<4x16x16xf32> to vector<4x16x16xbf16>
    "tpu.trace_start"() <{level = 10 : i32, message = "bqk,bkd->bqd"}> : () -> ()
    %cst_54 = arith.constant dense<0.000000e+00> : vector<4x16x16xf32>
    %157 = tpu.matmul %156, %144, %cst_54 {dimension_numbers = #tpu.dot_dimension_numbers<[2], [1], [1], [2], [0, 0, 0, 1, 1, 2], [0], [0]>} : vector<4x16x16xbf16>, vector<4x16x16xbf16>, vector<4x16x16xf32> -> vector<4x16x16xf32>
    "tpu.trace_stop"() : () -> ()
    %158 = vector.shape_cast %157 : vector<4x16x16xf32> to vector<64x16xf32>
    %159 = arith.truncf %158 : vector<64x16xf32> to vector<64x16xbf16>
    %c5 = arith.constant 5 : index
    %c0_55 = arith.constant 0 : index
    %c0_56 = arith.constant 0 : index
    %160 = vector.load %arg4[%c5, %c0_55, %c0_56] : memref<8x16x128xbf16, #tpu.memory_space<vmem>>, vector<1x16x128xbf16>
    %161 = vector.shape_cast %160 : vector<1x16x128xbf16> to vector<16x128xbf16>
    %cst_57 = arith.constant dense<0.000000e+00> : vector<64x128xf32>
    %162 = tpu.matmul %159, %161, %cst_57 {dimension_numbers = #tpu.dot_dimension_numbers<[1], [0], [0], [1], [0, 0, 1, 1], [], []>} : vector<64x16xbf16>, vector<16x128xbf16>, vector<64x128xf32> -> vector<64x128xf32>
    %163 = arith.addf %138, %162 : vector<64x128xf32>
    %164 = vector.extract_strided_slice %12 {offsets = [0, 96], sizes = [64, 16], strides = [1, 1]} : vector<64x384xbf16> to vector<64x16xbf16>
    %165 = vector.shape_cast %164 : vector<64x16xbf16> to vector<4x16x16xbf16>
    %166 = vector.extract_strided_slice %12 {offsets = [0, 224], sizes = [64, 16], strides = [1, 1]} : vector<64x384xbf16> to vector<64x16xbf16>
    %167 = vector.shape_cast %166 : vector<64x16xbf16> to vector<4x16x16xbf16>
    %168 = vector.extract_strided_slice %12 {offsets = [0, 352], sizes = [64, 16], strides = [1, 1]} : vector<64x384xbf16> to vector<64x16xbf16>
    %169 = vector.shape_cast %168 : vector<64x16xbf16> to vector<4x16x16xbf16>
    "tpu.trace_start"() <{level = 10 : i32, message = "bqd,bkd->bqk"}> : () -> ()
    %cst_58 = arith.constant dense<0.000000e+00> : vector<4x16x16xf32>
    %170 = tpu.matmul %165, %167, %cst_58 {dimension_numbers = #tpu.dot_dimension_numbers<[2], [2], [1], [1], [0, 0, 0, 1, 1, 1], [0], [0]>} : vector<4x16x16xbf16>, vector<4x16x16xbf16>, vector<4x16x16xf32> -> vector<4x16x16xf32>
    "tpu.trace_stop"() : () -> ()
    %cst_59 = arith.constant dense<0xFF800000> : vector<4x16xf32>
    %171 = vector.multi_reduction <maximumf>, %170, %cst_59 [2] : vector<4x16x16xf32> to vector<4x16xf32>
    %172 = vector.shape_cast %171 : vector<4x16xf32> to vector<4x16x1xf32>
    %173 = vector.broadcast %172 : vector<4x16x1xf32> to vector<4x16x16xf32>
    %174 = arith.subf %170, %173 : vector<4x16x16xf32>
    %175 = math.exp %174 : vector<4x16x16xf32>
    %cst_60 = arith.constant dense<0.000000e+00> : vector<4x16xf32>
    %176 = vector.multi_reduction <add>, %175, %cst_60 [2] : vector<4x16x16xf32> to vector<4x16xf32>
    %177 = vector.shape_cast %176 : vector<4x16xf32> to vector<4x16x1xf32>
    %178 = tpu.reciprocal %177 : vector<4x16x1xf32> -> vector<4x16x1xf32>
    %179 = vector.broadcast %178 : vector<4x16x1xf32> to vector<4x16x16xf32>
    %180 = arith.mulf %175, %179 : vector<4x16x16xf32>
    %181 = arith.truncf %180 : vector<4x16x16xf32> to vector<4x16x16xbf16>
    "tpu.trace_start"() <{level = 10 : i32, message = "bqk,bkd->bqd"}> : () -> ()
    %cst_61 = arith.constant dense<0.000000e+00> : vector<4x16x16xf32>
    %182 = tpu.matmul %181, %169, %cst_61 {dimension_numbers = #tpu.dot_dimension_numbers<[2], [1], [1], [2], [0, 0, 0, 1, 1, 2], [0], [0]>} : vector<4x16x16xbf16>, vector<4x16x16xbf16>, vector<4x16x16xf32> -> vector<4x16x16xf32>
    "tpu.trace_stop"() : () -> ()
    %183 = vector.shape_cast %182 : vector<4x16x16xf32> to vector<64x16xf32>
    %184 = arith.truncf %183 : vector<64x16xf32> to vector<64x16xbf16>
    %c6 = arith.constant 6 : index
    %c0_62 = arith.constant 0 : index
    %c0_63 = arith.constant 0 : index
    %185 = vector.load %arg4[%c6, %c0_62, %c0_63] : memref<8x16x128xbf16, #tpu.memory_space<vmem>>, vector<1x16x128xbf16>
    %186 = vector.shape_cast %185 : vector<1x16x128xbf16> to vector<16x128xbf16>
    %cst_64 = arith.constant dense<0.000000e+00> : vector<64x128xf32>
    %187 = tpu.matmul %184, %186, %cst_64 {dimension_numbers = #tpu.dot_dimension_numbers<[1], [0], [0], [1], [0, 0, 1, 1], [], []>} : vector<64x16xbf16>, vector<16x128xbf16>, vector<64x128xf32> -> vector<64x128xf32>
    %188 = arith.addf %163, %187 : vector<64x128xf32>
    %189 = vector.extract_strided_slice %12 {offsets = [0, 112], sizes = [64, 16], strides = [1, 1]} : vector<64x384xbf16> to vector<64x16xbf16>
    %190 = vector.shape_cast %189 : vector<64x16xbf16> to vector<4x16x16xbf16>
    %191 = vector.extract_strided_slice %12 {offsets = [0, 240], sizes = [64, 16], strides = [1, 1]} : vector<64x384xbf16> to vector<64x16xbf16>
    %192 = vector.shape_cast %191 : vector<64x16xbf16> to vector<4x16x16xbf16>
    %193 = vector.extract_strided_slice %12 {offsets = [0, 368], sizes = [64, 16], strides = [1, 1]} : vector<64x384xbf16> to vector<64x16xbf16>
    %194 = vector.shape_cast %193 : vector<64x16xbf16> to vector<4x16x16xbf16>
    "tpu.trace_start"() <{level = 10 : i32, message = "bqd,bkd->bqk"}> : () -> ()
    %cst_65 = arith.constant dense<0.000000e+00> : vector<4x16x16xf32>
    %195 = tpu.matmul %190, %192, %cst_65 {dimension_numbers = #tpu.dot_dimension_numbers<[2], [2], [1], [1], [0, 0, 0, 1, 1, 1], [0], [0]>} : vector<4x16x16xbf16>, vector<4x16x16xbf16>, vector<4x16x16xf32> -> vector<4x16x16xf32>
    "tpu.trace_stop"() : () -> ()
    %cst_66 = arith.constant dense<0xFF800000> : vector<4x16xf32>
    %196 = vector.multi_reduction <maximumf>, %195, %cst_66 [2] : vector<4x16x16xf32> to vector<4x16xf32>
    %197 = vector.shape_cast %196 : vector<4x16xf32> to vector<4x16x1xf32>
    %198 = vector.broadcast %197 : vector<4x16x1xf32> to vector<4x16x16xf32>
    %199 = arith.subf %195, %198 : vector<4x16x16xf32>
    %200 = math.exp %199 : vector<4x16x16xf32>
    %cst_67 = arith.constant dense<0.000000e+00> : vector<4x16xf32>
    %201 = vector.multi_reduction <add>, %200, %cst_67 [2] : vector<4x16x16xf32> to vector<4x16xf32>
    %202 = vector.shape_cast %201 : vector<4x16xf32> to vector<4x16x1xf32>
    %203 = tpu.reciprocal %202 : vector<4x16x1xf32> -> vector<4x16x1xf32>
    %204 = vector.broadcast %203 : vector<4x16x1xf32> to vector<4x16x16xf32>
    %205 = arith.mulf %200, %204 : vector<4x16x16xf32>
    %206 = arith.truncf %205 : vector<4x16x16xf32> to vector<4x16x16xbf16>
    "tpu.trace_start"() <{level = 10 : i32, message = "bqk,bkd->bqd"}> : () -> ()
    %cst_68 = arith.constant dense<0.000000e+00> : vector<4x16x16xf32>
    %207 = tpu.matmul %206, %194, %cst_68 {dimension_numbers = #tpu.dot_dimension_numbers<[2], [1], [1], [2], [0, 0, 0, 1, 1, 2], [0], [0]>} : vector<4x16x16xbf16>, vector<4x16x16xbf16>, vector<4x16x16xf32> -> vector<4x16x16xf32>
    "tpu.trace_stop"() : () -> ()
    %208 = vector.shape_cast %207 : vector<4x16x16xf32> to vector<64x16xf32>
    %209 = arith.truncf %208 : vector<64x16xf32> to vector<64x16xbf16>
    %c7 = arith.constant 7 : index
    %c0_69 = arith.constant 0 : index
    %c0_70 = arith.constant 0 : index
    %210 = vector.load %arg4[%c7, %c0_69, %c0_70] : memref<8x16x128xbf16, #tpu.memory_space<vmem>>, vector<1x16x128xbf16>
    %211 = vector.shape_cast %210 : vector<1x16x128xbf16> to vector<16x128xbf16>
    %cst_71 = arith.constant dense<0.000000e+00> : vector<64x128xf32>
    %212 = tpu.matmul %209, %211, %cst_71 {dimension_numbers = #tpu.dot_dimension_numbers<[1], [0], [0], [1], [0, 0, 1, 1], [], []>} : vector<64x16xbf16>, vector<16x128xbf16>, vector<64x128xf32> -> vector<64x128xf32>
    %213 = arith.addf %188, %212 : vector<64x128xf32>
    %214 = vector.broadcast %4 : vector<1x128xf32> to vector<64x128xf32>
    %215 = arith.addf %213, %214 : vector<64x128xf32>
    %216 = arith.truncf %215 : vector<64x128xf32> to vector<64x128xbf16>
    %c0_72 = arith.constant 0 : index
    %c0_73 = arith.constant 0 : index
    %217 = vector.load %arg6[%c0_72, %c0_73] : memref<128x512xbf16, #tpu.memory_space<vmem>>, vector<128x512xbf16>
    %cst_74 = arith.constant dense<0.000000e+00> : vector<64x512xf32>
    %218 = tpu.matmul %216, %217, %cst_74 {dimension_numbers = #tpu.dot_dimension_numbers<[1], [0], [0], [1], [0, 0, 1, 1], [], []>} : vector<64x128xbf16>, vector<128x512xbf16>, vector<64x512xf32> -> vector<64x512xf32>
    %219 = vector.broadcast %5 : vector<1x512xf32> to vector<64x512xf32>
    %220 = arith.addf %218, %219 : vector<64x512xf32>
    %221 = arith.mulf %220, %220 : vector<64x512xf32>
    %222 = arith.mulf %220, %221 : vector<64x512xf32>
    %cst_75 = arith.constant 4.471500e-02 : f32
    %223 = vector.broadcast %cst_75 : f32 to vector<64x512xf32>
    %224 = arith.mulf %223, %222 : vector<64x512xf32>
    %225 = arith.addf %220, %224 : vector<64x512xf32>
    %cst_76 = arith.constant 0.797884583 : f32
    %226 = vector.broadcast %cst_76 : f32 to vector<64x512xf32>
    %227 = arith.mulf %226, %225 : vector<64x512xf32>
    %228 = math.tanh %227 : vector<64x512xf32>
    %cst_77 = arith.constant 1.000000e+00 : f32
    %229 = vector.broadcast %cst_77 : f32 to vector<64x512xf32>
    %230 = arith.addf %229, %228 : vector<64x512xf32>
    %cst_78 = arith.constant 5.000000e-01 : f32
    %231 = vector.broadcast %cst_78 : f32 to vector<64x512xf32>
    %232 = arith.mulf %231, %230 : vector<64x512xf32>
    %233 = arith.mulf %220, %232 : vector<64x512xf32>
    %234 = arith.truncf %233 : vector<64x512xf32> to vector<64x512xbf16>
    %c0_79 = arith.constant 0 : index
    %c0_80 = arith.constant 0 : index
    %235 = vector.load %arg8[%c0_79, %c0_80] : memref<512x256xbf16, #tpu.memory_space<vmem>>, vector<512x256xbf16>
    %cst_81 = arith.constant dense<0.000000e+00> : vector<64x256xf32>
    %236 = tpu.matmul %234, %235, %cst_81 {dimension_numbers = #tpu.dot_dimension_numbers<[1], [0], [0], [1], [0, 0, 1, 1], [], []>} : vector<64x512xbf16>, vector<512x256xbf16>, vector<64x256xf32> -> vector<64x256xf32>
    %237 = vector.broadcast %6 : vector<1x256xf32> to vector<64x256xf32>
    %238 = arith.addf %236, %237 : vector<64x256xf32>
    %239 = arith.mulf %238, %238 : vector<64x256xf32>
    %240 = arith.mulf %238, %239 : vector<64x256xf32>
    %cst_82 = arith.constant 4.471500e-02 : f32
    %241 = vector.broadcast %cst_82 : f32 to vector<64x256xf32>
    %242 = arith.mulf %241, %240 : vector<64x256xf32>
    %243 = arith.addf %238, %242 : vector<64x256xf32>
    %cst_83 = arith.constant 0.797884583 : f32
    %244 = vector.broadcast %cst_83 : f32 to vector<64x256xf32>
    %245 = arith.mulf %244, %243 : vector<64x256xf32>
    %246 = math.tanh %245 : vector<64x256xf32>
    %cst_84 = arith.constant 1.000000e+00 : f32
    %247 = vector.broadcast %cst_84 : f32 to vector<64x256xf32>
    %248 = arith.addf %247, %246 : vector<64x256xf32>
    %cst_85 = arith.constant 5.000000e-01 : f32
    %249 = vector.broadcast %cst_85 : f32 to vector<64x256xf32>
    %250 = arith.mulf %249, %248 : vector<64x256xf32>
    %251 = arith.mulf %238, %250 : vector<64x256xf32>
    %252 = arith.truncf %251 : vector<64x256xf32> to vector<64x256xbf16>
    %c0_86 = arith.constant 0 : index
    %c0_87 = arith.constant 0 : index
    %253 = vector.load %arg10[%c0_86, %c0_87] : memref<256x128xbf16, #tpu.memory_space<vmem>>, vector<256x128xbf16>
    %cst_88 = arith.constant dense<0.000000e+00> : vector<64x128xf32>
    %254 = tpu.matmul %252, %253, %cst_88 {dimension_numbers = #tpu.dot_dimension_numbers<[1], [0], [0], [1], [0, 0, 1, 1], [], []>} : vector<64x256xbf16>, vector<256x128xbf16>, vector<64x128xf32> -> vector<64x128xf32>
    %255 = vector.broadcast %7 : vector<1x128xf32> to vector<64x128xf32>
    %256 = arith.addf %254, %255 : vector<64x128xf32>
    %257 = arith.addf %256, %1 : vector<64x128xf32>
    %258 = vector.shape_cast %257 : vector<64x128xf32> to vector<4x16x128xf32>
    %c0_89 = arith.constant 0 : index
    %c0_90 = arith.constant 0 : index
    %c0_91 = arith.constant 0 : index
    %259 = vector.load %arg12[%c0_89, %c0_90, %c0_91] : memref<4x16x128xf32, #tpu.memory_space<vmem>>, vector<4x16x128xf32>
    tpu.vector_store %arg12[%c0_89, %c0_90, %c0_91], %258 {strides = array<i32>} : memref<4x16x128xf32, #tpu.memory_space<vmem>>, vector<4x16x128xf32>,
    return
  }
  func.func @transform_0(%arg0: i32) -> (i32, i32, i32) {
    %c0_i32 = arith.constant 0 : i32
    %c0_i32_0 = arith.constant 0 : i32
    %c0_i32_1 = arith.constant 0 : i32
    return %arg0, %c0_i32, %c0_i32_0 : i32, i32, i32
  }
  func.func @transform_1(%arg0: i32) -> (i32, i32) {
    %c0_i32 = arith.constant 0 : i32
    %c0_i32_0 = arith.constant 0 : i32
    %c0_i32_1 = arith.constant 0 : i32
    return %c0_i32, %c0_i32_0 : i32, i32
  }
  func.func @transform_2(%arg0: i32) -> (i32, i32) {
    %c0_i32 = arith.constant 0 : i32
    %c0_i32_0 = arith.constant 0 : i32
    %c0_i32_1 = arith.constant 0 : i32
    return %c0_i32, %c0_i32_0 : i32, i32
  }
  func.func @transform_3(%arg0: i32) -> (i32, i32, i32) {
    %c0_i32 = arith.constant 0 : i32
    %c0_i32_0 = arith.constant 0 : i32
    %c0_i32_1 = arith.constant 0 : i32
    %c0_i32_2 = arith.constant 0 : i32
    return %c0_i32, %c0_i32_0, %c0_i32_1 : i32, i32, i32
  }
  func.func @transform_4(%arg0: i32) -> (i32, i32) {
    %c0_i32 = arith.constant 0 : i32
    %c0_i32_0 = arith.constant 0 : i32
    %c0_i32_1 = arith.constant 0 : i32
    return %c0_i32, %c0_i32_0 : i32, i32
  }
  func.func @transform_5(%arg0: i32) -> (i32, i32) {
    %c0_i32 = arith.constant 0 : i32
    %c0_i32_0 = arith.constant 0 : i32
    %c0_i32_1 = arith.constant 0 : i32
    return %c0_i32, %c0_i32_0 : i32, i32
  }
  func.func @transform_6(%arg0: i32) -> (i32, i32) {
    %c0_i32 = arith.constant 0 : i32
    %c0_i32_0 = arith.constant 0 : i32
    %c0_i32_1 = arith.constant 0 : i32
    return %c0_i32, %c0_i32_0 : i32, i32
  }
  func.func @transform_7(%arg0: i32) -> (i32, i32) {
    %c0_i32 = arith.constant 0 : i32
    %c0_i32_0 = arith.constant 0 : i32
    %c0_i32_1 = arith.constant 0 : i32
    return %c0_i32, %c0_i32_0 : i32, i32
  }
  func.func @transform_8(%arg0: i32) -> (i32, i32) {
    %c0_i32 = arith.constant 0 : i32
    %c0_i32_0 = arith.constant 0 : i32
    %c0_i32_1 = arith.constant 0 : i32
    return %c0_i32, %c0_i32_0 : i32, i32
  }
  func.func @transform_9(%arg0: i32) -> (i32, i32) {
    %c0_i32 = arith.constant 0 : i32
    %c0_i32_0 = arith.constant 0 : i32
    %c0_i32_1 = arith.constant 0 : i32
    return %c0_i32, %c0_i32_0 : i32, i32
  }
  func.func @transform_10(%arg0: i32) -> (i32, i32) {
    %c0_i32 = arith.constant 0 : i32
    %c0_i32_0 = arith.constant 0 : i32
    %c0_i32_1 = arith.constant 0 : i32
    return %c0_i32, %c0_i32_0 : i32, i32
  }
  func.func @transform_11(%arg0: i32) -> (i32, i32, i32) {
    %c0_i32 = arith.constant 0 : i32
    %c0_i32_0 = arith.constant 0 : i32
    %c0_i32_1 = arith.constant 0 : i32
    return %arg0, %c0_i32, %c0_i32_0 : i32, i32, i32
  }
}

</mosaic_0001>

<llo_original>
// kernel: tpu_custom_call.1
$region0: #{tpu_custom_call.1}
  #allocation0 [shape = 'u32[]', space=smem, size = 0x4, offset = 0x4, fixed_abs, tag = 'smem constant byte address 0x4 - core index']
  #allocation1 [shape = 'u32[144,128]{1,0:T(1,128)}', space=vmem, size = 0x12000, scoped, tag = 'internal scratch']
  %s0 = inlined_call_operand.hbm [shape: f32[4,16,128], index: 0, kind: input, shape index: {}]
  %s1 = inlined_call_operand.hbm [shape: bf16[128,384], index: 1, kind: input, shape index: {}]
  %s2 = inlined_call_operand.vmem [shape: f32[1,384], index: 2, kind: input, shape index: {}]
  %s3 = inlined_call_operand.hbm [shape: bf16[8,16,128], index: 3, kind: input, shape index: {}]
  %s4 = inlined_call_operand.vmem [shape: f32[1,128], index: 4, kind: input, shape index: {}]
  %s5 = inlined_call_operand.hbm [shape: bf16[128,512], index: 5, kind: input, shape index: {}]
  %s6 = inlined_call_operand.vmem [shape: f32[1,512], index: 6, kind: input, shape index: {}]
  %s7 = inlined_call_operand.hbm [shape: bf16[512,256], index: 7, kind: input, shape index: {}]
  %s8 = inlined_call_operand.vmem [shape: f32[1,256], index: 8, kind: input, shape index: {}]
  %s9 = inlined_call_operand.hbm [shape: bf16[256,128], index: 9, kind: input, shape index: {}]
  %s10 = inlined_call_operand.vmem [shape: f32[1,128], index: 10, kind: input, shape index: {}]
  %s11 = inlined_call_operand.hbm [shape: f32[4,16,128], index: 11, kind: output, shape index: {}]
  %s12 = sld [smem:[#allocation0]]
  $region78: #{tpu_custom_call.1} parent=0
    _
  %s14 = ssub.s32 1, %s12
  %s15 = scalar_select 0, %s14, %s12
  $region1: #{tpu_custom_call.1} parent=0
    #allocation2 [shape = 'u8[32768]{0}', space=vmem, size = 0x8000, scoped, tag = 'input window, operand 0, single buffered']
    #allocation3 [shape = 's32[1]{0}', space=sflag, size = 0x4, scoped, tag = 'scoped memory for tpu_custom_call.1']
    #allocation4 [shape = 's32[1]{0}', space=sflag, size = 0x4, scoped, tag = 'scoped memory for tpu_custom_call.1']
    #allocation5 [shape = 'u8[98304]{0}', space=vmem, size = 0x18000, scoped, tag = 'input window, operand 1, single buffered']
    #allocation6 [shape = 's32[1]{0}', space=sflag, size = 0x4, scoped, tag = 'scoped memory for tpu_custom_call.1']
    #allocation7 [shape = 'u8[32768]{0}', space=vmem, size = 0x8000, scoped, tag = 'input window, operand 3, single buffered']
    #allocation8 [shape = 'u8[131072]{0}', space=vmem, size = 0x20000, scoped, tag = 'input window, operand 5, single buffered']
    #allocation9 [shape = 's32[1]{0}', space=sflag, size = 0x4, scoped, tag = 'scoped memory for tpu_custom_call.1']
    #allocation10 [shape = 'u8[262144]{0}', space=vmem, size = 0x40000, scoped, tag = 'input window, operand 7, single buffered']
    #allocation11 [shape = 'u8[65536]{0}', space=vmem, size = 0x10000, scoped, tag = 'input window, operand 9, single buffered']
    #allocation12 [shape = 's32[1]{0}', space=sflag, size = 0x4, scoped, tag = 'scoped memory for tpu_custom_call.1']
    #allocation13 [shape = 'u8[32768]{0}', space=vmem, size = 0x8000, scoped, tag = 'output window, operand 0, single buffered']
    %16 = vsyncpa [#allocation3], 0
    %17 = vsyncpa [#allocation6], 0
    %18 = vsyncpa [#allocation9], 0
    %19 = vsyncpa [#allocation12], 0
    %20 = vsyncpa [#allocation4], 0
    // Predicated region
    $region2: #{tpu_custom_call.1} parent=1 // pred_check
      _
    $region3: #{tpu_custom_call.1} parent=1 // pred_check_branch
      %22 = sbr.rel (0) target = $region5
    $region4: #{tpu_custom_call.1} parent=1 // pred_region
      %s24 = ssub.s32 1024, 1024
      %25 = vsyncadd [#allocation3], %s24
      %s26 = sshll.u32 [#allocation2], 4
      %s27 = int_to_ptr.vmem [resolvable:$true] %s26
      %32 = dma.hbm_to_vmem [thread:$0]  %s0, 1024, %s27, [#allocation3], 128, 128, 8
    $region5: #{tpu_custom_call.1} parent=1 // pred_fallthru
      _
    // Predicated region
    $region6: #{tpu_custom_call.1} parent=1 // pred_check
      _
    $region7: #{tpu_custom_call.1} parent=1 // pred_check_branch
      %34 = sbr.rel (0) target = $region9
    $region8: #{tpu_custom_call.1} parent=1 // pred_region
      %s36 = ssub.s32 3072, 3072
      %37 = vsyncadd [#allocation6], %s36
      %s38 = sshll.u32 [#allocation5], 4
      %s39 = int_to_ptr.vmem [resolvable:$true] %s38
      %44 = dma.hbm_to_vmem [thread:$0]  %s1, 3072, %s39, [#allocation6], 192, 192, 12
    $region9: #{tpu_custom_call.1} parent=1 // pred_fallthru
      _
    // Predicated region
    $region10: #{tpu_custom_call.1} parent=1 // pred_check
      _
    $region11: #{tpu_custom_call.1} parent=1 // pred_check_branch
      %46 = sbr.rel (0) target = $region13
    $region12: #{tpu_custom_call.1} parent=1 // pred_region
      _
    $region13: #{tpu_custom_call.1} parent=1 // pred_fallthru
      _
    // Predicated region
    $region14: #{tpu_custom_call.1} parent=1 // pred_check
      _
    $region15: #{tpu_custom_call.1} parent=1 // pred_check_branch
      %48 = sbr.rel (0) target = $region17
    $region16: #{tpu_custom_call.1} parent=1 // pred_region
      %s50 = ssub.s32 1024, 1024
      %51 = vsyncadd [#allocation6], %s50
      %s52 = sshll.u32 [#allocation7], 4
      %s53 = int_to_ptr.vmem [resolvable:$true] %s52
      %58 = dma.hbm_to_vmem [thread:$0]  %s3, 1024, %s53, [#allocation6], 64, 64, 4
    $region17: #{tpu_custom_call.1} parent=1 // pred_fallthru
      _
    // Predicated region
    $region18: #{tpu_custom_call.1} parent=1 // pred_check
      _
    $region19: #{tpu_custom_call.1} parent=1 // pred_check_branch
      %60 = sbr.rel (0) target = $region21
    $region20: #{tpu_custom_call.1} parent=1 // pred_region
      _
    $region21: #{tpu_custom_call.1} parent=1 // pred_fallthru
      _
    // Predicated region
    $region22: #{tpu_custom_call.1} parent=1 // pred_check
      _
    $region23: #{tpu_custom_call.1} parent=1 // pred_check_branch
      %62 = sbr.rel (0) target = $region25
    $region24: #{tpu_custom_call.1} parent=1 // pred_region
      %s64 = ssub.s32 4096, 4096
      %65 = vsyncadd [#allocation9], %s64
      %s66 = sshll.u32 [#allocation8], 4
      %s67 = int_to_ptr.vmem [resolvable:$true] %s66
      %72 = dma.hbm_to_vmem [thread:$0]  %s5, 4096, %s67, [#allocation9], 256, 256, 16
    $region25: #{tpu_custom_call.1} parent=1 // pred_fallthru
      _
    // Predicated region
    $region26: #{tpu_custom_call.1} parent=1 // pred_check
      _
    $region27: #{tpu_custom_call.1} parent=1 // pred_check_branch
      %74 = sbr.rel (0) target = $region29
    $region28: #{tpu_custom_call.1} parent=1 // pred_region
      _
    $region29: #{tpu_custom_call.1} parent=1 // pred_fallthru
      _
    // Predicated region
    $region30: #{tpu_custom_call.1} parent=1 // pred_check
      _
    $region31: #{tpu_custom_call.1} parent=1 // pred_check_branch
      %76 = sbr.rel (0) target = $region33
    $region32: #{tpu_custom_call.1} parent=1 // pred_region
      %s78 = ssub.s32 8192, 8192
      %79 = vsyncadd [#allocation9], %s78
      %s80 = sshll.u32 [#allocation10], 4
      %s81 = int_to_ptr.vmem [resolvable:$true] %s80
      %86 = dma.hbm_to_vmem [thread:$0]  %s7, 8192, %s81, [#allocation9], 128, 128, 8
    $region33: #{tpu_custom_call.1} parent=1 // pred_fallthru
      _
    // Predicated region
    $region34: #{tpu_custom_call.1} parent=1 // pred_check
      _
    $region35: #{tpu_custom_call.1} parent=1 // pred_check_branch
      %88 = sbr.rel (0) target = $region37
    $region36: #{tpu_custom_call.1} parent=1 // pred_region
      _
    $region37: #{tpu_custom_call.1} parent=1 // pred_fallthru
      _
    // Predicated region
    $region38: #{tpu_custom_call.1} parent=1 // pred_check
      _
    $region39: #{tpu_custom_call.1} parent=1 // pred_check_branch
      %90 = sbr.rel (0) target = $region41
    $region40: #{tpu_custom_call.1} parent=1 // pred_region
      %s92 = ssub.s32 2048, 2048
      %93 = vsyncadd [#allocation12], %s92
      %s94 = sshll.u32 [#allocation11], 4
      %s95 = int_to_ptr.vmem [resolvable:$true] %s94
      %100 = dma.hbm_to_vmem [thread:$0]  %s9, 2048, %s95, [#allocation12], 64, 64, 4
    $region41: #{tpu_custom_call.1} parent=1 // pred_fallthru
      _
    // Predicated region
    $region42: #{tpu_custom_call.1} parent=1 // pred_check
      _
    $region43: #{tpu_custom_call.1} parent=1 // pred_check_branch
      %102 = sbr.rel (0) target = $region45
    $region44: #{tpu_custom_call.1} parent=1 // pred_region
      _
    $region45: #{tpu_custom_call.1} parent=1 // pred_fallthru
      _
    // Predicated region
    $region46: #{tpu_custom_call.1} parent=1 // pred_check
      _
    $region47: #{tpu_custom_call.1} parent=1 // pred_check_branch
      %104 = sbr.rel (0) target = $region49
    $region48: #{tpu_custom_call.1} parent=1 // pred_region
      %105 = dma.done [#allocation3], 1024
    $region49: #{tpu_custom_call.1} parent=1 // pred_fallthru
      _
    // Predicated region
    $region50: #{tpu_custom_call.1} parent=1 // pred_check
      _
    $region51: #{tpu_custom_call.1} parent=1 // pred_check_branch
      %107 = sbr.rel (0) target = $region53
    $region52: #{tpu_custom_call.1} parent=1 // pred_region
      %108 = dma.done [#allocation6], 3072
    $region53: #{tpu_custom_call.1} parent=1 // pred_fallthru
      _
    // Predicated region
    $region54: #{tpu_custom_call.1} parent=1 // pred_check
      _
    $region55: #{tpu_custom_call.1} parent=1 // pred_check_branch
      %110 = sbr.rel (0) target = $region57
    $region56: #{tpu_custom_call.1} parent=1 // pred_region
      %111 = dma.done [#allocation6], 1024
    $region57: #{tpu_custom_call.1} parent=1 // pred_fallthru
      _
    // Predicated region
    $region58: #{tpu_custom_call.1} parent=1 // pred_check
      _
    $region59: #{tpu_custom_call.1} parent=1 // pred_check_branch
      %113 = sbr.rel (0) target = $region61
    $region60: #{tpu_custom_call.1} parent=1 // pred_region
      %114 = dma.done [#allocation9], 4096
    $region61: #{tpu_custom_call.1} parent=1 // pred_fallthru
      _
    // Predicated region
    $region62: #{tpu_custom_call.1} parent=1 // pred_check
      _
    $region63: #{tpu_custom_call.1} parent=1 // pred_check_branch
      %116 = sbr.rel (0) target = $region65
    $region64: #{tpu_custom_call.1} parent=1 // pred_region
      %117 = dma.done [#allocation9], 8192
    $region65: #{tpu_custom_call.1} parent=1 // pred_fallthru
      _
    // Predicated region
    $region66: #{tpu_custom_call.1} parent=1 // pred_check
      _
    $region67: #{tpu_custom_call.1} parent=1 // pred_check_branch
      %119 = sbr.rel (0) target = $region69
    $region68: #{tpu_custom_call.1} parent=1 // pred_region
      %120 = dma.done [#allocation12], 2048
    $region69: #{tpu_custom_call.1} parent=1 // pred_fallthru
      _
    %v122 = vld [vmem:[#allocation2] sm:$0xff]
    %v123 = vld [vmem:[#allocation2 + $0x8] sm:$0xff]
    %v124 = vld [vmem:[#allocation2 + $0x10] sm:$0xff]
    %v125 = vld [vmem:[#allocation2 + $0x18] sm:$0xff]
    %v126 = vld [vmem:[#allocation2 + $0x20] sm:$0xff]
    %v127 = vld [vmem:[#allocation2 + $0x28] sm:$0xff]
    %v128 = vld [vmem:[#allocation2 + $0x30] sm:$0xff]
    %v129 = vld [vmem:[#allocation2 + $0x38] sm:$0xff]
    %v130 = vpack.c.bf16 %v123, %v122
    %v131 = vpack.c.bf16 %v125, %v124
    %v132 = vpack.c.bf16 %v127, %v126
    %v133 = vpack.c.bf16 %v129, %v128
    %v134 = vld [vmem:[%s2] sm:$0x7]
    %v135 = vld [vmem:[%s4] sm:$0x1]
    %v136 = vld [vmem:[%s6] sm:$0xf]
    %v137 = vld [vmem:[%s8] sm:$0x3]
    %v138 = vld [vmem:[%s10] sm:$0x1]
    %v139 = vld [vmem:[#allocation5] sm:$0xff]
    %v140 = vld [vmem:[#allocation5 + $0x8] sm:$0xf]
    %v141 = vld [vmem:[#allocation5 + $0xc] sm:$0xff]
    %v142 = vld [vmem:[#allocation5 + $0x14] sm:$0xf]
    %v143 = vld [vmem:[#allocation5 + $0x18] sm:$0xff]
    %v144 = vld [vmem:[#allocation5 + $0x20] sm:$0xf]
    %v145 = vld [vmem:[#allocation5 + $0x24] sm:$0xff]
    %v146 = vld [vmem:[#allocation5 + $0x2c] sm:$0xf]
    %v147 = vld [vmem:[#allocation5 + $0x30] sm:$0xff]
    %v148 = vld [vmem:[#allocation5 + $0x38] sm:$0xf]
    %v149 = vld [vmem:[#allocation5 + $0x3c] sm:$0xff]
    %v150 = vld [vmem:[#allocation5 + $0x44] sm:$0xf]
    %v151 = vld [vmem:[#allocation5 + $0x48] sm:$0xff]
    %v152 = vld [vmem:[#allocation5 + $0x50] sm:$0xf]
    %v153 = vld [vmem:[#allocation5 + $0x54] sm:$0xff]
    %v154 = vld [vmem:[#allocation5 + $0x5c] sm:$0xf]
    %v155 = vld [vmem:[#allocation5 + $0x60] sm:$0xff]
    %v156 = vld [vmem:[#allocation5 + $0x68] sm:$0xf]
    %v157 = vld [vmem:[#allocation5 + $0x6c] sm:$0xff]
    %v158 = vld [vmem:[#allocation5 + $0x74] sm:$0xf]
    %v159 = vld [vmem:[#allocation5 + $0x78] sm:$0xff]
    %v160 = vld [vmem:[#allocation5 + $0x80] sm:$0xf]
    %v161 = vld [vmem:[#allocation5 + $0x84] sm:$0xff]
    %v162 = vld [vmem:[#allocation5 + $0x8c] sm:$0xf]
    %v163 = vld [vmem:[#allocation5 + $0x90] sm:$0xff]
    %v164 = vld [vmem:[#allocation5 + $0x98] sm:$0xf]
    %v165 = vld [vmem:[#allocation5 + $0x9c] sm:$0xff]
    %v166 = vld [vmem:[#allocation5 + $0xa4] sm:$0xf]
    %v167 = vld [vmem:[#allocation5 + $0xa8] sm:$0xff]
    %v168 = vld [vmem:[#allocation5 + $0xb0] sm:$0xf]
    %v169 = vld [vmem:[#allocation5 + $0xb4] sm:$0xff]
    %v170 = vld [vmem:[#allocation5 + $0xbc] sm:$0xf]
    %v172 = vlaneseq
    %v173 = vshrl.u32 %v172, 7
    %v174 = vsub.s32 0, %v173
    %v175 = vrot.slane %v134, %v174
    %v176 = vlaneseq
    %v177 = vshrl.u32 %v176, 7
    %v178 = vsub.s32 1, %v177
    %v179 = vrot.slane %v134, %v178
    %v180 = vlaneseq
    %v181 = vshrl.u32 %v180, 7
    %v182 = vsub.s32 2, %v181
    %v183 = vrot.slane %v134, %v182
    %v219 = vunpack.c.l.b16 %v139
    %v220 = vunpack.c.h.b16 %v139
    %v221 = vunpack.c.l.b16 %v140
    %v222 = vunpack.c.l.b16 %v141
    %v223 = vunpack.c.h.b16 %v141
    %v224 = vunpack.c.l.b16 %v142
    %v225 = vunpack.c.l.b16 %v143
    %v226 = vunpack.c.h.b16 %v143
    %v227 = vunpack.c.l.b16 %v144
    %v228 = vunpack.c.l.b16 %v145
    %v229 = vunpack.c.h.b16 %v145
    %v230 = vunpack.c.l.b16 %v146
    %v231 = vunpack.c.l.b16 %v147
    %v232 = vunpack.c.h.b16 %v147
    %v233 = vunpack.c.l.b16 %v148
    %v234 = vunpack.c.l.b16 %v149
    %v235 = vunpack.c.h.b16 %v149
    %v236 = vunpack.c.l.b16 %v150
    %v237 = vunpack.c.l.b16 %v151
    %v238 = vunpack.c.h.b16 %v151
    %v239 = vunpack.c.l.b16 %v152
    %v240 = vunpack.c.l.b16 %v153
    %v241 = vunpack.c.h.b16 %v153
    %v242 = vunpack.c.l.b16 %v154
    %v243 = vunpack.c.l.b16 %v155
    %v244 = vunpack.c.h.b16 %v155
    %v245 = vunpack.c.l.b16 %v156
    %v246 = vunpack.c.l.b16 %v157
    %v247 = vunpack.c.h.b16 %v157
    %v248 = vunpack.c.l.b16 %v158
    %v249 = vunpack.c.l.b16 %v159
    %v250 = vunpack.c.h.b16 %v159
    %v251 = vunpack.c.l.b16 %v160
    %v252 = vunpack.c.l.b16 %v161
    %v253 = vunpack.c.h.b16 %v161
    %v254 = vunpack.c.l.b16 %v162
    %v255 = vunpack.c.l.b16 %v163
    %v256 = vunpack.c.h.b16 %v163
    %v257 = vunpack.c.l.b16 %v164
    %v258 = vunpack.c.l.b16 %v165
    %v259 = vunpack.c.h.b16 %v165
    %v260 = vunpack.c.l.b16 %v166
    %v261 = vunpack.c.l.b16 %v167
    %v262 = vunpack.c.h.b16 %v167
    %v263 = vunpack.c.l.b16 %v168
    %v264 = vunpack.c.l.b16 %v169
    %v265 = vunpack.c.h.b16 %v169
    %v266 = vunpack.c.l.b16 %v170
    %v267 = vpack.c.b16 %v222, %v219
    %v268 = vpack.c.b16 %v223, %v220
    %v269 = vpack.c.b16 %v224, %v221
    %v270 = vpack.c.b16 %v228, %v225
    %v271 = vpack.c.b16 %v229, %v226
    %v272 = vpack.c.b16 %v230, %v227
    %v273 = vpack.c.b16 %v234, %v231
    %v274 = vpack.c.b16 %v235, %v232
    %v275 = vpack.c.b16 %v236, %v233
    %v276 = vpack.c.b16 %v240, %v237
    %v277 = vpack.c.b16 %v241, %v238
    %v278 = vpack.c.b16 %v242, %v239
    %v279 = vpack.c.b16 %v246, %v243
    %v280 = vpack.c.b16 %v247, %v244
    %v281 = vpack.c.b16 %v248, %v245
    %v282 = vpack.c.b16 %v252, %v249
    %v283 = vpack.c.b16 %v253, %v250
    %v284 = vpack.c.b16 %v254, %v251
    %v285 = vpack.c.b16 %v258, %v255
    %v286 = vpack.c.b16 %v259, %v256
    %v287 = vpack.c.b16 %v260, %v257
    %v288 = vpack.c.b16 %v264, %v261
    %v289 = vpack.c.b16 %v265, %v262
    %v290 = vpack.c.b16 %v266, %v263
    %315 = vmatprep.subr.bf16.mxu0 %v268
    %316 = vmatpush1.bf16.msra.mxu0 %v267
    %317 = vmatprep.subr.bf16.mxu0 %v271
    %318 = vmatpush1.bf16.msra.mxu0 %v270
    %319 = vmatprep.subr.bf16.mxu0 %v274
    %320 = vmatpush1.bf16.msra.mxu0 %v273
    %321 = vmatprep.subr.bf16.mxu0 %v277
    %322 = vmatpush1.bf16.msra.mxu0 %v276
    %323 = vmatprep.subr.bf16.mxu0 %v280
    %324 = vmatpush1.bf16.msra.mxu0 %v279
    %325 = vmatprep.subr.bf16.mxu0 %v283
    %326 = vmatpush1.bf16.msra.mxu0 %v282
    %327 = vmatprep.subr.bf16.mxu0 %v286
    %328 = vmatpush1.bf16.msra.mxu0 %v285
    %329 = vmatprep.subr.bf16.mxu0 %v289
    %330 = vmatpush1.bf16.msra.mxu0 %v288
    %331 = vmatprep.subr.bf16.mxu0 0
    %332 = vmatpush1.bf16.msra.mxu0 0
    %333 = vmatprep.subr.bf16.mxu0 0
    %334 = vmatpush1.bf16.msra.mxu0 0
    %335 = vmatprep.subr.bf16.mxu0 0
    %336 = vmatpush1.bf16.msra.mxu0 0
    %337 = vmatprep.subr.bf16.mxu0 0
    %338 = vmatpush1.bf16.msra.mxu0 0
    %339 = vmatprep.subr.bf16.mxu0 0
    %340 = vmatpush1.bf16.msra.mxu0 0
    %341 = vmatprep.subr.bf16.mxu0 0
    %342 = vmatpush1.bf16.msra.mxu0 0
    %343 = vmatprep.subr.bf16.mxu0 0
    %344 = vmatpush1.bf16.msra.mxu0 0
    %345 = vmatprep.subr.bf16.mxu0 0
    %346 = vmatpush1.bf16.msra.mxu0 0
    %347 = vmatprep.mubr.bf16.mxu0 0
    %348 = vmatmul.mubr.bf16.gmra.mrb[0].mxu0 %v130
    %v349 = vpop.f32.mrb[0].mxu0
    %v350 = vadd.f32 %v175, %v349
    %v351 = vpop.f32.mrb[0].mxu0
    %v352 = vadd.f32 %v179, %v351
    %v353 = vpop.f32.mrb[0].mxu0
    %v354 = vadd.f32 %v175, %v353
    %v355 = vpop.f32.mrb[0].mxu0
    %v356 = vadd.f32 %v179, %v355
    %357 = vmatprep.mubr.bf16.mxu0 0
    %358 = vmatmul.mubr.bf16.gmra.mrb[0].mxu0 %v131
    %v359 = vpop.f32.mrb[0].mxu0
    %v360 = vadd.f32 %v175, %v359
    %v361 = vpop.f32.mrb[0].mxu0
    %v362 = vadd.f32 %v179, %v361
    %v363 = vpop.f32.mrb[0].mxu0
    %v364 = vadd.f32 %v175, %v363
    %v365 = vpop.f32.mrb[0].mxu0
    %v366 = vadd.f32 %v179, %v365
    %367 = vmatprep.mubr.bf16.mxu0 0
    %368 = vmatmul.mubr.bf16.gmra.mrb[0].mxu0 %v132
    %v369 = vpop.f32.mrb[0].mxu0
    %v370 = vadd.f32 %v175, %v369
    %v371 = vpop.f32.mrb[0].mxu0
    %v372 = vadd.f32 %v179, %v371
    %v373 = vpop.f32.mrb[0].mxu0
    %v374 = vadd.f32 %v175, %v373
    %v375 = vpop.f32.mrb[0].mxu0
    %v376 = vadd.f32 %v179, %v375
    %377 = vmatprep.mubr.bf16.mxu0 0
    %378 = vmatmul.mubr.bf16.gmra.mrb[0].mxu0 %v133
    %v379 = vpop.f32.mrb[0].mxu0
    %v380 = vadd.f32 %v175, %v379
    %v381 = vpop.f32.mrb[0].mxu0
    %v382 = vadd.f32 %v179, %v381
    %v383 = vpop.f32.mrb[0].mxu0
    %v384 = vadd.f32 %v175, %v383
    %v385 = vpop.f32.mrb[0].mxu0
    %v386 = vadd.f32 %v179, %v385
    %387 = vdwg.mxu0
    %388 = vmatprep.subr.bf16.mxu0 0
    %389 = vmatpush1.bf16.msra.mxu0 %v269
    %390 = vmatprep.subr.bf16.mxu0 0
    %391 = vmatpush1.bf16.msra.mxu0 %v272
    %392 = vmatprep.subr.bf16.mxu0 0
    %393 = vmatpush1.bf16.msra.mxu0 %v275
    %394 = vmatprep.subr.bf16.mxu0 0
    %395 = vmatpush1.bf16.msra.mxu0 %v278
    %396 = vmatprep.subr.bf16.mxu0 0
    %397 = vmatpush1.bf16.msra.mxu0 %v281
    %398 = vmatprep.subr.bf16.mxu0 0
    %399 = vmatpush1.bf16.msra.mxu0 %v284
    %400 = vmatprep.subr.bf16.mxu0 0
    %401 = vmatpush1.bf16.msra.mxu0 %v287
    %402 = vmatprep.subr.bf16.mxu0 0
    %403 = vmatpush1.bf16.msra.mxu0 %v290
    %404 = vmatprep.subr.bf16.mxu0 0
    %405 = vmatpush1.bf16.msra.mxu0 0
    %406 = vmatprep.subr.bf16.mxu0 0
    %407 = vmatpush1.bf16.msra.mxu0 0
    %408 = vmatprep.subr.bf16.mxu0 0
    %409 = vmatpush1.bf16.msra.mxu0 0
    %410 = vmatprep.subr.bf16.mxu0 0
    %411 = vmatpush1.bf16.msra.mxu0 0
    %412 = vmatprep.subr.bf16.mxu0 0
    %413 = vmatpush1.bf16.msra.mxu0 0
    %414 = vmatprep.subr.bf16.mxu0 0
    %415 = vmatpush1.bf16.msra.mxu0 0
    %416 = vmatprep.subr.bf16.mxu0 0
    %417 = vmatpush1.bf16.msra.mxu0 0
    %418 = vmatprep.subr.bf16.mxu0 0
    %419 = vmatpush1.bf16.msra.mxu0 0
    %420 = vmatprep.mubr.bf16.mxu0 0
    %421 = vmatmul.mubr.bf16.gmra.mrb[0].mxu0 %v130
    %v422 = vpop.f32.mrb[0].mxu0
    %v423 = vadd.f32 %v183, %v422
    %v424 = vpop.f32.mrb[0].mxu0
    %v425 = vpop.f32.mrb[0].mxu0
    %v426 = vadd.f32 %v183, %v425
    %v427 = vpop.f32.mrb[0].mxu0
    %428 = vmatprep.mubr.bf16.mxu0 0
    %429 = vmatmul.mubr.bf16.gmra.mrb[0].mxu0 %v131
    %v430 = vpop.f32.mrb[0].mxu0
    %v431 = vadd.f32 %v183, %v430
    %v432 = vpop.f32.mrb[0].mxu0
    %v433 = vpop.f32.mrb[0].mxu0
    %v434 = vadd.f32 %v183, %v433
    %v435 = vpop.f32.mrb[0].mxu0
    %436 = vmatprep.mubr.bf16.mxu0 0
    %437 = vmatmul.mubr.bf16.gmra.mrb[0].mxu0 %v132
    %v438 = vpop.f32.mrb[0].mxu0
    %v439 = vadd.f32 %v183, %v438
    %v440 = vpop.f32.mrb[0].mxu0
    %v441 = vpop.f32.mrb[0].mxu0
    %v442 = vadd.f32 %v183, %v441
    %v443 = vpop.f32.mrb[0].mxu0
    %444 = vmatprep.mubr.bf16.mxu0 0
    %445 = vmatmul.mubr.bf16.gmra.mrb[0].mxu0 %v133
    %v446 = vpop.f32.mrb[0].mxu0
    %v447 = vadd.f32 %v183, %v446
    %v448 = vpop.f32.mrb[0].mxu0
    %v449 = vpop.f32.mrb[0].mxu0
    %v450 = vadd.f32 %v183, %v449
    %v451 = vpop.f32.mrb[0].mxu0
    %452 = vdwg.mxu0
    %v453 = vpack.c.bf16 %v354, %v350
    %v454 = vpack.c.bf16 %v356, %v352
    %v455 = vpack.c.bf16 %v426, %v423
    %v456 = vpack.c.bf16 %v364, %v360
    %v457 = vpack.c.bf16 %v366, %v362
    %v458 = vpack.c.bf16 %v434, %v431
    %v459 = vpack.c.bf16 %v374, %v370
    %v460 = vpack.c.bf16 %v376, %v372
    %v461 = vpack.c.bf16 %v442, %v439
    %v462 = vpack.c.bf16 %v384, %v380
    %v463 = vpack.c.bf16 %v386, %v382
    %v464 = vpack.c.bf16 %v450, %v447
    %vm465 = vcmask 130048
    %v467 = vsel %vm465, %v453, 0
    %v470 = vsel %vm465, %v454, 0
    %472 = vmatprep.subr.bf16.mxu0 0
    %473 = vmatpush1.bf16.xpose.msra.mxu0 %v470
    %474 = vmatprep.subr.bf16.mxu0 0
    %475 = vmatpush1.bf16.xpose.msra.mxu0 0
    %476 = vmatprep.subr.bf16.mxu0 0
    %477 = vmatpush1.bf16.xpose.msra.mxu0 0
    %478 = vmatprep.subr.bf16.mxu0 0
    %479 = vmatpush1.bf16.xpose.msra.mxu0 0
    %480 = vmatprep.subr.bf16.mxu0 0
    %481 = vmatpush1.bf16.xpose.msra.mxu0 0
    %482 = vmatprep.subr.bf16.mxu0 0
    %483 = vmatpush1.bf16.xpose.msra.mxu0 0
    %484 = vmatprep.subr.bf16.mxu0 0
    %485 = vmatpush1.bf16.xpose.msra.mxu0 0
    %486 = vmatprep.subr.bf16.mxu0 0
    %487 = vmatpush1.bf16.xpose.msra.mxu0 0
    %488 = vmatprep.subr.bf16.mxu0 0
    %489 = vmatpush1.bf16.xpose.msra.mxu0 0
    %490 = vmatprep.subr.bf16.mxu0 0
    %491 = vmatpush1.bf16.xpose.msra.mxu0 0
    %492 = vmatprep.subr.bf16.mxu0 0
    %493 = vmatpush1.bf16.xpose.msra.mxu0 0
    %494 = vmatprep.subr.bf16.mxu0 0
    %495 = vmatpush1.bf16.xpose.msra.mxu0 0
    %496 = vmatprep.subr.bf16.mxu0 0
    %497 = vmatpush1.bf16.xpose.msra.mxu0 0
    %498 = vmatprep.subr.bf16.mxu0 0
    %499 = vmatpush1.bf16.xpose.msra.mxu0 0
    %500 = vmatprep.subr.bf16.mxu0 0
    %501 = vmatpush1.bf16.xpose.msra.mxu0 0
    %502 = vmatprep.subr.bf16.mxu0 0
    %503 = vmatpush1.bf16.xpose.msra.mxu0 0
    %504 = vmatprep.mubr.bf16.mxu0 0
    %505 = vmatmul.mubr.bf16.gmra.mrb[0].mxu0 %v467
    %v506 = vpop.f32.mrb[0].mxu0
    %v507 = vadd.f32 0.0, %v506
    %v508 = vpop.f32.mrb[0].mxu0
    %v509 = vpop.f32.mrb[0].mxu0
    %v510 = vadd.f32 0.0, %v509
    %v511 = vpop.f32.mrb[0].mxu0
    %512 = vdwg.mxu0
    %v514 = vsel %vm465, %v456, 0
    %v517 = vsel %vm465, %v457, 0
    %519 = vmatprep.subr.bf16.mxu0 0
    %520 = vmatpush1.bf16.xpose.msra.mxu0 %v517
    %521 = vmatprep.subr.bf16.mxu0 0
    %522 = vmatpush1.bf16.xpose.msra.mxu0 0
    %523 = vmatprep.subr.bf16.mxu0 0
    %524 = vmatpush1.bf16.xpose.msra.mxu0 0
    %525 = vmatprep.subr.bf16.mxu0 0
    %526 = vmatpush1.bf16.xpose.msra.mxu0 0
    %527 = vmatprep.subr.bf16.mxu0 0
    %528 = vmatpush1.bf16.xpose.msra.mxu0 0
    %529 = vmatprep.subr.bf16.mxu0 0
    %530 = vmatpush1.bf16.xpose.msra.mxu0 0
    %531 = vmatprep.subr.bf16.mxu0 0
    %532 = vmatpush1.bf16.xpose.msra.mxu0 0
    %533 = vmatprep.subr.bf16.mxu0 0
    %534 = vmatpush1.bf16.xpose.msra.mxu0 0
    %535 = vmatprep.subr.bf16.mxu0 0
    %536 = vmatpush1.bf16.xpose.msra.mxu0 0
    %537 = vmatprep.subr.bf16.mxu0 0
    %538 = vmatpush1.bf16.xpose.msra.mxu0 0
    %539 = vmatprep.subr.bf16.mxu0 0
    %540 = vmatpush1.bf16.xpose.msra.mxu0 0
    %541 = vmatprep.subr.bf16.mxu0 0
    %542 = vmatpush1.bf16.xpose.msra.mxu0 0
    %543 = vmatprep.subr.bf16.mxu0 0
    %544 = vmatpush1.bf16.xpose.msra.mxu0 0
    %545 = vmatprep.subr.bf16.mxu0 0
    %546 = vmatpush1.bf16.xpose.msra.mxu0 0
    %547 = vmatprep.subr.bf16.mxu0 0
    %548 = vmatpush1.bf16.xpose.msra.mxu0 0
    %549 = vmatprep.subr.bf16.mxu0 0
    %550 = vmatpush1.bf16.xpose.msra.mxu0 0
    %551 = vmatprep.mubr.bf16.mxu0 0
    %552 = vmatmul.mubr.bf16.gmra.mrb[0].mxu0 %v514
    %v553 = vpop.f32.mrb[0].mxu0
    %v554 = vadd.f32 0.0, %v553
    %v555 = vpop.f32.mrb[0].mxu0
    %v556 = vpop.f32.mrb[0].mxu0
    %v557 = vadd.f32 0.0, %v556
    %v558 = vpop.f32.mrb[0].mxu0
    %559 = vdwg.mxu0
    %v561 = vsel %vm465, %v459, 0
    %v564 = vsel %vm465, %v460, 0
    %566 = vmatprep.subr.bf16.mxu0 0
    %567 = vmatpush1.bf16.xpose.msra.mxu0 %v564
    %568 = vmatprep.subr.bf16.mxu0 0
    %569 = vmatpush1.bf16.xpose.msra.mxu0 0
    %570 = vmatprep.subr.bf16.mxu0 0
    %571 = vmatpush1.bf16.xpose.msra.mxu0 0
    %572 = vmatprep.subr.bf16.mxu0 0
    %573 = vmatpush1.bf16.xpose.msra.mxu0 0
    %574 = vmatprep.subr.bf16.mxu0 0
    %575 = vmatpush1.bf16.xpose.msra.mxu0 0
    %576 = vmatprep.subr.bf16.mxu0 0
    %577 = vmatpush1.bf16.xpose.msra.mxu0 0
    %578 = vmatprep.subr.bf16.mxu0 0
    %579 = vmatpush1.bf16.xpose.msra.mxu0 0
    %580 = vmatprep.subr.bf16.mxu0 0
    %581 = vmatpush1.bf16.xpose.msra.mxu0 0
    %582 = vmatprep.subr.bf16.mxu0 0
    %583 = vmatpush1.bf16.xpose.msra.mxu0 0
    %584 = vmatprep.subr.bf16.mxu0 0
    %585 = vmatpush1.bf16.xpose.msra.mxu0 0
    %586 = vmatprep.subr.bf16.mxu0 0
    %587 = vmatpush1.bf16.xpose.msra.mxu0 0
    %588 = vmatprep.subr.bf16.mxu0 0
    %589 = vmatpush1.bf16.xpose.msra.mxu0 0
    %590 = vmatprep.subr.bf16.mxu0 0
    %591 = vmatpush1.bf16.xpose.msra.mxu0 0
    %592 = vmatprep.subr.bf16.mxu0 0
    %593 = vmatpush1.bf16.xpose.msra.mxu0 0
    %594 = vmatprep.subr.bf16.mxu0 0
    %595 = vmatpush1.bf16.xpose.msra.mxu0 0
    %596 = vmatprep.subr.bf16.mxu0 0
    %597 = vmatpush1.bf16.xpose.msra.mxu0 0
    %598 = vmatprep.mubr.bf16.mxu0 0
    %599 = vmatmul.mubr.bf16.gmra.mrb[0].mxu0 %v561
    %v600 = vpop.f32.mrb[0].mxu0
    %v601 = vadd.f32 0.0, %v600
    %v602 = vpop.f32.mrb[0].mxu0
    %v603 = vpop.f32.mrb[0].mxu0
    %v604 = vadd.f32 0.0, %v603
    %v605 = vpop.f32.mrb[0].mxu0
    %606 = vdwg.mxu0
    %v608 = vsel %vm465, %v462, 0
    %v611 = vsel %vm465, %v463, 0
    %613 = vmatprep.subr.bf16.mxu0 0
    %614 = vmatpush1.bf16.xpose.msra.mxu0 %v611
    %615 = vmatprep.subr.bf16.mxu0 0
    %616 = vmatpush1.bf16.xpose.msra.mxu0 0
    %617 = vmatprep.subr.bf16.mxu0 0
    %618 = vmatpush1.bf16.xpose.msra.mxu0 0
    %619 = vmatprep.subr.bf16.mxu0 0
    %620 = vmatpush1.bf16.xpose.msra.mxu0 0
    %621 = vmatprep.subr.bf16.mxu0 0
    %622 = vmatpush1.bf16.xpose.msra.mxu0 0
    %623 = vmatprep.subr.bf16.mxu0 0
    %624 = vmatpush1.bf16.xpose.msra.mxu0 0
    %625 = vmatprep.subr.bf16.mxu0 0
    %626 = vmatpush1.bf16.xpose.msra.mxu0 0
    %627 = vmatprep.subr.bf16.mxu0 0
    %628 = vmatpush1.bf16.xpose.msra.mxu0 0
    %629 = vmatprep.subr.bf16.mxu0 0
    %630 = vmatpush1.bf16.xpose.msra.mxu0 0
    %631 = vmatprep.subr.bf16.mxu0 0
    %632 = vmatpush1.bf16.xpose.msra.mxu0 0
    %633 = vmatprep.subr.bf16.mxu0 0
    %634 = vmatpush1.bf16.xpose.msra.mxu0 0
    %635 = vmatprep.subr.bf16.mxu0 0
    %636 = vmatpush1.bf16.xpose.msra.mxu0 0
    %637 = vmatprep.subr.bf16.mxu0 0
    %638 = vmatpush1.bf16.xpose.msra.mxu0 0
    %639 = vmatprep.subr.bf16.mxu0 0
    %640 = vmatpush1.bf16.xpose.msra.mxu0 0
    %641 = vmatprep.subr.bf16.mxu0 0
    %642 = vmatpush1.bf16.xpose.msra.mxu0 0
    %643 = vmatprep.subr.bf16.mxu0 0
    %644 = vmatpush1.bf16.xpose.msra.mxu0 0
    %645 = vmatprep.mubr.bf16.mxu0 0
    %646 = vmatmul.mubr.bf16.gmra.mrb[0].mxu0 %v608
    %v647 = vpop.f32.mrb[0].mxu0
    %v648 = vadd.f32 0.0, %v647
    %v649 = vpop.f32.mrb[0].mxu0
    %v650 = vpop.f32.mrb[0].mxu0
    %v651 = vadd.f32 0.0, %v650
    %v652 = vpop.f32.mrb[0].mxu0
    %653 = vdwg.mxu0
    %v654 = vsel %vm465, %v507, -inf
    %655 = vmax.xlane.f32.xlu0 %v654
    %v656 = vpop.xlane.xlu0 %655
    %v657 = vsel %vm465, %v510, -inf
    %658 = vmax.xlane.f32.xlu0 %v657
    %v659 = vpop.xlane.xlu0 %658
    %v660 = vsel %vm465, %v554, -inf
    %661 = vmax.xlane.f32.xlu0 %v660
    %v662 = vpop.xlane.xlu0 %661
    %v663 = vsel %vm465, %v557, -inf
    %664 = vmax.xlane.f32.xlu0 %v663
    %v665 = vpop.xlane.xlu0 %664
    %v666 = vsel %vm465, %v601, -inf
    %667 = vmax.xlane.f32.xlu0 %v666
    %v668 = vpop.xlane.xlu0 %667
    %v669 = vsel %vm465, %v604, -inf
    %670 = vmax.xlane.f32.xlu0 %v669
    %v671 = vpop.xlane.xlu0 %670
    %v672 = vsel %vm465, %v648, -inf
    %673 = vmax.xlane.f32.xlu0 %v672
    %v674 = vpop.xlane.xlu0 %673
    %v675 = vsel %vm465, %v651, -inf
    %676 = vmax.xlane.f32.xlu0 %v675
    %v677 = vpop.xlane.xlu0 %676
    %v678 = vsub.f32 %v507, %v656
    %v679 = vsub.f32 %v510, %v659
    %v680 = vsub.f32 %v554, %v662
    %v681 = vsub.f32 %v557, %v665
    %v682 = vsub.f32 %v601, %v668
    %v683 = vsub.f32 %v604, %v671
    %v684 = vsub.f32 %v648, %v674
    %v685 = vsub.f32 %v651, %v677
    %v686 = vmul.f32 %v678, 1.442695
    %v687 = vpow.pop %v686
    %v688 = vmul.f32 %v679, 1.442695
    %v689 = vpow.pop %v688
    %v690 = vmul.f32 %v680, 1.442695
    %v691 = vpow.pop %v690
    %v692 = vmul.f32 %v681, 1.442695
    %v693 = vpow.pop %v692
    %v694 = vmul.f32 %v682, 1.442695
    %v695 = vpow.pop %v694
    %v696 = vmul.f32 %v683, 1.442695
    %v697 = vpow.pop %v696
    %v698 = vmul.f32 %v684, 1.442695
    %v699 = vpow.pop %v698
    %v700 = vmul.f32 %v685, 1.442695
    %v701 = vpow.pop %v700
    %v702 = vsel %vm465, %v687, 0.0
    %703 = vadd.xlane.f32.xlu0 %v702
    %v704 = vpop.xlane.xlu0 %703
    %v705 = vsel %vm465, %v689, 0.0
    %706 = vadd.xlane.f32.xlu0 %v705
    %v707 = vpop.xlane.xlu0 %706
    %v708 = vsel %vm465, %v691, 0.0
    %709 = vadd.xlane.f32.xlu0 %v708
    %v710 = vpop.xlane.xlu0 %709
    %v711 = vsel %vm465, %v693, 0.0
    %712 = vadd.xlane.f32.xlu0 %v711
    %v713 = vpop.xlane.xlu0 %712
    %v714 = vsel %vm465, %v695, 0.0
    %715 = vadd.xlane.f32.xlu0 %v714
    %v716 = vpop.xlane.xlu0 %715
    %v717 = vsel %vm465, %v697, 0.0
    %718 = vadd.xlane.f32.xlu0 %v717
    %v719 = vpop.xlane.xlu0 %718
    %v720 = vsel %vm465, %v699, 0.0
    %721 = vadd.xlane.f32.xlu0 %v720
    %v722 = vpop.xlane.xlu0 %721
    %v723 = vsel %vm465, %v701, 0.0
    %724 = vadd.xlane.f32.xlu0 %v723
    %v725 = vpop.xlane.xlu0 %724
    %v726 = vrcp.pop %v704
    %v727 = vrcp.pop %v707
    %v728 = vrcp.pop %v710
    %v729 = vrcp.pop %v713
    %v730 = vrcp.pop %v716
    %v731 = vrcp.pop %v719
    %v732 = vrcp.pop %v722
    %v733 = vrcp.pop %v725
    %v734 = vmul.f32 %v687, %v726
    %v735 = vmul.f32 %v689, %v727
    %v736 = vmul.f32 %v691, %v728
    %v737 = vmul.f32 %v693, %v729
    %v738 = vmul.f32 %v695, %v730
    %v739 = vmul.f32 %v697, %v731
    %v740 = vmul.f32 %v699, %v732
    %v741 = vmul.f32 %v701, %v733
    %v742 = vpack.c.bf16 %v735, %v734
    %v743 = vpack.c.bf16 %v737, %v736
    %v744 = vpack.c.bf16 %v739, %v738
    %v745 = vpack.c.bf16 %v741, %v740
    %v747 = vsel %vm465, %v742, 0
    %749 = vmatprep.subr.bf16.mxu0 0
    %750 = vmatpush1.bf16.msra.mxu0 %v455
    %751 = vmatprep.subr.bf16.mxu0 0
    %752 = vmatpush1.bf16.msra.mxu0 0
    %753 = vmatprep.subr.bf16.mxu0 0
    %754 = vmatpush1.bf16.msra.mxu0 0
    %755 = vmatprep.subr.bf16.mxu0 0
    %756 = vmatpush1.bf16.msra.mxu0 0
    %757 = vmatprep.subr.bf16.mxu0 0
    %758 = vmatpush1.bf16.msra.mxu0 0
    %759 = vmatprep.subr.bf16.mxu0 0
    %760 = vmatpush1.bf16.msra.mxu0 0
    %761 = vmatprep.subr.bf16.mxu0 0
    %762 = vmatpush1.bf16.msra.mxu0 0
    %763 = vmatprep.subr.bf16.mxu0 0
    %764 = vmatpush1.bf16.msra.mxu0 0
    %765 = vmatprep.subr.bf16.mxu0 0
    %766 = vmatpush1.bf16.msra.mxu0 0
    %767 = vmatprep.subr.bf16.mxu0 0
    %768 = vmatpush1.bf16.msra.mxu0 0
    %769 = vmatprep.subr.bf16.mxu0 0
    %770 = vmatpush1.bf16.msra.mxu0 0
    %771 = vmatprep.subr.bf16.mxu0 0
    %772 = vmatpush1.bf16.msra.mxu0 0
    %773 = vmatprep.subr.bf16.mxu0 0
    %774 = vmatpush1.bf16.msra.mxu0 0
    %775 = vmatprep.subr.bf16.mxu0 0
    %776 = vmatpush1.bf16.msra.mxu0 0
    %777 = vmatprep.subr.bf16.mxu0 0
    %778 = vmatpush1.bf16.msra.mxu0 0
    %779 = vmatprep.subr.bf16.mxu0 0
    %780 = vmatpush1.bf16.msra.mxu0 0
    %781 = vmatprep.mubr.bf16.mxu0 0
    %782 = vmatmul.mubr.bf16.gmra.mrb[0].mxu0 %v747
    %v783 = vpop.f32.mrb[0].mxu0
    %v784 = vadd.f32 0.0, %v783
    %v785 = vpop.f32.mrb[0].mxu0
    %v786 = vpop.f32.mrb[0].mxu0
    %v787 = vadd.f32 0.0, %v786
    %v788 = vpop.f32.mrb[0].mxu0
    %789 = vdwg.mxu0
    %v791 = vsel %vm465, %v743, 0
    %793 = vmatprep.subr.bf16.mxu0 0
    %794 = vmatpush1.bf16.msra.mxu0 %v458
    %795 = vmatprep.subr.bf16.mxu0 0
    %796 = vmatpush1.bf16.msra.mxu0 0
    %797 = vmatprep.subr.bf16.mxu0 0
    %798 = vmatpush1.bf16.msra.mxu0 0
    %799 = vmatprep.subr.bf16.mxu0 0
    %800 = vmatpush1.bf16.msra.mxu0 0
    %801 = vmatprep.subr.bf16.mxu0 0
    %802 = vmatpush1.bf16.msra.mxu0 0
    %803 = vmatprep.subr.bf16.mxu0 0
    %804 = vmatpush1.bf16.msra.mxu0 0
    %805 = vmatprep.subr.bf16.mxu0 0
    %806 = vmatpush1.bf16.msra.mxu0 0
    %807 = vmatprep.subr.bf16.mxu0 0
    %808 = vmatpush1.bf16.msra.mxu0 0
    %809 = vmatprep.subr.bf16.mxu0 0
    %810 = vmatpush1.bf16.msra.mxu0 0
    %811 = vmatprep.subr.bf16.mxu0 0
    %812 = vmatpush1.bf16.msra.mxu0 0
    %813 = vmatprep.subr.bf16.mxu0 0
    %814 = vmatpush1.bf16.msra.mxu0 0
    %815 = vmatprep.subr.bf16.mxu0 0
    %816 = vmatpush1.bf16.msra.mxu0 0
    %817 = vmatprep.subr.bf16.mxu0 0
    %818 = vmatpush1.bf16.msra.mxu0 0
    %819 = vmatprep.subr.bf16.mxu0 0
    %820 = vmatpush1.bf16.msra.mxu0 0
    %821 = vmatprep.subr.bf16.mxu0 0
    %822 = vmatpush1.bf16.msra.mxu0 0
    %823 = vmatprep.subr.bf16.mxu0 0
    %824 = vmatpush1.bf16.msra.mxu0 0
    %825 = vmatprep.mubr.bf16.mxu0 0
    %826 = vmatmul.mubr.bf16.gmra.mrb[0].mxu0 %v791
    %v827 = vpop.f32.mrb[0].mxu0
    %v828 = vadd.f32 0.0, %v827
    %v829 = vpop.f32.mrb[0].mxu0
    %v830 = vpop.f32.mrb[0].mxu0
    %v831 = vadd.f32 0.0, %v830
    %v832 = vpop.f32.mrb[0].mxu0
    %833 = vdwg.mxu0
    %v835 = vsel %vm465, %v744, 0
    %837 = vmatprep.subr.bf16.mxu0 0
    %838 = vmatpush1.bf16.msra.mxu0 %v461
    %839 = vmatprep.subr.bf16.mxu0 0
    %840 = vmatpush1.bf16.msra.mxu0 0
    %841 = vmatprep.subr.bf16.mxu0 0
    %842 = vmatpush1.bf16.msra.mxu0 0
    %843 = vmatprep.subr.bf16.mxu0 0
    %844 = vmatpush1.bf16.msra.mxu0 0
    %845 = vmatprep.subr.bf16.mxu0 0
    %846 = vmatpush1.bf16.msra.mxu0 0
    %847 = vmatprep.subr.bf16.mxu0 0
    %848 = vmatpush1.bf16.msra.mxu0 0
    %849 = vmatprep.subr.bf16.mxu0 0
    %850 = vmatpush1.bf16.msra.mxu0 0
    %851 = vmatprep.subr.bf16.mxu0 0
    %852 = vmatpush1.bf16.msra.mxu0 0
    %853 = vmatprep.subr.bf16.mxu0 0
    %854 = vmatpush1.bf16.msra.mxu0 0
    %855 = vmatprep.subr.bf16.mxu0 0
    %856 = vmatpush1.bf16.msra.mxu0 0
    %857 = vmatprep.subr.bf16.mxu0 0
    %858 = vmatpush1.bf16.msra.mxu0 0
    %859 = vmatprep.subr.bf16.mxu0 0
    %860 = vmatpush1.bf16.msra.mxu0 0
    %861 = vmatprep.subr.bf16.mxu0 0
    %862 = vmatpush1.bf16.msra.mxu0 0
    %863 = vmatprep.subr.bf16.mxu0 0
    %864 = vmatpush1.bf16.msra.mxu0 0
    %865 = vmatprep.subr.bf16.mxu0 0
    %866 = vmatpush1.bf16.msra.mxu0 0
    %867 = vmatprep.subr.bf16.mxu0 0
    %868 = vmatpush1.bf16.msra.mxu0 0
    %869 = vmatprep.mubr.bf16.mxu0 0
    %870 = vmatmul.mubr.bf16.gmra.mrb[0].mxu0 %v835
    %v871 = vpop.f32.mrb[0].mxu0
    %v872 = vadd.f32 0.0, %v871
    %v873 = vpop.f32.mrb[0].mxu0
    %v874 = vpop.f32.mrb[0].mxu0
    %v875 = vadd.f32 0.0, %v874
    %v876 = vpop.f32.mrb[0].mxu0
    %877 = vdwg.mxu0
    %v879 = vsel %vm465, %v745, 0
    %881 = vmatprep.subr.bf16.mxu0 0
    %882 = vmatpush1.bf16.msra.mxu0 %v464
    %883 = vmatprep.subr.bf16.mxu0 0
    %884 = vmatpush1.bf16.msra.mxu0 0
    %885 = vmatprep.subr.bf16.mxu0 0
    %886 = vmatpush1.bf16.msra.mxu0 0
    %887 = vmatprep.subr.bf16.mxu0 0
    %888 = vmatpush1.bf16.msra.mxu0 0
    %889 = vmatprep.subr.bf16.mxu0 0
    %890 = vmatpush1.bf16.msra.mxu0 0
    %891 = vmatprep.subr.bf16.mxu0 0
    %892 = vmatpush1.bf16.msra.mxu0 0
    %893 = vmatprep.subr.bf16.mxu0 0
    %894 = vmatpush1.bf16.msra.mxu0 0
    %895 = vmatprep.subr.bf16.mxu0 0
    %896 = vmatpush1.bf16.msra.mxu0 0
    %897 = vmatprep.subr.bf16.mxu0 0
    %898 = vmatpush1.bf16.msra.mxu0 0
    %899 = vmatprep.subr.bf16.mxu0 0
    %900 = vmatpush1.bf16.msra.mxu0 0
    %901 = vmatprep.subr.bf16.mxu0 0
    %902 = vmatpush1.bf16.msra.mxu0 0
    %903 = vmatprep.subr.bf16.mxu0 0
    %904 = vmatpush1.bf16.msra.mxu0 0
    %905 = vmatprep.subr.bf16.mxu0 0
    %906 = vmatpush1.bf16.msra.mxu0 0
    %907 = vmatprep.subr.bf16.mxu0 0
    %908 = vmatpush1.bf16.msra.mxu0 0
    %909 = vmatprep.subr.bf16.mxu0 0
    %910 = vmatpush1.bf16.msra.mxu0 0
    %911 = vmatprep.subr.bf16.mxu0 0
    %912 = vmatpush1.bf16.msra.mxu0 0
    %913 = vmatprep.mubr.bf16.mxu0 0
    %914 = vmatmul.mubr.bf16.gmra.mrb[0].mxu0 %v879
    %v915 = vpop.f32.mrb[0].mxu0
    %v916 = vadd.f32 0.0, %v915
    %v917 = vpop.f32.mrb[0].mxu0
    %v918 = vpop.f32.mrb[0].mxu0
    %v919 = vadd.f32 0.0, %v918
    %v920 = vpop.f32.mrb[0].mxu0
    %921 = vdwg.mxu0
    %v922 = vpack.c.bf16 %v787, %v784
    %v923 = vpack.c.bf16 %v831, %v828
    %v924 = vpack.c.bf16 %v875, %v872
    %v925 = vpack.c.bf16 %v919, %v916
    %v926 = vld [vmem:[#allocation7] sm:$0xf]
    %v927 = vld [vmem:[#allocation7 + $0x4] sm:$0xf]
    %929 = vrot.lane.b32.xlu0 %v453, 112
    %v930 = vpop.permute.xlu0 %929
    %932 = vrot.lane.b32.xlu0 %v454, 112
    %v933 = vpop.permute.xlu0 %932
    %v935 = vsel %vm465, %v930, 0
    %v938 = vsel %vm465, %v933, 0
    %940 = vmatprep.subr.bf16.mxu0 0
    %941 = vmatpush1.bf16.xpose.msra.mxu0 %v938
    %942 = vmatprep.subr.bf16.mxu0 0
    %943 = vmatpush1.bf16.xpose.msra.mxu0 0
    %944 = vmatprep.subr.bf16.mxu0 0
    %945 = vmatpush1.bf16.xpose.msra.mxu0 0
    %946 = vmatprep.subr.bf16.mxu0 0
    %947 = vmatpush1.bf16.xpose.msra.mxu0 0
    %948 = vmatprep.subr.bf16.mxu0 0
    %949 = vmatpush1.bf16.xpose.msra.mxu0 0
    %950 = vmatprep.subr.bf16.mxu0 0
    %951 = vmatpush1.bf16.xpose.msra.mxu0 0
    %952 = vmatprep.subr.bf16.mxu0 0
    %953 = vmatpush1.bf16.xpose.msra.mxu0 0
    %954 = vmatprep.subr.bf16.mxu0 0
    %955 = vmatpush1.bf16.xpose.msra.mxu0 0
    %956 = vmatprep.subr.bf16.mxu0 0
    %957 = vmatpush1.bf16.xpose.msra.mxu0 0
    %958 = vmatprep.subr.bf16.mxu0 0
    %959 = vmatpush1.bf16.xpose.msra.mxu0 0
    %960 = vmatprep.subr.bf16.mxu0 0
    %961 = vmatpush1.bf16.xpose.msra.mxu0 0
    %962 = vmatprep.subr.bf16.mxu0 0
    %963 = vmatpush1.bf16.xpose.msra.mxu0 0
    %964 = vmatprep.subr.bf16.mxu0 0
    %965 = vmatpush1.bf16.xpose.msra.mxu0 0
    %966 = vmatprep.subr.bf16.mxu0 0
    %967 = vmatpush1.bf16.xpose.msra.mxu0 0
    %968 = vmatprep.subr.bf16.mxu0 0
    %969 = vmatpush1.bf16.xpose.msra.mxu0 0
    %970 = vmatprep.subr.bf16.mxu0 0
    %971 = vmatpush1.bf16.xpose.msra.mxu0 0
    %972 = vmatprep.mubr.bf16.mxu0 0
    %973 = vmatmul.mubr.bf16.gmra.mrb[0].mxu0 %v935
    %v974 = vpop.f32.mrb[0].mxu0
    %v975 = vadd.f32 0.0, %v974
    %v976 = vpop.f32.mrb[0].mxu0
    %v977 = vpop.f32.mrb[0].mxu0
    %v978 = vadd.f32 0.0, %v977
    %v979 = vpop.f32.mrb[0].mxu0
    %980 = vdwg.mxu0
    %982 = vrot.lane.b32.xlu0 %v456, 112
    %v983 = vpop.permute.xlu0 %982
    %985 = vrot.lane.b32.xlu0 %v457, 112
    %v986 = vpop.permute.xlu0 %985
    %v988 = vsel %vm465, %v983, 0
    %v991 = vsel %vm465, %v986, 0
    %993 = vmatprep.subr.bf16.mxu0 0
    %994 = vmatpush1.bf16.xpose.msra.mxu0 %v991
    %995 = vmatprep.subr.bf16.mxu0 0
    %996 = vmatpush1.bf16.xpose.msra.mxu0 0
    %997 = vmatprep.subr.bf16.mxu0 0
    %998 = vmatpush1.bf16.xpose.msra.mxu0 0
    %999 = vmatprep.subr.bf16.mxu0 0
    %1000 = vmatpush1.bf16.xpose.msra.mxu0 0
    %1001 = vmatprep.subr.bf16.mxu0 0
    %1002 = vmatpush1.bf16.xpose.msra.mxu0 0
    %1003 = vmatprep.subr.bf16.mxu0 0
    %1004 = vmatpush1.bf16.xpose.msra.mxu0 0
    %1005 = vmatprep.subr.bf16.mxu0 0
    %1006 = vmatpush1.bf16.xpose.msra.mxu0 0
    %1007 = vmatprep.subr.bf16.mxu0 0
    %1008 = vmatpush1.bf16.xpose.msra.mxu0 0
    %1009 = vmatprep.subr.bf16.mxu0 0
    %1010 = vmatpush1.bf16.xpose.msra.mxu0 0
    %1011 = vmatprep.subr.bf16.mxu0 0
    %1012 = vmatpush1.bf16.xpose.msra.mxu0 0
    %1013 = vmatprep.subr.bf16.mxu0 0
    %1014 = vmatpush1.bf16.xpose.msra.mxu0 0
    %1015 = vmatprep.subr.bf16.mxu0 0
    %1016 = vmatpush1.bf16.xpose.msra.mxu0 0
    %1017 = vmatprep.subr.bf16.mxu0 0
    %1018 = vmatpush1.bf16.xpose.msra.mxu0 0
    %1019 = vmatprep.subr.bf16.mxu0 0
    %1020 = vmatpush1.bf16.xpose.msra.mxu0 0
    %1021 = vmatprep.subr.bf16.mxu0 0
    %1022 = vmatpush1.bf16.xpose.msra.mxu0 0
    %1023 = vmatprep.subr.bf16.mxu0 0
    %1024 = vmatpush1.bf16.xpose.msra.mxu0 0
    %1025 = vmatprep.mubr.bf16.mxu0 0
    %1026 = vmatmul.mubr.bf16.gmra.mrb[0].mxu0 %v988
    %v1027 = vpop.f32.mrb[0].mxu0
    %v1028 = vadd.f32 0.0, %v1027
    %v1029 = vpop.f32.mrb[0].mxu0
    %v1030 = vpop.f32.mrb[0].mxu0
    %v1031 = vadd.f32 0.0, %v1030
    %v1032 = vpop.f32.mrb[0].mxu0
    %1033 = vdwg.mxu0
    %1035 = vrot.lane.b32.xlu0 %v459, 112
    %v1036 = vpop.permute.xlu0 %1035
    %1038 = vrot.lane.b32.xlu0 %v460, 112
    %v1039 = vpop.permute.xlu0 %1038
    %v1041 = vsel %vm465, %v1036, 0
    %v1044 = vsel %vm465, %v1039, 0
    %1046 = vmatprep.subr.bf16.mxu0 0
    %1047 = vmatpush1.bf16.xpose.msra.mxu0 %v1044
    %1048 = vmatprep.subr.bf16.mxu0 0
    %1049 = vmatpush1.bf16.xpose.msra.mxu0 0
    %1050 = vmatprep.subr.bf16.mxu0 0
    %1051 = vmatpush1.bf16.xpose.msra.mxu0 0
    %1052 = vmatprep.subr.bf16.mxu0 0
    %1053 = vmatpush1.bf16.xpose.msra.mxu0 0
    %1054 = vmatprep.subr.bf16.mxu0 0
    %1055 = vmatpush1.bf16.xpose.msra.mxu0 0
    %1056 = vmatprep.subr.bf16.mxu0 0
    %1057 = vmatpush1.bf16.xpose.msra.mxu0 0
    %1058 = vmatprep.subr.bf16.mxu0 0
    %1059 = vmatpush1.bf16.xpose.msra.mxu0 0
    %1060 = vmatprep.subr.bf16.mxu0 0
    %1061 = vmatpush1.bf16.xpose.msra.mxu0 0
    %1062 = vmatprep.subr.bf16.mxu0 0
    %1063 = vmatpush1.bf16.xpose.msra.mxu0 0
    %1064 = vmatprep.subr.bf16.mxu0 0
    %1065 = vmatpush1.bf16.xpose.msra.mxu0 0
    %1066 = vmatprep.subr.bf16.mxu0 0
    %1067 = vmatpush1.bf16.xpose.msra.mxu0 0
    %1068 = vmatprep.subr.bf16.mxu0 0
    %1069 = vmatpush1.bf16.xpose.msra.mxu0 0
    %1070 = vmatprep.subr.bf16.mxu0 0
    %1071 = vmatpush1.bf16.xpose.msra.mxu0 0
    %1072 = vmatprep.subr.bf16.mxu0 0
    %1073 = vmatpush1.bf16.xpose.msra.mxu0 0
    %1074 = vmatprep.subr.bf16.mxu0 0
    %1075 = vmatpush1.bf16.xpose.msra.mxu0 0
    %1076 = vmatprep.subr.bf16.mxu0 0
    %1077 = vmatpush1.bf16.xpose.msra.mxu0 0
    %1078 = vmatprep.mubr.bf16.mxu0 0
    %1079 = vmatmul.mubr.bf16.gmra.mrb[0].mxu0 %v1041
    %v1080 = vpop.f32.mrb[0].mxu0
    %v1081 = vadd.f32 0.0, %v1080
    %v1082 = vpop.f32.mrb[0].mxu0
    %v1083 = vpop.f32.mrb[0].mxu0
    %v1084 = vadd.f32 0.0, %v1083
    %v1085 = vpop.f32.mrb[0].mxu0
    %1086 = vdwg.mxu0
    %1088 = vrot.lane.b32.xlu0 %v462, 112
    %v1089 = vpop.permute.xlu0 %1088
    %1091 = vrot.lane.b32.xlu0 %v463, 112
    %v1092 = vpop.permute.xlu0 %1091
    %v1094 = vsel %vm465, %v1089, 0
    %v1097 = vsel %vm465, %v1092, 0
    %1099 = vmatprep.subr.bf16.mxu0 0
    %1100 = vmatpush1.bf16.xpose.msra.mxu0 %v1097
    %1101 = vmatprep.subr.bf16.mxu0 0
    %1102 = vmatpush1.bf16.xpose.msra.mxu0 0
    %1103 = vmatprep.subr.bf16.mxu0 0
    %1104 = vmatpush1.bf16.xpose.msra.mxu0 0
    %1105 = vmatprep.subr.bf16.mxu0 0
    %1106 = vmatpush1.bf16.xpose.msra.mxu0 0
    %1107 = vmatprep.subr.bf16.mxu0 0
    %1108 = vmatpush1.bf16.xpose.msra.mxu0 0
    %1109 = vmatprep.subr.bf16.mxu0 0
    %1110 = vmatpush1.bf16.xpose.msra.mxu0 0
    %1111 = vmatprep.subr.bf16.mxu0 0
    %1112 = vmatpush1.bf16.xpose.msra.mxu0 0
    %1113 = vmatprep.subr.bf16.mxu0 0
    %1114 = vmatpush1.bf16.xpose.msra.mxu0 0
    %1115 = vmatprep.subr.bf16.mxu0 0
    %1116 = vmatpush1.bf16.xpose.msra.mxu0 0
    %1117 = vmatprep.subr.bf16.mxu0 0
    %1118 = vmatpush1.bf16.xpose.msra.mxu0 0
    %1119 = vmatprep.subr.bf16.mxu0 0
    %1120 = vmatpush1.bf16.xpose.msra.mxu0 0
    %1121 = vmatprep.subr.bf16.mxu0 0
    %1122 = vmatpush1.bf16.xpose.msra.mxu0 0
    %1123 = vmatprep.subr.bf16.mxu0 0
    %1124 = vmatpush1.bf16.xpose.msra.mxu0 0
    %1125 = vmatprep.subr.bf16.mxu0 0
    %1126 = vmatpush1.bf16.xpose.msra.mxu0 0
    %1127 = vmatprep.subr.bf16.mxu0 0
    %1128 = vmatpush1.bf16.xpose.msra.mxu0 0
    %1129 = vmatprep.subr.bf16.mxu0 0
    %1130 = vmatpush1.bf16.xpose.msra.mxu0 0
    %1131 = vmatprep.mubr.bf16.mxu0 0
    %1132 = vmatmul.mubr.bf16.gmra.mrb[0].mxu0 %v1094
    %v1133 = vpop.f32.mrb[0].mxu0
    %v1134 = vadd.f32 0.0, %v1133
    %v1135 = vpop.f32.mrb[0].mxu0
    %v1136 = vpop.f32.mrb[0].mxu0
    %v1137 = vadd.f32 0.0, %v1136
    %v1138 = vpop.f32.mrb[0].mxu0
    %1139 = vdwg.mxu0
    %v1140 = vsel %vm465, %v975, -inf
    %1141 = vmax.xlane.f32.xlu0 %v1140
    %v1142 = vpop.xlane.xlu0 %1141
    %v1143 = vsel %vm465, %v978, -inf
    %1144 = vmax.xlane.f32.xlu0 %v1143
    %v1145 = vpop.xlane.xlu0 %1144
    %v1146 = vsel %vm465, %v1028, -inf
    %1147 = vmax.xlane.f32.xlu0 %v1146
    %v1148 = vpop.xlane.xlu0 %1147
    %v1149 = vsel %vm465, %v1031, -inf
    %1150 = vmax.xlane.f32.xlu0 %v1149
    %v1151 = vpop.xlane.xlu0 %1150
    %v1152 = vsel %vm465, %v1081, -inf
    %1153 = vmax.xlane.f32.xlu0 %v1152
    %v1154 = vpop.xlane.xlu0 %1153
    %v1155 = vsel %vm465, %v1084, -inf
    %1156 = vmax.xlane.f32.xlu0 %v1155
    %v1157 = vpop.xlane.xlu0 %1156
    %v1158 = vsel %vm465, %v1134, -inf
    %1159 = vmax.xlane.f32.xlu0 %v1158
    %v1160 = vpop.xlane.xlu0 %1159
    %v1161 = vsel %vm465, %v1137, -inf
    %1162 = vmax.xlane.f32.xlu0 %v1161
    %v1163 = vpop.xlane.xlu0 %1162
    %v1164 = vsub.f32 %v975, %v1142
    %v1165 = vsub.f32 %v978, %v1145
    %v1166 = vsub.f32 %v1028, %v1148
    %v1167 = vsub.f32 %v1031, %v1151
    %v1168 = vsub.f32 %v1081, %v1154
    %v1169 = vsub.f32 %v1084, %v1157
    %v1170 = vsub.f32 %v1134, %v1160
    %v1171 = vsub.f32 %v1137, %v1163
    %v1172 = vmul.f32 %v1164, 1.442695
    %v1173 = vpow.pop %v1172
    %v1174 = vmul.f32 %v1165, 1.442695
    %v1175 = vpow.pop %v1174
    %v1176 = vmul.f32 %v1166, 1.442695
    %v1177 = vpow.pop %v1176
    %v1178 = vmul.f32 %v1167, 1.442695
    %v1179 = vpow.pop %v1178
    %v1180 = vmul.f32 %v1168, 1.442695
    %v1181 = vpow.pop %v1180
    %v1182 = vmul.f32 %v1169, 1.442695
    %v1183 = vpow.pop %v1182
    %v1184 = vmul.f32 %v1170, 1.442695
    %v1185 = vpow.pop %v1184
    %v1186 = vmul.f32 %v1171, 1.442695
    %v1187 = vpow.pop %v1186
    %v1188 = vsel %vm465, %v1173, 0.0
    %1189 = vadd.xlane.f32.xlu0 %v1188
    %v1190 = vpop.xlane.xlu0 %1189
    %v1191 = vsel %vm465, %v1175, 0.0
    %1192 = vadd.xlane.f32.xlu0 %v1191
    %v1193 = vpop.xlane.xlu0 %1192
    %v1194 = vsel %vm465, %v1177, 0.0
    %1195 = vadd.xlane.f32.xlu0 %v1194
    %v1196 = vpop.xlane.xlu0 %1195
    %v1197 = vsel %vm465, %v1179, 0.0
    %1198 = vadd.xlane.f32.xlu0 %v1197
    %v1199 = vpop.xlane.xlu0 %1198
    %v1200 = vsel %vm465, %v1181, 0.0
    %1201 = vadd.xlane.f32.xlu0 %v1200
    %v1202 = vpop.xlane.xlu0 %1201
    %v1203 = vsel %vm465, %v1183, 0.0
    %1204 = vadd.xlane.f32.xlu0 %v1203
    %v1205 = vpop.xlane.xlu0 %1204
    %v1206 = vsel %vm465, %v1185, 0.0
    %1207 = vadd.xlane.f32.xlu0 %v1206
    %v1208 = vpop.xlane.xlu0 %1207
    %v1209 = vsel %vm465, %v1187, 0.0
    %1210 = vadd.xlane.f32.xlu0 %v1209
    %v1211 = vpop.xlane.xlu0 %1210
    %v1212 = vrcp.pop %v1190
    %v1213 = vrcp.pop %v1193
    %v1214 = vrcp.pop %v1196
    %v1215 = vrcp.pop %v1199
    %v1216 = vrcp.pop %v1202
    %v1217 = vrcp.pop %v1205
    %v1218 = vrcp.pop %v1208
    %v1219 = vrcp.pop %v1211
    %v1220 = vmul.f32 %v1173, %v1212
    %v1221 = vmul.f32 %v1175, %v1213
    %v1222 = vmul.f32 %v1177, %v1214
    %v1223 = vmul.f32 %v1179, %v1215
    %v1224 = vmul.f32 %v1181, %v1216
    %v1225 = vmul.f32 %v1183, %v1217
    %v1226 = vmul.f32 %v1185, %v1218
    %v1227 = vmul.f32 %v1187, %v1219
    %v1228 = vpack.c.bf16 %v1221, %v1220
    %v1229 = vpack.c.bf16 %v1223, %v1222
    %v1230 = vpack.c.bf16 %v1225, %v1224
    %v1231 = vpack.c.bf16 %v1227, %v1226
    %1233 = vrot.lane.b32.xlu0 %v455, 112
    %v1234 = vpop.permute.xlu0 %1233
    %v1237 = vsel %vm465, %v1228, 0
    %1239 = vmatprep.subr.bf16.mxu0 0
    %1240 = vmatpush1.bf16.msra.mxu0 %v1234
    %1241 = vmatprep.subr.bf16.mxu0 0
    %1242 = vmatpush1.bf16.msra.mxu0 0
    %1243 = vmatprep.subr.bf16.mxu0 0
    %1244 = vmatpush1.bf16.msra.mxu0 0
    %1245 = vmatprep.subr.bf16.mxu0 0
    %1246 = vmatpush1.bf16.msra.mxu0 0
    %1247 = vmatprep.subr.bf16.mxu0 0
    %1248 = vmatpush1.bf16.msra.mxu0 0
    %1249 = vmatprep.subr.bf16.mxu0 0
    %1250 = vmatpush1.bf16.msra.mxu0 0
    %1251 = vmatprep.subr.bf16.mxu0 0
    %1252 = vmatpush1.bf16.msra.mxu0 0
    %1253 = vmatprep.subr.bf16.mxu0 0
    %1254 = vmatpush1.bf16.msra.mxu0 0
    %1255 = vmatprep.subr.bf16.mxu0 0
    %1256 = vmatpush1.bf16.msra.mxu0 0
    %1257 = vmatprep.subr.bf16.mxu0 0
    %1258 = vmatpush1.bf16.msra.mxu0 0
    %1259 = vmatprep.subr.bf16.mxu0 0
    %1260 = vmatpush1.bf16.msra.mxu0 0
    %1261 = vmatprep.subr.bf16.mxu0 0
    %1262 = vmatpush1.bf16.msra.mxu0 0
    %1263 = vmatprep.subr.bf16.mxu0 0
    %1264 = vmatpush1.bf16.msra.mxu0 0
    %1265 = vmatprep.subr.bf16.mxu0 0
    %1266 = vmatpush1.bf16.msra.mxu0 0
    %1267 = vmatprep.subr.bf16.mxu0 0
    %1268 = vmatpush1.bf16.msra.mxu0 0
    %1269 = vmatprep.subr.bf16.mxu0 0
    %1270 = vmatpush1.bf16.msra.mxu0 0
    %1271 = vmatprep.mubr.bf16.mxu0 0
    %1272 = vmatmul.mubr.bf16.gmra.mrb[0].mxu0 %v1237
    %v1273 = vpop.f32.mrb[0].mxu0
    %v1274 = vadd.f32 0.0, %v1273
    %v1275 = vpop.f32.mrb[0].mxu0
    %v1276 = vpop.f32.mrb[0].mxu0
    %v1277 = vadd.f32 0.0, %v1276
    %v1278 = vpop.f32.mrb[0].mxu0
    %1279 = vdwg.mxu0
    %1281 = vrot.lane.b32.xlu0 %v458, 112
    %v1282 = vpop.permute.xlu0 %1281
    %v1285 = vsel %vm465, %v1229, 0
    %1287 = vmatprep.subr.bf16.mxu0 0
    %1288 = vmatpush1.bf16.msra.mxu0 %v1282
    %1289 = vmatprep.subr.bf16.mxu0 0
    %1290 = vmatpush1.bf16.msra.mxu0 0
    %1291 = vmatprep.subr.bf16.mxu0 0
    %1292 = vmatpush1.bf16.msra.mxu0 0
    %1293 = vmatprep.subr.bf16.mxu0 0
    %1294 = vmatpush1.bf16.msra.mxu0 0
    %1295 = vmatprep.subr.bf16.mxu0 0
    %1296 = vmatpush1.bf16.msra.mxu0 0
    %1297 = vmatprep.subr.bf16.mxu0 0
    %1298 = vmatpush1.bf16.msra.mxu0 0
    %1299 = vmatprep.subr.bf16.mxu0 0
    %1300 = vmatpush1.bf16.msra.mxu0 0
    %1301 = vmatprep.subr.bf16.mxu0 0
    %1302 = vmatpush1.bf16.msra.mxu0 0
    %1303 = vmatprep.subr.bf16.mxu0 0
    %1304 = vmatpush1.bf16.msra.mxu0 0
    %1305 = vmatprep.subr.bf16.mxu0 0
    %1306 = vmatpush1.bf16.msra.mxu0 0
    %1307 = vmatprep.subr.bf16.mxu0 0
    %1308 = vmatpush1.bf16.msra.mxu0 0
    %1309 = vmatprep.subr.bf16.mxu0 0
    %1310 = vmatpush1.bf16.msra.mxu0 0
    %1311 = vmatprep.subr.bf16.mxu0 0
    %1312 = vmatpush1.bf16.msra.mxu0 0
    %1313 = vmatprep.subr.bf16.mxu0 0
    %1314 = vmatpush1.bf16.msra.mxu0 0
    %1315 = vmatprep.subr.bf16.mxu0 0
    %1316 = vmatpush1.bf16.msra.mxu0 0
    %1317 = vmatprep.subr.bf16.mxu0 0
    %1318 = vmatpush1.bf16.msra.mxu0 0
    %1319 = vmatprep.mubr.bf16.mxu0 0
    %1320 = vmatmul.mubr.bf16.gmra.mrb[0].mxu0 %v1285
    %v1321 = vpop.f32.mrb[0].mxu0
    %v1322 = vadd.f32 0.0, %v1321
    %v1323 = vpop.f32.mrb[0].mxu0
    %v1324 = vpop.f32.mrb[0].mxu0
    %v1325 = vadd.f32 0.0, %v1324
    %v1326 = vpop.f32.mrb[0].mxu0
    %1327 = vdwg.mxu0
    %1329 = vrot.lane.b32.xlu0 %v461, 112
    %v1330 = vpop.permute.xlu0 %1329
    %v1333 = vsel %vm465, %v1230, 0
    %1335 = vmatprep.subr.bf16.mxu0 0
    %1336 = vmatpush1.bf16.msra.mxu0 %v1330
    %1337 = vmatprep.subr.bf16.mxu0 0
    %1338 = vmatpush1.bf16.msra.mxu0 0
    %1339 = vmatprep.subr.bf16.mxu0 0
    %1340 = vmatpush1.bf16.msra.mxu0 0
    %1341 = vmatprep.subr.bf16.mxu0 0
    %1342 = vmatpush1.bf16.msra.mxu0 0
    %1343 = vmatprep.subr.bf16.mxu0 0
    %1344 = vmatpush1.bf16.msra.mxu0 0
    %1345 = vmatprep.subr.bf16.mxu0 0
    %1346 = vmatpush1.bf16.msra.mxu0 0
    %1347 = vmatprep.subr.bf16.mxu0 0
    %1348 = vmatpush1.bf16.msra.mxu0 0
    %1349 = vmatprep.subr.bf16.mxu0 0
    %1350 = vmatpush1.bf16.msra.mxu0 0
    %1351 = vmatprep.subr.bf16.mxu0 0
    %1352 = vmatpush1.bf16.msra.mxu0 0
    %1353 = vmatprep.subr.bf16.mxu0 0
    %1354 = vmatpush1.bf16.msra.mxu0 0
    %1355 = vmatprep.subr.bf16.mxu0 0
    %1356 = vmatpush1.bf16.msra.mxu0 0
    %1357 = vmatprep.subr.bf16.mxu0 0
    %1358 = vmatpush1.bf16.msra.mxu0 0
    %1359 = vmatprep.subr.bf16.mxu0 0
    %1360 = vmatpush1.bf16.msra.mxu0 0
    %1361 = vmatprep.subr.bf16.mxu0 0
    %1362 = vmatpush1.bf16.msra.mxu0 0
    %1363 = vmatprep.subr.bf16.mxu0 0
    %1364 = vmatpush1.bf16.msra.mxu0 0
    %1365 = vmatprep.subr.bf16.mxu0 0
    %1366 = vmatpush1.bf16.msra.mxu0 0
    %1367 = vmatprep.mubr.bf16.mxu0 0
    %1368 = vmatmul.mubr.bf16.gmra.mrb[0].mxu0 %v1333
    %v1369 = vpop.f32.mrb[0].mxu0
    %v1370 = vadd.f32 0.0, %v1369
    %v1371 = vpop.f32.mrb[0].mxu0
    %v1372 = vpop.f32.mrb[0].mxu0
    %v1373 = vadd.f32 0.0, %v1372
    %v1374 = vpop.f32.mrb[0].mxu0
    %1375 = vdwg.mxu0
    %1377 = vrot.lane.b32.xlu0 %v464, 112
    %v1378 = vpop.permute.xlu0 %1377
    %v1381 = vsel %vm465, %v1231, 0
    %1383 = vmatprep.subr.bf16.mxu0 0
    %1384 = vmatpush1.bf16.msra.mxu0 %v1378
    %1385 = vmatprep.subr.bf16.mxu0 0
    %1386 = vmatpush1.bf16.msra.mxu0 0
    %1387 = vmatprep.subr.bf16.mxu0 0
    %1388 = vmatpush1.bf16.msra.mxu0 0
    %1389 = vmatprep.subr.bf16.mxu0 0
    %1390 = vmatpush1.bf16.msra.mxu0 0
    %1391 = vmatprep.subr.bf16.mxu0 0
    %1392 = vmatpush1.bf16.msra.mxu0 0
    %1393 = vmatprep.subr.bf16.mxu0 0
    %1394 = vmatpush1.bf16.msra.mxu0 0
    %1395 = vmatprep.subr.bf16.mxu0 0
    %1396 = vmatpush1.bf16.msra.mxu0 0
    %1397 = vmatprep.subr.bf16.mxu0 0
    %1398 = vmatpush1.bf16.msra.mxu0 0
    %1399 = vmatprep.subr.bf16.mxu0 0
    %1400 = vmatpush1.bf16.msra.mxu0 0
    %1401 = vmatprep.subr.bf16.mxu0 0
    %1402 = vmatpush1.bf16.msra.mxu0 0
    %1403 = vmatprep.subr.bf16.mxu0 0
    %1404 = vmatpush1.bf16.msra.mxu0 0
    %1405 = vmatprep.subr.bf16.mxu0 0
    %1406 = vmatpush1.bf16.msra.mxu0 0
    %1407 = vmatprep.subr.bf16.mxu0 0
    %1408 = vmatpush1.bf16.msra.mxu0 0
    %1409 = vmatprep.subr.bf16.mxu0 0
    %1410 = vmatpush1.bf16.msra.mxu0 0
    %1411 = vmatprep.subr.bf16.mxu0 0
    %1412 = vmatpush1.bf16.msra.mxu0 0
    %1413 = vmatprep.subr.bf16.mxu0 0
    %1414 = vmatpush1.bf16.msra.mxu0 0
    %1415 = vmatprep.mubr.bf16.mxu0 0
    %1416 = vmatmul.mubr.bf16.gmra.mrb[0].mxu0 %v1381
    %v1417 = vpop.f32.mrb[0].mxu0
    %v1418 = vadd.f32 0.0, %v1417
    %v1419 = vpop.f32.mrb[0].mxu0
    %v1420 = vpop.f32.mrb[0].mxu0
    %v1421 = vadd.f32 0.0, %v1420
    %v1422 = vpop.f32.mrb[0].mxu0
    %1423 = vdwg.mxu0
    %v1424 = vpack.c.bf16 %v1277, %v1274
    %v1425 = vpack.c.bf16 %v1325, %v1322
    %v1426 = vpack.c.bf16 %v1373, %v1370
    %v1427 = vpack.c.bf16 %v1421, %v1418
    %s1428 = scalar_lea.vmem [#allocation7], 8
    %v1429 = vld [vmem:[%s1428] sm:$0xf]
    %v1430 = vld [vmem:[%s1428 + $0x4] sm:$0xf]
    %v1433 = vunpack.c.l.b16 %v1429
    %v1434 = vunpack.c.l.b16 %v1430
    %v1435 = vpack.c.b16 %v1434, %v1433
    %v1438 = vsel %vm465, %v1424, 0
    %v1441 = vsel %vm465, %v1425, 0
    %v1444 = vsel %vm465, %v1426, 0
    %v1447 = vsel %vm465, %v1427, 0
    %1449 = vmatprep.subr.bf16.mxu0 0
    %1450 = vmatpush1.bf16.msra.mxu0 %v1435
    %1451 = vmatprep.subr.bf16.mxu0 0
    %1452 = vmatpush1.bf16.msra.mxu0 0
    %1453 = vmatprep.subr.bf16.mxu0 0
    %1454 = vmatpush1.bf16.msra.mxu0 0
    %1455 = vmatprep.subr.bf16.mxu0 0
    %1456 = vmatpush1.bf16.msra.mxu0 0
    %1457 = vmatprep.subr.bf16.mxu0 0
    %1458 = vmatpush1.bf16.msra.mxu0 0
    %1459 = vmatprep.subr.bf16.mxu0 0
    %1460 = vmatpush1.bf16.msra.mxu0 0
    %1461 = vmatprep.subr.bf16.mxu0 0
    %1462 = vmatpush1.bf16.msra.mxu0 0
    %1463 = vmatprep.subr.bf16.mxu0 0
    %1464 = vmatpush1.bf16.msra.mxu0 0
    %1465 = vmatprep.subr.bf16.mxu0 0
    %1466 = vmatpush1.bf16.msra.mxu0 0
    %1467 = vmatprep.subr.bf16.mxu0 0
    %1468 = vmatpush1.bf16.msra.mxu0 0
    %1469 = vmatprep.subr.bf16.mxu0 0
    %1470 = vmatpush1.bf16.msra.mxu0 0
    %1471 = vmatprep.subr.bf16.mxu0 0
    %1472 = vmatpush1.bf16.msra.mxu0 0
    %1473 = vmatprep.subr.bf16.mxu0 0
    %1474 = vmatpush1.bf16.msra.mxu0 0
    %1475 = vmatprep.subr.bf16.mxu0 0
    %1476 = vmatpush1.bf16.msra.mxu0 0
    %1477 = vmatprep.subr.bf16.mxu0 0
    %1478 = vmatpush1.bf16.msra.mxu0 0
    %1479 = vmatprep.subr.bf16.mxu0 0
    %1480 = vmatpush1.bf16.msra.mxu0 0
    %1481 = vmatprep.mubr.bf16.mxu0 0
    %1482 = vmatmul.mubr.bf16.gmra.mrb[0].mxu0 %v1438
    %v1483 = vpop.f32.mrb[0].mxu0
    %v1484 = vadd.f32 0.0, %v1483
    %v1485 = vpop.f32.mrb[0].mxu0
    %v1486 = vpop.f32.mrb[0].mxu0
    %v1487 = vadd.f32 0.0, %v1486
    %v1488 = vpop.f32.mrb[0].mxu0
    %1489 = vmatprep.mubr.bf16.mxu0 0
    %1490 = vmatmul.mubr.bf16.gmra.mrb[0].mxu0 %v1441
    %v1491 = vpop.f32.mrb[0].mxu0
    %v1492 = vadd.f32 0.0, %v1491
    %v1493 = vpop.f32.mrb[0].mxu0
    %v1494 = vpop.f32.mrb[0].mxu0
    %v1495 = vadd.f32 0.0, %v1494
    %v1496 = vpop.f32.mrb[0].mxu0
    %1497 = vmatprep.mubr.bf16.mxu0 0
    %1498 = vmatmul.mubr.bf16.gmra.mrb[0].mxu0 %v1444
    %v1499 = vpop.f32.mrb[0].mxu0
    %v1500 = vadd.f32 0.0, %v1499
    %v1501 = vpop.f32.mrb[0].mxu0
    %v1502 = vpop.f32.mrb[0].mxu0
    %v1503 = vadd.f32 0.0, %v1502
    %v1504 = vpop.f32.mrb[0].mxu0
    %1505 = vmatprep.mubr.bf16.mxu0 0
    %1506 = vmatmul.mubr.bf16.gmra.mrb[0].mxu0 %v1447
    %v1507 = vpop.f32.mrb[0].mxu0
    %v1508 = vadd.f32 0.0, %v1507
    %v1509 = vpop.f32.mrb[0].mxu0
    %v1510 = vpop.f32.mrb[0].mxu0
    %v1511 = vadd.f32 0.0, %v1510
    %v1512 = vpop.f32.mrb[0].mxu0
    %1513 = vdwg.mxu0
    %v1516 = vunpack.c.l.b16 %v926
    %v1517 = vunpack.c.l.b16 %v927
    %v1518 = vpack.c.b16 %v1517, %v1516
    %v1521 = vsel %vm465, %v922, 0
    %v1524 = vsel %vm465, %v923, 0
    %v1527 = vsel %vm465, %v924, 0
    %v1530 = vsel %vm465, %v925, 0
    %1532 = vmatprep.subr.bf16.mxu0 0
    %1533 = vmatpush1.bf16.msra.mxu0 %v1518
    %1534 = vmatprep.subr.bf16.mxu0 0
    %1535 = vmatpush1.bf16.msra.mxu0 0
    %1536 = vmatprep.subr.bf16.mxu0 0
    %1537 = vmatpush1.bf16.msra.mxu0 0
    %1538 = vmatprep.subr.bf16.mxu0 0
    %1539 = vmatpush1.bf16.msra.mxu0 0
    %1540 = vmatprep.subr.bf16.mxu0 0
    %1541 = vmatpush1.bf16.msra.mxu0 0
    %1542 = vmatprep.subr.bf16.mxu0 0
    %1543 = vmatpush1.bf16.msra.mxu0 0
    %1544 = vmatprep.subr.bf16.mxu0 0
    %1545 = vmatpush1.bf16.msra.mxu0 0
    %1546 = vmatprep.subr.bf16.mxu0 0
    %1547 = vmatpush1.bf16.msra.mxu0 0
    %1548 = vmatprep.subr.bf16.mxu0 0
    %1549 = vmatpush1.bf16.msra.mxu0 0
    %1550 = vmatprep.subr.bf16.mxu0 0
    %1551 = vmatpush1.bf16.msra.mxu0 0
    %1552 = vmatprep.subr.bf16.mxu0 0
    %1553 = vmatpush1.bf16.msra.mxu0 0
    %1554 = vmatprep.subr.bf16.mxu0 0
    %1555 = vmatpush1.bf16.msra.mxu0 0
    %1556 = vmatprep.subr.bf16.mxu0 0
    %1557 = vmatpush1.bf16.msra.mxu0 0
    %1558 = vmatprep.subr.bf16.mxu0 0
    %1559 = vmatpush1.bf16.msra.mxu0 0
    %1560 = vmatprep.subr.bf16.mxu0 0
    %1561 = vmatpush1.bf16.msra.mxu0 0
    %1562 = vmatprep.subr.bf16.mxu0 0
    %1563 = vmatpush1.bf16.msra.mxu0 0
    %1564 = vmatprep.mubr.bf16.mxu0 0
    %1565 = vmatmul.mubr.bf16.gmra.mrb[0].mxu0 %v1521
    %v1566 = vpop.f32.mrb[0].mxu0
    %v1567 = vadd.f32 %v1484, %v1566
    %v1568 = vpop.f32.mrb[0].mxu0
    %v1569 = vpop.f32.mrb[0].mxu0
    %v1570 = vadd.f32 %v1487, %v1569
    %v1571 = vpop.f32.mrb[0].mxu0
    %1572 = vmatprep.mubr.bf16.mxu0 0
    %1573 = vmatmul.mubr.bf16.gmra.mrb[0].mxu0 %v1524
    %v1574 = vpop.f32.mrb[0].mxu0
    %v1575 = vadd.f32 %v1492, %v1574
    %v1576 = vpop.f32.mrb[0].mxu0
    %v1577 = vpop.f32.mrb[0].mxu0
    %v1578 = vadd.f32 %v1495, %v1577
    %v1579 = vpop.f32.mrb[0].mxu0
    %1580 = vmatprep.mubr.bf16.mxu0 0
    %1581 = vmatmul.mubr.bf16.gmra.mrb[0].mxu0 %v1527
    %v1582 = vpop.f32.mrb[0].mxu0
    %v1583 = vadd.f32 %v1500, %v1582
    %v1584 = vpop.f32.mrb[0].mxu0
    %v1585 = vpop.f32.mrb[0].mxu0
    %v1586 = vadd.f32 %v1503, %v1585
    %v1587 = vpop.f32.mrb[0].mxu0
    %1588 = vmatprep.mubr.bf16.mxu0 0
    %1589 = vmatmul.mubr.bf16.gmra.mrb[0].mxu0 %v1530
    %v1590 = vpop.f32.mrb[0].mxu0
    %v1591 = vadd.f32 %v1508, %v1590
    %v1592 = vpop.f32.mrb[0].mxu0
    %v1593 = vpop.f32.mrb[0].mxu0
    %v1594 = vadd.f32 %v1511, %v1593
    %v1595 = vpop.f32.mrb[0].mxu0
    %1596 = vdwg.mxu0
    %1597 = vrot.lane.b32.xlu0 %v453, 96
    %v1598 = vpop.permute.xlu0 %1597
    %1599 = vrot.lane.b32.xlu0 %v454, 96
    %v1600 = vpop.permute.xlu0 %1599
    %v1602 = vsel %vm465, %v1598, 0
    %v1605 = vsel %vm465, %v1600, 0
    %1607 = vmatprep.subr.bf16.mxu0 0
    %1608 = vmatpush1.bf16.xpose.msra.mxu0 %v1605
    %1609 = vmatprep.subr.bf16.mxu0 0
    %1610 = vmatpush1.bf16.xpose.msra.mxu0 0
    %1611 = vmatprep.subr.bf16.mxu0 0
    %1612 = vmatpush1.bf16.xpose.msra.mxu0 0
    %1613 = vmatprep.subr.bf16.mxu0 0
    %1614 = vmatpush1.bf16.xpose.msra.mxu0 0
    %1615 = vmatprep.subr.bf16.mxu0 0
    %1616 = vmatpush1.bf16.xpose.msra.mxu0 0
    %1617 = vmatprep.subr.bf16.mxu0 0
    %1618 = vmatpush1.bf16.xpose.msra.mxu0 0
    %1619 = vmatprep.subr.bf16.mxu0 0
    %1620 = vmatpush1.bf16.xpose.msra.mxu0 0
    %1621 = vmatprep.subr.bf16.mxu0 0
    %1622 = vmatpush1.bf16.xpose.msra.mxu0 0
    %1623 = vmatprep.subr.bf16.mxu0 0
    %1624 = vmatpush1.bf16.xpose.msra.mxu0 0
    %1625 = vmatprep.subr.bf16.mxu0 0
    %1626 = vmatpush1.bf16.xpose.msra.mxu0 0
    %1627 = vmatprep.subr.bf16.mxu0 0
    %1628 = vmatpush1.bf16.xpose.msra.mxu0 0
    %1629 = vmatprep.subr.bf16.mxu0 0
    %1630 = vmatpush1.bf16.xpose.msra.mxu0 0
    %1631 = vmatprep.subr.bf16.mxu0 0
    %1632 = vmatpush1.bf16.xpose.msra.mxu0 0
    %1633 = vmatprep.subr.bf16.mxu0 0
    %1634 = vmatpush1.bf16.xpose.msra.mxu0 0
    %1635 = vmatprep.subr.bf16.mxu0 0
    %1636 = vmatpush1.bf16.xpose.msra.mxu0 0
    %1637 = vmatprep.subr.bf16.mxu0 0
    %1638 = vmatpush1.bf16.xpose.msra.mxu0 0
    %1639 = vmatprep.mubr.bf16.mxu0 0
    %1640 = vmatmul.mubr.bf16.gmra.mrb[0].mxu0 %v1602
    %v1641 = vpop.f32.mrb[0].mxu0
    %v1642 = vadd.f32 0.0, %v1641
    %v1643 = vpop.f32.mrb[0].mxu0
    %v1644 = vpop.f32.mrb[0].mxu0
    %v1645 = vadd.f32 0.0, %v1644
    %v1646 = vpop.f32.mrb[0].mxu0
    %1647 = vdwg.mxu0
    %1648 = vrot.lane.b32.xlu0 %v456, 96
    %v1649 = vpop.permute.xlu0 %1648
    %1650 = vrot.lane.b32.xlu0 %v457, 96
    %v1651 = vpop.permute.xlu0 %1650
    %v1653 = vsel %vm465, %v1649, 0
    %v1656 = vsel %vm465, %v1651, 0
    %1658 = vmatprep.subr.bf16.mxu0 0
    %1659 = vmatpush1.bf16.xpose.msra.mxu0 %v1656
    %1660 = vmatprep.subr.bf16.mxu0 0
    %1661 = vmatpush1.bf16.xpose.msra.mxu0 0
    %1662 = vmatprep.subr.bf16.mxu0 0
    %1663 = vmatpush1.bf16.xpose.msra.mxu0 0
    %1664 = vmatprep.subr.bf16.mxu0 0
    %1665 = vmatpush1.bf16.xpose.msra.mxu0 0
    %1666 = vmatprep.subr.bf16.mxu0 0
    %1667 = vmatpush1.bf16.xpose.msra.mxu0 0
    %1668 = vmatprep.subr.bf16.mxu0 0
    %1669 = vmatpush1.bf16.xpose.msra.mxu0 0
    %1670 = vmatprep.subr.bf16.mxu0 0
    %1671 = vmatpush1.bf16.xpose.msra.mxu0 0
    %1672 = vmatprep.subr.bf16.mxu0 0
    %1673 = vmatpush1.bf16.xpose.msra.mxu0 0
    %1674 = vmatprep.subr.bf16.mxu0 0
    %1675 = vmatpush1.bf16.xpose.msra.mxu0 0
    %1676 = vmatprep.subr.bf16.mxu0 0
    %1677 = vmatpush1.bf16.xpose.msra.mxu0 0
    %1678 = vmatprep.subr.bf16.mxu0 0
    %1679 = vmatpush1.bf16.xpose.msra.mxu0 0
    %1680 = vmatprep.subr.bf16.mxu0 0
    %1681 = vmatpush1.bf16.xpose.msra.mxu0 0
    %1682 = vmatprep.subr.bf16.mxu0 0
    %1683 = vmatpush1.bf16.xpose.msra.mxu0 0
    %1684 = vmatprep.subr.bf16.mxu0 0
    %1685 = vmatpush1.bf16.xpose.msra.mxu0 0
    %1686 = vmatprep.subr.bf16.mxu0 0
    %1687 = vmatpush1.bf16.xpose.msra.mxu0 0
    %1688 = vmatprep.subr.bf16.mxu0 0
    %1689 = vmatpush1.bf16.xpose.msra.mxu0 0
    %1690 = vmatprep.mubr.bf16.mxu0 0
    %1691 = vmatmul.mubr.bf16.gmra.mrb[0].mxu0 %v1653
    %v1692 = vpop.f32.mrb[0].mxu0
    %v1693 = vadd.f32 0.0, %v1692
    %v1694 = vpop.f32.mrb[0].mxu0
    %v1695 = vpop.f32.mrb[0].mxu0
    %v1696 = vadd.f32 0.0, %v1695
    %v1697 = vpop.f32.mrb[0].mxu0
    %1698 = vdwg.mxu0
    %1699 = vrot.lane.b32.xlu0 %v459, 96
    %v1700 = vpop.permute.xlu0 %1699
    %1701 = vrot.lane.b32.xlu0 %v460, 96
    %v1702 = vpop.permute.xlu0 %1701
    %v1704 = vsel %vm465, %v1700, 0
    %v1707 = vsel %vm465, %v1702, 0
    %1709 = vmatprep.subr.bf16.mxu0 0
    %1710 = vmatpush1.bf16.xpose.msra.mxu0 %v1707
    %1711 = vmatprep.subr.bf16.mxu0 0
    %1712 = vmatpush1.bf16.xpose.msra.mxu0 0
    %1713 = vmatprep.subr.bf16.mxu0 0
    %1714 = vmatpush1.bf16.xpose.msra.mxu0 0
    %1715 = vmatprep.subr.bf16.mxu0 0
    %1716 = vmatpush1.bf16.xpose.msra.mxu0 0
    %1717 = vmatprep.subr.bf16.mxu0 0
    %1718 = vmatpush1.bf16.xpose.msra.mxu0 0
    %1719 = vmatprep.subr.bf16.mxu0 0
    %1720 = vmatpush1.bf16.xpose.msra.mxu0 0
    %1721 = vmatprep.subr.bf16.mxu0 0
    %1722 = vmatpush1.bf16.xpose.msra.mxu0 0
    %1723 = vmatprep.subr.bf16.mxu0 0
    %1724 = vmatpush1.bf16.xpose.msra.mxu0 0
    %1725 = vmatprep.subr.bf16.mxu0 0
    %1726 = vmatpush1.bf16.xpose.msra.mxu0 0
    %1727 = vmatprep.subr.bf16.mxu0 0
    %1728 = vmatpush1.bf16.xpose.msra.mxu0 0
    %1729 = vmatprep.subr.bf16.mxu0 0
    %1730 = vmatpush1.bf16.xpose.msra.mxu0 0
    %1731 = vmatprep.subr.bf16.mxu0 0
    %1732 = vmatpush1.bf16.xpose.msra.mxu0 0
    %1733 = vmatprep.subr.bf16.mxu0 0
    %1734 = vmatpush1.bf16.xpose.msra.mxu0 0
    %1735 = vmatprep.subr.bf16.mxu0 0
    %1736 = vmatpush1.bf16.xpose.msra.mxu0 0
    %1737 = vmatprep.subr.bf16.mxu0 0
    %1738 = vmatpush1.bf16.xpose.msra.mxu0 0
    %1739 = vmatprep.subr.bf16.mxu0 0
    %1740 = vmatpush1.bf16.xpose.msra.mxu0 0
    %1741 = vmatprep.mubr.bf16.mxu0 0
    %1742 = vmatmul.mubr.bf16.gmra.mrb[0].mxu0 %v1704
    %v1743 = vpop.f32.mrb[0].mxu0
    %v1744 = vadd.f32 0.0, %v1743
    %v1745 = vpop.f32.mrb[0].mxu0
    %v1746 = vpop.f32.mrb[0].mxu0
    %v1747 = vadd.f32 0.0, %v1746
    %v1748 = vpop.f32.mrb[0].mxu0
    %1749 = vdwg.mxu0
    %1750 = vrot.lane.b32.xlu0 %v462, 96
    %v1751 = vpop.permute.xlu0 %1750
    %1752 = vrot.lane.b32.xlu0 %v463, 96
    %v1753 = vpop.permute.xlu0 %1752
    %v1755 = vsel %vm465, %v1751, 0
    %v1758 = vsel %vm465, %v1753, 0
    %1760 = vmatprep.subr.bf16.mxu0 0
    %1761 = vmatpush1.bf16.xpose.msra.mxu0 %v1758
    %1762 = vmatprep.subr.bf16.mxu0 0
    %1763 = vmatpush1.bf16.xpose.msra.mxu0 0
    %1764 = vmatprep.subr.bf16.mxu0 0
    %1765 = vmatpush1.bf16.xpose.msra.mxu0 0
    %1766 = vmatprep.subr.bf16.mxu0 0
    %1767 = vmatpush1.bf16.xpose.msra.mxu0 0
    %1768 = vmatprep.subr.bf16.mxu0 0
    %1769 = vmatpush1.bf16.xpose.msra.mxu0 0
    %1770 = vmatprep.subr.bf16.mxu0 0
    %1771 = vmatpush1.bf16.xpose.msra.mxu0 0
    %1772 = vmatprep.subr.bf16.mxu0 0
    %1773 = vmatpush1.bf16.xpose.msra.mxu0 0
    %1774 = vmatprep.subr.bf16.mxu0 0
    %1775 = vmatpush1.bf16.xpose.msra.mxu0 0
    %1776 = vmatprep.subr.bf16.mxu0 0
    %1777 = vmatpush1.bf16.xpose.msra.mxu0 0
    %1778 = vmatprep.subr.bf16.mxu0 0
    %1779 = vmatpush1.bf16.xpose.msra.mxu0 0
    %1780 = vmatprep.subr.bf16.mxu0 0
    %1781 = vmatpush1.bf16.xpose.msra.mxu0 0
    %1782 = vmatprep.subr.bf16.mxu0 0
    %1783 = vmatpush1.bf16.xpose.msra.mxu0 0
    %1784 = vmatprep.subr.bf16.mxu0 0
    %1785 = vmatpush1.bf16.xpose.msra.mxu0 0
    %1786 = vmatprep.subr.bf16.mxu0 0
    %1787 = vmatpush1.bf16.xpose.msra.mxu0 0
    %1788 = vmatprep.subr.bf16.mxu0 0
    %1789 = vmatpush1.bf16.xpose.msra.mxu0 0
    %1790 = vmatprep.subr.bf16.mxu0 0
    %1791 = vmatpush1.bf16.xpose.msra.mxu0 0
    %1792 = vmatprep.mubr.bf16.mxu0 0
    %1793 = vmatmul.mubr.bf16.gmra.mrb[0].mxu0 %v1755
    %v1794 = vpop.f32.mrb[0].mxu0
    %v1795 = vadd.f32 0.0, %v1794
    %v1796 = vpop.f32.mrb[0].mxu0
    %v1797 = vpop.f32.mrb[0].mxu0
    %v1798 = vadd.f32 0.0, %v1797
    %v1799 = vpop.f32.mrb[0].mxu0
    %1800 = vdwg.mxu0
    %v1801 = vsel %vm465, %v1642, -inf
    %1802 = vmax.xlane.f32.xlu0 %v1801
    %v1803 = vpop.xlane.xlu0 %1802
    %v1804 = vsel %vm465, %v1645, -inf
    %1805 = vmax.xlane.f32.xlu0 %v1804
    %v1806 = vpop.xlane.xlu0 %1805
    %v1807 = vsel %vm465, %v1693, -inf
    %1808 = vmax.xlane.f32.xlu0 %v1807
    %v1809 = vpop.xlane.xlu0 %1808
    %v1810 = vsel %vm465, %v1696, -inf
    %1811 = vmax.xlane.f32.xlu0 %v1810
    %v1812 = vpop.xlane.xlu0 %1811
    %v1813 = vsel %vm465, %v1744, -inf
    %1814 = vmax.xlane.f32.xlu0 %v1813
    %v1815 = vpop.xlane.xlu0 %1814
    %v1816 = vsel %vm465, %v1747, -inf
    %1817 = vmax.xlane.f32.xlu0 %v1816
    %v1818 = vpop.xlane.xlu0 %1817
    %v1819 = vsel %vm465, %v1795, -inf
    %1820 = vmax.xlane.f32.xlu0 %v1819
    %v1821 = vpop.xlane.xlu0 %1820
    %v1822 = vsel %vm465, %v1798, -inf
    %1823 = vmax.xlane.f32.xlu0 %v1822
    %v1824 = vpop.xlane.xlu0 %1823
    %v1825 = vsub.f32 %v1642, %v1803
    %v1826 = vsub.f32 %v1645, %v1806
    %v1827 = vsub.f32 %v1693, %v1809
    %v1828 = vsub.f32 %v1696, %v1812
    %v1829 = vsub.f32 %v1744, %v1815
    %v1830 = vsub.f32 %v1747, %v1818
    %v1831 = vsub.f32 %v1795, %v1821
    %v1832 = vsub.f32 %v1798, %v1824
    %v1833 = vmul.f32 %v1825, 1.442695
    %v1834 = vpow.pop %v1833
    %v1835 = vmul.f32 %v1826, 1.442695
    %v1836 = vpow.pop %v1835
    %v1837 = vmul.f32 %v1827, 1.442695
    %v1838 = vpow.pop %v1837
    %v1839 = vmul.f32 %v1828, 1.442695
    %v1840 = vpow.pop %v1839
    %v1841 = vmul.f32 %v1829, 1.442695
    %v1842 = vpow.pop %v1841
    %v1843 = vmul.f32 %v1830, 1.442695
    %v1844 = vpow.pop %v1843
    %v1845 = vmul.f32 %v1831, 1.442695
    %v1846 = vpow.pop %v1845
    %v1847 = vmul.f32 %v1832, 1.442695
    %v1848 = vpow.pop %v1847
    %v1849 = vsel %vm465, %v1834, 0.0
    %1850 = vadd.xlane.f32.xlu0 %v1849
    %v1851 = vpop.xlane.xlu0 %1850
    %v1852 = vsel %vm465, %v1836, 0.0
    %1853 = vadd.xlane.f32.xlu0 %v1852
    %v1854 = vpop.xlane.xlu0 %1853
    %v1855 = vsel %vm465, %v1838, 0.0
    %1856 = vadd.xlane.f32.xlu0 %v1855
    %v1857 = vpop.xlane.xlu0 %1856
    %v1858 = vsel %vm465, %v1840, 0.0
    %1859 = vadd.xlane.f32.xlu0 %v1858
    %v1860 = vpop.xlane.xlu0 %1859
    %v1861 = vsel %vm465, %v1842, 0.0
    %1862 = vadd.xlane.f32.xlu0 %v1861
    %v1863 = vpop.xlane.xlu0 %1862
    %v1864 = vsel %vm465, %v1844, 0.0
    %1865 = vadd.xlane.f32.xlu0 %v1864
    %v1866 = vpop.xlane.xlu0 %1865
    %v1867 = vsel %vm465, %v1846, 0.0
    %1868 = vadd.xlane.f32.xlu0 %v1867
    %v1869 = vpop.xlane.xlu0 %1868
    %v1870 = vsel %vm465, %v1848, 0.0
    %1871 = vadd.xlane.f32.xlu0 %v1870
    %v1872 = vpop.xlane.xlu0 %1871
    %v1873 = vrcp.pop %v1851
    %v1874 = vrcp.pop %v1854
    %v1875 = vrcp.pop %v1857
    %v1876 = vrcp.pop %v1860
    %v1877 = vrcp.pop %v1863
    %v1878 = vrcp.pop %v1866
    %v1879 = vrcp.pop %v1869
    %v1880 = vrcp.pop %v1872
    %v1881 = vmul.f32 %v1834, %v1873
    %v1882 = vmul.f32 %v1836, %v1874
    %v1883 = vmul.f32 %v1838, %v1875
    %v1884 = vmul.f32 %v1840, %v1876
    %v1885 = vmul.f32 %v1842, %v1877
    %v1886 = vmul.f32 %v1844, %v1878
    %v1887 = vmul.f32 %v1846, %v1879
    %v1888 = vmul.f32 %v1848, %v1880
    %v1889 = vpack.c.bf16 %v1882, %v1881
    %v1890 = vpack.c.bf16 %v1884, %v1883
    %v1891 = vpack.c.bf16 %v1886, %v1885
    %v1892 = vpack.c.bf16 %v1888, %v1887
    %1893 = vrot.lane.b32.xlu0 %v455, 96
    %v1894 = vpop.permute.xlu0 %1893
    %v1897 = vsel %vm465, %v1889, 0
    %1899 = vmatprep.subr.bf16.mxu0 0
    %1900 = vmatpush1.bf16.msra.mxu0 %v1894
    %1901 = vmatprep.subr.bf16.mxu0 0
    %1902 = vmatpush1.bf16.msra.mxu0 0
    %1903 = vmatprep.subr.bf16.mxu0 0
    %1904 = vmatpush1.bf16.msra.mxu0 0
    %1905 = vmatprep.subr.bf16.mxu0 0
    %1906 = vmatpush1.bf16.msra.mxu0 0
    %1907 = vmatprep.subr.bf16.mxu0 0
    %1908 = vmatpush1.bf16.msra.mxu0 0
    %1909 = vmatprep.subr.bf16.mxu0 0
    %1910 = vmatpush1.bf16.msra.mxu0 0
    %1911 = vmatprep.subr.bf16.mxu0 0
    %1912 = vmatpush1.bf16.msra.mxu0 0
    %1913 = vmatprep.subr.bf16.mxu0 0
    %1914 = vmatpush1.bf16.msra.mxu0 0
    %1915 = vmatprep.subr.bf16.mxu0 0
    %1916 = vmatpush1.bf16.msra.mxu0 0
    %1917 = vmatprep.subr.bf16.mxu0 0
    %1918 = vmatpush1.bf16.msra.mxu0 0
    %1919 = vmatprep.subr.bf16.mxu0 0
    %1920 = vmatpush1.bf16.msra.mxu0 0
    %1921 = vmatprep.subr.bf16.mxu0 0
    %1922 = vmatpush1.bf16.msra.mxu0 0
    %1923 = vmatprep.subr.bf16.mxu0 0
    %1924 = vmatpush1.bf16.msra.mxu0 0
    %1925 = vmatprep.subr.bf16.mxu0 0
    %1926 = vmatpush1.bf16.msra.mxu0 0
    %1927 = vmatprep.subr.bf16.mxu0 0
    %1928 = vmatpush1.bf16.msra.mxu0 0
    %1929 = vmatprep.subr.bf16.mxu0 0
    %1930 = vmatpush1.bf16.msra.mxu0 0
    %1931 = vmatprep.mubr.bf16.mxu0 0
    %1932 = vmatmul.mubr.bf16.gmra.mrb[0].mxu0 %v1897
    %v1933 = vpop.f32.mrb[0].mxu0
    %v1934 = vadd.f32 0.0, %v1933
    %v1935 = vpop.f32.mrb[0].mxu0
    %v1936 = vpop.f32.mrb[0].mxu0
    %v1937 = vadd.f32 0.0, %v1936
    %v1938 = vpop.f32.mrb[0].mxu0
    %1939 = vdwg.mxu0
    %1940 = vrot.lane.b32.xlu0 %v458, 96
    %v1941 = vpop.permute.xlu0 %1940
    %v1944 = vsel %vm465, %v1890, 0
    %1946 = vmatprep.subr.bf16.mxu0 0
    %1947 = vmatpush1.bf16.msra.mxu0 %v1941
    %1948 = vmatprep.subr.bf16.mxu0 0
    %1949 = vmatpush1.bf16.msra.mxu0 0
    %1950 = vmatprep.subr.bf16.mxu0 0
    %1951 = vmatpush1.bf16.msra.mxu0 0
    %1952 = vmatprep.subr.bf16.mxu0 0
    %1953 = vmatpush1.bf16.msra.mxu0 0
    %1954 = vmatprep.subr.bf16.mxu0 0
    %1955 = vmatpush1.bf16.msra.mxu0 0
    %1956 = vmatprep.subr.bf16.mxu0 0
    %1957 = vmatpush1.bf16.msra.mxu0 0
    %1958 = vmatprep.subr.bf16.mxu0 0
    %1959 = vmatpush1.bf16.msra.mxu0 0
    %1960 = vmatprep.subr.bf16.mxu0 0
    %1961 = vmatpush1.bf16.msra.mxu0 0
    %1962 = vmatprep.subr.bf16.mxu0 0
    %1963 = vmatpush1.bf16.msra.mxu0 0
    %1964 = vmatprep.subr.bf16.mxu0 0
    %1965 = vmatpush1.bf16.msra.mxu0 0
    %1966 = vmatprep.subr.bf16.mxu0 0
    %1967 = vmatpush1.bf16.msra.mxu0 0
    %1968 = vmatprep.subr.bf16.mxu0 0
    %1969 = vmatpush1.bf16.msra.mxu0 0
    %1970 = vmatprep.subr.bf16.mxu0 0
    %1971 = vmatpush1.bf16.msra.mxu0 0
    %1972 = vmatprep.subr.bf16.mxu0 0
    %1973 = vmatpush1.bf16.msra.mxu0 0
    %1974 = vmatprep.subr.bf16.mxu0 0
    %1975 = vmatpush1.bf16.msra.mxu0 0
    %1976 = vmatprep.subr.bf16.mxu0 0
    %1977 = vmatpush1.bf16.msra.mxu0 0
    %1978 = vmatprep.mubr.bf16.mxu0 0
    %1979 = vmatmul.mubr.bf16.gmra.mrb[0].mxu0 %v1944
    %v1980 = vpop.f32.mrb[0].mxu0
    %v1981 = vadd.f32 0.0, %v1980
    %v1982 = vpop.f32.mrb[0].mxu0
    %v1983 = vpop.f32.mrb[0].mxu0
    %v1984 = vadd.f32 0.0, %v1983
    %v1985 = vpop.f32.mrb[0].mxu0
    %1986 = vdwg.mxu0
    %1987 = vrot.lane.b32.xlu0 %v461, 96
    %v1988 = vpop.permute.xlu0 %1987
    %v1991 = vsel %vm465, %v1891, 0
    %1993 = vmatprep.subr.bf16.mxu0 0
    %1994 = vmatpush1.bf16.msra.mxu0 %v1988
    %1995 = vmatprep.subr.bf16.mxu0 0
    %1996 = vmatpush1.bf16.msra.mxu0 0
    %1997 = vmatprep.subr.bf16.mxu0 0
    %1998 = vmatpush1.bf16.msra.mxu0 0
    %1999 = vmatprep.subr.bf16.mxu0 0
    %2000 = vmatpush1.bf16.msra.mxu0 0
    %2001 = vmatprep.subr.bf16.mxu0 0
    %2002 = vmatpush1.bf16.msra.mxu0 0
    %2003 = vmatprep.subr.bf16.mxu0 0
    %2004 = vmatpush1.bf16.msra.mxu0 0
    %2005 = vmatprep.subr.bf16.mxu0 0
    %2006 = vmatpush1.bf16.msra.mxu0 0
    %2007 = vmatprep.subr.bf16.mxu0 0
    %2008 = vmatpush1.bf16.msra.mxu0 0
    %2009 = vmatprep.subr.bf16.mxu0 0
    %2010 = vmatpush1.bf16.msra.mxu0 0
    %2011 = vmatprep.subr.bf16.mxu0 0
    %2012 = vmatpush1.bf16.msra.mxu0 0
    %2013 = vmatprep.subr.bf16.mxu0 0
    %2014 = vmatpush1.bf16.msra.mxu0 0
    %2015 = vmatprep.subr.bf16.mxu0 0
    %2016 = vmatpush1.bf16.msra.mxu0 0
    %2017 = vmatprep.subr.bf16.mxu0 0
    %2018 = vmatpush1.bf16.msra.mxu0 0
    %2019 = vmatprep.subr.bf16.mxu0 0
    %2020 = vmatpush1.bf16.msra.mxu0 0
    %2021 = vmatprep.subr.bf16.mxu0 0
    %2022 = vmatpush1.bf16.msra.mxu0 0
    %2023 = vmatprep.subr.bf16.mxu0 0
    %2024 = vmatpush1.bf16.msra.mxu0 0
    %2025 = vmatprep.mubr.bf16.mxu0 0
    %2026 = vmatmul.mubr.bf16.gmra.mrb[0].mxu0 %v1991
    %v2027 = vpop.f32.mrb[0].mxu0
    %v2028 = vadd.f32 0.0, %v2027
    %v2029 = vpop.f32.mrb[0].mxu0
    %v2030 = vpop.f32.mrb[0].mxu0
    %v2031 = vadd.f32 0.0, %v2030
    %v2032 = vpop.f32.mrb[0].mxu0
    %2033 = vdwg.mxu0
    %2034 = vrot.lane.b32.xlu0 %v464, 96
    %v2035 = vpop.permute.xlu0 %2034
    %v2038 = vsel %vm465, %v1892, 0
    %2040 = vmatprep.subr.bf16.mxu0 0
    %2041 = vmatpush1.bf16.msra.mxu0 %v2035
    %2042 = vmatprep.subr.bf16.mxu0 0
    %2043 = vmatpush1.bf16.msra.mxu0 0
    %2044 = vmatprep.subr.bf16.mxu0 0
    %2045 = vmatpush1.bf16.msra.mxu0 0
    %2046 = vmatprep.subr.bf16.mxu0 0
    %2047 = vmatpush1.bf16.msra.mxu0 0
    %2048 = vmatprep.subr.bf16.mxu0 0
    %2049 = vmatpush1.bf16.msra.mxu0 0
    %2050 = vmatprep.subr.bf16.mxu0 0
    %2051 = vmatpush1.bf16.msra.mxu0 0
    %2052 = vmatprep.subr.bf16.mxu0 0
    %2053 = vmatpush1.bf16.msra.mxu0 0
    %2054 = vmatprep.subr.bf16.mxu0 0
    %2055 = vmatpush1.bf16.msra.mxu0 0
    %2056 = vmatprep.subr.bf16.mxu0 0
    %2057 = vmatpush1.bf16.msra.mxu0 0
    %2058 = vmatprep.subr.bf16.mxu0 0
    %2059 = vmatpush1.bf16.msra.mxu0 0
    %2060 = vmatprep.subr.bf16.mxu0 0
    %2061 = vmatpush1.bf16.msra.mxu0 0
    %2062 = vmatprep.subr.bf16.mxu0 0
    %2063 = vmatpush1.bf16.msra.mxu0 0
    %2064 = vmatprep.subr.bf16.mxu0 0
    %2065 = vmatpush1.bf16.msra.mxu0 0
    %2066 = vmatprep.subr.bf16.mxu0 0
    %2067 = vmatpush1.bf16.msra.mxu0 0
    %2068 = vmatprep.subr.bf16.mxu0 0
    %2069 = vmatpush1.bf16.msra.mxu0 0
    %2070 = vmatprep.subr.bf16.mxu0 0
    %2071 = vmatpush1.bf16.msra.mxu0 0
    %2072 = vmatprep.mubr.bf16.mxu0 0
    %2073 = vmatmul.mubr.bf16.gmra.mrb[0].mxu0 %v2038
    %v2074 = vpop.f32.mrb[0].mxu0
    %v2075 = vadd.f32 0.0, %v2074
    %v2076 = vpop.f32.mrb[0].mxu0
    %v2077 = vpop.f32.mrb[0].mxu0
    %v2078 = vadd.f32 0.0, %v2077
    %v2079 = vpop.f32.mrb[0].mxu0
    %2080 = vdwg.mxu0
    %v2081 = vpack.c.bf16 %v1937, %v1934
    %v2082 = vpack.c.bf16 %v1984, %v1981
    %v2083 = vpack.c.bf16 %v2031, %v2028
    %v2084 = vpack.c.bf16 %v2078, %v2075
    %s2085 = scalar_lea.vmem [#allocation7], 16
    %v2086 = vld [vmem:[%s2085] sm:$0xf]
    %v2087 = vld [vmem:[%s2085 + $0x4] sm:$0xf]
    %v2090 = vunpack.c.l.b16 %v2086
    %v2091 = vunpack.c.l.b16 %v2087
    %v2092 = vpack.c.b16 %v2091, %v2090
    %v2095 = vsel %vm465, %v2081, 0
    %v2098 = vsel %vm465, %v2082, 0
    %v2101 = vsel %vm465, %v2083, 0
    %v2104 = vsel %vm465, %v2084, 0
    %2106 = vmatprep.subr.bf16.mxu0 0
    %2107 = vmatpush1.bf16.msra.mxu0 %v2092
    %2108 = vmatprep.subr.bf16.mxu0 0
    %2109 = vmatpush1.bf16.msra.mxu0 0
    %2110 = vmatprep.subr.bf16.mxu0 0
    %2111 = vmatpush1.bf16.msra.mxu0 0
    %2112 = vmatprep.subr.bf16.mxu0 0
    %2113 = vmatpush1.bf16.msra.mxu0 0
    %2114 = vmatprep.subr.bf16.mxu0 0
    %2115 = vmatpush1.bf16.msra.mxu0 0
    %2116 = vmatprep.subr.bf16.mxu0 0
    %2117 = vmatpush1.bf16.msra.mxu0 0
    %2118 = vmatprep.subr.bf16.mxu0 0
    %2119 = vmatpush1.bf16.msra.mxu0 0
    %2120 = vmatprep.subr.bf16.mxu0 0
    %2121 = vmatpush1.bf16.msra.mxu0 0
    %2122 = vmatprep.subr.bf16.mxu0 0
    %2123 = vmatpush1.bf16.msra.mxu0 0
    %2124 = vmatprep.subr.bf16.mxu0 0
    %2125 = vmatpush1.bf16.msra.mxu0 0
    %2126 = vmatprep.subr.bf16.mxu0 0
    %2127 = vmatpush1.bf16.msra.mxu0 0
    %2128 = vmatprep.subr.bf16.mxu0 0
    %2129 = vmatpush1.bf16.msra.mxu0 0
    %2130 = vmatprep.subr.bf16.mxu0 0
    %2131 = vmatpush1.bf16.msra.mxu0 0
    %2132 = vmatprep.subr.bf16.mxu0 0
    %2133 = vmatpush1.bf16.msra.mxu0 0
    %2134 = vmatprep.subr.bf16.mxu0 0
    %2135 = vmatpush1.bf16.msra.mxu0 0
    %2136 = vmatprep.subr.bf16.mxu0 0
    %2137 = vmatpush1.bf16.msra.mxu0 0
    %2138 = vmatprep.mubr.bf16.mxu0 0
    %2139 = vmatmul.mubr.bf16.gmra.mrb[0].mxu0 %v2095
    %v2140 = vpop.f32.mrb[0].mxu0
    %v2141 = vadd.f32 0.0, %v2140
    %v2142 = vpop.f32.mrb[0].mxu0
    %v2143 = vpop.f32.mrb[0].mxu0
    %v2144 = vadd.f32 0.0, %v2143
    %v2145 = vpop.f32.mrb[0].mxu0
    %2146 = vmatprep.mubr.bf16.mxu0 0
    %2147 = vmatmul.mubr.bf16.gmra.mrb[0].mxu0 %v2098
    %v2148 = vpop.f32.mrb[0].mxu0
    %v2149 = vadd.f32 0.0, %v2148
    %v2150 = vpop.f32.mrb[0].mxu0
    %v2151 = vpop.f32.mrb[0].mxu0
    %v2152 = vadd.f32 0.0, %v2151
    %v2153 = vpop.f32.mrb[0].mxu0
    %2154 = vmatprep.mubr.bf16.mxu0 0
    %2155 = vmatmul.mubr.bf16.gmra.mrb[0].mxu0 %v2101
    %v2156 = vpop.f32.mrb[0].mxu0
    %v2157 = vadd.f32 0.0, %v2156
    %v2158 = vpop.f32.mrb[0].mxu0
    %v2159 = vpop.f32.mrb[0].mxu0
    %v2160 = vadd.f32 0.0, %v2159
    %v2161 = vpop.f32.mrb[0].mxu0
    %2162 = vmatprep.mubr.bf16.mxu0 0
    %2163 = vmatmul.mubr.bf16.gmra.mrb[0].mxu0 %v2104
    %v2164 = vpop.f32.mrb[0].mxu0
    %v2165 = vadd.f32 0.0, %v2164
    %v2166 = vpop.f32.mrb[0].mxu0
    %v2167 = vpop.f32.mrb[0].mxu0
    %v2168 = vadd.f32 0.0, %v2167
    %v2169 = vpop.f32.mrb[0].mxu0
    %2170 = vdwg.mxu0
    %v2171 = vadd.f32 %v1567, %v2141
    %v2172 = vadd.f32 %v1570, %v2144
    %v2173 = vadd.f32 %v1575, %v2149
    %v2174 = vadd.f32 %v1578, %v2152
    %v2175 = vadd.f32 %v1583, %v2157
    %v2176 = vadd.f32 %v1586, %v2160
    %v2177 = vadd.f32 %v1591, %v2165
    %v2178 = vadd.f32 %v1594, %v2168
    %2179 = vrot.lane.b32.xlu0 %v453, 80
    %v2180 = vpop.permute.xlu0 %2179
    %2181 = vrot.lane.b32.xlu0 %v454, 80
    %v2182 = vpop.permute.xlu0 %2181
    %v2184 = vsel %vm465, %v2180, 0
    %v2187 = vsel %vm465, %v2182, 0
    %2189 = vmatprep.subr.bf16.mxu0 0
    %2190 = vmatpush1.bf16.xpose.msra.mxu0 %v2187
    %2191 = vmatprep.subr.bf16.mxu0 0
    %2192 = vmatpush1.bf16.xpose.msra.mxu0 0
    %2193 = vmatprep.subr.bf16.mxu0 0
    %2194 = vmatpush1.bf16.xpose.msra.mxu0 0
    %2195 = vmatprep.subr.bf16.mxu0 0
    %2196 = vmatpush1.bf16.xpose.msra.mxu0 0
    %2197 = vmatprep.subr.bf16.mxu0 0
    %2198 = vmatpush1.bf16.xpose.msra.mxu0 0
    %2199 = vmatprep.subr.bf16.mxu0 0
    %2200 = vmatpush1.bf16.xpose.msra.mxu0 0
    %2201 = vmatprep.subr.bf16.mxu0 0
    %2202 = vmatpush1.bf16.xpose.msra.mxu0 0
    %2203 = vmatprep.subr.bf16.mxu0 0
    %2204 = vmatpush1.bf16.xpose.msra.mxu0 0
    %2205 = vmatprep.subr.bf16.mxu0 0
    %2206 = vmatpush1.bf16.xpose.msra.mxu0 0
    %2207 = vmatprep.subr.bf16.mxu0 0
    %2208 = vmatpush1.bf16.xpose.msra.mxu0 0
    %2209 = vmatprep.subr.bf16.mxu0 0
    %2210 = vmatpush1.bf16.xpose.msra.mxu0 0
    %2211 = vmatprep.subr.bf16.mxu0 0
    %2212 = vmatpush1.bf16.xpose.msra.mxu0 0
    %2213 = vmatprep.subr.bf16.mxu0 0
    %2214 = vmatpush1.bf16.xpose.msra.mxu0 0
    %2215 = vmatprep.subr.bf16.mxu0 0
    %2216 = vmatpush1.bf16.xpose.msra.mxu0 0
    %2217 = vmatprep.subr.bf16.mxu0 0
    %2218 = vmatpush1.bf16.xpose.msra.mxu0 0
    %2219 = vmatprep.subr.bf16.mxu0 0
    %2220 = vmatpush1.bf16.xpose.msra.mxu0 0
    %2221 = vmatprep.mubr.bf16.mxu0 0
    %2222 = vmatmul.mubr.bf16.gmra.mrb[0].mxu0 %v2184
    %v2223 = vpop.f32.mrb[0].mxu0
    %v2224 = vadd.f32 0.0, %v2223
    %v2225 = vpop.f32.mrb[0].mxu0
    %v2226 = vpop.f32.mrb[0].mxu0
    %v2227 = vadd.f32 0.0, %v2226
    %v2228 = vpop.f32.mrb[0].mxu0
    %2229 = vdwg.mxu0
    %2230 = vrot.lane.b32.xlu0 %v456, 80
    %v2231 = vpop.permute.xlu0 %2230
    %2232 = vrot.lane.b32.xlu0 %v457, 80
    %v2233 = vpop.permute.xlu0 %2232
    %v2235 = vsel %vm465, %v2231, 0
    %v2238 = vsel %vm465, %v2233, 0
    %2240 = vmatprep.subr.bf16.mxu0 0
    %2241 = vmatpush1.bf16.xpose.msra.mxu0 %v2238
    %2242 = vmatprep.subr.bf16.mxu0 0
    %2243 = vmatpush1.bf16.xpose.msra.mxu0 0
    %2244 = vmatprep.subr.bf16.mxu0 0
    %2245 = vmatpush1.bf16.xpose.msra.mxu0 0
    %2246 = vmatprep.subr.bf16.mxu0 0
    %2247 = vmatpush1.bf16.xpose.msra.mxu0 0
    %2248 = vmatprep.subr.bf16.mxu0 0
    %2249 = vmatpush1.bf16.xpose.msra.mxu0 0
    %2250 = vmatprep.subr.bf16.mxu0 0
    %2251 = vmatpush1.bf16.xpose.msra.mxu0 0
    %2252 = vmatprep.subr.bf16.mxu0 0
    %2253 = vmatpush1.bf16.xpose.msra.mxu0 0
    %2254 = vmatprep.subr.bf16.mxu0 0
    %2255 = vmatpush1.bf16.xpose.msra.mxu0 0
    %2256 = vmatprep.subr.bf16.mxu0 0
    %2257 = vmatpush1.bf16.xpose.msra.mxu0 0
    %2258 = vmatprep.subr.bf16.mxu0 0
    %2259 = vmatpush1.bf16.xpose.msra.mxu0 0
    %2260 = vmatprep.subr.bf16.mxu0 0
    %2261 = vmatpush1.bf16.xpose.msra.mxu0 0
    %2262 = vmatprep.subr.bf16.mxu0 0
    %2263 = vmatpush1.bf16.xpose.msra.mxu0 0
    %2264 = vmatprep.subr.bf16.mxu0 0
    %2265 = vmatpush1.bf16.xpose.msra.mxu0 0
    %2266 = vmatprep.subr.bf16.mxu0 0
    %2267 = vmatpush1.bf16.xpose.msra.mxu0 0
    %2268 = vmatprep.subr.bf16.mxu0 0
    %2269 = vmatpush1.bf16.xpose.msra.mxu0 0
    %2270 = vmatprep.subr.bf16.mxu0 0
    %2271 = vmatpush1.bf16.xpose.msra.mxu0 0
    %2272 = vmatprep.mubr.bf16.mxu0 0
    %2273 = vmatmul.mubr.bf16.gmra.mrb[0].mxu0 %v2235
    %v2274 = vpop.f32.mrb[0].mxu0
    %v2275 = vadd.f32 0.0, %v2274
    %v2276 = vpop.f32.mrb[0].mxu0
    %v2277 = vpop.f32.mrb[0].mxu0
    %v2278 = vadd.f32 0.0, %v2277
    %v2279 = vpop.f32.mrb[0].mxu0
    %2280 = vdwg.mxu0
    %2281 = vrot.lane.b32.xlu0 %v459, 80
    %v2282 = vpop.permute.xlu0 %2281
    %2283 = vrot.lane.b32.xlu0 %v460, 80
    %v2284 = vpop.permute.xlu0 %2283
    %v2286 = vsel %vm465, %v2282, 0
    %v2289 = vsel %vm465, %v2284, 0
    %2291 = vmatprep.subr.bf16.mxu0 0
    %2292 = vmatpush1.bf16.xpose.msra.mxu0 %v2289
    %2293 = vmatprep.subr.bf16.mxu0 0
    %2294 = vmatpush1.bf16.xpose.msra.mxu0 0
    %2295 = vmatprep.subr.bf16.mxu0 0
    %2296 = vmatpush1.bf16.xpose.msra.mxu0 0
    %2297 = vmatprep.subr.bf16.mxu0 0
    %2298 = vmatpush1.bf16.xpose.msra.mxu0 0
    %2299 = vmatprep.subr.bf16.mxu0 0
    %2300 = vmatpush1.bf16.xpose.msra.mxu0 0
    %2301 = vmatprep.subr.bf16.mxu0 0
    %2302 = vmatpush1.bf16.xpose.msra.mxu0 0
    %2303 = vmatprep.subr.bf16.mxu0 0
    %2304 = vmatpush1.bf16.xpose.msra.mxu0 0
    %2305 = vmatprep.subr.bf16.mxu0 0
    %2306 = vmatpush1.bf16.xpose.msra.mxu0 0
    %2307 = vmatprep.subr.bf16.mxu0 0
    %2308 = vmatpush1.bf16.xpose.msra.mxu0 0
    %2309 = vmatprep.subr.bf16.mxu0 0
    %2310 = vmatpush1.bf16.xpose.msra.mxu0 0
    %2311 = vmatprep.subr.bf16.mxu0 0
    %2312 = vmatpush1.bf16.xpose.msra.mxu0 0
    %2313 = vmatprep.subr.bf16.mxu0 0
    %2314 = vmatpush1.bf16.xpose.msra.mxu0 0
    %2315 = vmatprep.subr.bf16.mxu0 0
    %2316 = vmatpush1.bf16.xpose.msra.mxu0 0
    %2317 = vmatprep.subr.bf16.mxu0 0
    %2318 = vmatpush1.bf16.xpose.msra.mxu0 0
    %2319 = vmatprep.subr.bf16.mxu0 0
    %2320 = vmatpush1.bf16.xpose.msra.mxu0 0
    %2321 = vmatprep.subr.bf16.mxu0 0
    %2322 = vmatpush1.bf16.xpose.msra.mxu0 0
    %2323 = vmatprep.mubr.bf16.mxu0 0
    %2324 = vmatmul.mubr.bf16.gmra.mrb[0].mxu0 %v2286
    %v2325 = vpop.f32.mrb[0].mxu0
    %v2326 = vadd.f32 0.0, %v2325
    %v2327 = vpop.f32.mrb[0].mxu0
    %v2328 = vpop.f32.mrb[0].mxu0
    %v2329 = vadd.f32 0.0, %v2328
    %v2330 = vpop.f32.mrb[0].mxu0
    %2331 = vdwg.mxu0
    %2332 = vrot.lane.b32.xlu0 %v462, 80
    %v2333 = vpop.permute.xlu0 %2332
    %2334 = vrot.lane.b32.xlu0 %v463, 80
    %v2335 = vpop.permute.xlu0 %2334
    %v2337 = vsel %vm465, %v2333, 0
    %v2340 = vsel %vm465, %v2335, 0
    %2342 = vmatprep.subr.bf16.mxu0 0
    %2343 = vmatpush1.bf16.xpose.msra.mxu0 %v2340
    %2344 = vmatprep.subr.bf16.mxu0 0
    %2345 = vmatpush1.bf16.xpose.msra.mxu0 0
    %2346 = vmatprep.subr.bf16.mxu0 0
    %2347 = vmatpush1.bf16.xpose.msra.mxu0 0
    %2348 = vmatprep.subr.bf16.mxu0 0
    %2349 = vmatpush1.bf16.xpose.msra.mxu0 0
    %2350 = vmatprep.subr.bf16.mxu0 0
    %2351 = vmatpush1.bf16.xpose.msra.mxu0 0
    %2352 = vmatprep.subr.bf16.mxu0 0
    %2353 = vmatpush1.bf16.xpose.msra.mxu0 0
    %2354 = vmatprep.subr.bf16.mxu0 0
    %2355 = vmatpush1.bf16.xpose.msra.mxu0 0
    %2356 = vmatprep.subr.bf16.mxu0 0
    %2357 = vmatpush1.bf16.xpose.msra.mxu0 0
    %2358 = vmatprep.subr.bf16.mxu0 0
    %2359 = vmatpush1.bf16.xpose.msra.mxu0 0
    %2360 = vmatprep.subr.bf16.mxu0 0
    %2361 = vmatpush1.bf16.xpose.msra.mxu0 0
    %2362 = vmatprep.subr.bf16.mxu0 0
    %2363 = vmatpush1.bf16.xpose.msra.mxu0 0
    %2364 = vmatprep.subr.bf16.mxu0 0
    %2365 = vmatpush1.bf16.xpose.msra.mxu0 0
    %2366 = vmatprep.subr.bf16.mxu0 0
    %2367 = vmatpush1.bf16.xpose.msra.mxu0 0
    %2368 = vmatprep.subr.bf16.mxu0 0
    %2369 = vmatpush1.bf16.xpose.msra.mxu0 0
    %2370 = vmatprep.subr.bf16.mxu0 0
    %2371 = vmatpush1.bf16.xpose.msra.mxu0 0
    %2372 = vmatprep.subr.bf16.mxu0 0
    %2373 = vmatpush1.bf16.xpose.msra.mxu0 0
    %2374 = vmatprep.mubr.bf16.mxu0 0
    %2375 = vmatmul.mubr.bf16.gmra.mrb[0].mxu0 %v2337
    %v2376 = vpop.f32.mrb[0].mxu0
    %v2377 = vadd.f32 0.0, %v2376
    %v2378 = vpop.f32.mrb[0].mxu0
    %v2379 = vpop.f32.mrb[0].mxu0
    %v2380 = vadd.f32 0.0, %v2379
    %v2381 = vpop.f32.mrb[0].mxu0
    %2382 = vdwg.mxu0
    %v2383 = vsel %vm465, %v2224, -inf
    %2384 = vmax.xlane.f32.xlu0 %v2383
    %v2385 = vpop.xlane.xlu0 %2384
    %v2386 = vsel %vm465, %v2227, -inf
    %2387 = vmax.xlane.f32.xlu0 %v2386
    %v2388 = vpop.xlane.xlu0 %2387
    %v2389 = vsel %vm465, %v2275, -inf
    %2390 = vmax.xlane.f32.xlu0 %v2389
    %v2391 = vpop.xlane.xlu0 %2390
    %v2392 = vsel %vm465, %v2278, -inf
    %2393 = vmax.xlane.f32.xlu0 %v2392
    %v2394 = vpop.xlane.xlu0 %2393
    %v2395 = vsel %vm465, %v2326, -inf
    %2396 = vmax.xlane.f32.xlu0 %v2395
    %v2397 = vpop.xlane.xlu0 %2396
    %v2398 = vsel %vm465, %v2329, -inf
    %2399 = vmax.xlane.f32.xlu0 %v2398
    %v2400 = vpop.xlane.xlu0 %2399
    %v2401 = vsel %vm465, %v2377, -inf
    %2402 = vmax.xlane.f32.xlu0 %v2401
    %v2403 = vpop.xlane.xlu0 %2402
    %v2404 = vsel %vm465, %v2380, -inf
    %2405 = vmax.xlane.f32.xlu0 %v2404
    %v2406 = vpop.xlane.xlu0 %2405
    %v2407 = vsub.f32 %v2224, %v2385
    %v2408 = vsub.f32 %v2227, %v2388
    %v2409 = vsub.f32 %v2275, %v2391
    %v2410 = vsub.f32 %v2278, %v2394
    %v2411 = vsub.f32 %v2326, %v2397
    %v2412 = vsub.f32 %v2329, %v2400
    %v2413 = vsub.f32 %v2377, %v2403
    %v2414 = vsub.f32 %v2380, %v2406
    %v2415 = vmul.f32 %v2407, 1.442695
    %v2416 = vpow.pop %v2415
    %v2417 = vmul.f32 %v2408, 1.442695
    %v2418 = vpow.pop %v2417
    %v2419 = vmul.f32 %v2409, 1.442695
    %v2420 = vpow.pop %v2419
    %v2421 = vmul.f32 %v2410, 1.442695
    %v2422 = vpow.pop %v2421
    %v2423 = vmul.f32 %v2411, 1.442695
    %v2424 = vpow.pop %v2423
    %v2425 = vmul.f32 %v2412, 1.442695
    %v2426 = vpow.pop %v2425
    %v2427 = vmul.f32 %v2413, 1.442695
    %v2428 = vpow.pop %v2427
    %v2429 = vmul.f32 %v2414, 1.442695
    %v2430 = vpow.pop %v2429
    %v2431 = vsel %vm465, %v2416, 0.0
    %2432 = vadd.xlane.f32.xlu0 %v2431
    %v2433 = vpop.xlane.xlu0 %2432
    %v2434 = vsel %vm465, %v2418, 0.0
    %2435 = vadd.xlane.f32.xlu0 %v2434
    %v2436 = vpop.xlane.xlu0 %2435
    %v2437 = vsel %vm465, %v2420, 0.0
    %2438 = vadd.xlane.f32.xlu0 %v2437
    %v2439 = vpop.xlane.xlu0 %2438
    %v2440 = vsel %vm465, %v2422, 0.0
    %2441 = vadd.xlane.f32.xlu0 %v2440
    %v2442 = vpop.xlane.xlu0 %2441
    %v2443 = vsel %vm465, %v2424, 0.0
    %2444 = vadd.xlane.f32.xlu0 %v2443
    %v2445 = vpop.xlane.xlu0 %2444
    %v2446 = vsel %vm465, %v2426, 0.0
    %2447 = vadd.xlane.f32.xlu0 %v2446
    %v2448 = vpop.xlane.xlu0 %2447
    %v2449 = vsel %vm465, %v2428, 0.0
    %2450 = vadd.xlane.f32.xlu0 %v2449
    %v2451 = vpop.xlane.xlu0 %2450
    %v2452 = vsel %vm465, %v2430, 0.0
    %2453 = vadd.xlane.f32.xlu0 %v2452
    %v2454 = vpop.xlane.xlu0 %2453
    %v2455 = vrcp.pop %v2433
    %v2456 = vrcp.pop %v2436
    %v2457 = vrcp.pop %v2439
    %v2458 = vrcp.pop %v2442
    %v2459 = vrcp.pop %v2445
    %v2460 = vrcp.pop %v2448
    %v2461 = vrcp.pop %v2451
    %v2462 = vrcp.pop %v2454
    %v2463 = vmul.f32 %v2416, %v2455
    %v2464 = vmul.f32 %v2418, %v2456
    %v2465 = vmul.f32 %v2420, %v2457
    %v2466 = vmul.f32 %v2422, %v2458
    %v2467 = vmul.f32 %v2424, %v2459
    %v2468 = vmul.f32 %v2426, %v2460
    %v2469 = vmul.f32 %v2428, %v2461
    %v2470 = vmul.f32 %v2430, %v2462
    %v2471 = vpack.c.bf16 %v2464, %v2463
    %v2472 = vpack.c.bf16 %v2466, %v2465
    %v2473 = vpack.c.bf16 %v2468, %v2467
    %v2474 = vpack.c.bf16 %v2470, %v2469
    %2475 = vrot.lane.b32.xlu0 %v455, 80
    %v2476 = vpop.permute.xlu0 %2475
    %v2479 = vsel %vm465, %v2471, 0
    %2481 = vmatprep.subr.bf16.mxu0 0
    %2482 = vmatpush1.bf16.msra.mxu0 %v2476
    %2483 = vmatprep.subr.bf16.mxu0 0
    %2484 = vmatpush1.bf16.msra.mxu0 0
    %2485 = vmatprep.subr.bf16.mxu0 0
    %2486 = vmatpush1.bf16.msra.mxu0 0
    %2487 = vmatprep.subr.bf16.mxu0 0
    %2488 = vmatpush1.bf16.msra.mxu0 0
    %2489 = vmatprep.subr.bf16.mxu0 0
    %2490 = vmatpush1.bf16.msra.mxu0 0
    %2491 = vmatprep.subr.bf16.mxu0 0
    %2492 = vmatpush1.bf16.msra.mxu0 0
    %2493 = vmatprep.subr.bf16.mxu0 0
    %2494 = vmatpush1.bf16.msra.mxu0 0
    %2495 = vmatprep.subr.bf16.mxu0 0
    %2496 = vmatpush1.bf16.msra.mxu0 0
    %2497 = vmatprep.subr.bf16.mxu0 0
    %2498 = vmatpush1.bf16.msra.mxu0 0
    %2499 = vmatprep.subr.bf16.mxu0 0
    %2500 = vmatpush1.bf16.msra.mxu0 0
    %2501 = vmatprep.subr.bf16.mxu0 0
    %2502 = vmatpush1.bf16.msra.mxu0 0
    %2503 = vmatprep.subr.bf16.mxu0 0
    %2504 = vmatpush1.bf16.msra.mxu0 0
    %2505 = vmatprep.subr.bf16.mxu0 0
    %2506 = vmatpush1.bf16.msra.mxu0 0
    %2507 = vmatprep.subr.bf16.mxu0 0
    %2508 = vmatpush1.bf16.msra.mxu0 0
    %2509 = vmatprep.subr.bf16.mxu0 0
    %2510 = vmatpush1.bf16.msra.mxu0 0
    %2511 = vmatprep.subr.bf16.mxu0 0
    %2512 = vmatpush1.bf16.msra.mxu0 0
    %2513 = vmatprep.mubr.bf16.mxu0 0
    %2514 = vmatmul.mubr.bf16.gmra.mrb[0].mxu0 %v2479
    %v2515 = vpop.f32.mrb[0].mxu0
    %v2516 = vadd.f32 0.0, %v2515
    %v2517 = vpop.f32.mrb[0].mxu0
    %v2518 = vpop.f32.mrb[0].mxu0
    %v2519 = vadd.f32 0.0, %v2518
    %v2520 = vpop.f32.mrb[0].mxu0
    %2521 = vdwg.mxu0
    %2522 = vrot.lane.b32.xlu0 %v458, 80
    %v2523 = vpop.permute.xlu0 %2522
    %v2526 = vsel %vm465, %v2472, 0
    %2528 = vmatprep.subr.bf16.mxu0 0
    %2529 = vmatpush1.bf16.msra.mxu0 %v2523
    %2530 = vmatprep.subr.bf16.mxu0 0
    %2531 = vmatpush1.bf16.msra.mxu0 0
    %2532 = vmatprep.subr.bf16.mxu0 0
    %2533 = vmatpush1.bf16.msra.mxu0 0
    %2534 = vmatprep.subr.bf16.mxu0 0
    %2535 = vmatpush1.bf16.msra.mxu0 0
    %2536 = vmatprep.subr.bf16.mxu0 0
    %2537 = vmatpush1.bf16.msra.mxu0 0
    %2538 = vmatprep.subr.bf16.mxu0 0
    %2539 = vmatpush1.bf16.msra.mxu0 0
    %2540 = vmatprep.subr.bf16.mxu0 0
    %2541 = vmatpush1.bf16.msra.mxu0 0
    %2542 = vmatprep.subr.bf16.mxu0 0
    %2543 = vmatpush1.bf16.msra.mxu0 0
    %2544 = vmatprep.subr.bf16.mxu0 0
    %2545 = vmatpush1.bf16.msra.mxu0 0
    %2546 = vmatprep.subr.bf16.mxu0 0
    %2547 = vmatpush1.bf16.msra.mxu0 0
    %2548 = vmatprep.subr.bf16.mxu0 0
    %2549 = vmatpush1.bf16.msra.mxu0 0
    %2550 = vmatprep.subr.bf16.mxu0 0
    %2551 = vmatpush1.bf16.msra.mxu0 0
    %2552 = vmatprep.subr.bf16.mxu0 0
    %2553 = vmatpush1.bf16.msra.mxu0 0
    %2554 = vmatprep.subr.bf16.mxu0 0
    %2555 = vmatpush1.bf16.msra.mxu0 0
    %2556 = vmatprep.subr.bf16.mxu0 0
    %2557 = vmatpush1.bf16.msra.mxu0 0
    %2558 = vmatprep.subr.bf16.mxu0 0
    %2559 = vmatpush1.bf16.msra.mxu0 0
    %2560 = vmatprep.mubr.bf16.mxu0 0
    %2561 = vmatmul.mubr.bf16.gmra.mrb[0].mxu0 %v2526
    %v2562 = vpop.f32.mrb[0].mxu0
    %v2563 = vadd.f32 0.0, %v2562
    %v2564 = vpop.f32.mrb[0].mxu0
    %v2565 = vpop.f32.mrb[0].mxu0
    %v2566 = vadd.f32 0.0, %v2565
    %v2567 = vpop.f32.mrb[0].mxu0
    %2568 = vdwg.mxu0
    %2569 = vrot.lane.b32.xlu0 %v461, 80
    %v2570 = vpop.permute.xlu0 %2569
    %v2573 = vsel %vm465, %v2473, 0
    %2575 = vmatprep.subr.bf16.mxu0 0
    %2576 = vmatpush1.bf16.msra.mxu0 %v2570
    %2577 = vmatprep.subr.bf16.mxu0 0
    %2578 = vmatpush1.bf16.msra.mxu0 0
    %2579 = vmatprep.subr.bf16.mxu0 0
    %2580 = vmatpush1.bf16.msra.mxu0 0
    %2581 = vmatprep.subr.bf16.mxu0 0
    %2582 = vmatpush1.bf16.msra.mxu0 0
    %2583 = vmatprep.subr.bf16.mxu0 0
    %2584 = vmatpush1.bf16.msra.mxu0 0
    %2585 = vmatprep.subr.bf16.mxu0 0
    %2586 = vmatpush1.bf16.msra.mxu0 0
    %2587 = vmatprep.subr.bf16.mxu0 0
    %2588 = vmatpush1.bf16.msra.mxu0 0
    %2589 = vmatprep.subr.bf16.mxu0 0
    %2590 = vmatpush1.bf16.msra.mxu0 0
    %2591 = vmatprep.subr.bf16.mxu0 0
    %2592 = vmatpush1.bf16.msra.mxu0 0
    %2593 = vmatprep.subr.bf16.mxu0 0
    %2594 = vmatpush1.bf16.msra.mxu0 0
    %2595 = vmatprep.subr.bf16.mxu0 0
    %2596 = vmatpush1.bf16.msra.mxu0 0
    %2597 = vmatprep.subr.bf16.mxu0 0
    %2598 = vmatpush1.bf16.msra.mxu0 0
    %2599 = vmatprep.subr.bf16.mxu0 0
    %2600 = vmatpush1.bf16.msra.mxu0 0
    %2601 = vmatprep.subr.bf16.mxu0 0
    %2602 = vmatpush1.bf16.msra.mxu0 0
    %2603 = vmatprep.subr.bf16.mxu0 0
    %2604 = vmatpush1.bf16.msra.mxu0 0
    %2605 = vmatprep.subr.bf16.mxu0 0
    %2606 = vmatpush1.bf16.msra.mxu0 0
    %2607 = vmatprep.mubr.bf16.mxu0 0
    %2608 = vmatmul.mubr.bf16.gmra.mrb[0].mxu0 %v2573
    %v2609 = vpop.f32.mrb[0].mxu0
    %v2610 = vadd.f32 0.0, %v2609
    %v2611 = vpop.f32.mrb[0].mxu0
    %v2612 = vpop.f32.mrb[0].mxu0
    %v2613 = vadd.f32 0.0, %v2612
    %v2614 = vpop.f32.mrb[0].mxu0
    %2615 = vdwg.mxu0
    %2616 = vrot.lane.b32.xlu0 %v464, 80
    %v2617 = vpop.permute.xlu0 %2616
    %v2620 = vsel %vm465, %v2474, 0
    %2622 = vmatprep.subr.bf16.mxu0 0
    %2623 = vmatpush1.bf16.msra.mxu0 %v2617
    %2624 = vmatprep.subr.bf16.mxu0 0
    %2625 = vmatpush1.bf16.msra.mxu0 0
    %2626 = vmatprep.subr.bf16.mxu0 0
    %2627 = vmatpush1.bf16.msra.mxu0 0
    %2628 = vmatprep.subr.bf16.mxu0 0
    %2629 = vmatpush1.bf16.msra.mxu0 0
    %2630 = vmatprep.subr.bf16.mxu0 0
    %2631 = vmatpush1.bf16.msra.mxu0 0
    %2632 = vmatprep.subr.bf16.mxu0 0
    %2633 = vmatpush1.bf16.msra.mxu0 0
    %2634 = vmatprep.subr.bf16.mxu0 0
    %2635 = vmatpush1.bf16.msra.mxu0 0
    %2636 = vmatprep.subr.bf16.mxu0 0
    %2637 = vmatpush1.bf16.msra.mxu0 0
    %2638 = vmatprep.subr.bf16.mxu0 0
    %2639 = vmatpush1.bf16.msra.mxu0 0
    %2640 = vmatprep.subr.bf16.mxu0 0
    %2641 = vmatpush1.bf16.msra.mxu0 0
    %2642 = vmatprep.subr.bf16.mxu0 0
    %2643 = vmatpush1.bf16.msra.mxu0 0
    %2644 = vmatprep.subr.bf16.mxu0 0
    %2645 = vmatpush1.bf16.msra.mxu0 0
    %2646 = vmatprep.subr.bf16.mxu0 0
    %2647 = vmatpush1.bf16.msra.mxu0 0
    %2648 = vmatprep.subr.bf16.mxu0 0
    %2649 = vmatpush1.bf16.msra.mxu0 0
    %2650 = vmatprep.subr.bf16.mxu0 0
    %2651 = vmatpush1.bf16.msra.mxu0 0
    %2652 = vmatprep.subr.bf16.mxu0 0
    %2653 = vmatpush1.bf16.msra.mxu0 0
    %2654 = vmatprep.mubr.bf16.mxu0 0
    %2655 = vmatmul.mubr.bf16.gmra.mrb[0].mxu0 %v2620
    %v2656 = vpop.f32.mrb[0].mxu0
    %v2657 = vadd.f32 0.0, %v2656
    %v2658 = vpop.f32.mrb[0].mxu0
    %v2659 = vpop.f32.mrb[0].mxu0
    %v2660 = vadd.f32 0.0, %v2659
    %v2661 = vpop.f32.mrb[0].mxu0
    %2662 = vdwg.mxu0
    %v2663 = vpack.c.bf16 %v2519, %v2516
    %v2664 = vpack.c.bf16 %v2566, %v2563
    %v2665 = vpack.c.bf16 %v2613, %v2610
    %v2666 = vpack.c.bf16 %v2660, %v2657
    %s2667 = scalar_lea.vmem [#allocation7], 24
    %v2668 = vld [vmem:[%s2667] sm:$0xf]
    %v2669 = vld [vmem:[%s2667 + $0x4] sm:$0xf]
    %v2672 = vunpack.c.l.b16 %v2668
    %v2673 = vunpack.c.l.b16 %v2669
    %v2674 = vpack.c.b16 %v2673, %v2672
    %v2677 = vsel %vm465, %v2663, 0
    %v2680 = vsel %vm465, %v2664, 0
    %v2683 = vsel %vm465, %v2665, 0
    %v2686 = vsel %vm465, %v2666, 0
    %2688 = vmatprep.subr.bf16.mxu0 0
    %2689 = vmatpush1.bf16.msra.mxu0 %v2674
    %2690 = vmatprep.subr.bf16.mxu0 0
    %2691 = vmatpush1.bf16.msra.mxu0 0
    %2692 = vmatprep.subr.bf16.mxu0 0
    %2693 = vmatpush1.bf16.msra.mxu0 0
    %2694 = vmatprep.subr.bf16.mxu0 0
    %2695 = vmatpush1.bf16.msra.mxu0 0
    %2696 = vmatprep.subr.bf16.mxu0 0
    %2697 = vmatpush1.bf16.msra.mxu0 0
    %2698 = vmatprep.subr.bf16.mxu0 0
    %2699 = vmatpush1.bf16.msra.mxu0 0
    %2700 = vmatprep.subr.bf16.mxu0 0
    %2701 = vmatpush1.bf16.msra.mxu0 0
    %2702 = vmatprep.subr.bf16.mxu0 0
    %2703 = vmatpush1.bf16.msra.mxu0 0
    %2704 = vmatprep.subr.bf16.mxu0 0
    %2705 = vmatpush1.bf16.msra.mxu0 0
    %2706 = vmatprep.subr.bf16.mxu0 0
    %2707 = vmatpush1.bf16.msra.mxu0 0
    %2708 = vmatprep.subr.bf16.mxu0 0
    %2709 = vmatpush1.bf16.msra.mxu0 0
    %2710 = vmatprep.subr.bf16.mxu0 0
    %2711 = vmatpush1.bf16.msra.mxu0 0
    %2712 = vmatprep.subr.bf16.mxu0 0
    %2713 = vmatpush1.bf16.msra.mxu0 0
    %2714 = vmatprep.subr.bf16.mxu0 0
    %2715 = vmatpush1.bf16.msra.mxu0 0
    %2716 = vmatprep.subr.bf16.mxu0 0
    %2717 = vmatpush1.bf16.msra.mxu0 0
    %2718 = vmatprep.subr.bf16.mxu0 0
    %2719 = vmatpush1.bf16.msra.mxu0 0
    %2720 = vmatprep.mubr.bf16.mxu0 0
    %2721 = vmatmul.mubr.bf16.gmra.mrb[0].mxu0 %v2677
    %v2722 = vpop.f32.mrb[0].mxu0
    %v2723 = vadd.f32 0.0, %v2722
    %v2724 = vpop.f32.mrb[0].mxu0
    %v2725 = vpop.f32.mrb[0].mxu0
    %v2726 = vadd.f32 0.0, %v2725
    %v2727 = vpop.f32.mrb[0].mxu0
    %2728 = vmatprep.mubr.bf16.mxu0 0
    %2729 = vmatmul.mubr.bf16.gmra.mrb[0].mxu0 %v2680
    %v2730 = vpop.f32.mrb[0].mxu0
    %v2731 = vadd.f32 0.0, %v2730
    %v2732 = vpop.f32.mrb[0].mxu0
    %v2733 = vpop.f32.mrb[0].mxu0
    %v2734 = vadd.f32 0.0, %v2733
    %v2735 = vpop.f32.mrb[0].mxu0
    %2736 = vmatprep.mubr.bf16.mxu0 0
    %2737 = vmatmul.mubr.bf16.gmra.mrb[0].mxu0 %v2683
    %v2738 = vpop.f32.mrb[0].mxu0
    %v2739 = vadd.f32 0.0, %v2738
    %v2740 = vpop.f32.mrb[0].mxu0
    %v2741 = vpop.f32.mrb[0].mxu0
    %v2742 = vadd.f32 0.0, %v2741
    %v2743 = vpop.f32.mrb[0].mxu0
    %2744 = vmatprep.mubr.bf16.mxu0 0
    %2745 = vmatmul.mubr.bf16.gmra.mrb[0].mxu0 %v2686
    %v2746 = vpop.f32.mrb[0].mxu0
    %v2747 = vadd.f32 0.0, %v2746
    %v2748 = vpop.f32.mrb[0].mxu0
    %v2749 = vpop.f32.mrb[0].mxu0
    %v2750 = vadd.f32 0.0, %v2749
    %v2751 = vpop.f32.mrb[0].mxu0
    %2752 = vdwg.mxu0
    %v2753 = vadd.f32 %v2171, %v2723
    %v2754 = vadd.f32 %v2172, %v2726
    %v2755 = vadd.f32 %v2173, %v2731
    %v2756 = vadd.f32 %v2174, %v2734
    %v2757 = vadd.f32 %v2175, %v2739
    %v2758 = vadd.f32 %v2176, %v2742
    %v2759 = vadd.f32 %v2177, %v2747
    %v2760 = vadd.f32 %v2178, %v2750
    %2761 = vrot.lane.b32.xlu0 %v453, 64
    %v2762 = vpop.permute.xlu0 %2761
    %2763 = vrot.lane.b32.xlu0 %v454, 64
    %v2764 = vpop.permute.xlu0 %2763
    %v2766 = vsel %vm465, %v2762, 0
    %v2769 = vsel %vm465, %v2764, 0
    %2771 = vmatprep.subr.bf16.mxu0 0
    %2772 = vmatpush1.bf16.xpose.msra.mxu0 %v2769
    %2773 = vmatprep.subr.bf16.mxu0 0
    %2774 = vmatpush1.bf16.xpose.msra.mxu0 0
    %2775 = vmatprep.subr.bf16.mxu0 0
    %2776 = vmatpush1.bf16.xpose.msra.mxu0 0
    %2777 = vmatprep.subr.bf16.mxu0 0
    %2778 = vmatpush1.bf16.xpose.msra.mxu0 0
    %2779 = vmatprep.subr.bf16.mxu0 0
    %2780 = vmatpush1.bf16.xpose.msra.mxu0 0
    %2781 = vmatprep.subr.bf16.mxu0 0
    %2782 = vmatpush1.bf16.xpose.msra.mxu0 0
    %2783 = vmatprep.subr.bf16.mxu0 0
    %2784 = vmatpush1.bf16.xpose.msra.mxu0 0
    %2785 = vmatprep.subr.bf16.mxu0 0
    %2786 = vmatpush1.bf16.xpose.msra.mxu0 0
    %2787 = vmatprep.subr.bf16.mxu0 0
    %2788 = vmatpush1.bf16.xpose.msra.mxu0 0
    %2789 = vmatprep.subr.bf16.mxu0 0
    %2790 = vmatpush1.bf16.xpose.msra.mxu0 0
    %2791 = vmatprep.subr.bf16.mxu0 0
    %2792 = vmatpush1.bf16.xpose.msra.mxu0 0
    %2793 = vmatprep.subr.bf16.mxu0 0
    %2794 = vmatpush1.bf16.xpose.msra.mxu0 0
    %2795 = vmatprep.subr.bf16.mxu0 0
    %2796 = vmatpush1.bf16.xpose.msra.mxu0 0
    %2797 = vmatprep.subr.bf16.mxu0 0
    %2798 = vmatpush1.bf16.xpose.msra.mxu0 0
    %2799 = vmatprep.subr.bf16.mxu0 0
    %2800 = vmatpush1.bf16.xpose.msra.mxu0 0
    %2801 = vmatprep.subr.bf16.mxu0 0
    %2802 = vmatpush1.bf16.xpose.msra.mxu0 0
    %2803 = vmatprep.mubr.bf16.mxu0 0
    %2804 = vmatmul.mubr.bf16.gmra.mrb[0].mxu0 %v2766
    %v2805 = vpop.f32.mrb[0].mxu0
    %v2806 = vadd.f32 0.0, %v2805
    %v2807 = vpop.f32.mrb[0].mxu0
    %v2808 = vpop.f32.mrb[0].mxu0
    %v2809 = vadd.f32 0.0, %v2808
    %v2810 = vpop.f32.mrb[0].mxu0
    %2811 = vdwg.mxu0
    %2812 = vrot.lane.b32.xlu0 %v456, 64
    %v2813 = vpop.permute.xlu0 %2812
    %2814 = vrot.lane.b32.xlu0 %v457, 64
    %v2815 = vpop.permute.xlu0 %2814
    %v2817 = vsel %vm465, %v2813, 0
    %v2820 = vsel %vm465, %v2815, 0
    %2822 = vmatprep.subr.bf16.mxu0 0
    %2823 = vmatpush1.bf16.xpose.msra.mxu0 %v2820
    %2824 = vmatprep.subr.bf16.mxu0 0
    %2825 = vmatpush1.bf16.xpose.msra.mxu0 0
    %2826 = vmatprep.subr.bf16.mxu0 0
    %2827 = vmatpush1.bf16.xpose.msra.mxu0 0
    %2828 = vmatprep.subr.bf16.mxu0 0
    %2829 = vmatpush1.bf16.xpose.msra.mxu0 0
    %2830 = vmatprep.subr.bf16.mxu0 0
    %2831 = vmatpush1.bf16.xpose.msra.mxu0 0
    %2832 = vmatprep.subr.bf16.mxu0 0
    %2833 = vmatpush1.bf16.xpose.msra.mxu0 0
    %2834 = vmatprep.subr.bf16.mxu0 0
    %2835 = vmatpush1.bf16.xpose.msra.mxu0 0
    %2836 = vmatprep.subr.bf16.mxu0 0
    %2837 = vmatpush1.bf16.xpose.msra.mxu0 0
    %2838 = vmatprep.subr.bf16.mxu0 0
    %2839 = vmatpush1.bf16.xpose.msra.mxu0 0
    %2840 = vmatprep.subr.bf16.mxu0 0
    %2841 = vmatpush1.bf16.xpose.msra.mxu0 0
    %2842 = vmatprep.subr.bf16.mxu0 0
    %2843 = vmatpush1.bf16.xpose.msra.mxu0 0
    %2844 = vmatprep.subr.bf16.mxu0 0
    %2845 = vmatpush1.bf16.xpose.msra.mxu0 0
    %2846 = vmatprep.subr.bf16.mxu0 0
    %2847 = vmatpush1.bf16.xpose.msra.mxu0 0
    %2848 = vmatprep.subr.bf16.mxu0 0
    %2849 = vmatpush1.bf16.xpose.msra.mxu0 0
    %2850 = vmatprep.subr.bf16.mxu0 0
    %2851 = vmatpush1.bf16.xpose.msra.mxu0 0
    %2852 = vmatprep.subr.bf16.mxu0 0
    %2853 = vmatpush1.bf16.xpose.msra.mxu0 0
    %2854 = vmatprep.mubr.bf16.mxu0 0
    %2855 = vmatmul.mubr.bf16.gmra.mrb[0].mxu0 %v2817
    %v2856 = vpop.f32.mrb[0].mxu0
    %v2857 = vadd.f32 0.0, %v2856
    %v2858 = vpop.f32.mrb[0].mxu0
    %v2859 = vpop.f32.mrb[0].mxu0
    %v2860 = vadd.f32 0.0, %v2859
    %v2861 = vpop.f32.mrb[0].mxu0
    %2862 = vdwg.mxu0
    %2863 = vrot.lane.b32.xlu0 %v459, 64
    %v2864 = vpop.permute.xlu0 %2863
    %2865 = vrot.lane.b32.xlu0 %v460, 64
    %v2866 = vpop.permute.xlu0 %2865
    %v2868 = vsel %vm465, %v2864, 0
    %v2871 = vsel %vm465, %v2866, 0
    %2873 = vmatprep.subr.bf16.mxu0 0
    %2874 = vmatpush1.bf16.xpose.msra.mxu0 %v2871
    %2875 = vmatprep.subr.bf16.mxu0 0
    %2876 = vmatpush1.bf16.xpose.msra.mxu0 0
    %2877 = vmatprep.subr.bf16.mxu0 0
    %2878 = vmatpush1.bf16.xpose.msra.mxu0 0
    %2879 = vmatprep.subr.bf16.mxu0 0
    %2880 = vmatpush1.bf16.xpose.msra.mxu0 0
    %2881 = vmatprep.subr.bf16.mxu0 0
    %2882 = vmatpush1.bf16.xpose.msra.mxu0 0
    %2883 = vmatprep.subr.bf16.mxu0 0
    %2884 = vmatpush1.bf16.xpose.msra.mxu0 0
    %2885 = vmatprep.subr.bf16.mxu0 0
    %2886 = vmatpush1.bf16.xpose.msra.mxu0 0
    %2887 = vmatprep.subr.bf16.mxu0 0
    %2888 = vmatpush1.bf16.xpose.msra.mxu0 0
    %2889 = vmatprep.subr.bf16.mxu0 0
    %2890 = vmatpush1.bf16.xpose.msra.mxu0 0
    %2891 = vmatprep.subr.bf16.mxu0 0
    %2892 = vmatpush1.bf16.xpose.msra.mxu0 0
    %2893 = vmatprep.subr.bf16.mxu0 0
    %2894 = vmatpush1.bf16.xpose.msra.mxu0 0
    %2895 = vmatprep.subr.bf16.mxu0 0
    %2896 = vmatpush1.bf16.xpose.msra.mxu0 0
    %2897 = vmatprep.subr.bf16.mxu0 0
    %2898 = vmatpush1.bf16.xpose.msra.mxu0 0
    %2899 = vmatprep.subr.bf16.mxu0 0
    %2900 = vmatpush1.bf16.xpose.msra.mxu0 0
    %2901 = vmatprep.subr.bf16.mxu0 0
    %2902 = vmatpush1.bf16.xpose.msra.mxu0 0
    %2903 = vmatprep.subr.bf16.mxu0 0
    %2904 = vmatpush1.bf16.xpose.msra.mxu0 0
    %2905 = vmatprep.mubr.bf16.mxu0 0
    %2906 = vmatmul.mubr.bf16.gmra.mrb[0].mxu0 %v2868
    %v2907 = vpop.f32.mrb[0].mxu0
    %v2908 = vadd.f32 0.0, %v2907
    %v2909 = vpop.f32.mrb[0].mxu0
    %v2910 = vpop.f32.mrb[0].mxu0
    %v2911 = vadd.f32 0.0, %v2910
    %v2912 = vpop.f32.mrb[0].mxu0
    %2913 = vdwg.mxu0
    %2914 = vrot.lane.b32.xlu0 %v462, 64
    %v2915 = vpop.permute.xlu0 %2914
    %2916 = vrot.lane.b32.xlu0 %v463, 64
    %v2917 = vpop.permute.xlu0 %2916
    %v2919 = vsel %vm465, %v2915, 0
    %v2922 = vsel %vm465, %v2917, 0
    %2924 = vmatprep.subr.bf16.mxu0 0
    %2925 = vmatpush1.bf16.xpose.msra.mxu0 %v2922
    %2926 = vmatprep.subr.bf16.mxu0 0
    %2927 = vmatpush1.bf16.xpose.msra.mxu0 0
    %2928 = vmatprep.subr.bf16.mxu0 0
    %2929 = vmatpush1.bf16.xpose.msra.mxu0 0
    %2930 = vmatprep.subr.bf16.mxu0 0
    %2931 = vmatpush1.bf16.xpose.msra.mxu0 0
    %2932 = vmatprep.subr.bf16.mxu0 0
    %2933 = vmatpush1.bf16.xpose.msra.mxu0 0
    %2934 = vmatprep.subr.bf16.mxu0 0
    %2935 = vmatpush1.bf16.xpose.msra.mxu0 0
    %2936 = vmatprep.subr.bf16.mxu0 0
    %2937 = vmatpush1.bf16.xpose.msra.mxu0 0
    %2938 = vmatprep.subr.bf16.mxu0 0
    %2939 = vmatpush1.bf16.xpose.msra.mxu0 0
    %2940 = vmatprep.subr.bf16.mxu0 0
    %2941 = vmatpush1.bf16.xpose.msra.mxu0 0
    %2942 = vmatprep.subr.bf16.mxu0 0
    %2943 = vmatpush1.bf16.xpose.msra.mxu0 0
    %2944 = vmatprep.subr.bf16.mxu0 0
    %2945 = vmatpush1.bf16.xpose.msra.mxu0 0
    %2946 = vmatprep.subr.bf16.mxu0 0
    %2947 = vmatpush1.bf16.xpose.msra.mxu0 0
    %2948 = vmatprep.subr.bf16.mxu0 0
    %2949 = vmatpush1.bf16.xpose.msra.mxu0 0
    %2950 = vmatprep.subr.bf16.mxu0 0
    %2951 = vmatpush1.bf16.xpose.msra.mxu0 0
    %2952 = vmatprep.subr.bf16.mxu0 0
    %2953 = vmatpush1.bf16.xpose.msra.mxu0 0
    %2954 = vmatprep.subr.bf16.mxu0 0
    %2955 = vmatpush1.bf16.xpose.msra.mxu0 0
    %2956 = vmatprep.mubr.bf16.mxu0 0
    %2957 = vmatmul.mubr.bf16.gmra.mrb[0].mxu0 %v2919
    %v2958 = vpop.f32.mrb[0].mxu0
    %v2959 = vadd.f32 0.0, %v2958
    %v2960 = vpop.f32.mrb[0].mxu0
    %v2961 = vpop.f32.mrb[0].mxu0
    %v2962 = vadd.f32 0.0, %v2961
    %v2963 = vpop.f32.mrb[0].mxu0
    %2964 = vdwg.mxu0
    %v2965 = vsel %vm465, %v2806, -inf
    %2966 = vmax.xlane.f32.xlu0 %v2965
    %v2967 = vpop.xlane.xlu0 %2966
    %v2968 = vsel %vm465, %v2809, -inf
    %2969 = vmax.xlane.f32.xlu0 %v2968
    %v2970 = vpop.xlane.xlu0 %2969
    %v2971 = vsel %vm465, %v2857, -inf
    %2972 = vmax.xlane.f32.xlu0 %v2971
    %v2973 = vpop.xlane.xlu0 %2972
    %v2974 = vsel %vm465, %v2860, -inf
    %2975 = vmax.xlane.f32.xlu0 %v2974
    %v2976 = vpop.xlane.xlu0 %2975
    %v2977 = vsel %vm465, %v2908, -inf
    %2978 = vmax.xlane.f32.xlu0 %v2977
    %v2979 = vpop.xlane.xlu0 %2978
    %v2980 = vsel %vm465, %v2911, -inf
    %2981 = vmax.xlane.f32.xlu0 %v2980
    %v2982 = vpop.xlane.xlu0 %2981
    %v2983 = vsel %vm465, %v2959, -inf
    %2984 = vmax.xlane.f32.xlu0 %v2983
    %v2985 = vpop.xlane.xlu0 %2984
    %v2986 = vsel %vm465, %v2962, -inf
    %2987 = vmax.xlane.f32.xlu0 %v2986
    %v2988 = vpop.xlane.xlu0 %2987
    %v2989 = vsub.f32 %v2806, %v2967
    %v2990 = vsub.f32 %v2809, %v2970
    %v2991 = vsub.f32 %v2857, %v2973
    %v2992 = vsub.f32 %v2860, %v2976
    %v2993 = vsub.f32 %v2908, %v2979
    %v2994 = vsub.f32 %v2911, %v2982
    %v2995 = vsub.f32 %v2959, %v2985
    %v2996 = vsub.f32 %v2962, %v2988
    %v2997 = vmul.f32 %v2989, 1.442695
    %v2998 = vpow.pop %v2997
    %v2999 = vmul.f32 %v2990, 1.442695
    %v3000 = vpow.pop %v2999
    %v3001 = vmul.f32 %v2991, 1.442695
    %v3002 = vpow.pop %v3001
    %v3003 = vmul.f32 %v2992, 1.442695
    %v3004 = vpow.pop %v3003
    %v3005 = vmul.f32 %v2993, 1.442695
    %v3006 = vpow.pop %v3005
    %v3007 = vmul.f32 %v2994, 1.442695
    %v3008 = vpow.pop %v3007
    %v3009 = vmul.f32 %v2995, 1.442695
    %v3010 = vpow.pop %v3009
    %v3011 = vmul.f32 %v2996, 1.442695
    %v3012 = vpow.pop %v3011
    %v3013 = vsel %vm465, %v2998, 0.0
    %3014 = vadd.xlane.f32.xlu0 %v3013
    %v3015 = vpop.xlane.xlu0 %3014
    %v3016 = vsel %vm465, %v3000, 0.0
    %3017 = vadd.xlane.f32.xlu0 %v3016
    %v3018 = vpop.xlane.xlu0 %3017
    %v3019 = vsel %vm465, %v3002, 0.0
    %3020 = vadd.xlane.f32.xlu0 %v3019
    %v3021 = vpop.xlane.xlu0 %3020
    %v3022 = vsel %vm465, %v3004, 0.0
    %3023 = vadd.xlane.f32.xlu0 %v3022
    %v3024 = vpop.xlane.xlu0 %3023
    %v3025 = vsel %vm465, %v3006, 0.0
    %3026 = vadd.xlane.f32.xlu0 %v3025
    %v3027 = vpop.xlane.xlu0 %3026
    %v3028 = vsel %vm465, %v3008, 0.0
    %3029 = vadd.xlane.f32.xlu0 %v3028
    %v3030 = vpop.xlane.xlu0 %3029
    %v3031 = vsel %vm465, %v3010, 0.0
    %3032 = vadd.xlane.f32.xlu0 %v3031
    %v3033 = vpop.xlane.xlu0 %3032
    %v3034 = vsel %vm465, %v3012, 0.0
    %3035 = vadd.xlane.f32.xlu0 %v3034
    %v3036 = vpop.xlane.xlu0 %3035
    %v3037 = vrcp.pop %v3015
    %v3038 = vrcp.pop %v3018
    %v3039 = vrcp.pop %v3021
    %v3040 = vrcp.pop %v3024
    %v3041 = vrcp.pop %v3027
    %v3042 = vrcp.pop %v3030
    %v3043 = vrcp.pop %v3033
    %v3044 = vrcp.pop %v3036
    %v3045 = vmul.f32 %v2998, %v3037
    %v3046 = vmul.f32 %v3000, %v3038
    %v3047 = vmul.f32 %v3002, %v3039
    %v3048 = vmul.f32 %v3004, %v3040
    %v3049 = vmul.f32 %v3006, %v3041
    %v3050 = vmul.f32 %v3008, %v3042
    %v3051 = vmul.f32 %v3010, %v3043
    %v3052 = vmul.f32 %v3012, %v3044
    %v3053 = vpack.c.bf16 %v3046, %v3045
    %v3054 = vpack.c.bf16 %v3048, %v3047
    %v3055 = vpack.c.bf16 %v3050, %v3049
    %v3056 = vpack.c.bf16 %v3052, %v3051
    %3057 = vrot.lane.b32.xlu0 %v455, 64
    %v3058 = vpop.permute.xlu0 %3057
    %v3061 = vsel %vm465, %v3053, 0
    %3063 = vmatprep.subr.bf16.mxu0 0
    %3064 = vmatpush1.bf16.msra.mxu0 %v3058
    %3065 = vmatprep.subr.bf16.mxu0 0
    %3066 = vmatpush1.bf16.msra.mxu0 0
    %3067 = vmatprep.subr.bf16.mxu0 0
    %3068 = vmatpush1.bf16.msra.mxu0 0
    %3069 = vmatprep.subr.bf16.mxu0 0
    %3070 = vmatpush1.bf16.msra.mxu0 0
    %3071 = vmatprep.subr.bf16.mxu0 0
    %3072 = vmatpush1.bf16.msra.mxu0 0
    %3073 = vmatprep.subr.bf16.mxu0 0
    %3074 = vmatpush1.bf16.msra.mxu0 0
    %3075 = vmatprep.subr.bf16.mxu0 0
    %3076 = vmatpush1.bf16.msra.mxu0 0
    %3077 = vmatprep.subr.bf16.mxu0 0
    %3078 = vmatpush1.bf16.msra.mxu0 0
    %3079 = vmatprep.subr.bf16.mxu0 0
    %3080 = vmatpush1.bf16.msra.mxu0 0
    %3081 = vmatprep.subr.bf16.mxu0 0
    %3082 = vmatpush1.bf16.msra.mxu0 0
    %3083 = vmatprep.subr.bf16.mxu0 0
    %3084 = vmatpush1.bf16.msra.mxu0 0
    %3085 = vmatprep.subr.bf16.mxu0 0
    %3086 = vmatpush1.bf16.msra.mxu0 0
    %3087 = vmatprep.subr.bf16.mxu0 0
    %3088 = vmatpush1.bf16.msra.mxu0 0
    %3089 = vmatprep.subr.bf16.mxu0 0
    %3090 = vmatpush1.bf16.msra.mxu0 0
    %3091 = vmatprep.subr.bf16.mxu0 0
    %3092 = vmatpush1.bf16.msra.mxu0 0
    %3093 = vmatprep.subr.bf16.mxu0 0
    %3094 = vmatpush1.bf16.msra.mxu0 0
    %3095 = vmatprep.mubr.bf16.mxu0 0
    %3096 = vmatmul.mubr.bf16.gmra.mrb[0].mxu0 %v3061
    %v3097 = vpop.f32.mrb[0].mxu0
    %v3098 = vadd.f32 0.0, %v3097
    %v3099 = vpop.f32.mrb[0].mxu0
    %v3100 = vpop.f32.mrb[0].mxu0
    %v3101 = vadd.f32 0.0, %v3100
    %v3102 = vpop.f32.mrb[0].mxu0
    %3103 = vdwg.mxu0
    %3104 = vrot.lane.b32.xlu0 %v458, 64
    %v3105 = vpop.permute.xlu0 %3104
    %v3108 = vsel %vm465, %v3054, 0
    %3110 = vmatprep.subr.bf16.mxu0 0
    %3111 = vmatpush1.bf16.msra.mxu0 %v3105
    %3112 = vmatprep.subr.bf16.mxu0 0
    %3113 = vmatpush1.bf16.msra.mxu0 0
    %3114 = vmatprep.subr.bf16.mxu0 0
    %3115 = vmatpush1.bf16.msra.mxu0 0
    %3116 = vmatprep.subr.bf16.mxu0 0
    %3117 = vmatpush1.bf16.msra.mxu0 0
    %3118 = vmatprep.subr.bf16.mxu0 0
    %3119 = vmatpush1.bf16.msra.mxu0 0
    %3120 = vmatprep.subr.bf16.mxu0 0
    %3121 = vmatpush1.bf16.msra.mxu0 0
    %3122 = vmatprep.subr.bf16.mxu0 0
    %3123 = vmatpush1.bf16.msra.mxu0 0
    %3124 = vmatprep.subr.bf16.mxu0 0
    %3125 = vmatpush1.bf16.msra.mxu0 0
    %3126 = vmatprep.subr.bf16.mxu0 0
    %3127 = vmatpush1.bf16.msra.mxu0 0
    %3128 = vmatprep.subr.bf16.mxu0 0
    %3129 = vmatpush1.bf16.msra.mxu0 0
    %3130 = vmatprep.subr.bf16.mxu0 0
    %3131 = vmatpush1.bf16.msra.mxu0 0
    %3132 = vmatprep.subr.bf16.mxu0 0
    %3133 = vmatpush1.bf16.msra.mxu0 0
    %3134 = vmatprep.subr.bf16.mxu0 0
    %3135 = vmatpush1.bf16.msra.mxu0 0
    %3136 = vmatprep.subr.bf16.mxu0 0
    %3137 = vmatpush1.bf16.msra.mxu0 0
    %3138 = vmatprep.subr.bf16.mxu0 0
    %3139 = vmatpush1.bf16.msra.mxu0 0
    %3140 = vmatprep.subr.bf16.mxu0 0
    %3141 = vmatpush1.bf16.msra.mxu0 0
    %3142 = vmatprep.mubr.bf16.mxu0 0
    %3143 = vmatmul.mubr.bf16.gmra.mrb[0].mxu0 %v3108
    %v3144 = vpop.f32.mrb[0].mxu0
    %v3145 = vadd.f32 0.0, %v3144
    %v3146 = vpop.f32.mrb[0].mxu0
    %v3147 = vpop.f32.mrb[0].mxu0
    %v3148 = vadd.f32 0.0, %v3147
    %v3149 = vpop.f32.mrb[0].mxu0
    %3150 = vdwg.mxu0
    %3151 = vrot.lane.b32.xlu0 %v461, 64
    %v3152 = vpop.permute.xlu0 %3151
    %v3155 = vsel %vm465, %v3055, 0
    %3157 = vmatprep.subr.bf16.mxu0 0
    %3158 = vmatpush1.bf16.msra.mxu0 %v3152
    %3159 = vmatprep.subr.bf16.mxu0 0
    %3160 = vmatpush1.bf16.msra.mxu0 0
    %3161 = vmatprep.subr.bf16.mxu0 0
    %3162 = vmatpush1.bf16.msra.mxu0 0
    %3163 = vmatprep.subr.bf16.mxu0 0
    %3164 = vmatpush1.bf16.msra.mxu0 0
    %3165 = vmatprep.subr.bf16.mxu0 0
    %3166 = vmatpush1.bf16.msra.mxu0 0
    %3167 = vmatprep.subr.bf16.mxu0 0
    %3168 = vmatpush1.bf16.msra.mxu0 0
    %3169 = vmatprep.subr.bf16.mxu0 0
    %3170 = vmatpush1.bf16.msra.mxu0 0
    %3171 = vmatprep.subr.bf16.mxu0 0
    %3172 = vmatpush1.bf16.msra.mxu0 0
    %3173 = vmatprep.subr.bf16.mxu0 0
    %3174 = vmatpush1.bf16.msra.mxu0 0
    %3175 = vmatprep.subr.bf16.mxu0 0
    %3176 = vmatpush1.bf16.msra.mxu0 0
    %3177 = vmatprep.subr.bf16.mxu0 0
    %3178 = vmatpush1.bf16.msra.mxu0 0
    %3179 = vmatprep.subr.bf16.mxu0 0
    %3180 = vmatpush1.bf16.msra.mxu0 0
    %3181 = vmatprep.subr.bf16.mxu0 0
    %3182 = vmatpush1.bf16.msra.mxu0 0
    %3183 = vmatprep.subr.bf16.mxu0 0
    %3184 = vmatpush1.bf16.msra.mxu0 0
    %3185 = vmatprep.subr.bf16.mxu0 0
    %3186 = vmatpush1.bf16.msra.mxu0 0
    %3187 = vmatprep.subr.bf16.mxu0 0
    %3188 = vmatpush1.bf16.msra.mxu0 0
    %3189 = vmatprep.mubr.bf16.mxu0 0
    %3190 = vmatmul.mubr.bf16.gmra.mrb[0].mxu0 %v3155
    %v3191 = vpop.f32.mrb[0].mxu0
    %v3192 = vadd.f32 0.0, %v3191
    %v3193 = vpop.f32.mrb[0].mxu0
    %v3194 = vpop.f32.mrb[0].mxu0
    %v3195 = vadd.f32 0.0, %v3194
    %v3196 = vpop.f32.mrb[0].mxu0
    %3197 = vdwg.mxu0
    %3198 = vrot.lane.b32.xlu0 %v464, 64
    %v3199 = vpop.permute.xlu0 %3198
    %v3202 = vsel %vm465, %v3056, 0
    %3204 = vmatprep.subr.bf16.mxu0 0
    %3205 = vmatpush1.bf16.msra.mxu0 %v3199
    %3206 = vmatprep.subr.bf16.mxu0 0
    %3207 = vmatpush1.bf16.msra.mxu0 0
    %3208 = vmatprep.subr.bf16.mxu0 0
    %3209 = vmatpush1.bf16.msra.mxu0 0
    %3210 = vmatprep.subr.bf16.mxu0 0
    %3211 = vmatpush1.bf16.msra.mxu0 0
    %3212 = vmatprep.subr.bf16.mxu0 0
    %3213 = vmatpush1.bf16.msra.mxu0 0
    %3214 = vmatprep.subr.bf16.mxu0 0
    %3215 = vmatpush1.bf16.msra.mxu0 0
    %3216 = vmatprep.subr.bf16.mxu0 0
    %3217 = vmatpush1.bf16.msra.mxu0 0
    %3218 = vmatprep.subr.bf16.mxu0 0
    %3219 = vmatpush1.bf16.msra.mxu0 0
    %3220 = vmatprep.subr.bf16.mxu0 0
    %3221 = vmatpush1.bf16.msra.mxu0 0
    %3222 = vmatprep.subr.bf16.mxu0 0
    %3223 = vmatpush1.bf16.msra.mxu0 0
    %3224 = vmatprep.subr.bf16.mxu0 0
    %3225 = vmatpush1.bf16.msra.mxu0 0
    %3226 = vmatprep.subr.bf16.mxu0 0
    %3227 = vmatpush1.bf16.msra.mxu0 0
    %3228 = vmatprep.subr.bf16.mxu0 0
    %3229 = vmatpush1.bf16.msra.mxu0 0
    %3230 = vmatprep.subr.bf16.mxu0 0
    %3231 = vmatpush1.bf16.msra.mxu0 0
    %3232 = vmatprep.subr.bf16.mxu0 0
    %3233 = vmatpush1.bf16.msra.mxu0 0
    %3234 = vmatprep.subr.bf16.mxu0 0
    %3235 = vmatpush1.bf16.msra.mxu0 0
    %3236 = vmatprep.mubr.bf16.mxu0 0
    %3237 = vmatmul.mubr.bf16.gmra.mrb[0].mxu0 %v3202
    %v3238 = vpop.f32.mrb[0].mxu0
    %v3239 = vadd.f32 0.0, %v3238
    %v3240 = vpop.f32.mrb[0].mxu0
    %v3241 = vpop.f32.mrb[0].mxu0
    %v3242 = vadd.f32 0.0, %v3241
    %v3243 = vpop.f32.mrb[0].mxu0
    %3244 = vdwg.mxu0
    %v3245 = vpack.c.bf16 %v3101, %v3098
    %v3246 = vpack.c.bf16 %v3148, %v3145
    %v3247 = vpack.c.bf16 %v3195, %v3192
    %v3248 = vpack.c.bf16 %v3242, %v3239
    %s3249 = scalar_lea.vmem [#allocation7], 32
    %v3250 = vld [vmem:[%s3249] sm:$0xf]
    %v3251 = vld [vmem:[%s3249 + $0x4] sm:$0xf]
    %v3254 = vunpack.c.l.b16 %v3250
    %v3255 = vunpack.c.l.b16 %v3251
    %v3256 = vpack.c.b16 %v3255, %v3254
    %v3259 = vsel %vm465, %v3245, 0
    %v3262 = vsel %vm465, %v3246, 0
    %v3265 = vsel %vm465, %v3247, 0
    %v3268 = vsel %vm465, %v3248, 0
    %3270 = vmatprep.subr.bf16.mxu0 0
    %3271 = vmatpush1.bf16.msra.mxu0 %v3256
    %3272 = vmatprep.subr.bf16.mxu0 0
    %3273 = vmatpush1.bf16.msra.mxu0 0
    %3274 = vmatprep.subr.bf16.mxu0 0
    %3275 = vmatpush1.bf16.msra.mxu0 0
    %3276 = vmatprep.subr.bf16.mxu0 0
    %3277 = vmatpush1.bf16.msra.mxu0 0
    %3278 = vmatprep.subr.bf16.mxu0 0
    %3279 = vmatpush1.bf16.msra.mxu0 0
    %3280 = vmatprep.subr.bf16.mxu0 0
    %3281 = vmatpush1.bf16.msra.mxu0 0
    %3282 = vmatprep.subr.bf16.mxu0 0
    %3283 = vmatpush1.bf16.msra.mxu0 0
    %3284 = vmatprep.subr.bf16.mxu0 0
    %3285 = vmatpush1.bf16.msra.mxu0 0
    %3286 = vmatprep.subr.bf16.mxu0 0
    %3287 = vmatpush1.bf16.msra.mxu0 0
    %3288 = vmatprep.subr.bf16.mxu0 0
    %3289 = vmatpush1.bf16.msra.mxu0 0
    %3290 = vmatprep.subr.bf16.mxu0 0
    %3291 = vmatpush1.bf16.msra.mxu0 0
    %3292 = vmatprep.subr.bf16.mxu0 0
    %3293 = vmatpush1.bf16.msra.mxu0 0
    %3294 = vmatprep.subr.bf16.mxu0 0
    %3295 = vmatpush1.bf16.msra.mxu0 0
    %3296 = vmatprep.subr.bf16.mxu0 0
    %3297 = vmatpush1.bf16.msra.mxu0 0
    %3298 = vmatprep.subr.bf16.mxu0 0
    %3299 = vmatpush1.bf16.msra.mxu0 0
    %3300 = vmatprep.subr.bf16.mxu0 0
    %3301 = vmatpush1.bf16.msra.mxu0 0
    %3302 = vmatprep.mubr.bf16.mxu0 0
    %3303 = vmatmul.mubr.bf16.gmra.mrb[0].mxu0 %v3259
    %v3304 = vpop.f32.mrb[0].mxu0
    %v3305 = vadd.f32 0.0, %v3304
    %v3306 = vpop.f32.mrb[0].mxu0
    %v3307 = vpop.f32.mrb[0].mxu0
    %v3308 = vadd.f32 0.0, %v3307
    %v3309 = vpop.f32.mrb[0].mxu0
    %3310 = vmatprep.mubr.bf16.mxu0 0
    %3311 = vmatmul.mubr.bf16.gmra.mrb[0].mxu0 %v3262
    %v3312 = vpop.f32.mrb[0].mxu0
    %v3313 = vadd.f32 0.0, %v3312
    %v3314 = vpop.f32.mrb[0].mxu0
    %v3315 = vpop.f32.mrb[0].mxu0
    %v3316 = vadd.f32 0.0, %v3315
    %v3317 = vpop.f32.mrb[0].mxu0
    %3318 = vmatprep.mubr.bf16.mxu0 0
    %3319 = vmatmul.mubr.bf16.gmra.mrb[0].mxu0 %v3265
    %v3320 = vpop.f32.mrb[0].mxu0
    %v3321 = vadd.f32 0.0, %v3320
    %v3322 = vpop.f32.mrb[0].mxu0
    %v3323 = vpop.f32.mrb[0].mxu0
    %v3324 = vadd.f32 0.0, %v3323
    %v3325 = vpop.f32.mrb[0].mxu0
    %3326 = vmatprep.mubr.bf16.mxu0 0
    %3327 = vmatmul.mubr.bf16.gmra.mrb[0].mxu0 %v3268
    %v3328 = vpop.f32.mrb[0].mxu0
    %v3329 = vadd.f32 0.0, %v3328
    %v3330 = vpop.f32.mrb[0].mxu0
    %v3331 = vpop.f32.mrb[0].mxu0
    %v3332 = vadd.f32 0.0, %v3331
    %v3333 = vpop.f32.mrb[0].mxu0
    %3334 = vdwg.mxu0
    %v3335 = vadd.f32 %v2753, %v3305
    %v3336 = vadd.f32 %v2754, %v3308
    %v3337 = vadd.f32 %v2755, %v3313
    %v3338 = vadd.f32 %v2756, %v3316
    %v3339 = vadd.f32 %v2757, %v3321
    %v3340 = vadd.f32 %v2758, %v3324
    %v3341 = vadd.f32 %v2759, %v3329
    %v3342 = vadd.f32 %v2760, %v3332
    %3343 = vrot.lane.b32.xlu0 %v453, 48
    %v3344 = vpop.permute.xlu0 %3343
    %3345 = vrot.lane.b32.xlu0 %v454, 48
    %v3346 = vpop.permute.xlu0 %3345
    %v3348 = vsel %vm465, %v3344, 0
    %v3351 = vsel %vm465, %v3346, 0
    %3353 = vmatprep.subr.bf16.mxu0 0
    %3354 = vmatpush1.bf16.xpose.msra.mxu0 %v3351
    %3355 = vmatprep.subr.bf16.mxu0 0
    %3356 = vmatpush1.bf16.xpose.msra.mxu0 0
    %3357 = vmatprep.subr.bf16.mxu0 0
    %3358 = vmatpush1.bf16.xpose.msra.mxu0 0
    %3359 = vmatprep.subr.bf16.mxu0 0
    %3360 = vmatpush1.bf16.xpose.msra.mxu0 0
    %3361 = vmatprep.subr.bf16.mxu0 0
    %3362 = vmatpush1.bf16.xpose.msra.mxu0 0
    %3363 = vmatprep.subr.bf16.mxu0 0
    %3364 = vmatpush1.bf16.xpose.msra.mxu0 0
    %3365 = vmatprep.subr.bf16.mxu0 0
    %3366 = vmatpush1.bf16.xpose.msra.mxu0 0
    %3367 = vmatprep.subr.bf16.mxu0 0
    %3368 = vmatpush1.bf16.xpose.msra.mxu0 0
    %3369 = vmatprep.subr.bf16.mxu0 0
    %3370 = vmatpush1.bf16.xpose.msra.mxu0 0
    %3371 = vmatprep.subr.bf16.mxu0 0
    %3372 = vmatpush1.bf16.xpose.msra.mxu0 0
    %3373 = vmatprep.subr.bf16.mxu0 0
    %3374 = vmatpush1.bf16.xpose.msra.mxu0 0
    %3375 = vmatprep.subr.bf16.mxu0 0
    %3376 = vmatpush1.bf16.xpose.msra.mxu0 0
    %3377 = vmatprep.subr.bf16.mxu0 0
    %3378 = vmatpush1.bf16.xpose.msra.mxu0 0
    %3379 = vmatprep.subr.bf16.mxu0 0
    %3380 = vmatpush1.bf16.xpose.msra.mxu0 0
    %3381 = vmatprep.subr.bf16.mxu0 0
    %3382 = vmatpush1.bf16.xpose.msra.mxu0 0
    %3383 = vmatprep.subr.bf16.mxu0 0
    %3384 = vmatpush1.bf16.xpose.msra.mxu0 0
    %3385 = vmatprep.mubr.bf16.mxu0 0
    %3386 = vmatmul.mubr.bf16.gmra.mrb[0].mxu0 %v3348
    %v3387 = vpop.f32.mrb[0].mxu0
    %v3388 = vadd.f32 0.0, %v3387
    %v3389 = vpop.f32.mrb[0].mxu0
    %v3390 = vpop.f32.mrb[0].mxu0
    %v3391 = vadd.f32 0.0, %v3390
    %v3392 = vpop.f32.mrb[0].mxu0
    %3393 = vdwg.mxu0
    %3394 = vrot.lane.b32.xlu0 %v456, 48
    %v3395 = vpop.permute.xlu0 %3394
    %3396 = vrot.lane.b32.xlu0 %v457, 48
    %v3397 = vpop.permute.xlu0 %3396
    %v3399 = vsel %vm465, %v3395, 0
    %v3402 = vsel %vm465, %v3397, 0
    %3404 = vmatprep.subr.bf16.mxu0 0
    %3405 = vmatpush1.bf16.xpose.msra.mxu0 %v3402
    %3406 = vmatprep.subr.bf16.mxu0 0
    %3407 = vmatpush1.bf16.xpose.msra.mxu0 0
    %3408 = vmatprep.subr.bf16.mxu0 0
    %3409 = vmatpush1.bf16.xpose.msra.mxu0 0
    %3410 = vmatprep.subr.bf16.mxu0 0
    %3411 = vmatpush1.bf16.xpose.msra.mxu0 0
    %3412 = vmatprep.subr.bf16.mxu0 0
    %3413 = vmatpush1.bf16.xpose.msra.mxu0 0
    %3414 = vmatprep.subr.bf16.mxu0 0
    %3415 = vmatpush1.bf16.xpose.msra.mxu0 0
    %3416 = vmatprep.subr.bf16.mxu0 0
    %3417 = vmatpush1.bf16.xpose.msra.mxu0 0
    %3418 = vmatprep.subr.bf16.mxu0 0
    %3419 = vmatpush1.bf16.xpose.msra.mxu0 0
    %3420 = vmatprep.subr.bf16.mxu0 0
    %3421 = vmatpush1.bf16.xpose.msra.mxu0 0
    %3422 = vmatprep.subr.bf16.mxu0 0
    %3423 = vmatpush1.bf16.xpose.msra.mxu0 0
    %3424 = vmatprep.subr.bf16.mxu0 0
    %3425 = vmatpush1.bf16.xpose.msra.mxu0 0
    %3426 = vmatprep.subr.bf16.mxu0 0
    %3427 = vmatpush1.bf16.xpose.msra.mxu0 0
    %3428 = vmatprep.subr.bf16.mxu0 0
    %3429 = vmatpush1.bf16.xpose.msra.mxu0 0
    %3430 = vmatprep.subr.bf16.mxu0 0
    %3431 = vmatpush1.bf16.xpose.msra.mxu0 0
    %3432 = vmatprep.subr.bf16.mxu0 0
    %3433 = vmatpush1.bf16.xpose.msra.mxu0 0
    %3434 = vmatprep.subr.bf16.mxu0 0
    %3435 = vmatpush1.bf16.xpose.msra.mxu0 0
    %3436 = vmatprep.mubr.bf16.mxu0 0
    %3437 = vmatmul.mubr.bf16.gmra.mrb[0].mxu0 %v3399
    %v3438 = vpop.f32.mrb[0].mxu0
    %v3439 = vadd.f32 0.0, %v3438
    %v3440 = vpop.f32.mrb[0].mxu0
    %v3441 = vpop.f32.mrb[0].mxu0
    %v3442 = vadd.f32 0.0, %v3441
    %v3443 = vpop.f32.mrb[0].mxu0
    %3444 = vdwg.mxu0
    %3445 = vrot.lane.b32.xlu0 %v459, 48
    %v3446 = vpop.permute.xlu0 %3445
    %3447 = vrot.lane.b32.xlu0 %v460, 48
    %v3448 = vpop.permute.xlu0 %3447
    %v3450 = vsel %vm465, %v3446, 0
    %v3453 = vsel %vm465, %v3448, 0
    %3455 = vmatprep.subr.bf16.mxu0 0
    %3456 = vmatpush1.bf16.xpose.msra.mxu0 %v3453
    %3457 = vmatprep.subr.bf16.mxu0 0
    %3458 = vmatpush1.bf16.xpose.msra.mxu0 0
    %3459 = vmatprep.subr.bf16.mxu0 0
    %3460 = vmatpush1.bf16.xpose.msra.mxu0 0
    %3461 = vmatprep.subr.bf16.mxu0 0
    %3462 = vmatpush1.bf16.xpose.msra.mxu0 0
    %3463 = vmatprep.subr.bf16.mxu0 0
    %3464 = vmatpush1.bf16.xpose.msra.mxu0 0
    %3465 = vmatprep.subr.bf16.mxu0 0
    %3466 = vmatpush1.bf16.xpose.msra.mxu0 0
    %3467 = vmatprep.subr.bf16.mxu0 0
    %3468 = vmatpush1.bf16.xpose.msra.mxu0 0
    %3469 = vmatprep.subr.bf16.mxu0 0
    %3470 = vmatpush1.bf16.xpose.msra.mxu0 0
    %3471 = vmatprep.subr.bf16.mxu0 0
    %3472 = vmatpush1.bf16.xpose.msra.mxu0 0
    %3473 = vmatprep.subr.bf16.mxu0 0
    %3474 = vmatpush1.bf16.xpose.msra.mxu0 0
    %3475 = vmatprep.subr.bf16.mxu0 0
    %3476 = vmatpush1.bf16.xpose.msra.mxu0 0
    %3477 = vmatprep.subr.bf16.mxu0 0
    %3478 = vmatpush1.bf16.xpose.msra.mxu0 0
    %3479 = vmatprep.subr.bf16.mxu0 0
    %3480 = vmatpush1.bf16.xpose.msra.mxu0 0
    %3481 = vmatprep.subr.bf16.mxu0 0
    %3482 = vmatpush1.bf16.xpose.msra.mxu0 0
    %3483 = vmatprep.subr.bf16.mxu0 0
    %3484 = vmatpush1.bf16.xpose.msra.mxu0 0
    %3485 = vmatprep.subr.bf16.mxu0 0
    %3486 = vmatpush1.bf16.xpose.msra.mxu0 0
    %3487 = vmatprep.mubr.bf16.mxu0 0
    %3488 = vmatmul.mubr.bf16.gmra.mrb[0].mxu0 %v3450
    %v3489 = vpop.f32.mrb[0].mxu0
    %v3490 = vadd.f32 0.0, %v3489
    %v3491 = vpop.f32.mrb[0].mxu0
    %v3492 = vpop.f32.mrb[0].mxu0
    %v3493 = vadd.f32 0.0, %v3492
    %v3494 = vpop.f32.mrb[0].mxu0
    %3495 = vdwg.mxu0
    %3496 = vrot.lane.b32.xlu0 %v462, 48
    %v3497 = vpop.permute.xlu0 %3496
    %3498 = vrot.lane.b32.xlu0 %v463, 48
    %v3499 = vpop.permute.xlu0 %3498
    %v3501 = vsel %vm465, %v3497, 0
    %v3504 = vsel %vm465, %v3499, 0
    %3506 = vmatprep.subr.bf16.mxu0 0
    %3507 = vmatpush1.bf16.xpose.msra.mxu0 %v3504
    %3508 = vmatprep.subr.bf16.mxu0 0
    %3509 = vmatpush1.bf16.xpose.msra.mxu0 0
    %3510 = vmatprep.subr.bf16.mxu0 0
    %3511 = vmatpush1.bf16.xpose.msra.mxu0 0
    %3512 = vmatprep.subr.bf16.mxu0 0
    %3513 = vmatpush1.bf16.xpose.msra.mxu0 0
    %3514 = vmatprep.subr.bf16.mxu0 0
    %3515 = vmatpush1.bf16.xpose.msra.mxu0 0
    %3516 = vmatprep.subr.bf16.mxu0 0
    %3517 = vmatpush1.bf16.xpose.msra.mxu0 0
    %3518 = vmatprep.subr.bf16.mxu0 0
    %3519 = vmatpush1.bf16.xpose.msra.mxu0 0
    %3520 = vmatprep.subr.bf16.mxu0 0
    %3521 = vmatpush1.bf16.xpose.msra.mxu0 0
    %3522 = vmatprep.subr.bf16.mxu0 0
    %3523 = vmatpush1.bf16.xpose.msra.mxu0 0
    %3524 = vmatprep.subr.bf16.mxu0 0
    %3525 = vmatpush1.bf16.xpose.msra.mxu0 0
    %3526 = vmatprep.subr.bf16.mxu0 0
    %3527 = vmatpush1.bf16.xpose.msra.mxu0 0
    %3528 = vmatprep.subr.bf16.mxu0 0
    %3529 = vmatpush1.bf16.xpose.msra.mxu0 0
    %3530 = vmatprep.subr.bf16.mxu0 0
    %3531 = vmatpush1.bf16.xpose.msra.mxu0 0
    %3532 = vmatprep.subr.bf16.mxu0 0
    %3533 = vmatpush1.bf16.xpose.msra.mxu0 0
    %3534 = vmatprep.subr.bf16.mxu0 0
    %3535 = vmatpush1.bf16.xpose.msra.mxu0 0
    %3536 = vmatprep.subr.bf16.mxu0 0
    %3537 = vmatpush1.bf16.xpose.msra.mxu0 0
    %3538 = vmatprep.mubr.bf16.mxu0 0
    %3539 = vmatmul.mubr.bf16.gmra.mrb[0].mxu0 %v3501
    %v3540 = vpop.f32.mrb[0].mxu0
    %v3541 = vadd.f32 0.0, %v3540
    %v3542 = vpop.f32.mrb[0].mxu0
    %v3543 = vpop.f32.mrb[0].mxu0
    %v3544 = vadd.f32 0.0, %v3543
    %v3545 = vpop.f32.mrb[0].mxu0
    %3546 = vdwg.mxu0
    %v3547 = vsel %vm465, %v3388, -inf
    %3548 = vmax.xlane.f32.xlu0 %v3547
    %v3549 = vpop.xlane.xlu0 %3548
    %v3550 = vsel %vm465, %v3391, -inf
    %3551 = vmax.xlane.f32.xlu0 %v3550
    %v3552 = vpop.xlane.xlu0 %3551
    %v3553 = vsel %vm465, %v3439, -inf
    %3554 = vmax.xlane.f32.xlu0 %v3553
    %v3555 = vpop.xlane.xlu0 %3554
    %v3556 = vsel %vm465, %v3442, -inf
    %3557 = vmax.xlane.f32.xlu0 %v3556
    %v3558 = vpop.xlane.xlu0 %3557
    %v3559 = vsel %vm465, %v3490, -inf
    %3560 = vmax.xlane.f32.xlu0 %v3559
    %v3561 = vpop.xlane.xlu0 %3560
    %v3562 = vsel %vm465, %v3493, -inf
    %3563 = vmax.xlane.f32.xlu0 %v3562
    %v3564 = vpop.xlane.xlu0 %3563
    %v3565 = vsel %vm465, %v3541, -inf
    %3566 = vmax.xlane.f32.xlu0 %v3565
    %v3567 = vpop.xlane.xlu0 %3566
    %v3568 = vsel %vm465, %v3544, -inf
    %3569 = vmax.xlane.f32.xlu0 %v3568
    %v3570 = vpop.xlane.xlu0 %3569
    %v3571 = vsub.f32 %v3388, %v3549
    %v3572 = vsub.f32 %v3391, %v3552
    %v3573 = vsub.f32 %v3439, %v3555
    %v3574 = vsub.f32 %v3442, %v3558
    %v3575 = vsub.f32 %v3490, %v3561
    %v3576 = vsub.f32 %v3493, %v3564
    %v3577 = vsub.f32 %v3541, %v3567
    %v3578 = vsub.f32 %v3544, %v3570
    %v3579 = vmul.f32 %v3571, 1.442695
    %v3580 = vpow.pop %v3579
    %v3581 = vmul.f32 %v3572, 1.442695
    %v3582 = vpow.pop %v3581
    %v3583 = vmul.f32 %v3573, 1.442695
    %v3584 = vpow.pop %v3583
    %v3585 = vmul.f32 %v3574, 1.442695
    %v3586 = vpow.pop %v3585
    %v3587 = vmul.f32 %v3575, 1.442695
    %v3588 = vpow.pop %v3587
    %v3589 = vmul.f32 %v3576, 1.442695
    %v3590 = vpow.pop %v3589
    %v3591 = vmul.f32 %v3577, 1.442695
    %v3592 = vpow.pop %v3591
    %v3593 = vmul.f32 %v3578, 1.442695
    %v3594 = vpow.pop %v3593
    %v3595 = vsel %vm465, %v3580, 0.0
    %3596 = vadd.xlane.f32.xlu0 %v3595
    %v3597 = vpop.xlane.xlu0 %3596
    %v3598 = vsel %vm465, %v3582, 0.0
    %3599 = vadd.xlane.f32.xlu0 %v3598
    %v3600 = vpop.xlane.xlu0 %3599
    %v3601 = vsel %vm465, %v3584, 0.0
    %3602 = vadd.xlane.f32.xlu0 %v3601
    %v3603 = vpop.xlane.xlu0 %3602
    %v3604 = vsel %vm465, %v3586, 0.0
    %3605 = vadd.xlane.f32.xlu0 %v3604
    %v3606 = vpop.xlane.xlu0 %3605
    %v3607 = vsel %vm465, %v3588, 0.0
    %3608 = vadd.xlane.f32.xlu0 %v3607
    %v3609 = vpop.xlane.xlu0 %3608
    %v3610 = vsel %vm465, %v3590, 0.0
    %3611 = vadd.xlane.f32.xlu0 %v3610
    %v3612 = vpop.xlane.xlu0 %3611
    %v3613 = vsel %vm465, %v3592, 0.0
    %3614 = vadd.xlane.f32.xlu0 %v3613
    %v3615 = vpop.xlane.xlu0 %3614
    %v3616 = vsel %vm465, %v3594, 0.0
    %3617 = vadd.xlane.f32.xlu0 %v3616
    %v3618 = vpop.xlane.xlu0 %3617
    %v3619 = vrcp.pop %v3597
    %v3620 = vrcp.pop %v3600
    %v3621 = vrcp.pop %v3603
    %v3622 = vrcp.pop %v3606
    %v3623 = vrcp.pop %v3609
    %v3624 = vrcp.pop %v3612
    %v3625 = vrcp.pop %v3615
    %v3626 = vrcp.pop %v3618
    %v3627 = vmul.f32 %v3580, %v3619
    %v3628 = vmul.f32 %v3582, %v3620
    %v3629 = vmul.f32 %v3584, %v3621
    %v3630 = vmul.f32 %v3586, %v3622
    %v3631 = vmul.f32 %v3588, %v3623
    %v3632 = vmul.f32 %v3590, %v3624
    %v3633 = vmul.f32 %v3592, %v3625
    %v3634 = vmul.f32 %v3594, %v3626
    %v3635 = vpack.c.bf16 %v3628, %v3627
    %v3636 = vpack.c.bf16 %v3630, %v3629
    %v3637 = vpack.c.bf16 %v3632, %v3631
    %v3638 = vpack.c.bf16 %v3634, %v3633
    %3639 = vrot.lane.b32.xlu0 %v455, 48
    %v3640 = vpop.permute.xlu0 %3639
    %v3643 = vsel %vm465, %v3635, 0
    %3645 = vmatprep.subr.bf16.mxu0 0
    %3646 = vmatpush1.bf16.msra.mxu0 %v3640
    %3647 = vmatprep.subr.bf16.mxu0 0
    %3648 = vmatpush1.bf16.msra.mxu0 0
    %3649 = vmatprep.subr.bf16.mxu0 0
    %3650 = vmatpush1.bf16.msra.mxu0 0
    %3651 = vmatprep.subr.bf16.mxu0 0
    %3652 = vmatpush1.bf16.msra.mxu0 0
    %3653 = vmatprep.subr.bf16.mxu0 0
    %3654 = vmatpush1.bf16.msra.mxu0 0
    %3655 = vmatprep.subr.bf16.mxu0 0
    %3656 = vmatpush1.bf16.msra.mxu0 0
    %3657 = vmatprep.subr.bf16.mxu0 0
    %3658 = vmatpush1.bf16.msra.mxu0 0
    %3659 = vmatprep.subr.bf16.mxu0 0
    %3660 = vmatpush1.bf16.msra.mxu0 0
    %3661 = vmatprep.subr.bf16.mxu0 0
    %3662 = vmatpush1.bf16.msra.mxu0 0
    %3663 = vmatprep.subr.bf16.mxu0 0
    %3664 = vmatpush1.bf16.msra.mxu0 0
    %3665 = vmatprep.subr.bf16.mxu0 0
    %3666 = vmatpush1.bf16.msra.mxu0 0
    %3667 = vmatprep.subr.bf16.mxu0 0
    %3668 = vmatpush1.bf16.msra.mxu0 0
    %3669 = vmatprep.subr.bf16.mxu0 0
    %3670 = vmatpush1.bf16.msra.mxu0 0
    %3671 = vmatprep.subr.bf16.mxu0 0
    %3672 = vmatpush1.bf16.msra.mxu0 0
    %3673 = vmatprep.subr.bf16.mxu0 0
    %3674 = vmatpush1.bf16.msra.mxu0 0
    %3675 = vmatprep.subr.bf16.mxu0 0
    %3676 = vmatpush1.bf16.msra.mxu0 0
    %3677 = vmatprep.mubr.bf16.mxu0 0
    %3678 = vmatmul.mubr.bf16.gmra.mrb[0].mxu0 %v3643
    %v3679 = vpop.f32.mrb[0].mxu0
    %v3680 = vadd.f32 0.0, %v3679
    %v3681 = vpop.f32.mrb[0].mxu0
    %v3682 = vpop.f32.mrb[0].mxu0
    %v3683 = vadd.f32 0.0, %v3682
    %v3684 = vpop.f32.mrb[0].mxu0
    %3685 = vdwg.mxu0
    %3686 = vrot.lane.b32.xlu0 %v458, 48
    %v3687 = vpop.permute.xlu0 %3686
    %v3690 = vsel %vm465, %v3636, 0
    %3692 = vmatprep.subr.bf16.mxu0 0
    %3693 = vmatpush1.bf16.msra.mxu0 %v3687
    %3694 = vmatprep.subr.bf16.mxu0 0
    %3695 = vmatpush1.bf16.msra.mxu0 0
    %3696 = vmatprep.subr.bf16.mxu0 0
    %3697 = vmatpush1.bf16.msra.mxu0 0
    %3698 = vmatprep.subr.bf16.mxu0 0
    %3699 = vmatpush1.bf16.msra.mxu0 0
    %3700 = vmatprep.subr.bf16.mxu0 0
    %3701 = vmatpush1.bf16.msra.mxu0 0
    %3702 = vmatprep.subr.bf16.mxu0 0
    %3703 = vmatpush1.bf16.msra.mxu0 0
    %3704 = vmatprep.subr.bf16.mxu0 0
    %3705 = vmatpush1.bf16.msra.mxu0 0
    %3706 = vmatprep.subr.bf16.mxu0 0
    %3707 = vmatpush1.bf16.msra.mxu0 0
    %3708 = vmatprep.subr.bf16.mxu0 0
    %3709 = vmatpush1.bf16.msra.mxu0 0
    %3710 = vmatprep.subr.bf16.mxu0 0
    %3711 = vmatpush1.bf16.msra.mxu0 0
    %3712 = vmatprep.subr.bf16.mxu0 0
    %3713 = vmatpush1.bf16.msra.mxu0 0
    %3714 = vmatprep.subr.bf16.mxu0 0
    %3715 = vmatpush1.bf16.msra.mxu0 0
    %3716 = vmatprep.subr.bf16.mxu0 0
    %3717 = vmatpush1.bf16.msra.mxu0 0
    %3718 = vmatprep.subr.bf16.mxu0 0
    %3719 = vmatpush1.bf16.msra.mxu0 0
    %3720 = vmatprep.subr.bf16.mxu0 0
    %3721 = vmatpush1.bf16.msra.mxu0 0
    %3722 = vmatprep.subr.bf16.mxu0 0
    %3723 = vmatpush1.bf16.msra.mxu0 0
    %3724 = vmatprep.mubr.bf16.mxu0 0
    %3725 = vmatmul.mubr.bf16.gmra.mrb[0].mxu0 %v3690
    %v3726 = vpop.f32.mrb[0].mxu0
    %v3727 = vadd.f32 0.0, %v3726
    %v3728 = vpop.f32.mrb[0].mxu0
    %v3729 = vpop.f32.mrb[0].mxu0
    %v3730 = vadd.f32 0.0, %v3729
    %v3731 = vpop.f32.mrb[0].mxu0
    %3732 = vdwg.mxu0
    %3733 = vrot.lane.b32.xlu0 %v461, 48
    %v3734 = vpop.permute.xlu0 %3733
    %v3737 = vsel %vm465, %v3637, 0
    %3739 = vmatprep.subr.bf16.mxu0 0
    %3740 = vmatpush1.bf16.msra.mxu0 %v3734
    %3741 = vmatprep.subr.bf16.mxu0 0
    %3742 = vmatpush1.bf16.msra.mxu0 0
    %3743 = vmatprep.subr.bf16.mxu0 0
    %3744 = vmatpush1.bf16.msra.mxu0 0
    %3745 = vmatprep.subr.bf16.mxu0 0
    %3746 = vmatpush1.bf16.msra.mxu0 0
    %3747 = vmatprep.subr.bf16.mxu0 0
    %3748 = vmatpush1.bf16.msra.mxu0 0
    %3749 = vmatprep.subr.bf16.mxu0 0
    %3750 = vmatpush1.bf16.msra.mxu0 0
    %3751 = vmatprep.subr.bf16.mxu0 0
    %3752 = vmatpush1.bf16.msra.mxu0 0
    %3753 = vmatprep.subr.bf16.mxu0 0
    %3754 = vmatpush1.bf16.msra.mxu0 0
    %3755 = vmatprep.subr.bf16.mxu0 0
    %3756 = vmatpush1.bf16.msra.mxu0 0
    %3757 = vmatprep.subr.bf16.mxu0 0
    %3758 = vmatpush1.bf16.msra.mxu0 0
    %3759 = vmatprep.subr.bf16.mxu0 0
    %3760 = vmatpush1.bf16.msra.mxu0 0
    %3761 = vmatprep.subr.bf16.mxu0 0
    %3762 = vmatpush1.bf16.msra.mxu0 0
    %3763 = vmatprep.subr.bf16.mxu0 0
    %3764 = vmatpush1.bf16.msra.mxu0 0
    %3765 = vmatprep.subr.bf16.mxu0 0
    %3766 = vmatpush1.bf16.msra.mxu0 0
    %3767 = vmatprep.subr.bf16.mxu0 0
    %3768 = vmatpush1.bf16.msra.mxu0 0
    %3769 = vmatprep.subr.bf16.mxu0 0
    %3770 = vmatpush1.bf16.msra.mxu0 0
    %3771 = vmatprep.mubr.bf16.mxu0 0
    %3772 = vmatmul.mubr.bf16.gmra.mrb[0].mxu0 %v3737
    %v3773 = vpop.f32.mrb[0].mxu0
    %v3774 = vadd.f32 0.0, %v3773
    %v3775 = vpop.f32.mrb[0].mxu0
    %v3776 = vpop.f32.mrb[0].mxu0
    %v3777 = vadd.f32 0.0, %v3776
    %v3778 = vpop.f32.mrb[0].mxu0
    %3779 = vdwg.mxu0
    %3780 = vrot.lane.b32.xlu0 %v464, 48
    %v3781 = vpop.permute.xlu0 %3780
    %v3784 = vsel %vm465, %v3638, 0
    %3786 = vmatprep.subr.bf16.mxu0 0
    %3787 = vmatpush1.bf16.msra.mxu0 %v3781
    %3788 = vmatprep.subr.bf16.mxu0 0
    %3789 = vmatpush1.bf16.msra.mxu0 0
    %3790 = vmatprep.subr.bf16.mxu0 0
    %3791 = vmatpush1.bf16.msra.mxu0 0
    %3792 = vmatprep.subr.bf16.mxu0 0
    %3793 = vmatpush1.bf16.msra.mxu0 0
    %3794 = vmatprep.subr.bf16.mxu0 0
    %3795 = vmatpush1.bf16.msra.mxu0 0
    %3796 = vmatprep.subr.bf16.mxu0 0
    %3797 = vmatpush1.bf16.msra.mxu0 0
    %3798 = vmatprep.subr.bf16.mxu0 0
    %3799 = vmatpush1.bf16.msra.mxu0 0
    %3800 = vmatprep.subr.bf16.mxu0 0
    %3801 = vmatpush1.bf16.msra.mxu0 0
    %3802 = vmatprep.subr.bf16.mxu0 0
    %3803 = vmatpush1.bf16.msra.mxu0 0
    %3804 = vmatprep.subr.bf16.mxu0 0
    %3805 = vmatpush1.bf16.msra.mxu0 0
    %3806 = vmatprep.subr.bf16.mxu0 0
    %3807 = vmatpush1.bf16.msra.mxu0 0
    %3808 = vmatprep.subr.bf16.mxu0 0
    %3809 = vmatpush1.bf16.msra.mxu0 0
    %3810 = vmatprep.subr.bf16.mxu0 0
    %3811 = vmatpush1.bf16.msra.mxu0 0
    %3812 = vmatprep.subr.bf16.mxu0 0
    %3813 = vmatpush1.bf16.msra.mxu0 0
    %3814 = vmatprep.subr.bf16.mxu0 0
    %3815 = vmatpush1.bf16.msra.mxu0 0
    %3816 = vmatprep.subr.bf16.mxu0 0
    %3817 = vmatpush1.bf16.msra.mxu0 0
    %3818 = vmatprep.mubr.bf16.mxu0 0
    %3819 = vmatmul.mubr.bf16.gmra.mrb[0].mxu0 %v3784
    %v3820 = vpop.f32.mrb[0].mxu0
    %v3821 = vadd.f32 0.0, %v3820
    %v3822 = vpop.f32.mrb[0].mxu0
    %v3823 = vpop.f32.mrb[0].mxu0
    %v3824 = vadd.f32 0.0, %v3823
    %v3825 = vpop.f32.mrb[0].mxu0
    %3826 = vdwg.mxu0
    %v3827 = vpack.c.bf16 %v3683, %v3680
    %v3828 = vpack.c.bf16 %v3730, %v3727
    %v3829 = vpack.c.bf16 %v3777, %v3774
    %v3830 = vpack.c.bf16 %v3824, %v3821
    %s3831 = scalar_lea.vmem [#allocation7], 40
    %v3832 = vld [vmem:[%s3831] sm:$0xf]
    %v3833 = vld [vmem:[%s3831 + $0x4] sm:$0xf]
    %v3836 = vunpack.c.l.b16 %v3832
    %v3837 = vunpack.c.l.b16 %v3833
    %v3838 = vpack.c.b16 %v3837, %v3836
    %v3841 = vsel %vm465, %v3827, 0
    %v3844 = vsel %vm465, %v3828, 0
    %v3847 = vsel %vm465, %v3829, 0
    %v3850 = vsel %vm465, %v3830, 0
    %3852 = vmatprep.subr.bf16.mxu0 0
    %3853 = vmatpush1.bf16.msra.mxu0 %v3838
    %3854 = vmatprep.subr.bf16.mxu0 0
    %3855 = vmatpush1.bf16.msra.mxu0 0
    %3856 = vmatprep.subr.bf16.mxu0 0
    %3857 = vmatpush1.bf16.msra.mxu0 0
    %3858 = vmatprep.subr.bf16.mxu0 0
    %3859 = vmatpush1.bf16.msra.mxu0 0
    %3860 = vmatprep.subr.bf16.mxu0 0
    %3861 = vmatpush1.bf16.msra.mxu0 0
    %3862 = vmatprep.subr.bf16.mxu0 0
    %3863 = vmatpush1.bf16.msra.mxu0 0
    %3864 = vmatprep.subr.bf16.mxu0 0
    %3865 = vmatpush1.bf16.msra.mxu0 0
    %3866 = vmatprep.subr.bf16.mxu0 0
    %3867 = vmatpush1.bf16.msra.mxu0 0
    %3868 = vmatprep.subr.bf16.mxu0 0
    %3869 = vmatpush1.bf16.msra.mxu0 0
    %3870 = vmatprep.subr.bf16.mxu0 0
    %3871 = vmatpush1.bf16.msra.mxu0 0
    %3872 = vmatprep.subr.bf16.mxu0 0
    %3873 = vmatpush1.bf16.msra.mxu0 0
    %3874 = vmatprep.subr.bf16.mxu0 0
    %3875 = vmatpush1.bf16.msra.mxu0 0
    %3876 = vmatprep.subr.bf16.mxu0 0
    %3877 = vmatpush1.bf16.msra.mxu0 0
    %3878 = vmatprep.subr.bf16.mxu0 0
    %3879 = vmatpush1.bf16.msra.mxu0 0
    %3880 = vmatprep.subr.bf16.mxu0 0
    %3881 = vmatpush1.bf16.msra.mxu0 0
    %3882 = vmatprep.subr.bf16.mxu0 0
    %3883 = vmatpush1.bf16.msra.mxu0 0
    %3884 = vmatprep.mubr.bf16.mxu0 0
    %3885 = vmatmul.mubr.bf16.gmra.mrb[0].mxu0 %v3841
    %v3886 = vpop.f32.mrb[0].mxu0
    %v3887 = vadd.f32 0.0, %v3886
    %v3888 = vpop.f32.mrb[0].mxu0
    %v3889 = vpop.f32.mrb[0].mxu0
    %v3890 = vadd.f32 0.0, %v3889
    %v3891 = vpop.f32.mrb[0].mxu0
    %3892 = vmatprep.mubr.bf16.mxu0 0
    %3893 = vmatmul.mubr.bf16.gmra.mrb[0].mxu0 %v3844
    %v3894 = vpop.f32.mrb[0].mxu0
    %v3895 = vadd.f32 0.0, %v3894
    %v3896 = vpop.f32.mrb[0].mxu0
    %v3897 = vpop.f32.mrb[0].mxu0
    %v3898 = vadd.f32 0.0, %v3897
    %v3899 = vpop.f32.mrb[0].mxu0
    %3900 = vmatprep.mubr.bf16.mxu0 0
    %3901 = vmatmul.mubr.bf16.gmra.mrb[0].mxu0 %v3847
    %v3902 = vpop.f32.mrb[0].mxu0
    %v3903 = vadd.f32 0.0, %v3902
    %v3904 = vpop.f32.mrb[0].mxu0
    %v3905 = vpop.f32.mrb[0].mxu0
    %v3906 = vadd.f32 0.0, %v3905
    %v3907 = vpop.f32.mrb[0].mxu0
    %3908 = vmatprep.mubr.bf16.mxu0 0
    %3909 = vmatmul.mubr.bf16.gmra.mrb[0].mxu0 %v3850
    %v3910 = vpop.f32.mrb[0].mxu0
    %v3911 = vadd.f32 0.0, %v3910
    %v3912 = vpop.f32.mrb[0].mxu0
    %v3913 = vpop.f32.mrb[0].mxu0
    %v3914 = vadd.f32 0.0, %v3913
    %v3915 = vpop.f32.mrb[0].mxu0
    %3916 = vdwg.mxu0
    %v3917 = vadd.f32 %v3335, %v3887
    %v3918 = vadd.f32 %v3336, %v3890
    %v3919 = vadd.f32 %v3337, %v3895
    %v3920 = vadd.f32 %v3338, %v3898
    %v3921 = vadd.f32 %v3339, %v3903
    %v3922 = vadd.f32 %v3340, %v3906
    %v3923 = vadd.f32 %v3341, %v3911
    %v3924 = vadd.f32 %v3342, %v3914
    %3925 = vrot.lane.b32.xlu0 %v453, 32
    %v3926 = vpop.permute.xlu0 %3925
    %3927 = vrot.lane.b32.xlu0 %v454, 32
    %v3928 = vpop.permute.xlu0 %3927
    %v3930 = vsel %vm465, %v3926, 0
    %v3933 = vsel %vm465, %v3928, 0
    %3935 = vmatprep.subr.bf16.mxu0 0
    %3936 = vmatpush1.bf16.xpose.msra.mxu0 %v3933
    %3937 = vmatprep.subr.bf16.mxu0 0
    %3938 = vmatpush1.bf16.xpose.msra.mxu0 0
    %3939 = vmatprep.subr.bf16.mxu0 0
    %3940 = vmatpush1.bf16.xpose.msra.mxu0 0
    %3941 = vmatprep.subr.bf16.mxu0 0
    %3942 = vmatpush1.bf16.xpose.msra.mxu0 0
    %3943 = vmatprep.subr.bf16.mxu0 0
    %3944 = vmatpush1.bf16.xpose.msra.mxu0 0
    %3945 = vmatprep.subr.bf16.mxu0 0
    %3946 = vmatpush1.bf16.xpose.msra.mxu0 0
    %3947 = vmatprep.subr.bf16.mxu0 0
    %3948 = vmatpush1.bf16.xpose.msra.mxu0 0
    %3949 = vmatprep.subr.bf16.mxu0 0
    %3950 = vmatpush1.bf16.xpose.msra.mxu0 0
    %3951 = vmatprep.subr.bf16.mxu0 0
    %3952 = vmatpush1.bf16.xpose.msra.mxu0 0
    %3953 = vmatprep.subr.bf16.mxu0 0
    %3954 = vmatpush1.bf16.xpose.msra.mxu0 0
    %3955 = vmatprep.subr.bf16.mxu0 0
    %3956 = vmatpush1.bf16.xpose.msra.mxu0 0
    %3957 = vmatprep.subr.bf16.mxu0 0
    %3958 = vmatpush1.bf16.xpose.msra.mxu0 0
    %3959 = vmatprep.subr.bf16.mxu0 0
    %3960 = vmatpush1.bf16.xpose.msra.mxu0 0
    %3961 = vmatprep.subr.bf16.mxu0 0
    %3962 = vmatpush1.bf16.xpose.msra.mxu0 0
    %3963 = vmatprep.subr.bf16.mxu0 0
    %3964 = vmatpush1.bf16.xpose.msra.mxu0 0
    %3965 = vmatprep.subr.bf16.mxu0 0
    %3966 = vmatpush1.bf16.xpose.msra.mxu0 0
    %3967 = vmatprep.mubr.bf16.mxu0 0
    %3968 = vmatmul.mubr.bf16.gmra.mrb[0].mxu0 %v3930
    %v3969 = vpop.f32.mrb[0].mxu0
    %v3970 = vadd.f32 0.0, %v3969
    %v3971 = vpop.f32.mrb[0].mxu0
    %v3972 = vpop.f32.mrb[0].mxu0
    %v3973 = vadd.f32 0.0, %v3972
    %v3974 = vpop.f32.mrb[0].mxu0
    %3975 = vdwg.mxu0
    %3976 = vrot.lane.b32.xlu0 %v456, 32
    %v3977 = vpop.permute.xlu0 %3976
    %3978 = vrot.lane.b32.xlu0 %v457, 32
    %v3979 = vpop.permute.xlu0 %3978
    %v3981 = vsel %vm465, %v3977, 0
    %v3984 = vsel %vm465, %v3979, 0
    %3986 = vmatprep.subr.bf16.mxu0 0
    %3987 = vmatpush1.bf16.xpose.msra.mxu0 %v3984
    %3988 = vmatprep.subr.bf16.mxu0 0
    %3989 = vmatpush1.bf16.xpose.msra.mxu0 0
    %3990 = vmatprep.subr.bf16.mxu0 0
    %3991 = vmatpush1.bf16.xpose.msra.mxu0 0
    %3992 = vmatprep.subr.bf16.mxu0 0
    %3993 = vmatpush1.bf16.xpose.msra.mxu0 0
    %3994 = vmatprep.subr.bf16.mxu0 0
    %3995 = vmatpush1.bf16.xpose.msra.mxu0 0
    %3996 = vmatprep.subr.bf16.mxu0 0
    %3997 = vmatpush1.bf16.xpose.msra.mxu0 0
    %3998 = vmatprep.subr.bf16.mxu0 0
    %3999 = vmatpush1.bf16.xpose.msra.mxu0 0
    %4000 = vmatprep.subr.bf16.mxu0 0
    %4001 = vmatpush1.bf16.xpose.msra.mxu0 0
    %4002 = vmatprep.subr.bf16.mxu0 0
    %4003 = vmatpush1.bf16.xpose.msra.mxu0 0
    %4004 = vmatprep.subr.bf16.mxu0 0
    %4005 = vmatpush1.bf16.xpose.msra.mxu0 0
    %4006 = vmatprep.subr.bf16.mxu0 0
    %4007 = vmatpush1.bf16.xpose.msra.mxu0 0
    %4008 = vmatprep.subr.bf16.mxu0 0
    %4009 = vmatpush1.bf16.xpose.msra.mxu0 0
    %4010 = vmatprep.subr.bf16.mxu0 0
    %4011 = vmatpush1.bf16.xpose.msra.mxu0 0
    %4012 = vmatprep.subr.bf16.mxu0 0
    %4013 = vmatpush1.bf16.xpose.msra.mxu0 0
    %4014 = vmatprep.subr.bf16.mxu0 0
    %4015 = vmatpush1.bf16.xpose.msra.mxu0 0
    %4016 = vmatprep.subr.bf16.mxu0 0
    %4017 = vmatpush1.bf16.xpose.msra.mxu0 0
    %4018 = vmatprep.mubr.bf16.mxu0 0
    %4019 = vmatmul.mubr.bf16.gmra.mrb[0].mxu0 %v3981
    %v4020 = vpop.f32.mrb[0].mxu0
    %v4021 = vadd.f32 0.0, %v4020
    %v4022 = vpop.f32.mrb[0].mxu0
    %v4023 = vpop.f32.mrb[0].mxu0
    %v4024 = vadd.f32 0.0, %v4023
    %v4025 = vpop.f32.mrb[0].mxu0
    %4026 = vdwg.mxu0
    %4027 = vrot.lane.b32.xlu0 %v459, 32
    %v4028 = vpop.permute.xlu0 %4027
    %4029 = vrot.lane.b32.xlu0 %v460, 32
    %v4030 = vpop.permute.xlu0 %4029
    %v4032 = vsel %vm465, %v4028, 0
    %v4035 = vsel %vm465, %v4030, 0
    %4037 = vmatprep.subr.bf16.mxu0 0
    %4038 = vmatpush1.bf16.xpose.msra.mxu0 %v4035
    %4039 = vmatprep.subr.bf16.mxu0 0
    %4040 = vmatpush1.bf16.xpose.msra.mxu0 0
    %4041 = vmatprep.subr.bf16.mxu0 0
    %4042 = vmatpush1.bf16.xpose.msra.mxu0 0
    %4043 = vmatprep.subr.bf16.mxu0 0
    %4044 = vmatpush1.bf16.xpose.msra.mxu0 0
    %4045 = vmatprep.subr.bf16.mxu0 0
    %4046 = vmatpush1.bf16.xpose.msra.mxu0 0
    %4047 = vmatprep.subr.bf16.mxu0 0
    %4048 = vmatpush1.bf16.xpose.msra.mxu0 0
    %4049 = vmatprep.subr.bf16.mxu0 0
    %4050 = vmatpush1.bf16.xpose.msra.mxu0 0
    %4051 = vmatprep.subr.bf16.mxu0 0
    %4052 = vmatpush1.bf16.xpose.msra.mxu0 0
    %4053 = vmatprep.subr.bf16.mxu0 0
    %4054 = vmatpush1.bf16.xpose.msra.mxu0 0
    %4055 = vmatprep.subr.bf16.mxu0 0
    %4056 = vmatpush1.bf16.xpose.msra.mxu0 0
    %4057 = vmatprep.subr.bf16.mxu0 0
    %4058 = vmatpush1.bf16.xpose.msra.mxu0 0
    %4059 = vmatprep.subr.bf16.mxu0 0
    %4060 = vmatpush1.bf16.xpose.msra.mxu0 0
    %4061 = vmatprep.subr.bf16.mxu0 0
    %4062 = vmatpush1.bf16.xpose.msra.mxu0 0
    %4063 = vmatprep.subr.bf16.mxu0 0
    %4064 = vmatpush1.bf16.xpose.msra.mxu0 0
    %4065 = vmatprep.subr.bf16.mxu0 0
    %4066 = vmatpush1.bf16.xpose.msra.mxu0 0
    %4067 = vmatprep.subr.bf16.mxu0 0
    %4068 = vmatpush1.bf16.xpose.msra.mxu0 0
    %4069 = vmatprep.mubr.bf16.mxu0 0
    %4070 = vmatmul.mubr.bf16.gmra.mrb[0].mxu0 %v4032
    %v4071 = vpop.f32.mrb[0].mxu0
    %v4072 = vadd.f32 0.0, %v4071
    %v4073 = vpop.f32.mrb[0].mxu0
    %v4074 = vpop.f32.mrb[0].mxu0
    %v4075 = vadd.f32 0.0, %v4074
    %v4076 = vpop.f32.mrb[0].mxu0
    %4077 = vdwg.mxu0
    %4078 = vrot.lane.b32.xlu0 %v462, 32
    %v4079 = vpop.permute.xlu0 %4078
    %4080 = vrot.lane.b32.xlu0 %v463, 32
    %v4081 = vpop.permute.xlu0 %4080
    %v4083 = vsel %vm465, %v4079, 0
    %v4086 = vsel %vm465, %v4081, 0
    %4088 = vmatprep.subr.bf16.mxu0 0
    %4089 = vmatpush1.bf16.xpose.msra.mxu0 %v4086
    %4090 = vmatprep.subr.bf16.mxu0 0
    %4091 = vmatpush1.bf16.xpose.msra.mxu0 0
    %4092 = vmatprep.subr.bf16.mxu0 0
    %4093 = vmatpush1.bf16.xpose.msra.mxu0 0
    %4094 = vmatprep.subr.bf16.mxu0 0
    %4095 = vmatpush1.bf16.xpose.msra.mxu0 0
    %4096 = vmatprep.subr.bf16.mxu0 0
    %4097 = vmatpush1.bf16.xpose.msra.mxu0 0
    %4098 = vmatprep.subr.bf16.mxu0 0
    %4099 = vmatpush1.bf16.xpose.msra.mxu0 0
    %4100 = vmatprep.subr.bf16.mxu0 0
    %4101 = vmatpush1.bf16.xpose.msra.mxu0 0
    %4102 = vmatprep.subr.bf16.mxu0 0
    %4103 = vmatpush1.bf16.xpose.msra.mxu0 0
    %4104 = vmatprep.subr.bf16.mxu0 0
    %4105 = vmatpush1.bf16.xpose.msra.mxu0 0
    %4106 = vmatprep.subr.bf16.mxu0 0
    %4107 = vmatpush1.bf16.xpose.msra.mxu0 0
    %4108 = vmatprep.subr.bf16.mxu0 0
    %4109 = vmatpush1.bf16.xpose.msra.mxu0 0
    %4110 = vmatprep.subr.bf16.mxu0 0
    %4111 = vmatpush1.bf16.xpose.msra.mxu0 0
    %4112 = vmatprep.subr.bf16.mxu0 0
    %4113 = vmatpush1.bf16.xpose.msra.mxu0 0
    %4114 = vmatprep.subr.bf16.mxu0 0
    %4115 = vmatpush1.bf16.xpose.msra.mxu0 0
    %4116 = vmatprep.subr.bf16.mxu0 0
    %4117 = vmatpush1.bf16.xpose.msra.mxu0 0
    %4118 = vmatprep.subr.bf16.mxu0 0
    %4119 = vmatpush1.bf16.xpose.msra.mxu0 0
    %4120 = vmatprep.mubr.bf16.mxu0 0
    %4121 = vmatmul.mubr.bf16.gmra.mrb[0].mxu0 %v4083
    %v4122 = vpop.f32.mrb[0].mxu0
    %v4123 = vadd.f32 0.0, %v4122
    %v4124 = vpop.f32.mrb[0].mxu0
    %v4125 = vpop.f32.mrb[0].mxu0
    %v4126 = vadd.f32 0.0, %v4125
    %v4127 = vpop.f32.mrb[0].mxu0
    %4128 = vdwg.mxu0
    %v4129 = vsel %vm465, %v3970, -inf
    %4130 = vmax.xlane.f32.xlu0 %v4129
    %v4131 = vpop.xlane.xlu0 %4130
    %v4132 = vsel %vm465, %v3973, -inf
    %4133 = vmax.xlane.f32.xlu0 %v4132
    %v4134 = vpop.xlane.xlu0 %4133
    %v4135 = vsel %vm465, %v4021, -inf
    %4136 = vmax.xlane.f32.xlu0 %v4135
    %v4137 = vpop.xlane.xlu0 %4136
    %v4138 = vsel %vm465, %v4024, -inf
    %4139 = vmax.xlane.f32.xlu0 %v4138
    %v4140 = vpop.xlane.xlu0 %4139
    %v4141 = vsel %vm465, %v4072, -inf
    %4142 = vmax.xlane.f32.xlu0 %v4141
    %v4143 = vpop.xlane.xlu0 %4142
    %v4144 = vsel %vm465, %v4075, -inf
    %4145 = vmax.xlane.f32.xlu0 %v4144
    %v4146 = vpop.xlane.xlu0 %4145
    %v4147 = vsel %vm465, %v4123, -inf
    %4148 = vmax.xlane.f32.xlu0 %v4147
    %v4149 = vpop.xlane.xlu0 %4148
    %v4150 = vsel %vm465, %v4126, -inf
    %4151 = vmax.xlane.f32.xlu0 %v4150
    %v4152 = vpop.xlane.xlu0 %4151
    %v4153 = vsub.f32 %v3970, %v4131
    %v4154 = vsub.f32 %v3973, %v4134
    %v4155 = vsub.f32 %v4021, %v4137
    %v4156 = vsub.f32 %v4024, %v4140
    %v4157 = vsub.f32 %v4072, %v4143
    %v4158 = vsub.f32 %v4075, %v4146
    %v4159 = vsub.f32 %v4123, %v4149
    %v4160 = vsub.f32 %v4126, %v4152
    %v4161 = vmul.f32 %v4153, 1.442695
    %v4162 = vpow.pop %v4161
    %v4163 = vmul.f32 %v4154, 1.442695
    %v4164 = vpow.pop %v4163
    %v4165 = vmul.f32 %v4155, 1.442695
    %v4166 = vpow.pop %v4165
    %v4167 = vmul.f32 %v4156, 1.442695
    %v4168 = vpow.pop %v4167
    %v4169 = vmul.f32 %v4157, 1.442695
    %v4170 = vpow.pop %v4169
    %v4171 = vmul.f32 %v4158, 1.442695
    %v4172 = vpow.pop %v4171
    %v4173 = vmul.f32 %v4159, 1.442695
    %v4174 = vpow.pop %v4173
    %v4175 = vmul.f32 %v4160, 1.442695
    %v4176 = vpow.pop %v4175
    %v4177 = vsel %vm465, %v4162, 0.0
    %4178 = vadd.xlane.f32.xlu0 %v4177
    %v4179 = vpop.xlane.xlu0 %4178
    %v4180 = vsel %vm465, %v4164, 0.0
    %4181 = vadd.xlane.f32.xlu0 %v4180
    %v4182 = vpop.xlane.xlu0 %4181
    %v4183 = vsel %vm465, %v4166, 0.0
    %4184 = vadd.xlane.f32.xlu0 %v4183
    %v4185 = vpop.xlane.xlu0 %4184
    %v4186 = vsel %vm465, %v4168, 0.0
    %4187 = vadd.xlane.f32.xlu0 %v4186
    %v4188 = vpop.xlane.xlu0 %4187
    %v4189 = vsel %vm465, %v4170, 0.0
    %4190 = vadd.xlane.f32.xlu0 %v4189
    %v4191 = vpop.xlane.xlu0 %4190
    %v4192 = vsel %vm465, %v4172, 0.0
    %4193 = vadd.xlane.f32.xlu0 %v4192
    %v4194 = vpop.xlane.xlu0 %4193
    %v4195 = vsel %vm465, %v4174, 0.0
    %4196 = vadd.xlane.f32.xlu0 %v4195
    %v4197 = vpop.xlane.xlu0 %4196
    %v4198 = vsel %vm465, %v4176, 0.0
    %4199 = vadd.xlane.f32.xlu0 %v4198
    %v4200 = vpop.xlane.xlu0 %4199
    %v4201 = vrcp.pop %v4179
    %v4202 = vrcp.pop %v4182
    %v4203 = vrcp.pop %v4185
    %v4204 = vrcp.pop %v4188
    %v4205 = vrcp.pop %v4191
    %v4206 = vrcp.pop %v4194
    %v4207 = vrcp.pop %v4197
    %v4208 = vrcp.pop %v4200
    %v4209 = vmul.f32 %v4162, %v4201
    %v4210 = vmul.f32 %v4164, %v4202
    %v4211 = vmul.f32 %v4166, %v4203
    %v4212 = vmul.f32 %v4168, %v4204
    %v4213 = vmul.f32 %v4170, %v4205
    %v4214 = vmul.f32 %v4172, %v4206
    %v4215 = vmul.f32 %v4174, %v4207
    %v4216 = vmul.f32 %v4176, %v4208
    %v4217 = vpack.c.bf16 %v4210, %v4209
    %v4218 = vpack.c.bf16 %v4212, %v4211
    %v4219 = vpack.c.bf16 %v4214, %v4213
    %v4220 = vpack.c.bf16 %v4216, %v4215
    %4221 = vrot.lane.b32.xlu0 %v455, 32
    %v4222 = vpop.permute.xlu0 %4221
    %v4225 = vsel %vm465, %v4217, 0
    %4227 = vmatprep.subr.bf16.mxu0 0
    %4228 = vmatpush1.bf16.msra.mxu0 %v4222
    %4229 = vmatprep.subr.bf16.mxu0 0
    %4230 = vmatpush1.bf16.msra.mxu0 0
    %4231 = vmatprep.subr.bf16.mxu0 0
    %4232 = vmatpush1.bf16.msra.mxu0 0
    %4233 = vmatprep.subr.bf16.mxu0 0
    %4234 = vmatpush1.bf16.msra.mxu0 0
    %4235 = vmatprep.subr.bf16.mxu0 0
    %4236 = vmatpush1.bf16.msra.mxu0 0
    %4237 = vmatprep.subr.bf16.mxu0 0
    %4238 = vmatpush1.bf16.msra.mxu0 0
    %4239 = vmatprep.subr.bf16.mxu0 0
    %4240 = vmatpush1.bf16.msra.mxu0 0
    %4241 = vmatprep.subr.bf16.mxu0 0
    %4242 = vmatpush1.bf16.msra.mxu0 0
    %4243 = vmatprep.subr.bf16.mxu0 0
    %4244 = vmatpush1.bf16.msra.mxu0 0
    %4245 = vmatprep.subr.bf16.mxu0 0
    %4246 = vmatpush1.bf16.msra.mxu0 0
    %4247 = vmatprep.subr.bf16.mxu0 0
    %4248 = vmatpush1.bf16.msra.mxu0 0
    %4249 = vmatprep.subr.bf16.mxu0 0
    %4250 = vmatpush1.bf16.msra.mxu0 0
    %4251 = vmatprep.subr.bf16.mxu0 0
    %4252 = vmatpush1.bf16.msra.mxu0 0
    %4253 = vmatprep.subr.bf16.mxu0 0
    %4254 = vmatpush1.bf16.msra.mxu0 0
    %4255 = vmatprep.subr.bf16.mxu0 0
    %4256 = vmatpush1.bf16.msra.mxu0 0
    %4257 = vmatprep.subr.bf16.mxu0 0
    %4258 = vmatpush1.bf16.msra.mxu0 0
    %4259 = vmatprep.mubr.bf16.mxu0 0
    %4260 = vmatmul.mubr.bf16.gmra.mrb[0].mxu0 %v4225
    %v4261 = vpop.f32.mrb[0].mxu0
    %v4262 = vadd.f32 0.0, %v4261
    %v4263 = vpop.f32.mrb[0].mxu0
    %v4264 = vpop.f32.mrb[0].mxu0
    %v4265 = vadd.f32 0.0, %v4264
    %v4266 = vpop.f32.mrb[0].mxu0
    %4267 = vdwg.mxu0
    %4268 = vrot.lane.b32.xlu0 %v458, 32
    %v4269 = vpop.permute.xlu0 %4268
    %v4272 = vsel %vm465, %v4218, 0
    %4274 = vmatprep.subr.bf16.mxu0 0
    %4275 = vmatpush1.bf16.msra.mxu0 %v4269
    %4276 = vmatprep.subr.bf16.mxu0 0
    %4277 = vmatpush1.bf16.msra.mxu0 0
    %4278 = vmatprep.subr.bf16.mxu0 0
    %4279 = vmatpush1.bf16.msra.mxu0 0
    %4280 = vmatprep.subr.bf16.mxu0 0
    %4281 = vmatpush1.bf16.msra.mxu0 0
    %4282 = vmatprep.subr.bf16.mxu0 0
    %4283 = vmatpush1.bf16.msra.mxu0 0
    %4284 = vmatprep.subr.bf16.mxu0 0
    %4285 = vmatpush1.bf16.msra.mxu0 0
    %4286 = vmatprep.subr.bf16.mxu0 0
    %4287 = vmatpush1.bf16.msra.mxu0 0
    %4288 = vmatprep.subr.bf16.mxu0 0
    %4289 = vmatpush1.bf16.msra.mxu0 0
    %4290 = vmatprep.subr.bf16.mxu0 0
    %4291 = vmatpush1.bf16.msra.mxu0 0
    %4292 = vmatprep.subr.bf16.mxu0 0
    %4293 = vmatpush1.bf16.msra.mxu0 0
    %4294 = vmatprep.subr.bf16.mxu0 0
    %4295 = vmatpush1.bf16.msra.mxu0 0
    %4296 = vmatprep.subr.bf16.mxu0 0
    %4297 = vmatpush1.bf16.msra.mxu0 0
    %4298 = vmatprep.subr.bf16.mxu0 0
    %4299 = vmatpush1.bf16.msra.mxu0 0
    %4300 = vmatprep.subr.bf16.mxu0 0
    %4301 = vmatpush1.bf16.msra.mxu0 0
    %4302 = vmatprep.subr.bf16.mxu0 0
    %4303 = vmatpush1.bf16.msra.mxu0 0
    %4304 = vmatprep.subr.bf16.mxu0 0
    %4305 = vmatpush1.bf16.msra.mxu0 0
    %4306 = vmatprep.mubr.bf16.mxu0 0
    %4307 = vmatmul.mubr.bf16.gmra.mrb[0].mxu0 %v4272
    %v4308 = vpop.f32.mrb[0].mxu0
    %v4309 = vadd.f32 0.0, %v4308
    %v4310 = vpop.f32.mrb[0].mxu0
    %v4311 = vpop.f32.mrb[0].mxu0
    %v4312 = vadd.f32 0.0, %v4311
    %v4313 = vpop.f32.mrb[0].mxu0
    %4314 = vdwg.mxu0
    %4315 = vrot.lane.b32.xlu0 %v461, 32
    %v4316 = vpop.permute.xlu0 %4315
    %v4319 = vsel %vm465, %v4219, 0
    %4321 = vmatprep.subr.bf16.mxu0 0
    %4322 = vmatpush1.bf16.msra.mxu0 %v4316
    %4323 = vmatprep.subr.bf16.mxu0 0
    %4324 = vmatpush1.bf16.msra.mxu0 0
    %4325 = vmatprep.subr.bf16.mxu0 0
    %4326 = vmatpush1.bf16.msra.mxu0 0
    %4327 = vmatprep.subr.bf16.mxu0 0
    %4328 = vmatpush1.bf16.msra.mxu0 0
    %4329 = vmatprep.subr.bf16.mxu0 0
    %4330 = vmatpush1.bf16.msra.mxu0 0
    %4331 = vmatprep.subr.bf16.mxu0 0
    %4332 = vmatpush1.bf16.msra.mxu0 0
    %4333 = vmatprep.subr.bf16.mxu0 0
    %4334 = vmatpush1.bf16.msra.mxu0 0
    %4335 = vmatprep.subr.bf16.mxu0 0
    %4336 = vmatpush1.bf16.msra.mxu0 0
    %4337 = vmatprep.subr.bf16.mxu0 0
    %4338 = vmatpush1.bf16.msra.mxu0 0
    %4339 = vmatprep.subr.bf16.mxu0 0
    %4340 = vmatpush1.bf16.msra.mxu0 0
    %4341 = vmatprep.subr.bf16.mxu0 0
    %4342 = vmatpush1.bf16.msra.mxu0 0
    %4343 = vmatprep.subr.bf16.mxu0 0
    %4344 = vmatpush1.bf16.msra.mxu0 0
    %4345 = vmatprep.subr.bf16.mxu0 0
    %4346 = vmatpush1.bf16.msra.mxu0 0
    %4347 = vmatprep.subr.bf16.mxu0 0
    %4348 = vmatpush1.bf16.msra.mxu0 0
    %4349 = vmatprep.subr.bf16.mxu0 0
    %4350 = vmatpush1.bf16.msra.mxu0 0
    %4351 = vmatprep.subr.bf16.mxu0 0
    %4352 = vmatpush1.bf16.msra.mxu0 0
    %4353 = vmatprep.mubr.bf16.mxu0 0
    %4354 = vmatmul.mubr.bf16.gmra.mrb[0].mxu0 %v4319
    %v4355 = vpop.f32.mrb[0].mxu0
    %v4356 = vadd.f32 0.0, %v4355
    %v4357 = vpop.f32.mrb[0].mxu0
    %v4358 = vpop.f32.mrb[0].mxu0
    %v4359 = vadd.f32 0.0, %v4358
    %v4360 = vpop.f32.mrb[0].mxu0
    %4361 = vdwg.mxu0
    %4362 = vrot.lane.b32.xlu0 %v464, 32
    %v4363 = vpop.permute.xlu0 %4362
    %v4366 = vsel %vm465, %v4220, 0
    %4368 = vmatprep.subr.bf16.mxu0 0
    %4369 = vmatpush1.bf16.msra.mxu0 %v4363
    %4370 = vmatprep.subr.bf16.mxu0 0
    %4371 = vmatpush1.bf16.msra.mxu0 0
    %4372 = vmatprep.subr.bf16.mxu0 0
    %4373 = vmatpush1.bf16.msra.mxu0 0
    %4374 = vmatprep.subr.bf16.mxu0 0
    %4375 = vmatpush1.bf16.msra.mxu0 0
    %4376 = vmatprep.subr.bf16.mxu0 0
    %4377 = vmatpush1.bf16.msra.mxu0 0
    %4378 = vmatprep.subr.bf16.mxu0 0
    %4379 = vmatpush1.bf16.msra.mxu0 0
    %4380 = vmatprep.subr.bf16.mxu0 0
    %4381 = vmatpush1.bf16.msra.mxu0 0
    %4382 = vmatprep.subr.bf16.mxu0 0
    %4383 = vmatpush1.bf16.msra.mxu0 0
    %4384 = vmatprep.subr.bf16.mxu0 0
    %4385 = vmatpush1.bf16.msra.mxu0 0
    %4386 = vmatprep.subr.bf16.mxu0 0
    %4387 = vmatpush1.bf16.msra.mxu0 0
    %4388 = vmatprep.subr.bf16.mxu0 0
    %4389 = vmatpush1.bf16.msra.mxu0 0
    %4390 = vmatprep.subr.bf16.mxu0 0
    %4391 = vmatpush1.bf16.msra.mxu0 0
    %4392 = vmatprep.subr.bf16.mxu0 0
    %4393 = vmatpush1.bf16.msra.mxu0 0
    %4394 = vmatprep.subr.bf16.mxu0 0
    %4395 = vmatpush1.bf16.msra.mxu0 0
    %4396 = vmatprep.subr.bf16.mxu0 0
    %4397 = vmatpush1.bf16.msra.mxu0 0
    %4398 = vmatprep.subr.bf16.mxu0 0
    %4399 = vmatpush1.bf16.msra.mxu0 0
    %4400 = vmatprep.mubr.bf16.mxu0 0
    %4401 = vmatmul.mubr.bf16.gmra.mrb[0].mxu0 %v4366
    %v4402 = vpop.f32.mrb[0].mxu0
    %v4403 = vadd.f32 0.0, %v4402
    %v4404 = vpop.f32.mrb[0].mxu0
    %v4405 = vpop.f32.mrb[0].mxu0
    %v4406 = vadd.f32 0.0, %v4405
    %v4407 = vpop.f32.mrb[0].mxu0
    %4408 = vdwg.mxu0
    %v4409 = vpack.c.bf16 %v4265, %v4262
    %v4410 = vpack.c.bf16 %v4312, %v4309
    %v4411 = vpack.c.bf16 %v4359, %v4356
    %v4412 = vpack.c.bf16 %v4406, %v4403
    %s4413 = scalar_lea.vmem [#allocation7], 48
    %v4414 = vld [vmem:[%s4413] sm:$0xf]
    %v4415 = vld [vmem:[%s4413 + $0x4] sm:$0xf]
    %v4418 = vunpack.c.l.b16 %v4414
    %v4419 = vunpack.c.l.b16 %v4415
    %v4420 = vpack.c.b16 %v4419, %v4418
    %v4423 = vsel %vm465, %v4409, 0
    %v4426 = vsel %vm465, %v4410, 0
    %v4429 = vsel %vm465, %v4411, 0
    %v4432 = vsel %vm465, %v4412, 0
    %4434 = vmatprep.subr.bf16.mxu0 0
    %4435 = vmatpush1.bf16.msra.mxu0 %v4420
    %4436 = vmatprep.subr.bf16.mxu0 0
    %4437 = vmatpush1.bf16.msra.mxu0 0
    %4438 = vmatprep.subr.bf16.mxu0 0
    %4439 = vmatpush1.bf16.msra.mxu0 0
    %4440 = vmatprep.subr.bf16.mxu0 0
    %4441 = vmatpush1.bf16.msra.mxu0 0
    %4442 = vmatprep.subr.bf16.mxu0 0
    %4443 = vmatpush1.bf16.msra.mxu0 0
    %4444 = vmatprep.subr.bf16.mxu0 0
    %4445 = vmatpush1.bf16.msra.mxu0 0
    %4446 = vmatprep.subr.bf16.mxu0 0
    %4447 = vmatpush1.bf16.msra.mxu0 0
    %4448 = vmatprep.subr.bf16.mxu0 0
    %4449 = vmatpush1.bf16.msra.mxu0 0
    %4450 = vmatprep.subr.bf16.mxu0 0
    %4451 = vmatpush1.bf16.msra.mxu0 0
    %4452 = vmatprep.subr.bf16.mxu0 0
    %4453 = vmatpush1.bf16.msra.mxu0 0
    %4454 = vmatprep.subr.bf16.mxu0 0
    %4455 = vmatpush1.bf16.msra.mxu0 0
    %4456 = vmatprep.subr.bf16.mxu0 0
    %4457 = vmatpush1.bf16.msra.mxu0 0
    %4458 = vmatprep.subr.bf16.mxu0 0
    %4459 = vmatpush1.bf16.msra.mxu0 0
    %4460 = vmatprep.subr.bf16.mxu0 0
    %4461 = vmatpush1.bf16.msra.mxu0 0
    %4462 = vmatprep.subr.bf16.mxu0 0
    %4463 = vmatpush1.bf16.msra.mxu0 0
    %4464 = vmatprep.subr.bf16.mxu0 0
    %4465 = vmatpush1.bf16.msra.mxu0 0
    %4466 = vmatprep.mubr.bf16.mxu0 0
    %4467 = vmatmul.mubr.bf16.gmra.mrb[0].mxu0 %v4423
    %v4468 = vpop.f32.mrb[0].mxu0
    %v4469 = vadd.f32 0.0, %v4468
    %v4470 = vpop.f32.mrb[0].mxu0
    %v4471 = vpop.f32.mrb[0].mxu0
    %v4472 = vadd.f32 0.0, %v4471
    %v4473 = vpop.f32.mrb[0].mxu0
    %4474 = vmatprep.mubr.bf16.mxu0 0
    %4475 = vmatmul.mubr.bf16.gmra.mrb[0].mxu0 %v4426
    %v4476 = vpop.f32.mrb[0].mxu0
    %v4477 = vadd.f32 0.0, %v4476
    %v4478 = vpop.f32.mrb[0].mxu0
    %v4479 = vpop.f32.mrb[0].mxu0
    %v4480 = vadd.f32 0.0, %v4479
    %v4481 = vpop.f32.mrb[0].mxu0
    %4482 = vmatprep.mubr.bf16.mxu0 0
    %4483 = vmatmul.mubr.bf16.gmra.mrb[0].mxu0 %v4429
    %v4484 = vpop.f32.mrb[0].mxu0
    %v4485 = vadd.f32 0.0, %v4484
    %v4486 = vpop.f32.mrb[0].mxu0
    %v4487 = vpop.f32.mrb[0].mxu0
    %v4488 = vadd.f32 0.0, %v4487
    %v4489 = vpop.f32.mrb[0].mxu0
    %4490 = vmatprep.mubr.bf16.mxu0 0
    %4491 = vmatmul.mubr.bf16.gmra.mrb[0].mxu0 %v4432
    %v4492 = vpop.f32.mrb[0].mxu0
    %v4493 = vadd.f32 0.0, %v4492
    %v4494 = vpop.f32.mrb[0].mxu0
    %v4495 = vpop.f32.mrb[0].mxu0
    %v4496 = vadd.f32 0.0, %v4495
    %v4497 = vpop.f32.mrb[0].mxu0
    %4498 = vdwg.mxu0
    %v4499 = vadd.f32 %v3917, %v4469
    %v4500 = vadd.f32 %v3918, %v4472
    %v4501 = vadd.f32 %v3919, %v4477
    %v4502 = vadd.f32 %v3920, %v4480
    %v4503 = vadd.f32 %v3921, %v4485
    %v4504 = vadd.f32 %v3922, %v4488
    %v4505 = vadd.f32 %v3923, %v4493
    %v4506 = vadd.f32 %v3924, %v4496
    %4507 = vrot.lane.b32.xlu0 %v453, 16
    %v4508 = vpop.permute.xlu0 %4507
    %4509 = vrot.lane.b32.xlu0 %v454, 16
    %v4510 = vpop.permute.xlu0 %4509
    %v4512 = vsel %vm465, %v4508, 0
    %v4515 = vsel %vm465, %v4510, 0
    %4517 = vmatprep.subr.bf16.mxu0 0
    %4518 = vmatpush1.bf16.xpose.msra.mxu0 %v4515
    %4519 = vmatprep.subr.bf16.mxu0 0
    %4520 = vmatpush1.bf16.xpose.msra.mxu0 0
    %4521 = vmatprep.subr.bf16.mxu0 0
    %4522 = vmatpush1.bf16.xpose.msra.mxu0 0
    %4523 = vmatprep.subr.bf16.mxu0 0
    %4524 = vmatpush1.bf16.xpose.msra.mxu0 0
    %4525 = vmatprep.subr.bf16.mxu0 0
    %4526 = vmatpush1.bf16.xpose.msra.mxu0 0
    %4527 = vmatprep.subr.bf16.mxu0 0
    %4528 = vmatpush1.bf16.xpose.msra.mxu0 0
    %4529 = vmatprep.subr.bf16.mxu0 0
    %4530 = vmatpush1.bf16.xpose.msra.mxu0 0
    %4531 = vmatprep.subr.bf16.mxu0 0
    %4532 = vmatpush1.bf16.xpose.msra.mxu0 0
    %4533 = vmatprep.subr.bf16.mxu0 0
    %4534 = vmatpush1.bf16.xpose.msra.mxu0 0
    %4535 = vmatprep.subr.bf16.mxu0 0
    %4536 = vmatpush1.bf16.xpose.msra.mxu0 0
    %4537 = vmatprep.subr.bf16.mxu0 0
    %4538 = vmatpush1.bf16.xpose.msra.mxu0 0
    %4539 = vmatprep.subr.bf16.mxu0 0
    %4540 = vmatpush1.bf16.xpose.msra.mxu0 0
    %4541 = vmatprep.subr.bf16.mxu0 0
    %4542 = vmatpush1.bf16.xpose.msra.mxu0 0
    %4543 = vmatprep.subr.bf16.mxu0 0
    %4544 = vmatpush1.bf16.xpose.msra.mxu0 0
    %4545 = vmatprep.subr.bf16.mxu0 0
    %4546 = vmatpush1.bf16.xpose.msra.mxu0 0
    %4547 = vmatprep.subr.bf16.mxu0 0
    %4548 = vmatpush1.bf16.xpose.msra.mxu0 0
    %4549 = vmatprep.mubr.bf16.mxu0 0
    %4550 = vmatmul.mubr.bf16.gmra.mrb[0].mxu0 %v4512
    %v4551 = vpop.f32.mrb[0].mxu0
    %v4552 = vadd.f32 0.0, %v4551
    %v4553 = vpop.f32.mrb[0].mxu0
    %v4554 = vpop.f32.mrb[0].mxu0
    %v4555 = vadd.f32 0.0, %v4554
    %v4556 = vpop.f32.mrb[0].mxu0
    %4557 = vdwg.mxu0
    %4558 = vrot.lane.b32.xlu0 %v456, 16
    %v4559 = vpop.permute.xlu0 %4558
    %4560 = vrot.lane.b32.xlu0 %v457, 16
    %v4561 = vpop.permute.xlu0 %4560
    %v4563 = vsel %vm465, %v4559, 0
    %v4566 = vsel %vm465, %v4561, 0
    %4568 = vmatprep.subr.bf16.mxu0 0
    %4569 = vmatpush1.bf16.xpose.msra.mxu0 %v4566
    %4570 = vmatprep.subr.bf16.mxu0 0
    %4571 = vmatpush1.bf16.xpose.msra.mxu0 0
    %4572 = vmatprep.subr.bf16.mxu0 0
    %4573 = vmatpush1.bf16.xpose.msra.mxu0 0
    %4574 = vmatprep.subr.bf16.mxu0 0
    %4575 = vmatpush1.bf16.xpose.msra.mxu0 0
    %4576 = vmatprep.subr.bf16.mxu0 0
    %4577 = vmatpush1.bf16.xpose.msra.mxu0 0
    %4578 = vmatprep.subr.bf16.mxu0 0
    %4579 = vmatpush1.bf16.xpose.msra.mxu0 0
    %4580 = vmatprep.subr.bf16.mxu0 0
    %4581 = vmatpush1.bf16.xpose.msra.mxu0 0
    %4582 = vmatprep.subr.bf16.mxu0 0
    %4583 = vmatpush1.bf16.xpose.msra.mxu0 0
    %4584 = vmatprep.subr.bf16.mxu0 0
    %4585 = vmatpush1.bf16.xpose.msra.mxu0 0
    %4586 = vmatprep.subr.bf16.mxu0 0
    %4587 = vmatpush1.bf16.xpose.msra.mxu0 0
    %4588 = vmatprep.subr.bf16.mxu0 0
    %4589 = vmatpush1.bf16.xpose.msra.mxu0 0
    %4590 = vmatprep.subr.bf16.mxu0 0
    %4591 = vmatpush1.bf16.xpose.msra.mxu0 0
    %4592 = vmatprep.subr.bf16.mxu0 0
    %4593 = vmatpush1.bf16.xpose.msra.mxu0 0
    %4594 = vmatprep.subr.bf16.mxu0 0
    %4595 = vmatpush1.bf16.xpose.msra.mxu0 0
    %4596 = vmatprep.subr.bf16.mxu0 0
    %4597 = vmatpush1.bf16.xpose.msra.mxu0 0
    %4598 = vmatprep.subr.bf16.mxu0 0
    %4599 = vmatpush1.bf16.xpose.msra.mxu0 0
    %4600 = vmatprep.mubr.bf16.mxu0 0
    %4601 = vmatmul.mubr.bf16.gmra.mrb[0].mxu0 %v4563
    %v4602 = vpop.f32.mrb[0].mxu0
    %v4603 = vadd.f32 0.0, %v4602
    %v4604 = vpop.f32.mrb[0].mxu0
    %v4605 = vpop.f32.mrb[0].mxu0
    %v4606 = vadd.f32 0.0, %v4605
    %v4607 = vpop.f32.mrb[0].mxu0
    %4608 = vdwg.mxu0
    %4609 = vrot.lane.b32.xlu0 %v459, 16
    %v4610 = vpop.permute.xlu0 %4609
    %4611 = vrot.lane.b32.xlu0 %v460, 16
    %v4612 = vpop.permute.xlu0 %4611
    %v4614 = vsel %vm465, %v4610, 0
    %v4617 = vsel %vm465, %v4612, 0
    %4619 = vmatprep.subr.bf16.mxu0 0
    %4620 = vmatpush1.bf16.xpose.msra.mxu0 %v4617
    %4621 = vmatprep.subr.bf16.mxu0 0
    %4622 = vmatpush1.bf16.xpose.msra.mxu0 0
    %4623 = vmatprep.subr.bf16.mxu0 0
    %4624 = vmatpush1.bf16.xpose.msra.mxu0 0
    %4625 = vmatprep.subr.bf16.mxu0 0
    %4626 = vmatpush1.bf16.xpose.msra.mxu0 0
    %4627 = vmatprep.subr.bf16.mxu0 0
    %4628 = vmatpush1.bf16.xpose.msra.mxu0 0
    %4629 = vmatprep.subr.bf16.mxu0 0
    %4630 = vmatpush1.bf16.xpose.msra.mxu0 0
    %4631 = vmatprep.subr.bf16.mxu0 0
    %4632 = vmatpush1.bf16.xpose.msra.mxu0 0
    %4633 = vmatprep.subr.bf16.mxu0 0
    %4634 = vmatpush1.bf16.xpose.msra.mxu0 0
    %4635 = vmatprep.subr.bf16.mxu0 0
    %4636 = vmatpush1.bf16.xpose.msra.mxu0 0
    %4637 = vmatprep.subr.bf16.mxu0 0
    %4638 = vmatpush1.bf16.xpose.msra.mxu0 0
    %4639 = vmatprep.subr.bf16.mxu0 0
    %4640 = vmatpush1.bf16.xpose.msra.mxu0 0
    %4641 = vmatprep.subr.bf16.mxu0 0
    %4642 = vmatpush1.bf16.xpose.msra.mxu0 0
    %4643 = vmatprep.subr.bf16.mxu0 0
    %4644 = vmatpush1.bf16.xpose.msra.mxu0 0
    %4645 = vmatprep.subr.bf16.mxu0 0
    %4646 = vmatpush1.bf16.xpose.msra.mxu0 0
    %4647 = vmatprep.subr.bf16.mxu0 0
    %4648 = vmatpush1.bf16.xpose.msra.mxu0 0
    %4649 = vmatprep.subr.bf16.mxu0 0
    %4650 = vmatpush1.bf16.xpose.msra.mxu0 0
    %4651 = vmatprep.mubr.bf16.mxu0 0
    %4652 = vmatmul.mubr.bf16.gmra.mrb[0].mxu0 %v4614
    %v4653 = vpop.f32.mrb[0].mxu0
    %v4654 = vadd.f32 0.0, %v4653
    %v4655 = vpop.f32.mrb[0].mxu0
    %v4656 = vpop.f32.mrb[0].mxu0
    %v4657 = vadd.f32 0.0, %v4656
    %v4658 = vpop.f32.mrb[0].mxu0
    %4659 = vdwg.mxu0
    %4660 = vrot.lane.b32.xlu0 %v462, 16
    %v4661 = vpop.permute.xlu0 %4660
    %4662 = vrot.lane.b32.xlu0 %v463, 16
    %v4663 = vpop.permute.xlu0 %4662
    %v4665 = vsel %vm465, %v4661, 0
    %v4668 = vsel %vm465, %v4663, 0
    %4670 = vmatprep.subr.bf16.mxu0 0
    %4671 = vmatpush1.bf16.xpose.msra.mxu0 %v4668
    %4672 = vmatprep.subr.bf16.mxu0 0
    %4673 = vmatpush1.bf16.xpose.msra.mxu0 0
    %4674 = vmatprep.subr.bf16.mxu0 0
    %4675 = vmatpush1.bf16.xpose.msra.mxu0 0
    %4676 = vmatprep.subr.bf16.mxu0 0
    %4677 = vmatpush1.bf16.xpose.msra.mxu0 0
    %4678 = vmatprep.subr.bf16.mxu0 0
    %4679 = vmatpush1.bf16.xpose.msra.mxu0 0
    %4680 = vmatprep.subr.bf16.mxu0 0
    %4681 = vmatpush1.bf16.xpose.msra.mxu0 0
    %4682 = vmatprep.subr.bf16.mxu0 0
    %4683 = vmatpush1.bf16.xpose.msra.mxu0 0
    %4684 = vmatprep.subr.bf16.mxu0 0
    %4685 = vmatpush1.bf16.xpose.msra.mxu0 0
    %4686 = vmatprep.subr.bf16.mxu0 0
    %4687 = vmatpush1.bf16.xpose.msra.mxu0 0
    %4688 = vmatprep.subr.bf16.mxu0 0
    %4689 = vmatpush1.bf16.xpose.msra.mxu0 0
    %4690 = vmatprep.subr.bf16.mxu0 0
    %4691 = vmatpush1.bf16.xpose.msra.mxu0 0
    %4692 = vmatprep.subr.bf16.mxu0 0
    %4693 = vmatpush1.bf16.xpose.msra.mxu0 0
    %4694 = vmatprep.subr.bf16.mxu0 0
    %4695 = vmatpush1.bf16.xpose.msra.mxu0 0
    %4696 = vmatprep.subr.bf16.mxu0 0
    %4697 = vmatpush1.bf16.xpose.msra.mxu0 0
    %4698 = vmatprep.subr.bf16.mxu0 0
    %4699 = vmatpush1.bf16.xpose.msra.mxu0 0
    %4700 = vmatprep.subr.bf16.mxu0 0
    %4701 = vmatpush1.bf16.xpose.msra.mxu0 0
    %4702 = vmatprep.mubr.bf16.mxu0 0
    %4703 = vmatmul.mubr.bf16.gmra.mrb[0].mxu0 %v4665
    %v4704 = vpop.f32.mrb[0].mxu0
    %v4705 = vadd.f32 0.0, %v4704
    %v4706 = vpop.f32.mrb[0].mxu0
    %v4707 = vpop.f32.mrb[0].mxu0
    %v4708 = vadd.f32 0.0, %v4707
    %v4709 = vpop.f32.mrb[0].mxu0
    %4710 = vdwg.mxu0
    %v4711 = vsel %vm465, %v4552, -inf
    %4712 = vmax.xlane.f32.xlu0 %v4711
    %v4713 = vpop.xlane.xlu0 %4712
    %v4714 = vsel %vm465, %v4555, -inf
    %4715 = vmax.xlane.f32.xlu0 %v4714
    %v4716 = vpop.xlane.xlu0 %4715
    %v4717 = vsel %vm465, %v4603, -inf
    %4718 = vmax.xlane.f32.xlu0 %v4717
    %v4719 = vpop.xlane.xlu0 %4718
    %v4720 = vsel %vm465, %v4606, -inf
    %4721 = vmax.xlane.f32.xlu0 %v4720
    %v4722 = vpop.xlane.xlu0 %4721
    %v4723 = vsel %vm465, %v4654, -inf
    %4724 = vmax.xlane.f32.xlu0 %v4723
    %v4725 = vpop.xlane.xlu0 %4724
    %v4726 = vsel %vm465, %v4657, -inf
    %4727 = vmax.xlane.f32.xlu0 %v4726
    %v4728 = vpop.xlane.xlu0 %4727
    %v4729 = vsel %vm465, %v4705, -inf
    %4730 = vmax.xlane.f32.xlu0 %v4729
    %v4731 = vpop.xlane.xlu0 %4730
    %v4732 = vsel %vm465, %v4708, -inf
    %4733 = vmax.xlane.f32.xlu0 %v4732
    %v4734 = vpop.xlane.xlu0 %4733
    %v4735 = vsub.f32 %v4552, %v4713
    %v4736 = vsub.f32 %v4555, %v4716
    %v4737 = vsub.f32 %v4603, %v4719
    %v4738 = vsub.f32 %v4606, %v4722
    %v4739 = vsub.f32 %v4654, %v4725
    %v4740 = vsub.f32 %v4657, %v4728
    %v4741 = vsub.f32 %v4705, %v4731
    %v4742 = vsub.f32 %v4708, %v4734
    %v4743 = vmul.f32 %v4735, 1.442695
    %v4744 = vpow.pop %v4743
    %v4745 = vmul.f32 %v4736, 1.442695
    %v4746 = vpow.pop %v4745
    %v4747 = vmul.f32 %v4737, 1.442695
    %v4748 = vpow.pop %v4747
    %v4749 = vmul.f32 %v4738, 1.442695
    %v4750 = vpow.pop %v4749
    %v4751 = vmul.f32 %v4739, 1.442695
    %v4752 = vpow.pop %v4751
    %v4753 = vmul.f32 %v4740, 1.442695
    %v4754 = vpow.pop %v4753
    %v4755 = vmul.f32 %v4741, 1.442695
    %v4756 = vpow.pop %v4755
    %v4757 = vmul.f32 %v4742, 1.442695
    %v4758 = vpow.pop %v4757
    %v4759 = vsel %vm465, %v4744, 0.0
    %4760 = vadd.xlane.f32.xlu0 %v4759
    %v4761 = vpop.xlane.xlu0 %4760
    %v4762 = vsel %vm465, %v4746, 0.0
    %4763 = vadd.xlane.f32.xlu0 %v4762
    %v4764 = vpop.xlane.xlu0 %4763
    %v4765 = vsel %vm465, %v4748, 0.0
    %4766 = vadd.xlane.f32.xlu0 %v4765
    %v4767 = vpop.xlane.xlu0 %4766
    %v4768 = vsel %vm465, %v4750, 0.0
    %4769 = vadd.xlane.f32.xlu0 %v4768
    %v4770 = vpop.xlane.xlu0 %4769
    %v4771 = vsel %vm465, %v4752, 0.0
    %4772 = vadd.xlane.f32.xlu0 %v4771
    %v4773 = vpop.xlane.xlu0 %4772
    %v4774 = vsel %vm465, %v4754, 0.0
    %4775 = vadd.xlane.f32.xlu0 %v4774
    %v4776 = vpop.xlane.xlu0 %4775
    %v4777 = vsel %vm465, %v4756, 0.0
    %4778 = vadd.xlane.f32.xlu0 %v4777
    %v4779 = vpop.xlane.xlu0 %4778
    %v4780 = vsel %vm465, %v4758, 0.0
    %4781 = vadd.xlane.f32.xlu0 %v4780
    %v4782 = vpop.xlane.xlu0 %4781
    %v4783 = vrcp.pop %v4761
    %v4784 = vrcp.pop %v4764
    %v4785 = vrcp.pop %v4767
    %v4786 = vrcp.pop %v4770
    %v4787 = vrcp.pop %v4773
    %v4788 = vrcp.pop %v4776
    %v4789 = vrcp.pop %v4779
    %v4790 = vrcp.pop %v4782
    %v4791 = vmul.f32 %v4744, %v4783
    %v4792 = vmul.f32 %v4746, %v4784
    %v4793 = vmul.f32 %v4748, %v4785
    %v4794 = vmul.f32 %v4750, %v4786
    %v4795 = vmul.f32 %v4752, %v4787
    %v4796 = vmul.f32 %v4754, %v4788
    %v4797 = vmul.f32 %v4756, %v4789
    %v4798 = vmul.f32 %v4758, %v4790
    %v4799 = vpack.c.bf16 %v4792, %v4791
    %v4800 = vpack.c.bf16 %v4794, %v4793
    %v4801 = vpack.c.bf16 %v4796, %v4795
    %v4802 = vpack.c.bf16 %v4798, %v4797
    %4803 = vrot.lane.b32.xlu0 %v455, 16
    %v4804 = vpop.permute.xlu0 %4803
    %v4807 = vsel %vm465, %v4799, 0
    %4809 = vmatprep.subr.bf16.mxu0 0
    %4810 = vmatpush1.bf16.msra.mxu0 %v4804
    %4811 = vmatprep.subr.bf16.mxu0 0
    %4812 = vmatpush1.bf16.msra.mxu0 0
    %4813 = vmatprep.subr.bf16.mxu0 0
    %4814 = vmatpush1.bf16.msra.mxu0 0
    %4815 = vmatprep.subr.bf16.mxu0 0
    %4816 = vmatpush1.bf16.msra.mxu0 0
    %4817 = vmatprep.subr.bf16.mxu0 0
    %4818 = vmatpush1.bf16.msra.mxu0 0
    %4819 = vmatprep.subr.bf16.mxu0 0
    %4820 = vmatpush1.bf16.msra.mxu0 0
    %4821 = vmatprep.subr.bf16.mxu0 0
    %4822 = vmatpush1.bf16.msra.mxu0 0
    %4823 = vmatprep.subr.bf16.mxu0 0
    %4824 = vmatpush1.bf16.msra.mxu0 0
    %4825 = vmatprep.subr.bf16.mxu0 0
    %4826 = vmatpush1.bf16.msra.mxu0 0
    %4827 = vmatprep.subr.bf16.mxu0 0
    %4828 = vmatpush1.bf16.msra.mxu0 0
    %4829 = vmatprep.subr.bf16.mxu0 0
    %4830 = vmatpush1.bf16.msra.mxu0 0
    %4831 = vmatprep.subr.bf16.mxu0 0
    %4832 = vmatpush1.bf16.msra.mxu0 0
    %4833 = vmatprep.subr.bf16.mxu0 0
    %4834 = vmatpush1.bf16.msra.mxu0 0
    %4835 = vmatprep.subr.bf16.mxu0 0
    %4836 = vmatpush1.bf16.msra.mxu0 0
    %4837 = vmatprep.subr.bf16.mxu0 0
    %4838 = vmatpush1.bf16.msra.mxu0 0
    %4839 = vmatprep.subr.bf16.mxu0 0
    %4840 = vmatpush1.bf16.msra.mxu0 0
    %4841 = vmatprep.mubr.bf16.mxu0 0
    %4842 = vmatmul.mubr.bf16.gmra.mrb[0].mxu0 %v4807
    %v4843 = vpop.f32.mrb[0].mxu0
    %v4844 = vadd.f32 0.0, %v4843
    %v4845 = vpop.f32.mrb[0].mxu0
    %v4846 = vpop.f32.mrb[0].mxu0
    %v4847 = vadd.f32 0.0, %v4846
    %v4848 = vpop.f32.mrb[0].mxu0
    %4849 = vdwg.mxu0
    %4850 = vrot.lane.b32.xlu0 %v458, 16
    %v4851 = vpop.permute.xlu0 %4850
    %v4854 = vsel %vm465, %v4800, 0
    %4856 = vmatprep.subr.bf16.mxu0 0
    %4857 = vmatpush1.bf16.msra.mxu0 %v4851
    %4858 = vmatprep.subr.bf16.mxu0 0
    %4859 = vmatpush1.bf16.msra.mxu0 0
    %4860 = vmatprep.subr.bf16.mxu0 0
    %4861 = vmatpush1.bf16.msra.mxu0 0
    %4862 = vmatprep.subr.bf16.mxu0 0
    %4863 = vmatpush1.bf16.msra.mxu0 0
    %4864 = vmatprep.subr.bf16.mxu0 0
    %4865 = vmatpush1.bf16.msra.mxu0 0
    %4866 = vmatprep.subr.bf16.mxu0 0
    %4867 = vmatpush1.bf16.msra.mxu0 0
    %4868 = vmatprep.subr.bf16.mxu0 0
    %4869 = vmatpush1.bf16.msra.mxu0 0
    %4870 = vmatprep.subr.bf16.mxu0 0
    %4871 = vmatpush1.bf16.msra.mxu0 0
    %4872 = vmatprep.subr.bf16.mxu0 0
    %4873 = vmatpush1.bf16.msra.mxu0 0
    %4874 = vmatprep.subr.bf16.mxu0 0
    %4875 = vmatpush1.bf16.msra.mxu0 0
    %4876 = vmatprep.subr.bf16.mxu0 0
    %4877 = vmatpush1.bf16.msra.mxu0 0
    %4878 = vmatprep.subr.bf16.mxu0 0
    %4879 = vmatpush1.bf16.msra.mxu0 0
    %4880 = vmatprep.subr.bf16.mxu0 0
    %4881 = vmatpush1.bf16.msra.mxu0 0
    %4882 = vmatprep.subr.bf16.mxu0 0
    %4883 = vmatpush1.bf16.msra.mxu0 0
    %4884 = vmatprep.subr.bf16.mxu0 0
    %4885 = vmatpush1.bf16.msra.mxu0 0
    %4886 = vmatprep.subr.bf16.mxu0 0
    %4887 = vmatpush1.bf16.msra.mxu0 0
    %4888 = vmatprep.mubr.bf16.mxu0 0
    %4889 = vmatmul.mubr.bf16.gmra.mrb[0].mxu0 %v4854
    %v4890 = vpop.f32.mrb[0].mxu0
    %v4891 = vadd.f32 0.0, %v4890
    %v4892 = vpop.f32.mrb[0].mxu0
    %v4893 = vpop.f32.mrb[0].mxu0
    %v4894 = vadd.f32 0.0, %v4893
    %v4895 = vpop.f32.mrb[0].mxu0
    %4896 = vdwg.mxu0
    %4897 = vrot.lane.b32.xlu0 %v461, 16
    %v4898 = vpop.permute.xlu0 %4897
    %v4901 = vsel %vm465, %v4801, 0
    %4903 = vmatprep.subr.bf16.mxu0 0
    %4904 = vmatpush1.bf16.msra.mxu0 %v4898
    %4905 = vmatprep.subr.bf16.mxu0 0
    %4906 = vmatpush1.bf16.msra.mxu0 0
    %4907 = vmatprep.subr.bf16.mxu0 0
    %4908 = vmatpush1.bf16.msra.mxu0 0
    %4909 = vmatprep.subr.bf16.mxu0 0
    %4910 = vmatpush1.bf16.msra.mxu0 0
    %4911 = vmatprep.subr.bf16.mxu0 0
    %4912 = vmatpush1.bf16.msra.mxu0 0
    %4913 = vmatprep.subr.bf16.mxu0 0
    %4914 = vmatpush1.bf16.msra.mxu0 0
    %4915 = vmatprep.subr.bf16.mxu0 0
    %4916 = vmatpush1.bf16.msra.mxu0 0
    %4917 = vmatprep.subr.bf16.mxu0 0
    %4918 = vmatpush1.bf16.msra.mxu0 0
    %4919 = vmatprep.subr.bf16.mxu0 0
    %4920 = vmatpush1.bf16.msra.mxu0 0
    %4921 = vmatprep.subr.bf16.mxu0 0
    %4922 = vmatpush1.bf16.msra.mxu0 0
    %4923 = vmatprep.subr.bf16.mxu0 0
    %4924 = vmatpush1.bf16.msra.mxu0 0
    %4925 = vmatprep.subr.bf16.mxu0 0
    %4926 = vmatpush1.bf16.msra.mxu0 0
    %4927 = vmatprep.subr.bf16.mxu0 0
    %4928 = vmatpush1.bf16.msra.mxu0 0
    %4929 = vmatprep.subr.bf16.mxu0 0
    %4930 = vmatpush1.bf16.msra.mxu0 0
    %4931 = vmatprep.subr.bf16.mxu0 0
    %4932 = vmatpush1.bf16.msra.mxu0 0
    %4933 = vmatprep.subr.bf16.mxu0 0
    %4934 = vmatpush1.bf16.msra.mxu0 0
    %4935 = vmatprep.mubr.bf16.mxu0 0
    %4936 = vmatmul.mubr.bf16.gmra.mrb[0].mxu0 %v4901
    %v4937 = vpop.f32.mrb[0].mxu0
    %v4938 = vadd.f32 0.0, %v4937
    %v4939 = vpop.f32.mrb[0].mxu0
    %v4940 = vpop.f32.mrb[0].mxu0
    %v4941 = vadd.f32 0.0, %v4940
    %v4942 = vpop.f32.mrb[0].mxu0
    %4943 = vdwg.mxu0
    %4944 = vrot.lane.b32.xlu0 %v464, 16
    %v4945 = vpop.permute.xlu0 %4944
    %v4948 = vsel %vm465, %v4802, 0
    %4950 = vmatprep.subr.bf16.mxu0 0
    %4951 = vmatpush1.bf16.msra.mxu0 %v4945
    %4952 = vmatprep.subr.bf16.mxu0 0
    %4953 = vmatpush1.bf16.msra.mxu0 0
    %4954 = vmatprep.subr.bf16.mxu0 0
    %4955 = vmatpush1.bf16.msra.mxu0 0
    %4956 = vmatprep.subr.bf16.mxu0 0
    %4957 = vmatpush1.bf16.msra.mxu0 0
    %4958 = vmatprep.subr.bf16.mxu0 0
    %4959 = vmatpush1.bf16.msra.mxu0 0
    %4960 = vmatprep.subr.bf16.mxu0 0
    %4961 = vmatpush1.bf16.msra.mxu0 0
    %4962 = vmatprep.subr.bf16.mxu0 0
    %4963 = vmatpush1.bf16.msra.mxu0 0
    %4964 = vmatprep.subr.bf16.mxu0 0
    %4965 = vmatpush1.bf16.msra.mxu0 0
    %4966 = vmatprep.subr.bf16.mxu0 0
    %4967 = vmatpush1.bf16.msra.mxu0 0
    %4968 = vmatprep.subr.bf16.mxu0 0
    %4969 = vmatpush1.bf16.msra.mxu0 0
    %4970 = vmatprep.subr.bf16.mxu0 0
    %4971 = vmatpush1.bf16.msra.mxu0 0
    %4972 = vmatprep.subr.bf16.mxu0 0
    %4973 = vmatpush1.bf16.msra.mxu0 0
    %4974 = vmatprep.subr.bf16.mxu0 0
    %4975 = vmatpush1.bf16.msra.mxu0 0
    %4976 = vmatprep.subr.bf16.mxu0 0
    %4977 = vmatpush1.bf16.msra.mxu0 0
    %4978 = vmatprep.subr.bf16.mxu0 0
    %4979 = vmatpush1.bf16.msra.mxu0 0
    %4980 = vmatprep.subr.bf16.mxu0 0
    %4981 = vmatpush1.bf16.msra.mxu0 0
    %4982 = vmatprep.mubr.bf16.mxu0 0
    %4983 = vmatmul.mubr.bf16.gmra.mrb[0].mxu0 %v4948
    %v4984 = vpop.f32.mrb[0].mxu0
    %v4985 = vadd.f32 0.0, %v4984
    %v4986 = vpop.f32.mrb[0].mxu0
    %v4987 = vpop.f32.mrb[0].mxu0
    %v4988 = vadd.f32 0.0, %v4987
    %v4989 = vpop.f32.mrb[0].mxu0
    %4990 = vdwg.mxu0
    %v4991 = vpack.c.bf16 %v4847, %v4844
    %v4992 = vpack.c.bf16 %v4894, %v4891
    %v4993 = vpack.c.bf16 %v4941, %v4938
    %v4994 = vpack.c.bf16 %v4988, %v4985
    %s4995 = scalar_lea.vmem [#allocation7], 56
    %v4996 = vld [vmem:[%s4995] sm:$0xf]
    %v4997 = vld [vmem:[%s4995 + $0x4] sm:$0xf]
    %v5000 = vunpack.c.l.b16 %v4996
    %v5001 = vunpack.c.l.b16 %v4997
    %v5002 = vpack.c.b16 %v5001, %v5000
    %v5005 = vsel %vm465, %v4991, 0
    %v5008 = vsel %vm465, %v4992, 0
    %v5011 = vsel %vm465, %v4993, 0
    %v5014 = vsel %vm465, %v4994, 0
    %5016 = vmatprep.subr.bf16.mxu0 0
    %5017 = vmatpush1.bf16.msra.mxu0 %v5002
    %5018 = vmatprep.subr.bf16.mxu0 0
    %5019 = vmatpush1.bf16.msra.mxu0 0
    %5020 = vmatprep.subr.bf16.mxu0 0
    %5021 = vmatpush1.bf16.msra.mxu0 0
    %5022 = vmatprep.subr.bf16.mxu0 0
    %5023 = vmatpush1.bf16.msra.mxu0 0
    %5024 = vmatprep.subr.bf16.mxu0 0
    %5025 = vmatpush1.bf16.msra.mxu0 0
    %5026 = vmatprep.subr.bf16.mxu0 0
    %5027 = vmatpush1.bf16.msra.mxu0 0
    %5028 = vmatprep.subr.bf16.mxu0 0
    %5029 = vmatpush1.bf16.msra.mxu0 0
    %5030 = vmatprep.subr.bf16.mxu0 0
    %5031 = vmatpush1.bf16.msra.mxu0 0
    %5032 = vmatprep.subr.bf16.mxu0 0
    %5033 = vmatpush1.bf16.msra.mxu0 0
    %5034 = vmatprep.subr.bf16.mxu0 0
    %5035 = vmatpush1.bf16.msra.mxu0 0
    %5036 = vmatprep.subr.bf16.mxu0 0
    %5037 = vmatpush1.bf16.msra.mxu0 0
    %5038 = vmatprep.subr.bf16.mxu0 0
    %5039 = vmatpush1.bf16.msra.mxu0 0
    %5040 = vmatprep.subr.bf16.mxu0 0
    %5041 = vmatpush1.bf16.msra.mxu0 0
    %5042 = vmatprep.subr.bf16.mxu0 0
    %5043 = vmatpush1.bf16.msra.mxu0 0
    %5044 = vmatprep.subr.bf16.mxu0 0
    %5045 = vmatpush1.bf16.msra.mxu0 0
    %5046 = vmatprep.subr.bf16.mxu0 0
    %5047 = vmatpush1.bf16.msra.mxu0 0
    %5048 = vmatprep.mubr.bf16.mxu0 0
    %5049 = vmatmul.mubr.bf16.gmra.mrb[0].mxu0 %v5005
    %v5050 = vpop.f32.mrb[0].mxu0
    %v5051 = vadd.f32 0.0, %v5050
    %v5052 = vpop.f32.mrb[0].mxu0
    %v5053 = vpop.f32.mrb[0].mxu0
    %v5054 = vadd.f32 0.0, %v5053
    %v5055 = vpop.f32.mrb[0].mxu0
    %5056 = vmatprep.mubr.bf16.mxu0 0
    %5057 = vmatmul.mubr.bf16.gmra.mrb[0].mxu0 %v5008
    %v5058 = vpop.f32.mrb[0].mxu0
    %v5059 = vadd.f32 0.0, %v5058
    %v5060 = vpop.f32.mrb[0].mxu0
    %v5061 = vpop.f32.mrb[0].mxu0
    %v5062 = vadd.f32 0.0, %v5061
    %v5063 = vpop.f32.mrb[0].mxu0
    %5064 = vmatprep.mubr.bf16.mxu0 0
    %5065 = vmatmul.mubr.bf16.gmra.mrb[0].mxu0 %v5011
    %v5066 = vpop.f32.mrb[0].mxu0
    %v5067 = vadd.f32 0.0, %v5066
    %v5068 = vpop.f32.mrb[0].mxu0
    %v5069 = vpop.f32.mrb[0].mxu0
    %v5070 = vadd.f32 0.0, %v5069
    %v5071 = vpop.f32.mrb[0].mxu0
    %5072 = vmatprep.mubr.bf16.mxu0 0
    %5073 = vmatmul.mubr.bf16.gmra.mrb[0].mxu0 %v5014
    %v5074 = vpop.f32.mrb[0].mxu0
    %v5075 = vadd.f32 0.0, %v5074
    %v5076 = vpop.f32.mrb[0].mxu0
    %v5077 = vpop.f32.mrb[0].mxu0
    %v5078 = vadd.f32 0.0, %v5077
    %v5079 = vpop.f32.mrb[0].mxu0
    %5080 = vdwg.mxu0
    %v5081 = vadd.f32 %v4499, %v5051
    %v5082 = vadd.f32 %v4500, %v5054
    %v5083 = vadd.f32 %v4501, %v5059
    %v5084 = vadd.f32 %v4502, %v5062
    %v5085 = vadd.f32 %v4503, %v5067
    %v5086 = vadd.f32 %v4504, %v5070
    %v5087 = vadd.f32 %v4505, %v5075
    %v5088 = vadd.f32 %v4506, %v5078
    %v5090 = vlaneseq
    %v5091 = vshrl.u32 %v5090, 7
    %v5092 = vsub.s32 0, %v5091
    %v5093 = vrot.slane %v135, %v5092
    %v5095 = vadd.f32 %v5081, %v5093
    %v5096 = vadd.f32 %v5082, %v5093
    %v5097 = vadd.f32 %v5083, %v5093
    %v5098 = vadd.f32 %v5084, %v5093
    %v5099 = vadd.f32 %v5085, %v5093
    %v5100 = vadd.f32 %v5086, %v5093
    %v5101 = vadd.f32 %v5087, %v5093
    %v5102 = vadd.f32 %v5088, %v5093
    %v5103 = vpack.c.bf16 %v5096, %v5095
    %v5104 = vpack.c.bf16 %v5098, %v5097
    %v5105 = vpack.c.bf16 %v5100, %v5099
    %v5106 = vpack.c.bf16 %v5102, %v5101
    %v5107 = vld [vmem:[#allocation8] sm:$0xff]
    %v5108 = vld [vmem:[#allocation8 + $0x8] sm:$0xff]
    %v5109 = vld [vmem:[#allocation8 + $0x10] sm:$0xff]
    %v5110 = vld [vmem:[#allocation8 + $0x18] sm:$0xff]
    %v5111 = vld [vmem:[#allocation8 + $0x20] sm:$0xff]
    %v5112 = vld [vmem:[#allocation8 + $0x28] sm:$0xff]
    %v5113 = vld [vmem:[#allocation8 + $0x30] sm:$0xff]
    %v5114 = vld [vmem:[#allocation8 + $0x38] sm:$0xff]
    %v5115 = vld [vmem:[#allocation8 + $0x40] sm:$0xff]
    %v5116 = vld [vmem:[#allocation8 + $0x48] sm:$0xff]
    %v5117 = vld [vmem:[#allocation8 + $0x50] sm:$0xff]
    %v5118 = vld [vmem:[#allocation8 + $0x58] sm:$0xff]
    %v5119 = vld [vmem:[#allocation8 + $0x60] sm:$0xff]
    %v5120 = vld [vmem:[#allocation8 + $0x68] sm:$0xff]
    %v5121 = vld [vmem:[#allocation8 + $0x70] sm:$0xff]
    %v5122 = vld [vmem:[#allocation8 + $0x78] sm:$0xff]
    %v5123 = vld [vmem:[#allocation8 + $0x80] sm:$0xff]
    %v5124 = vld [vmem:[#allocation8 + $0x88] sm:$0xff]
    %v5125 = vld [vmem:[#allocation8 + $0x90] sm:$0xff]
    %v5126 = vld [vmem:[#allocation8 + $0x98] sm:$0xff]
    %v5127 = vld [vmem:[#allocation8 + $0xa0] sm:$0xff]
    %v5128 = vld [vmem:[#allocation8 + $0xa8] sm:$0xff]
    %v5129 = vld [vmem:[#allocation8 + $0xb0] sm:$0xff]
    %v5130 = vld [vmem:[#allocation8 + $0xb8] sm:$0xff]
    %v5131 = vld [vmem:[#allocation8 + $0xc0] sm:$0xff]
    %v5132 = vld [vmem:[#allocation8 + $0xc8] sm:$0xff]
    %v5133 = vld [vmem:[#allocation8 + $0xd0] sm:$0xff]
    %v5134 = vld [vmem:[#allocation8 + $0xd8] sm:$0xff]
    %v5135 = vld [vmem:[#allocation8 + $0xe0] sm:$0xff]
    %v5136 = vld [vmem:[#allocation8 + $0xe8] sm:$0xff]
    %v5137 = vld [vmem:[#allocation8 + $0xf0] sm:$0xff]
    %v5138 = vld [vmem:[#allocation8 + $0xf8] sm:$0xff]
    %v5140 = vlaneseq
    %v5141 = vshrl.u32 %v5140, 7
    %v5142 = vsub.s32 0, %v5141
    %v5143 = vrot.slane %v136, %v5142
    %v5144 = vlaneseq
    %v5145 = vshrl.u32 %v5144, 7
    %v5146 = vsub.s32 1, %v5145
    %v5147 = vrot.slane %v136, %v5146
    %v5148 = vlaneseq
    %v5149 = vshrl.u32 %v5148, 7
    %v5150 = vsub.s32 2, %v5149
    %v5151 = vrot.slane %v136, %v5150
    %v5152 = vlaneseq
    %v5153 = vshrl.u32 %v5152, 7
    %v5154 = vsub.s32 3, %v5153
    %v5155 = vrot.slane %v136, %v5154
    %v5192 = vunpack.c.l.b16 %v5107
    %v5193 = vunpack.c.h.b16 %v5107
    %v5194 = vunpack.c.l.b16 %v5108
    %v5195 = vunpack.c.h.b16 %v5108
    %v5196 = vunpack.c.l.b16 %v5109
    %v5197 = vunpack.c.h.b16 %v5109
    %v5198 = vunpack.c.l.b16 %v5110
    %v5199 = vunpack.c.h.b16 %v5110
    %v5200 = vunpack.c.l.b16 %v5111
    %v5201 = vunpack.c.h.b16 %v5111
    %v5202 = vunpack.c.l.b16 %v5112
    %v5203 = vunpack.c.h.b16 %v5112
    %v5204 = vunpack.c.l.b16 %v5113
    %v5205 = vunpack.c.h.b16 %v5113
    %v5206 = vunpack.c.l.b16 %v5114
    %v5207 = vunpack.c.h.b16 %v5114
    %v5208 = vunpack.c.l.b16 %v5115
    %v5209 = vunpack.c.h.b16 %v5115
    %v5210 = vunpack.c.l.b16 %v5116
    %v5211 = vunpack.c.h.b16 %v5116
    %v5212 = vunpack.c.l.b16 %v5117
    %v5213 = vunpack.c.h.b16 %v5117
    %v5214 = vunpack.c.l.b16 %v5118
    %v5215 = vunpack.c.h.b16 %v5118
    %v5216 = vunpack.c.l.b16 %v5119
    %v5217 = vunpack.c.h.b16 %v5119
    %v5218 = vunpack.c.l.b16 %v5120
    %v5219 = vunpack.c.h.b16 %v5120
    %v5220 = vunpack.c.l.b16 %v5121
    %v5221 = vunpack.c.h.b16 %v5121
    %v5222 = vunpack.c.l.b16 %v5122
    %v5223 = vunpack.c.h.b16 %v5122
    %v5224 = vunpack.c.l.b16 %v5123
    %v5225 = vunpack.c.h.b16 %v5123
    %v5226 = vunpack.c.l.b16 %v5124
    %v5227 = vunpack.c.h.b16 %v5124
    %v5228 = vunpack.c.l.b16 %v5125
    %v5229 = vunpack.c.h.b16 %v5125
    %v5230 = vunpack.c.l.b16 %v5126
    %v5231 = vunpack.c.h.b16 %v5126
    %v5232 = vunpack.c.l.b16 %v5127
    %v5233 = vunpack.c.h.b16 %v5127
    %v5234 = vunpack.c.l.b16 %v5128
    %v5235 = vunpack.c.h.b16 %v5128
    %v5236 = vunpack.c.l.b16 %v5129
    %v5237 = vunpack.c.h.b16 %v5129
    %v5238 = vunpack.c.l.b16 %v5130
    %v5239 = vunpack.c.h.b16 %v5130
    %v5240 = vunpack.c.l.b16 %v5131
    %v5241 = vunpack.c.h.b16 %v5131
    %v5242 = vunpack.c.l.b16 %v5132
    %v5243 = vunpack.c.h.b16 %v5132
    %v5244 = vunpack.c.l.b16 %v5133
    %v5245 = vunpack.c.h.b16 %v5133
    %v5246 = vunpack.c.l.b16 %v5134
    %v5247 = vunpack.c.h.b16 %v5134
    %v5248 = vunpack.c.l.b16 %v5135
    %v5249 = vunpack.c.h.b16 %v5135
    %v5250 = vunpack.c.l.b16 %v5136
    %v5251 = vunpack.c.h.b16 %v5136
    %v5252 = vunpack.c.l.b16 %v5137
    %v5253 = vunpack.c.h.b16 %v5137
    %v5254 = vunpack.c.l.b16 %v5138
    %v5255 = vunpack.c.h.b16 %v5138
    %v5256 = vpack.c.b16 %v5196, %v5192
    %v5257 = vpack.c.b16 %v5197, %v5193
    %v5258 = vpack.c.b16 %v5198, %v5194
    %v5259 = vpack.c.b16 %v5199, %v5195
    %v5260 = vpack.c.b16 %v5204, %v5200
    %v5261 = vpack.c.b16 %v5205, %v5201
    %v5262 = vpack.c.b16 %v5206, %v5202
    %v5263 = vpack.c.b16 %v5207, %v5203
    %v5264 = vpack.c.b16 %v5212, %v5208
    %v5265 = vpack.c.b16 %v5213, %v5209
    %v5266 = vpack.c.b16 %v5214, %v5210
    %v5267 = vpack.c.b16 %v5215, %v5211
    %v5268 = vpack.c.b16 %v5220, %v5216
    %v5269 = vpack.c.b16 %v5221, %v5217
    %v5270 = vpack.c.b16 %v5222, %v5218
    %v5271 = vpack.c.b16 %v5223, %v5219
    %v5272 = vpack.c.b16 %v5228, %v5224
    %v5273 = vpack.c.b16 %v5229, %v5225
    %v5274 = vpack.c.b16 %v5230, %v5226
    %v5275 = vpack.c.b16 %v5231, %v5227
    %v5276 = vpack.c.b16 %v5236, %v5232
    %v5277 = vpack.c.b16 %v5237, %v5233
    %v5278 = vpack.c.b16 %v5238, %v5234
    %v5279 = vpack.c.b16 %v5239, %v5235
    %v5280 = vpack.c.b16 %v5244, %v5240
    %v5281 = vpack.c.b16 %v5245, %v5241
    %v5282 = vpack.c.b16 %v5246, %v5242
    %v5283 = vpack.c.b16 %v5247, %v5243
    %v5284 = vpack.c.b16 %v5252, %v5248
    %v5285 = vpack.c.b16 %v5253, %v5249
    %v5286 = vpack.c.b16 %v5254, %v5250
    %v5287 = vpack.c.b16 %v5255, %v5251
    %5320 = vmatprep.subr.bf16.mxu0 %v5257
    %5321 = vmatpush1.bf16.msra.mxu0 %v5256
    %5322 = vmatprep.subr.bf16.mxu0 %v5261
    %5323 = vmatpush1.bf16.msra.mxu0 %v5260
    %5324 = vmatprep.subr.bf16.mxu0 %v5265
    %5325 = vmatpush1.bf16.msra.mxu0 %v5264
    %5326 = vmatprep.subr.bf16.mxu0 %v5269
    %5327 = vmatpush1.bf16.msra.mxu0 %v5268
    %5328 = vmatprep.subr.bf16.mxu0 %v5273
    %5329 = vmatpush1.bf16.msra.mxu0 %v5272
    %5330 = vmatprep.subr.bf16.mxu0 %v5277
    %5331 = vmatpush1.bf16.msra.mxu0 %v5276
    %5332 = vmatprep.subr.bf16.mxu0 %v5281
    %5333 = vmatpush1.bf16.msra.mxu0 %v5280
    %5334 = vmatprep.subr.bf16.mxu0 %v5285
    %5335 = vmatpush1.bf16.msra.mxu0 %v5284
    %5336 = vmatprep.subr.bf16.mxu0 0
    %5337 = vmatpush1.bf16.msra.mxu0 0
    %5338 = vmatprep.subr.bf16.mxu0 0
    %5339 = vmatpush1.bf16.msra.mxu0 0
    %5340 = vmatprep.subr.bf16.mxu0 0
    %5341 = vmatpush1.bf16.msra.mxu0 0
    %5342 = vmatprep.subr.bf16.mxu0 0
    %5343 = vmatpush1.bf16.msra.mxu0 0
    %5344 = vmatprep.subr.bf16.mxu0 0
    %5345 = vmatpush1.bf16.msra.mxu0 0
    %5346 = vmatprep.subr.bf16.mxu0 0
    %5347 = vmatpush1.bf16.msra.mxu0 0
    %5348 = vmatprep.subr.bf16.mxu0 0
    %5349 = vmatpush1.bf16.msra.mxu0 0
    %5350 = vmatprep.subr.bf16.mxu0 0
    %5351 = vmatpush1.bf16.msra.mxu0 0
    %5352 = vmatprep.mubr.bf16.mxu0 0
    %5353 = vmatmul.mubr.bf16.gmra.mrb[0].mxu0 %v5103
    %v5354 = vpop.f32.mrb[0].mxu0
    %v5355 = vadd.f32 %v5143, %v5354
    %v5356 = vpop.f32.mrb[0].mxu0
    %v5357 = vadd.f32 %v5147, %v5356
    %v5358 = vpop.f32.mrb[0].mxu0
    %v5359 = vadd.f32 %v5143, %v5358
    %v5360 = vpop.f32.mrb[0].mxu0
    %v5361 = vadd.f32 %v5147, %v5360
    %5362 = vmatprep.mubr.bf16.mxu0 0
    %5363 = vmatmul.mubr.bf16.gmra.mrb[0].mxu0 %v5104
    %v5364 = vpop.f32.mrb[0].mxu0
    %v5365 = vadd.f32 %v5143, %v5364
    %v5366 = vpop.f32.mrb[0].mxu0
    %v5367 = vadd.f32 %v5147, %v5366
    %v5368 = vpop.f32.mrb[0].mxu0
    %v5369 = vadd.f32 %v5143, %v5368
    %v5370 = vpop.f32.mrb[0].mxu0
    %v5371 = vadd.f32 %v5147, %v5370
    %5372 = vmatprep.mubr.bf16.mxu0 0
    %5373 = vmatmul.mubr.bf16.gmra.mrb[0].mxu0 %v5105
    %v5374 = vpop.f32.mrb[0].mxu0
    %v5375 = vadd.f32 %v5143, %v5374
    %v5376 = vpop.f32.mrb[0].mxu0
    %v5377 = vadd.f32 %v5147, %v5376
    %v5378 = vpop.f32.mrb[0].mxu0
    %v5379 = vadd.f32 %v5143, %v5378
    %v5380 = vpop.f32.mrb[0].mxu0
    %v5381 = vadd.f32 %v5147, %v5380
    %5382 = vmatprep.mubr.bf16.mxu0 0
    %5383 = vmatmul.mubr.bf16.gmra.mrb[0].mxu0 %v5106
    %v5384 = vpop.f32.mrb[0].mxu0
    %v5385 = vadd.f32 %v5143, %v5384
    %v5386 = vpop.f32.mrb[0].mxu0
    %v5387 = vadd.f32 %v5147, %v5386
    %v5388 = vpop.f32.mrb[0].mxu0
    %v5389 = vadd.f32 %v5143, %v5388
    %v5390 = vpop.f32.mrb[0].mxu0
    %v5391 = vadd.f32 %v5147, %v5390
    %5392 = vdwg.mxu0
    %5393 = vmatprep.subr.bf16.mxu0 %v5259
    %5394 = vmatpush1.bf16.msra.mxu0 %v5258
    %5395 = vmatprep.subr.bf16.mxu0 %v5263
    %5396 = vmatpush1.bf16.msra.mxu0 %v5262
    %5397 = vmatprep.subr.bf16.mxu0 %v5267
    %5398 = vmatpush1.bf16.msra.mxu0 %v5266
    %5399 = vmatprep.subr.bf16.mxu0 %v5271
    %5400 = vmatpush1.bf16.msra.mxu0 %v5270
    %5401 = vmatprep.subr.bf16.mxu0 %v5275
    %5402 = vmatpush1.bf16.msra.mxu0 %v5274
    %5403 = vmatprep.subr.bf16.mxu0 %v5279
    %5404 = vmatpush1.bf16.msra.mxu0 %v5278
    %5405 = vmatprep.subr.bf16.mxu0 %v5283
    %5406 = vmatpush1.bf16.msra.mxu0 %v5282
    %5407 = vmatprep.subr.bf16.mxu0 %v5287
    %5408 = vmatpush1.bf16.msra.mxu0 %v5286
    %5409 = vmatprep.subr.bf16.mxu0 0
    %5410 = vmatpush1.bf16.msra.mxu0 0
    %5411 = vmatprep.subr.bf16.mxu0 0
    %5412 = vmatpush1.bf16.msra.mxu0 0
    %5413 = vmatprep.subr.bf16.mxu0 0
    %5414 = vmatpush1.bf16.msra.mxu0 0
    %5415 = vmatprep.subr.bf16.mxu0 0
    %5416 = vmatpush1.bf16.msra.mxu0 0
    %5417 = vmatprep.subr.bf16.mxu0 0
    %5418 = vmatpush1.bf16.msra.mxu0 0
    %5419 = vmatprep.subr.bf16.mxu0 0
    %5420 = vmatpush1.bf16.msra.mxu0 0
    %5421 = vmatprep.subr.bf16.mxu0 0
    %5422 = vmatpush1.bf16.msra.mxu0 0
    %5423 = vmatprep.subr.bf16.mxu0 0
    %5424 = vmatpush1.bf16.msra.mxu0 0
    %5425 = vmatprep.mubr.bf16.mxu0 0
    %5426 = vmatmul.mubr.bf16.gmra.mrb[0].mxu0 %v5103
    %v5427 = vpop.f32.mrb[0].mxu0
    %v5428 = vadd.f32 %v5151, %v5427
    %v5429 = vpop.f32.mrb[0].mxu0
    %v5430 = vadd.f32 %v5155, %v5429
    %v5431 = vpop.f32.mrb[0].mxu0
    %v5432 = vadd.f32 %v5151, %v5431
    %v5433 = vpop.f32.mrb[0].mxu0
    %v5434 = vadd.f32 %v5155, %v5433
    %5435 = vmatprep.mubr.bf16.mxu0 0
    %5436 = vmatmul.mubr.bf16.gmra.mrb[0].mxu0 %v5104
    %v5437 = vpop.f32.mrb[0].mxu0
    %v5438 = vadd.f32 %v5151, %v5437
    %v5439 = vpop.f32.mrb[0].mxu0
    %v5440 = vadd.f32 %v5155, %v5439
    %v5441 = vpop.f32.mrb[0].mxu0
    %v5442 = vadd.f32 %v5151, %v5441
    %v5443 = vpop.f32.mrb[0].mxu0
    %v5444 = vadd.f32 %v5155, %v5443
    %5445 = vmatprep.mubr.bf16.mxu0 0
    %5446 = vmatmul.mubr.bf16.gmra.mrb[0].mxu0 %v5105
    %v5447 = vpop.f32.mrb[0].mxu0
    %v5448 = vadd.f32 %v5151, %v5447
    %v5449 = vpop.f32.mrb[0].mxu0
    %v5450 = vadd.f32 %v5155, %v5449
    %v5451 = vpop.f32.mrb[0].mxu0
    %v5452 = vadd.f32 %v5151, %v5451
    %v5453 = vpop.f32.mrb[0].mxu0
    %v5454 = vadd.f32 %v5155, %v5453
    %5455 = vmatprep.mubr.bf16.mxu0 0
    %5456 = vmatmul.mubr.bf16.gmra.mrb[0].mxu0 %v5106
    %v5457 = vpop.f32.mrb[0].mxu0
    %v5458 = vadd.f32 %v5151, %v5457
    %v5459 = vpop.f32.mrb[0].mxu0
    %v5460 = vadd.f32 %v5155, %v5459
    %v5461 = vpop.f32.mrb[0].mxu0
    %v5462 = vadd.f32 %v5151, %v5461
    %v5463 = vpop.f32.mrb[0].mxu0
    %v5464 = vadd.f32 %v5155, %v5463
    %5465 = vdwg.mxu0
    %v5466 = vmul.f32 %v5355, %v5355
    %v5467 = vmul.f32 %v5357, %v5357
    %v5468 = vmul.f32 %v5428, %v5428
    %v5469 = vmul.f32 %v5430, %v5430
    %v5470 = vmul.f32 %v5359, %v5359
    %v5471 = vmul.f32 %v5361, %v5361
    %v5472 = vmul.f32 %v5432, %v5432
    %v5473 = vmul.f32 %v5434, %v5434
    %v5474 = vmul.f32 %v5365, %v5365
    %v5475 = vmul.f32 %v5367, %v5367
    %v5476 = vmul.f32 %v5438, %v5438
    %v5477 = vmul.f32 %v5440, %v5440
    %v5478 = vmul.f32 %v5369, %v5369
    %v5479 = vmul.f32 %v5371, %v5371
    %v5480 = vmul.f32 %v5442, %v5442
    %v5481 = vmul.f32 %v5444, %v5444
    %v5482 = vmul.f32 %v5375, %v5375
    %v5483 = vmul.f32 %v5377, %v5377
    %v5484 = vmul.f32 %v5448, %v5448
    %v5485 = vmul.f32 %v5450, %v5450
    %v5486 = vmul.f32 %v5379, %v5379
    %v5487 = vmul.f32 %v5381, %v5381
    %v5488 = vmul.f32 %v5452, %v5452
    %v5489 = vmul.f32 %v5454, %v5454
    %v5490 = vmul.f32 %v5385, %v5385
    %v5491 = vmul.f32 %v5387, %v5387
    %v5492 = vmul.f32 %v5458, %v5458
    %v5493 = vmul.f32 %v5460, %v5460
    %v5494 = vmul.f32 %v5389, %v5389
    %v5495 = vmul.f32 %v5391, %v5391
    %v5496 = vmul.f32 %v5462, %v5462
    %v5497 = vmul.f32 %v5464, %v5464
    %v5498 = vmul.f32 %v5355, %v5466
    %v5499 = vmul.f32 %v5357, %v5467
    %v5500 = vmul.f32 %v5428, %v5468
    %v5501 = vmul.f32 %v5430, %v5469
    %v5502 = vmul.f32 %v5359, %v5470
    %v5503 = vmul.f32 %v5361, %v5471
    %v5504 = vmul.f32 %v5432, %v5472
    %v5505 = vmul.f32 %v5434, %v5473
    %v5506 = vmul.f32 %v5365, %v5474
    %v5507 = vmul.f32 %v5367, %v5475
    %v5508 = vmul.f32 %v5438, %v5476
    %v5509 = vmul.f32 %v5440, %v5477
    %v5510 = vmul.f32 %v5369, %v5478
    %v5511 = vmul.f32 %v5371, %v5479
    %v5512 = vmul.f32 %v5442, %v5480
    %v5513 = vmul.f32 %v5444, %v5481
    %v5514 = vmul.f32 %v5375, %v5482
    %v5515 = vmul.f32 %v5377, %v5483
    %v5516 = vmul.f32 %v5448, %v5484
    %v5517 = vmul.f32 %v5450, %v5485
    %v5518 = vmul.f32 %v5379, %v5486
    %v5519 = vmul.f32 %v5381, %v5487
    %v5520 = vmul.f32 %v5452, %v5488
    %v5521 = vmul.f32 %v5454, %v5489
    %v5522 = vmul.f32 %v5385, %v5490
    %v5523 = vmul.f32 %v5387, %v5491
    %v5524 = vmul.f32 %v5458, %v5492
    %v5525 = vmul.f32 %v5460, %v5493
    %v5526 = vmul.f32 %v5389, %v5494
    %v5527 = vmul.f32 %v5391, %v5495
    %v5528 = vmul.f32 %v5462, %v5496
    %v5529 = vmul.f32 %v5464, %v5497
    %v5530 = vmul.f32 %v5498, 0.044715
    %v5531 = vmul.f32 %v5499, 0.044715
    %v5532 = vmul.f32 %v5500, 0.044715
    %v5533 = vmul.f32 %v5501, 0.044715
    %v5534 = vmul.f32 %v5502, 0.044715
    %v5535 = vmul.f32 %v5503, 0.044715
    %v5536 = vmul.f32 %v5504, 0.044715
    %v5537 = vmul.f32 %v5505, 0.044715
    %v5538 = vmul.f32 %v5506, 0.044715
    %v5539 = vmul.f32 %v5507, 0.044715
    %v5540 = vmul.f32 %v5508, 0.044715
    %v5541 = vmul.f32 %v5509, 0.044715
    %v5542 = vmul.f32 %v5510, 0.044715
    %v5543 = vmul.f32 %v5511, 0.044715
    %v5544 = vmul.f32 %v5512, 0.044715
    %v5545 = vmul.f32 %v5513, 0.044715
    %v5546 = vmul.f32 %v5514, 0.044715
    %v5547 = vmul.f32 %v5515, 0.044715
    %v5548 = vmul.f32 %v5516, 0.044715
    %v5549 = vmul.f32 %v5517, 0.044715
    %v5550 = vmul.f32 %v5518, 0.044715
    %v5551 = vmul.f32 %v5519, 0.044715
    %v5552 = vmul.f32 %v5520, 0.044715
    %v5553 = vmul.f32 %v5521, 0.044715
    %v5554 = vmul.f32 %v5522, 0.044715
    %v5555 = vmul.f32 %v5523, 0.044715
    %v5556 = vmul.f32 %v5524, 0.044715
    %v5557 = vmul.f32 %v5525, 0.044715
    %v5558 = vmul.f32 %v5526, 0.044715
    %v5559 = vmul.f32 %v5527, 0.044715
    %v5560 = vmul.f32 %v5528, 0.044715
    %v5561 = vmul.f32 %v5529, 0.044715
    %v5562 = vadd.f32 %v5355, %v5530
    %v5563 = vadd.f32 %v5357, %v5531
    %v5564 = vadd.f32 %v5428, %v5532
    %v5565 = vadd.f32 %v5430, %v5533
    %v5566 = vadd.f32 %v5359, %v5534
    %v5567 = vadd.f32 %v5361, %v5535
    %v5568 = vadd.f32 %v5432, %v5536
    %v5569 = vadd.f32 %v5434, %v5537
    %v5570 = vadd.f32 %v5365, %v5538
    %v5571 = vadd.f32 %v5367, %v5539
    %v5572 = vadd.f32 %v5438, %v5540
    %v5573 = vadd.f32 %v5440, %v5541
    %v5574 = vadd.f32 %v5369, %v5542
    %v5575 = vadd.f32 %v5371, %v5543
    %v5576 = vadd.f32 %v5442, %v5544
    %v5577 = vadd.f32 %v5444, %v5545
    %v5578 = vadd.f32 %v5375, %v5546
    %v5579 = vadd.f32 %v5377, %v5547
    %v5580 = vadd.f32 %v5448, %v5548
    %v5581 = vadd.f32 %v5450, %v5549
    %v5582 = vadd.f32 %v5379, %v5550
    %v5583 = vadd.f32 %v5381, %v5551
    %v5584 = vadd.f32 %v5452, %v5552
    %v5585 = vadd.f32 %v5454, %v5553
    %v5586 = vadd.f32 %v5385, %v5554
    %v5587 = vadd.f32 %v5387, %v5555
    %v5588 = vadd.f32 %v5458, %v5556
    %v5589 = vadd.f32 %v5460, %v5557
    %v5590 = vadd.f32 %v5389, %v5558
    %v5591 = vadd.f32 %v5391, %v5559
    %v5592 = vadd.f32 %v5462, %v5560
    %v5593 = vadd.f32 %v5464, %v5561
    %v5594 = vmul.f32 %v5562, 0.7978846
    %v5595 = vmul.f32 %v5563, 0.7978846
    %v5596 = vmul.f32 %v5564, 0.7978846
    %v5597 = vmul.f32 %v5565, 0.7978846
    %v5598 = vmul.f32 %v5566, 0.7978846
    %v5599 = vmul.f32 %v5567, 0.7978846
    %v5600 = vmul.f32 %v5568, 0.7978846
    %v5601 = vmul.f32 %v5569, 0.7978846
    %v5602 = vmul.f32 %v5570, 0.7978846
    %v5603 = vmul.f32 %v5571, 0.7978846
    %v5604 = vmul.f32 %v5572, 0.7978846
    %v5605 = vmul.f32 %v5573, 0.7978846
    %v5606 = vmul.f32 %v5574, 0.7978846
    %v5607 = vmul.f32 %v5575, 0.7978846
    %v5608 = vmul.f32 %v5576, 0.7978846
    %v5609 = vmul.f32 %v5577, 0.7978846
    %v5610 = vmul.f32 %v5578, 0.7978846
    %v5611 = vmul.f32 %v5579, 0.7978846
    %v5612 = vmul.f32 %v5580, 0.7978846
    %v5613 = vmul.f32 %v5581, 0.7978846
    %v5614 = vmul.f32 %v5582, 0.7978846
    %v5615 = vmul.f32 %v5583, 0.7978846
    %v5616 = vmul.f32 %v5584, 0.7978846
    %v5617 = vmul.f32 %v5585, 0.7978846
    %v5618 = vmul.f32 %v5586, 0.7978846
    %v5619 = vmul.f32 %v5587, 0.7978846
    %v5620 = vmul.f32 %v5588, 0.7978846
    %v5621 = vmul.f32 %v5589, 0.7978846
    %v5622 = vmul.f32 %v5590, 0.7978846
    %v5623 = vmul.f32 %v5591, 0.7978846
    %v5624 = vmul.f32 %v5592, 0.7978846
    %v5625 = vmul.f32 %v5593, 0.7978846
    %v5626 = vtanh.pop %v5594
    %v5627 = vtanh.pop %v5595
    %v5628 = vtanh.pop %v5596
    %v5629 = vtanh.pop %v5597
    %v5630 = vtanh.pop %v5598
    %v5631 = vtanh.pop %v5599
    %v5632 = vtanh.pop %v5600
    %v5633 = vtanh.pop %v5601
    %v5634 = vtanh.pop %v5602
    %v5635 = vtanh.pop %v5603
    %v5636 = vtanh.pop %v5604
    %v5637 = vtanh.pop %v5605
    %v5638 = vtanh.pop %v5606
    %v5639 = vtanh.pop %v5607
    %v5640 = vtanh.pop %v5608
    %v5641 = vtanh.pop %v5609
    %v5642 = vtanh.pop %v5610
    %v5643 = vtanh.pop %v5611
    %v5644 = vtanh.pop %v5612
    %v5645 = vtanh.pop %v5613
    %v5646 = vtanh.pop %v5614
    %v5647 = vtanh.pop %v5615
    %v5648 = vtanh.pop %v5616
    %v5649 = vtanh.pop %v5617
    %v5650 = vtanh.pop %v5618
    %v5651 = vtanh.pop %v5619
    %v5652 = vtanh.pop %v5620
    %v5653 = vtanh.pop %v5621
    %v5654 = vtanh.pop %v5622
    %v5655 = vtanh.pop %v5623
    %v5656 = vtanh.pop %v5624
    %v5657 = vtanh.pop %v5625
    %v5658 = vadd.f32 %v5626, 1.0
    %v5659 = vadd.f32 %v5627, 1.0
    %v5660 = vadd.f32 %v5628, 1.0
    %v5661 = vadd.f32 %v5629, 1.0
    %v5662 = vadd.f32 %v5630, 1.0
    %v5663 = vadd.f32 %v5631, 1.0
    %v5664 = vadd.f32 %v5632, 1.0
    %v5665 = vadd.f32 %v5633, 1.0
    %v5666 = vadd.f32 %v5634, 1.0
    %v5667 = vadd.f32 %v5635, 1.0
    %v5668 = vadd.f32 %v5636, 1.0
    %v5669 = vadd.f32 %v5637, 1.0
    %v5670 = vadd.f32 %v5638, 1.0
    %v5671 = vadd.f32 %v5639, 1.0
    %v5672 = vadd.f32 %v5640, 1.0
    %v5673 = vadd.f32 %v5641, 1.0
    %v5674 = vadd.f32 %v5642, 1.0
    %v5675 = vadd.f32 %v5643, 1.0
    %v5676 = vadd.f32 %v5644, 1.0
    %v5677 = vadd.f32 %v5645, 1.0
    %v5678 = vadd.f32 %v5646, 1.0
    %v5679 = vadd.f32 %v5647, 1.0
    %v5680 = vadd.f32 %v5648, 1.0
    %v5681 = vadd.f32 %v5649, 1.0
    %v5682 = vadd.f32 %v5650, 1.0
    %v5683 = vadd.f32 %v5651, 1.0
    %v5684 = vadd.f32 %v5652, 1.0
    %v5685 = vadd.f32 %v5653, 1.0
    %v5686 = vadd.f32 %v5654, 1.0
    %v5687 = vadd.f32 %v5655, 1.0
    %v5688 = vadd.f32 %v5656, 1.0
    %v5689 = vadd.f32 %v5657, 1.0
    %v5690 = vmul.f32 %v5658, 0.5
    %v5691 = vmul.f32 %v5659, 0.5
    %v5692 = vmul.f32 %v5660, 0.5
    %v5693 = vmul.f32 %v5661, 0.5
    %v5694 = vmul.f32 %v5662, 0.5
    %v5695 = vmul.f32 %v5663, 0.5
    %v5696 = vmul.f32 %v5664, 0.5
    %v5697 = vmul.f32 %v5665, 0.5
    %v5698 = vmul.f32 %v5666, 0.5
    %v5699 = vmul.f32 %v5667, 0.5
    %v5700 = vmul.f32 %v5668, 0.5
    %v5701 = vmul.f32 %v5669, 0.5
    %v5702 = vmul.f32 %v5670, 0.5
    %v5703 = vmul.f32 %v5671, 0.5
    %v5704 = vmul.f32 %v5672, 0.5
    %v5705 = vmul.f32 %v5673, 0.5
    %v5706 = vmul.f32 %v5674, 0.5
    %v5707 = vmul.f32 %v5675, 0.5
    %v5708 = vmul.f32 %v5676, 0.5
    %v5709 = vmul.f32 %v5677, 0.5
    %v5710 = vmul.f32 %v5678, 0.5
    %v5711 = vmul.f32 %v5679, 0.5
    %v5712 = vmul.f32 %v5680, 0.5
    %v5713 = vmul.f32 %v5681, 0.5
    %v5714 = vmul.f32 %v5682, 0.5
    %v5715 = vmul.f32 %v5683, 0.5
    %v5716 = vmul.f32 %v5684, 0.5
    %v5717 = vmul.f32 %v5685, 0.5
    %v5718 = vmul.f32 %v5686, 0.5
    %v5719 = vmul.f32 %v5687, 0.5
    %v5720 = vmul.f32 %v5688, 0.5
    %v5721 = vmul.f32 %v5689, 0.5
    %v5722 = vmul.f32 %v5355, %v5690
    %v5723 = vmul.f32 %v5357, %v5691
    %v5724 = vmul.f32 %v5428, %v5692
    %v5725 = vmul.f32 %v5430, %v5693
    %v5726 = vmul.f32 %v5359, %v5694
    %v5727 = vmul.f32 %v5361, %v5695
    %v5728 = vmul.f32 %v5432, %v5696
    %v5729 = vmul.f32 %v5434, %v5697
    %v5730 = vmul.f32 %v5365, %v5698
    %v5731 = vmul.f32 %v5367, %v5699
    %v5732 = vmul.f32 %v5438, %v5700
    %v5733 = vmul.f32 %v5440, %v5701
    %v5734 = vmul.f32 %v5369, %v5702
    %v5735 = vmul.f32 %v5371, %v5703
    %v5736 = vmul.f32 %v5442, %v5704
    %v5737 = vmul.f32 %v5444, %v5705
    %v5738 = vmul.f32 %v5375, %v5706
    %v5739 = vmul.f32 %v5377, %v5707
    %v5740 = vmul.f32 %v5448, %v5708
    %v5741 = vmul.f32 %v5450, %v5709
    %v5742 = vmul.f32 %v5379, %v5710
    %v5743 = vmul.f32 %v5381, %v5711
    %v5744 = vmul.f32 %v5452, %v5712
    %v5745 = vmul.f32 %v5454, %v5713
    %v5746 = vmul.f32 %v5385, %v5714
    %v5747 = vmul.f32 %v5387, %v5715
    %v5748 = vmul.f32 %v5458, %v5716
    %v5749 = vmul.f32 %v5460, %v5717
    %v5750 = vmul.f32 %v5389, %v5718
    %v5751 = vmul.f32 %v5391, %v5719
    %v5752 = vmul.f32 %v5462, %v5720
    %v5753 = vmul.f32 %v5464, %v5721
    %v5754 = vpack.c.bf16 %v5726, %v5722
    %v5755 = vpack.c.bf16 %v5727, %v5723
    %v5756 = vpack.c.bf16 %v5728, %v5724
    %v5757 = vpack.c.bf16 %v5729, %v5725
    %v5758 = vpack.c.bf16 %v5734, %v5730
    %v5759 = vpack.c.bf16 %v5735, %v5731
    %v5760 = vpack.c.bf16 %v5736, %v5732
    %v5761 = vpack.c.bf16 %v5737, %v5733
    %v5762 = vpack.c.bf16 %v5742, %v5738
    %v5763 = vpack.c.bf16 %v5743, %v5739
    %v5764 = vpack.c.bf16 %v5744, %v5740
    %v5765 = vpack.c.bf16 %v5745, %v5741
    %v5766 = vpack.c.bf16 %v5750, %v5746
    %v5767 = vpack.c.bf16 %v5751, %v5747
    %v5768 = vpack.c.bf16 %v5752, %v5748
    %v5769 = vpack.c.bf16 %v5753, %v5749
    %v5770 = vld [vmem:[#allocation10] sm:$0xff]
    %v5771 = vld [vmem:[#allocation10 + $0x8] sm:$0xff]
    %v5772 = vld [vmem:[#allocation10 + $0x10] sm:$0xff]
    %v5773 = vld [vmem:[#allocation10 + $0x18] sm:$0xff]
    %v5774 = vld [vmem:[#allocation10 + $0x20] sm:$0xff]
    %v5775 = vld [vmem:[#allocation10 + $0x28] sm:$0xff]
    %v5776 = vld [vmem:[#allocation10 + $0x30] sm:$0xff]
    %v5777 = vld [vmem:[#allocation10 + $0x38] sm:$0xff]
    %v5778 = vld [vmem:[#allocation10 + $0x40] sm:$0xff]
    %v5779 = vld [vmem:[#allocation10 + $0x48] sm:$0xff]
    %v5780 = vld [vmem:[#allocation10 + $0x50] sm:$0xff]
    %v5781 = vld [vmem:[#allocation10 + $0x58] sm:$0xff]
    %v5782 = vld [vmem:[#allocation10 + $0x60] sm:$0xff]
    %v5783 = vld [vmem:[#allocation10 + $0x68] sm:$0xff]
    %v5784 = vld [vmem:[#allocation10 + $0x70] sm:$0xff]
    %v5785 = vld [vmem:[#allocation10 + $0x78] sm:$0xff]
    %v5786 = vld [vmem:[#allocation10 + $0x80] sm:$0xff]
    %v5787 = vld [vmem:[#allocation10 + $0x88] sm:$0xff]
    %v5788 = vld [vmem:[#allocation10 + $0x90] sm:$0xff]
    %v5789 = vld [vmem:[#allocation10 + $0x98] sm:$0xff]
    %v5790 = vld [vmem:[#allocation10 + $0xa0] sm:$0xff]
    %v5791 = vld [vmem:[#allocation10 + $0xa8] sm:$0xff]
    %v5792 = vld [vmem:[#allocation10 + $0xb0] sm:$0xff]
    %v5793 = vld [vmem:[#allocation10 + $0xb8] sm:$0xff]
    %v5794 = vld [vmem:[#allocation10 + $0xc0] sm:$0xff]
    %v5795 = vld [vmem:[#allocation10 + $0xc8] sm:$0xff]
    %v5796 = vld [vmem:[#allocation10 + $0xd0] sm:$0xff]
    %v5797 = vld [vmem:[#allocation10 + $0xd8] sm:$0xff]
    %v5798 = vld [vmem:[#allocation10 + $0xe0] sm:$0xff]
    %v5799 = vld [vmem:[#allocation10 + $0xe8] sm:$0xff]
    %v5800 = vld [vmem:[#allocation10 + $0xf0] sm:$0xff]
    %v5801 = vld [vmem:[#allocation10 + $0xf8] sm:$0xff]
    %v5802 = vld [vmem:[#allocation10 + $0x100] sm:$0xff]
    %v5803 = vld [vmem:[#allocation10 + $0x108] sm:$0xff]
    %v5804 = vld [vmem:[#allocation10 + $0x110] sm:$0xff]
    %v5805 = vld [vmem:[#allocation10 + $0x118] sm:$0xff]
    %v5806 = vld [vmem:[#allocation10 + $0x120] sm:$0xff]
    %v5807 = vld [vmem:[#allocation10 + $0x128] sm:$0xff]
    %v5808 = vld [vmem:[#allocation10 + $0x130] sm:$0xff]
    %v5809 = vld [vmem:[#allocation10 + $0x138] sm:$0xff]
    %v5810 = vld [vmem:[#allocation10 + $0x140] sm:$0xff]
    %v5811 = vld [vmem:[#allocation10 + $0x148] sm:$0xff]
    %v5812 = vld [vmem:[#allocation10 + $0x150] sm:$0xff]
    %v5813 = vld [vmem:[#allocation10 + $0x158] sm:$0xff]
    %v5814 = vld [vmem:[#allocation10 + $0x160] sm:$0xff]
    %v5815 = vld [vmem:[#allocation10 + $0x168] sm:$0xff]
    %v5816 = vld [vmem:[#allocation10 + $0x170] sm:$0xff]
    %v5817 = vld [vmem:[#allocation10 + $0x178] sm:$0xff]
    %v5818 = vld [vmem:[#allocation10 + $0x180] sm:$0xff]
    %v5819 = vld [vmem:[#allocation10 + $0x188] sm:$0xff]
    %v5820 = vld [vmem:[#allocation10 + $0x190] sm:$0xff]
    %v5821 = vld [vmem:[#allocation10 + $0x198] sm:$0xff]
    %v5822 = vld [vmem:[#allocation10 + $0x1a0] sm:$0xff]
    %v5823 = vld [vmem:[#allocation10 + $0x1a8] sm:$0xff]
    %v5824 = vld [vmem:[#allocation10 + $0x1b0] sm:$0xff]
    %v5825 = vld [vmem:[#allocation10 + $0x1b8] sm:$0xff]
    %v5826 = vld [vmem:[#allocation10 + $0x1c0] sm:$0xff]
    %v5827 = vld [vmem:[#allocation10 + $0x1c8] sm:$0xff]
    %v5828 = vld [vmem:[#allocation10 + $0x1d0] sm:$0xff]
    %v5829 = vld [vmem:[#allocation10 + $0x1d8] sm:$0xff]
    %v5830 = vld [vmem:[#allocation10 + $0x1e0] sm:$0xff]
    %v5831 = vld [vmem:[#allocation10 + $0x1e8] sm:$0xff]
    %v5832 = vld [vmem:[#allocation10 + $0x1f0] sm:$0xff]
    %v5833 = vld [vmem:[#allocation10 + $0x1f8] sm:$0xff]
    %v5835 = vlaneseq
    %v5836 = vshrl.u32 %v5835, 7
    %v5837 = vsub.s32 0, %v5836
    %v5838 = vrot.slane %v137, %v5837
    %v5839 = vlaneseq
    %v5840 = vshrl.u32 %v5839, 7
    %v5841 = vsub.s32 1, %v5840
    %v5842 = vrot.slane %v137, %v5841
    %v5909 = vunpack.c.l.b16 %v5770
    %v5910 = vunpack.c.h.b16 %v5770
    %v5911 = vunpack.c.l.b16 %v5771
    %v5912 = vunpack.c.h.b16 %v5771
    %v5913 = vunpack.c.l.b16 %v5772
    %v5914 = vunpack.c.h.b16 %v5772
    %v5915 = vunpack.c.l.b16 %v5773
    %v5916 = vunpack.c.h.b16 %v5773
    %v5917 = vunpack.c.l.b16 %v5774
    %v5918 = vunpack.c.h.b16 %v5774
    %v5919 = vunpack.c.l.b16 %v5775
    %v5920 = vunpack.c.h.b16 %v5775
    %v5921 = vunpack.c.l.b16 %v5776
    %v5922 = vunpack.c.h.b16 %v5776
    %v5923 = vunpack.c.l.b16 %v5777
    %v5924 = vunpack.c.h.b16 %v5777
    %v5925 = vunpack.c.l.b16 %v5778
    %v5926 = vunpack.c.h.b16 %v5778
    %v5927 = vunpack.c.l.b16 %v5779
    %v5928 = vunpack.c.h.b16 %v5779
    %v5929 = vunpack.c.l.b16 %v5780
    %v5930 = vunpack.c.h.b16 %v5780
    %v5931 = vunpack.c.l.b16 %v5781
    %v5932 = vunpack.c.h.b16 %v5781
    %v5933 = vunpack.c.l.b16 %v5782
    %v5934 = vunpack.c.h.b16 %v5782
    %v5935 = vunpack.c.l.b16 %v5783
    %v5936 = vunpack.c.h.b16 %v5783
    %v5937 = vunpack.c.l.b16 %v5784
    %v5938 = vunpack.c.h.b16 %v5784
    %v5939 = vunpack.c.l.b16 %v5785
    %v5940 = vunpack.c.h.b16 %v5785
    %v5941 = vunpack.c.l.b16 %v5786
    %v5942 = vunpack.c.h.b16 %v5786
    %v5943 = vunpack.c.l.b16 %v5787
    %v5944 = vunpack.c.h.b16 %v5787
    %v5945 = vunpack.c.l.b16 %v5788
    %v5946 = vunpack.c.h.b16 %v5788
    %v5947 = vunpack.c.l.b16 %v5789
    %v5948 = vunpack.c.h.b16 %v5789
    %v5949 = vunpack.c.l.b16 %v5790
    %v5950 = vunpack.c.h.b16 %v5790
    %v5951 = vunpack.c.l.b16 %v5791
    %v5952 = vunpack.c.h.b16 %v5791
    %v5953 = vunpack.c.l.b16 %v5792
    %v5954 = vunpack.c.h.b16 %v5792
    %v5955 = vunpack.c.l.b16 %v5793
    %v5956 = vunpack.c.h.b16 %v5793
    %v5957 = vunpack.c.l.b16 %v5794
    %v5958 = vunpack.c.h.b16 %v5794
    %v5959 = vunpack.c.l.b16 %v5795
    %v5960 = vunpack.c.h.b16 %v5795
    %v5961 = vunpack.c.l.b16 %v5796
    %v5962 = vunpack.c.h.b16 %v5796
    %v5963 = vunpack.c.l.b16 %v5797
    %v5964 = vunpack.c.h.b16 %v5797
    %v5965 = vunpack.c.l.b16 %v5798
    %v5966 = vunpack.c.h.b16 %v5798
    %v5967 = vunpack.c.l.b16 %v5799
    %v5968 = vunpack.c.h.b16 %v5799
    %v5969 = vunpack.c.l.b16 %v5800
    %v5970 = vunpack.c.h.b16 %v5800
    %v5971 = vunpack.c.l.b16 %v5801
    %v5972 = vunpack.c.h.b16 %v5801
    %v5973 = vunpack.c.l.b16 %v5802
    %v5974 = vunpack.c.h.b16 %v5802
    %v5975 = vunpack.c.l.b16 %v5803
    %v5976 = vunpack.c.h.b16 %v5803
    %v5977 = vunpack.c.l.b16 %v5804
    %v5978 = vunpack.c.h.b16 %v5804
    %v5979 = vunpack.c.l.b16 %v5805
    %v5980 = vunpack.c.h.b16 %v5805
    %v5981 = vunpack.c.l.b16 %v5806
    %v5982 = vunpack.c.h.b16 %v5806
    %v5983 = vunpack.c.l.b16 %v5807
    %v5984 = vunpack.c.h.b16 %v5807
    %v5985 = vunpack.c.l.b16 %v5808
    %v5986 = vunpack.c.h.b16 %v5808
    %v5987 = vunpack.c.l.b16 %v5809
    %v5988 = vunpack.c.h.b16 %v5809
    %v5989 = vunpack.c.l.b16 %v5810
    %v5990 = vunpack.c.h.b16 %v5810
    %v5991 = vunpack.c.l.b16 %v5811
    %v5992 = vunpack.c.h.b16 %v5811
    %v5993 = vunpack.c.l.b16 %v5812
    %v5994 = vunpack.c.h.b16 %v5812
    %v5995 = vunpack.c.l.b16 %v5813
    %v5996 = vunpack.c.h.b16 %v5813
    %v5997 = vunpack.c.l.b16 %v5814
    %v5998 = vunpack.c.h.b16 %v5814
    %v5999 = vunpack.c.l.b16 %v5815
    %v6000 = vunpack.c.h.b16 %v5815
    %v6001 = vunpack.c.l.b16 %v5816
    %v6002 = vunpack.c.h.b16 %v5816
    %v6003 = vunpack.c.l.b16 %v5817
    %v6004 = vunpack.c.h.b16 %v5817
    %v6005 = vunpack.c.l.b16 %v5818
    %v6006 = vunpack.c.h.b16 %v5818
    %v6007 = vunpack.c.l.b16 %v5819
    %v6008 = vunpack.c.h.b16 %v5819
    %v6009 = vunpack.c.l.b16 %v5820
    %v6010 = vunpack.c.h.b16 %v5820
    %v6011 = vunpack.c.l.b16 %v5821
    %v6012 = vunpack.c.h.b16 %v5821
    %v6013 = vunpack.c.l.b16 %v5822
    %v6014 = vunpack.c.h.b16 %v5822
    %v6015 = vunpack.c.l.b16 %v5823
    %v6016 = vunpack.c.h.b16 %v5823
    %v6017 = vunpack.c.l.b16 %v5824
    %v6018 = vunpack.c.h.b16 %v5824
    %v6019 = vunpack.c.l.b16 %v5825
    %v6020 = vunpack.c.h.b16 %v5825
    %v6021 = vunpack.c.l.b16 %v5826
    %v6022 = vunpack.c.h.b16 %v5826
    %v6023 = vunpack.c.l.b16 %v5827
    %v6024 = vunpack.c.h.b16 %v5827
    %v6025 = vunpack.c.l.b16 %v5828
    %v6026 = vunpack.c.h.b16 %v5828
    %v6027 = vunpack.c.l.b16 %v5829
    %v6028 = vunpack.c.h.b16 %v5829
    %v6029 = vunpack.c.l.b16 %v5830
    %v6030 = vunpack.c.h.b16 %v5830
    %v6031 = vunpack.c.l.b16 %v5831
    %v6032 = vunpack.c.h.b16 %v5831
    %v6033 = vunpack.c.l.b16 %v5832
    %v6034 = vunpack.c.h.b16 %v5832
    %v6035 = vunpack.c.l.b16 %v5833
    %v6036 = vunpack.c.h.b16 %v5833
    %v6037 = vpack.c.b16 %v5911, %v5909
    %v6038 = vpack.c.b16 %v5912, %v5910
    %v6039 = vpack.c.b16 %v5915, %v5913
    %v6040 = vpack.c.b16 %v5916, %v5914
    %v6041 = vpack.c.b16 %v5919, %v5917
    %v6042 = vpack.c.b16 %v5920, %v5918
    %v6043 = vpack.c.b16 %v5923, %v5921
    %v6044 = vpack.c.b16 %v5924, %v5922
    %v6045 = vpack.c.b16 %v5927, %v5925
    %v6046 = vpack.c.b16 %v5928, %v5926
    %v6047 = vpack.c.b16 %v5931, %v5929
    %v6048 = vpack.c.b16 %v5932, %v5930
    %v6049 = vpack.c.b16 %v5935, %v5933
    %v6050 = vpack.c.b16 %v5936, %v5934
    %v6051 = vpack.c.b16 %v5939, %v5937
    %v6052 = vpack.c.b16 %v5940, %v5938
    %v6053 = vpack.c.b16 %v5943, %v5941
    %v6054 = vpack.c.b16 %v5944, %v5942
    %v6055 = vpack.c.b16 %v5947, %v5945
    %v6056 = vpack.c.b16 %v5948, %v5946
    %v6057 = vpack.c.b16 %v5951, %v5949
    %v6058 = vpack.c.b16 %v5952, %v5950
    %v6059 = vpack.c.b16 %v5955, %v5953
    %v6060 = vpack.c.b16 %v5956, %v5954
    %v6061 = vpack.c.b16 %v5959, %v5957
    %v6062 = vpack.c.b16 %v5960, %v5958
    %v6063 = vpack.c.b16 %v5963, %v5961
    %v6064 = vpack.c.b16 %v5964, %v5962
    %v6065 = vpack.c.b16 %v5967, %v5965
    %v6066 = vpack.c.b16 %v5968, %v5966
    %v6067 = vpack.c.b16 %v5971, %v5969
    %v6068 = vpack.c.b16 %v5972, %v5970
    %v6069 = vpack.c.b16 %v5975, %v5973
    %v6070 = vpack.c.b16 %v5976, %v5974
    %v6071 = vpack.c.b16 %v5979, %v5977
    %v6072 = vpack.c.b16 %v5980, %v5978
    %v6073 = vpack.c.b16 %v5983, %v5981
    %v6074 = vpack.c.b16 %v5984, %v5982
    %v6075 = vpack.c.b16 %v5987, %v5985
    %v6076 = vpack.c.b16 %v5988, %v5986
    %v6077 = vpack.c.b16 %v5991, %v5989
    %v6078 = vpack.c.b16 %v5992, %v5990
    %v6079 = vpack.c.b16 %v5995, %v5993
    %v6080 = vpack.c.b16 %v5996, %v5994
    %v6081 = vpack.c.b16 %v5999, %v5997
    %v6082 = vpack.c.b16 %v6000, %v5998
    %v6083 = vpack.c.b16 %v6003, %v6001
    %v6084 = vpack.c.b16 %v6004, %v6002
    %v6085 = vpack.c.b16 %v6007, %v6005
    %v6086 = vpack.c.b16 %v6008, %v6006
    %v6087 = vpack.c.b16 %v6011, %v6009
    %v6088 = vpack.c.b16 %v6012, %v6010
    %v6089 = vpack.c.b16 %v6015, %v6013
    %v6090 = vpack.c.b16 %v6016, %v6014
    %v6091 = vpack.c.b16 %v6019, %v6017
    %v6092 = vpack.c.b16 %v6020, %v6018
    %v6093 = vpack.c.b16 %v6023, %v6021
    %v6094 = vpack.c.b16 %v6024, %v6022
    %v6095 = vpack.c.b16 %v6027, %v6025
    %v6096 = vpack.c.b16 %v6028, %v6026
    %v6097 = vpack.c.b16 %v6031, %v6029
    %v6098 = vpack.c.b16 %v6032, %v6030
    %v6099 = vpack.c.b16 %v6035, %v6033
    %v6100 = vpack.c.b16 %v6036, %v6034
    %6165 = vmatprep.subr.bf16.mxu0 %v6038
    %6166 = vmatpush1.bf16.msra.mxu0 %v6037
    %6167 = vmatprep.subr.bf16.mxu0 %v6040
    %6168 = vmatpush1.bf16.msra.mxu0 %v6039
    %6169 = vmatprep.subr.bf16.mxu0 %v6042
    %6170 = vmatpush1.bf16.msra.mxu0 %v6041
    %6171 = vmatprep.subr.bf16.mxu0 %v6044
    %6172 = vmatpush1.bf16.msra.mxu0 %v6043
    %6173 = vmatprep.subr.bf16.mxu0 %v6046
    %6174 = vmatpush1.bf16.msra.mxu0 %v6045
    %6175 = vmatprep.subr.bf16.mxu0 %v6048
    %6176 = vmatpush1.bf16.msra.mxu0 %v6047
    %6177 = vmatprep.subr.bf16.mxu0 %v6050
    %6178 = vmatpush1.bf16.msra.mxu0 %v6049
    %6179 = vmatprep.subr.bf16.mxu0 %v6052
    %6180 = vmatpush1.bf16.msra.mxu0 %v6051
    %6181 = vmatprep.subr.bf16.mxu0 %v6054
    %6182 = vmatpush1.bf16.msra.mxu0 %v6053
    %6183 = vmatprep.subr.bf16.mxu0 %v6056
    %6184 = vmatpush1.bf16.msra.mxu0 %v6055
    %6185 = vmatprep.subr.bf16.mxu0 %v6058
    %6186 = vmatpush1.bf16.msra.mxu0 %v6057
    %6187 = vmatprep.subr.bf16.mxu0 %v6060
    %6188 = vmatpush1.bf16.msra.mxu0 %v6059
    %6189 = vmatprep.subr.bf16.mxu0 %v6062
    %6190 = vmatpush1.bf16.msra.mxu0 %v6061
    %6191 = vmatprep.subr.bf16.mxu0 %v6064
    %6192 = vmatpush1.bf16.msra.mxu0 %v6063
    %6193 = vmatprep.subr.bf16.mxu0 %v6066
    %6194 = vmatpush1.bf16.msra.mxu0 %v6065
    %6195 = vmatprep.subr.bf16.mxu0 %v6068
    %6196 = vmatpush1.bf16.msra.mxu0 %v6067
    %6197 = vmatprep.mubr.bf16.mxu0 %v5755
    %6198 = vmatmul.mubr.bf16.gmra.mrb[0].mxu0 %v5754
    %v6199 = vpop.f32.mrb[0].mxu0
    %v6200 = vadd.f32 %v5838, %v6199
    %v6201 = vpop.f32.mrb[0].mxu0
    %v6202 = vadd.f32 %v5842, %v6201
    %v6203 = vpop.f32.mrb[0].mxu0
    %v6204 = vadd.f32 %v5838, %v6203
    %v6205 = vpop.f32.mrb[0].mxu0
    %v6206 = vadd.f32 %v5842, %v6205
    %6207 = vmatprep.mubr.bf16.mxu0 %v5759
    %6208 = vmatmul.mubr.bf16.gmra.mrb[0].mxu0 %v5758
    %v6209 = vpop.f32.mrb[0].mxu0
    %v6210 = vadd.f32 %v5838, %v6209
    %v6211 = vpop.f32.mrb[0].mxu0
    %v6212 = vadd.f32 %v5842, %v6211
    %v6213 = vpop.f32.mrb[0].mxu0
    %v6214 = vadd.f32 %v5838, %v6213
    %v6215 = vpop.f32.mrb[0].mxu0
    %v6216 = vadd.f32 %v5842, %v6215
    %6217 = vmatprep.mubr.bf16.mxu0 %v5763
    %6218 = vmatmul.mubr.bf16.gmra.mrb[0].mxu0 %v5762
    %v6219 = vpop.f32.mrb[0].mxu0
    %v6220 = vadd.f32 %v5838, %v6219
    %v6221 = vpop.f32.mrb[0].mxu0
    %v6222 = vadd.f32 %v5842, %v6221
    %v6223 = vpop.f32.mrb[0].mxu0
    %v6224 = vadd.f32 %v5838, %v6223
    %v6225 = vpop.f32.mrb[0].mxu0
    %v6226 = vadd.f32 %v5842, %v6225
    %6227 = vmatprep.mubr.bf16.mxu0 %v5767
    %6228 = vmatmul.mubr.bf16.gmra.mrb[0].mxu0 %v5766
    %v6229 = vpop.f32.mrb[0].mxu0
    %v6230 = vadd.f32 %v5838, %v6229
    %v6231 = vpop.f32.mrb[0].mxu0
    %v6232 = vadd.f32 %v5842, %v6231
    %v6233 = vpop.f32.mrb[0].mxu0
    %v6234 = vadd.f32 %v5838, %v6233
    %v6235 = vpop.f32.mrb[0].mxu0
    %v6236 = vadd.f32 %v5842, %v6235
    %6237 = vdwg.mxu0
    %6238 = vmatprep.subr.bf16.mxu0 %v6070
    %6239 = vmatpush1.bf16.msra.mxu0 %v6069
    %6240 = vmatprep.subr.bf16.mxu0 %v6072
    %6241 = vmatpush1.bf16.msra.mxu0 %v6071
    %6242 = vmatprep.subr.bf16.mxu0 %v6074
    %6243 = vmatpush1.bf16.msra.mxu0 %v6073
    %6244 = vmatprep.subr.bf16.mxu0 %v6076
    %6245 = vmatpush1.bf16.msra.mxu0 %v6075
    %6246 = vmatprep.subr.bf16.mxu0 %v6078
    %6247 = vmatpush1.bf16.msra.mxu0 %v6077
    %6248 = vmatprep.subr.bf16.mxu0 %v6080
    %6249 = vmatpush1.bf16.msra.mxu0 %v6079
    %6250 = vmatprep.subr.bf16.mxu0 %v6082
    %6251 = vmatpush1.bf16.msra.mxu0 %v6081
    %6252 = vmatprep.subr.bf16.mxu0 %v6084
    %6253 = vmatpush1.bf16.msra.mxu0 %v6083
    %6254 = vmatprep.subr.bf16.mxu0 %v6086
    %6255 = vmatpush1.bf16.msra.mxu0 %v6085
    %6256 = vmatprep.subr.bf16.mxu0 %v6088
    %6257 = vmatpush1.bf16.msra.mxu0 %v6087
    %6258 = vmatprep.subr.bf16.mxu0 %v6090
    %6259 = vmatpush1.bf16.msra.mxu0 %v6089
    %6260 = vmatprep.subr.bf16.mxu0 %v6092
    %6261 = vmatpush1.bf16.msra.mxu0 %v6091
    %6262 = vmatprep.subr.bf16.mxu0 %v6094
    %6263 = vmatpush1.bf16.msra.mxu0 %v6093
    %6264 = vmatprep.subr.bf16.mxu0 %v6096
    %6265 = vmatpush1.bf16.msra.mxu0 %v6095
    %6266 = vmatprep.subr.bf16.mxu0 %v6098
    %6267 = vmatpush1.bf16.msra.mxu0 %v6097
    %6268 = vmatprep.subr.bf16.mxu0 %v6100
    %6269 = vmatpush1.bf16.msra.mxu0 %v6099
    %6270 = vmatprep.mubr.bf16.mxu0 %v5757
    %6271 = vmatmul.mubr.bf16.gmra.mrb[0].mxu0 %v5756
    %v6272 = vpop.f32.mrb[0].mxu0
    %v6273 = vadd.f32 %v6200, %v6272
    %v6274 = vpop.f32.mrb[0].mxu0
    %v6275 = vadd.f32 %v6202, %v6274
    %v6276 = vpop.f32.mrb[0].mxu0
    %v6277 = vadd.f32 %v6204, %v6276
    %v6278 = vpop.f32.mrb[0].mxu0
    %v6279 = vadd.f32 %v6206, %v6278
    %6280 = vmatprep.mubr.bf16.mxu0 %v5761
    %6281 = vmatmul.mubr.bf16.gmra.mrb[0].mxu0 %v5760
    %v6282 = vpop.f32.mrb[0].mxu0
    %v6283 = vadd.f32 %v6210, %v6282
    %v6284 = vpop.f32.mrb[0].mxu0
    %v6285 = vadd.f32 %v6212, %v6284
    %v6286 = vpop.f32.mrb[0].mxu0
    %v6287 = vadd.f32 %v6214, %v6286
    %v6288 = vpop.f32.mrb[0].mxu0
    %v6289 = vadd.f32 %v6216, %v6288
    %6290 = vmatprep.mubr.bf16.mxu0 %v5765
    %6291 = vmatmul.mubr.bf16.gmra.mrb[0].mxu0 %v5764
    %v6292 = vpop.f32.mrb[0].mxu0
    %v6293 = vadd.f32 %v6220, %v6292
    %v6294 = vpop.f32.mrb[0].mxu0
    %v6295 = vadd.f32 %v6222, %v6294
    %v6296 = vpop.f32.mrb[0].mxu0
    %v6297 = vadd.f32 %v6224, %v6296
    %v6298 = vpop.f32.mrb[0].mxu0
    %v6299 = vadd.f32 %v6226, %v6298
    %6300 = vmatprep.mubr.bf16.mxu0 %v5769
    %6301 = vmatmul.mubr.bf16.gmra.mrb[0].mxu0 %v5768
    %v6302 = vpop.f32.mrb[0].mxu0
    %v6303 = vadd.f32 %v6230, %v6302
    %v6304 = vpop.f32.mrb[0].mxu0
    %v6305 = vadd.f32 %v6232, %v6304
    %v6306 = vpop.f32.mrb[0].mxu0
    %v6307 = vadd.f32 %v6234, %v6306
    %v6308 = vpop.f32.mrb[0].mxu0
    %v6309 = vadd.f32 %v6236, %v6308
    %6310 = vdwg.mxu0
    %v6311 = vmul.f32 %v6273, %v6273
    %v6312 = vmul.f32 %v6275, %v6275
    %v6313 = vmul.f32 %v6277, %v6277
    %v6314 = vmul.f32 %v6279, %v6279
    %v6315 = vmul.f32 %v6283, %v6283
    %v6316 = vmul.f32 %v6285, %v6285
    %v6317 = vmul.f32 %v6287, %v6287
    %v6318 = vmul.f32 %v6289, %v6289
    %v6319 = vmul.f32 %v6293, %v6293
    %v6320 = vmul.f32 %v6295, %v6295
    %v6321 = vmul.f32 %v6297, %v6297
    %v6322 = vmul.f32 %v6299, %v6299
    %v6323 = vmul.f32 %v6303, %v6303
    %v6324 = vmul.f32 %v6305, %v6305
    %v6325 = vmul.f32 %v6307, %v6307
    %v6326 = vmul.f32 %v6309, %v6309
    %v6327 = vmul.f32 %v6273, %v6311
    %v6328 = vmul.f32 %v6275, %v6312
    %v6329 = vmul.f32 %v6277, %v6313
    %v6330 = vmul.f32 %v6279, %v6314
    %v6331 = vmul.f32 %v6283, %v6315
    %v6332 = vmul.f32 %v6285, %v6316
    %v6333 = vmul.f32 %v6287, %v6317
    %v6334 = vmul.f32 %v6289, %v6318
    %v6335 = vmul.f32 %v6293, %v6319
    %v6336 = vmul.f32 %v6295, %v6320
    %v6337 = vmul.f32 %v6297, %v6321
    %v6338 = vmul.f32 %v6299, %v6322
    %v6339 = vmul.f32 %v6303, %v6323
    %v6340 = vmul.f32 %v6305, %v6324
    %v6341 = vmul.f32 %v6307, %v6325
    %v6342 = vmul.f32 %v6309, %v6326
    %v6343 = vmul.f32 %v6327, 0.044715
    %v6344 = vmul.f32 %v6328, 0.044715
    %v6345 = vmul.f32 %v6329, 0.044715
    %v6346 = vmul.f32 %v6330, 0.044715
    %v6347 = vmul.f32 %v6331, 0.044715
    %v6348 = vmul.f32 %v6332, 0.044715
    %v6349 = vmul.f32 %v6333, 0.044715
    %v6350 = vmul.f32 %v6334, 0.044715
    %v6351 = vmul.f32 %v6335, 0.044715
    %v6352 = vmul.f32 %v6336, 0.044715
    %v6353 = vmul.f32 %v6337, 0.044715
    %v6354 = vmul.f32 %v6338, 0.044715
    %v6355 = vmul.f32 %v6339, 0.044715
    %v6356 = vmul.f32 %v6340, 0.044715
    %v6357 = vmul.f32 %v6341, 0.044715
    %v6358 = vmul.f32 %v6342, 0.044715
    %v6359 = vadd.f32 %v6273, %v6343
    %v6360 = vadd.f32 %v6275, %v6344
    %v6361 = vadd.f32 %v6277, %v6345
    %v6362 = vadd.f32 %v6279, %v6346
    %v6363 = vadd.f32 %v6283, %v6347
    %v6364 = vadd.f32 %v6285, %v6348
    %v6365 = vadd.f32 %v6287, %v6349
    %v6366 = vadd.f32 %v6289, %v6350
    %v6367 = vadd.f32 %v6293, %v6351
    %v6368 = vadd.f32 %v6295, %v6352
    %v6369 = vadd.f32 %v6297, %v6353
    %v6370 = vadd.f32 %v6299, %v6354
    %v6371 = vadd.f32 %v6303, %v6355
    %v6372 = vadd.f32 %v6305, %v6356
    %v6373 = vadd.f32 %v6307, %v6357
    %v6374 = vadd.f32 %v6309, %v6358
    %v6375 = vmul.f32 %v6359, 0.7978846
    %v6376 = vmul.f32 %v6360, 0.7978846
    %v6377 = vmul.f32 %v6361, 0.7978846
    %v6378 = vmul.f32 %v6362, 0.7978846
    %v6379 = vmul.f32 %v6363, 0.7978846
    %v6380 = vmul.f32 %v6364, 0.7978846
    %v6381 = vmul.f32 %v6365, 0.7978846
    %v6382 = vmul.f32 %v6366, 0.7978846
    %v6383 = vmul.f32 %v6367, 0.7978846
    %v6384 = vmul.f32 %v6368, 0.7978846
    %v6385 = vmul.f32 %v6369, 0.7978846
    %v6386 = vmul.f32 %v6370, 0.7978846
    %v6387 = vmul.f32 %v6371, 0.7978846
    %v6388 = vmul.f32 %v6372, 0.7978846
    %v6389 = vmul.f32 %v6373, 0.7978846
    %v6390 = vmul.f32 %v6374, 0.7978846
    %v6391 = vtanh.pop %v6375
    %v6392 = vtanh.pop %v6376
    %v6393 = vtanh.pop %v6377
    %v6394 = vtanh.pop %v6378
    %v6395 = vtanh.pop %v6379
    %v6396 = vtanh.pop %v6380
    %v6397 = vtanh.pop %v6381
    %v6398 = vtanh.pop %v6382
    %v6399 = vtanh.pop %v6383
    %v6400 = vtanh.pop %v6384
    %v6401 = vtanh.pop %v6385
    %v6402 = vtanh.pop %v6386
    %v6403 = vtanh.pop %v6387
    %v6404 = vtanh.pop %v6388
    %v6405 = vtanh.pop %v6389
    %v6406 = vtanh.pop %v6390
    %v6407 = vadd.f32 %v6391, 1.0
    %v6408 = vadd.f32 %v6392, 1.0
    %v6409 = vadd.f32 %v6393, 1.0
    %v6410 = vadd.f32 %v6394, 1.0
    %v6411 = vadd.f32 %v6395, 1.0
    %v6412 = vadd.f32 %v6396, 1.0
    %v6413 = vadd.f32 %v6397, 1.0
    %v6414 = vadd.f32 %v6398, 1.0
    %v6415 = vadd.f32 %v6399, 1.0
    %v6416 = vadd.f32 %v6400, 1.0
    %v6417 = vadd.f32 %v6401, 1.0
    %v6418 = vadd.f32 %v6402, 1.0
    %v6419 = vadd.f32 %v6403, 1.0
    %v6420 = vadd.f32 %v6404, 1.0
    %v6421 = vadd.f32 %v6405, 1.0
    %v6422 = vadd.f32 %v6406, 1.0
    %v6423 = vmul.f32 %v6407, 0.5
    %v6424 = vmul.f32 %v6408, 0.5
    %v6425 = vmul.f32 %v6409, 0.5
    %v6426 = vmul.f32 %v6410, 0.5
    %v6427 = vmul.f32 %v6411, 0.5
    %v6428 = vmul.f32 %v6412, 0.5
    %v6429 = vmul.f32 %v6413, 0.5
    %v6430 = vmul.f32 %v6414, 0.5
    %v6431 = vmul.f32 %v6415, 0.5
    %v6432 = vmul.f32 %v6416, 0.5
    %v6433 = vmul.f32 %v6417, 0.5
    %v6434 = vmul.f32 %v6418, 0.5
    %v6435 = vmul.f32 %v6419, 0.5
    %v6436 = vmul.f32 %v6420, 0.5
    %v6437 = vmul.f32 %v6421, 0.5
    %v6438 = vmul.f32 %v6422, 0.5
    %v6439 = vmul.f32 %v6273, %v6423
    %v6440 = vmul.f32 %v6275, %v6424
    %v6441 = vmul.f32 %v6277, %v6425
    %v6442 = vmul.f32 %v6279, %v6426
    %v6443 = vmul.f32 %v6283, %v6427
    %v6444 = vmul.f32 %v6285, %v6428
    %v6445 = vmul.f32 %v6287, %v6429
    %v6446 = vmul.f32 %v6289, %v6430
    %v6447 = vmul.f32 %v6293, %v6431
    %v6448 = vmul.f32 %v6295, %v6432
    %v6449 = vmul.f32 %v6297, %v6433
    %v6450 = vmul.f32 %v6299, %v6434
    %v6451 = vmul.f32 %v6303, %v6435
    %v6452 = vmul.f32 %v6305, %v6436
    %v6453 = vmul.f32 %v6307, %v6437
    %v6454 = vmul.f32 %v6309, %v6438
    %v6455 = vpack.c.bf16 %v6441, %v6439
    %v6456 = vpack.c.bf16 %v6442, %v6440
    %v6457 = vpack.c.bf16 %v6445, %v6443
    %v6458 = vpack.c.bf16 %v6446, %v6444
    %v6459 = vpack.c.bf16 %v6449, %v6447
    %v6460 = vpack.c.bf16 %v6450, %v6448
    %v6461 = vpack.c.bf16 %v6453, %v6451
    %v6462 = vpack.c.bf16 %v6454, %v6452
    %v6463 = vld [vmem:[#allocation11] sm:$0xf]
    %v6464 = vld [vmem:[#allocation11 + $0x4] sm:$0xf]
    %v6465 = vld [vmem:[#allocation11 + $0x8] sm:$0xf]
    %v6466 = vld [vmem:[#allocation11 + $0xc] sm:$0xf]
    %v6467 = vld [vmem:[#allocation11 + $0x10] sm:$0xf]
    %v6468 = vld [vmem:[#allocation11 + $0x14] sm:$0xf]
    %v6469 = vld [vmem:[#allocation11 + $0x18] sm:$0xf]
    %v6470 = vld [vmem:[#allocation11 + $0x1c] sm:$0xf]
    %v6471 = vld [vmem:[#allocation11 + $0x20] sm:$0xf]
    %v6472 = vld [vmem:[#allocation11 + $0x24] sm:$0xf]
    %v6473 = vld [vmem:[#allocation11 + $0x28] sm:$0xf]
    %v6474 = vld [vmem:[#allocation11 + $0x2c] sm:$0xf]
    %v6475 = vld [vmem:[#allocation11 + $0x30] sm:$0xf]
    %v6476 = vld [vmem:[#allocation11 + $0x34] sm:$0xf]
    %v6477 = vld [vmem:[#allocation11 + $0x38] sm:$0xf]
    %v6478 = vld [vmem:[#allocation11 + $0x3c] sm:$0xf]
    %v6479 = vld [vmem:[#allocation11 + $0x40] sm:$0xf]
    %v6480 = vld [vmem:[#allocation11 + $0x44] sm:$0xf]
    %v6481 = vld [vmem:[#allocation11 + $0x48] sm:$0xf]
    %v6482 = vld [vmem:[#allocation11 + $0x4c] sm:$0xf]
    %v6483 = vld [vmem:[#allocation11 + $0x50] sm:$0xf]
    %v6484 = vld [vmem:[#allocation11 + $0x54] sm:$0xf]
    %v6485 = vld [vmem:[#allocation11 + $0x58] sm:$0xf]
    %v6486 = vld [vmem:[#allocation11 + $0x5c] sm:$0xf]
    %v6487 = vld [vmem:[#allocation11 + $0x60] sm:$0xf]
    %v6488 = vld [vmem:[#allocation11 + $0x64] sm:$0xf]
    %v6489 = vld [vmem:[#allocation11 + $0x68] sm:$0xf]
    %v6490 = vld [vmem:[#allocation11 + $0x6c] sm:$0xf]
    %v6491 = vld [vmem:[#allocation11 + $0x70] sm:$0xf]
    %v6492 = vld [vmem:[#allocation11 + $0x74] sm:$0xf]
    %v6493 = vld [vmem:[#allocation11 + $0x78] sm:$0xf]
    %v6494 = vld [vmem:[#allocation11 + $0x7c] sm:$0xf]
    %v6496 = vlaneseq
    %v6497 = vshrl.u32 %v6496, 7
    %v6498 = vsub.s32 0, %v6497
    %v6499 = vrot.slane %v138, %v6498
    %v6533 = vunpack.c.l.b16 %v6463
    %v6534 = vunpack.c.l.b16 %v6464
    %v6535 = vunpack.c.l.b16 %v6465
    %v6536 = vunpack.c.l.b16 %v6466
    %v6537 = vunpack.c.l.b16 %v6467
    %v6538 = vunpack.c.l.b16 %v6468
    %v6539 = vunpack.c.l.b16 %v6469
    %v6540 = vunpack.c.l.b16 %v6470
    %v6541 = vunpack.c.l.b16 %v6471
    %v6542 = vunpack.c.l.b16 %v6472
    %v6543 = vunpack.c.l.b16 %v6473
    %v6544 = vunpack.c.l.b16 %v6474
    %v6545 = vunpack.c.l.b16 %v6475
    %v6546 = vunpack.c.l.b16 %v6476
    %v6547 = vunpack.c.l.b16 %v6477
    %v6548 = vunpack.c.l.b16 %v6478
    %v6549 = vunpack.c.l.b16 %v6479
    %v6550 = vunpack.c.l.b16 %v6480
    %v6551 = vunpack.c.l.b16 %v6481
    %v6552 = vunpack.c.l.b16 %v6482
    %v6553 = vunpack.c.l.b16 %v6483
    %v6554 = vunpack.c.l.b16 %v6484
    %v6555 = vunpack.c.l.b16 %v6485
    %v6556 = vunpack.c.l.b16 %v6486
    %v6557 = vunpack.c.l.b16 %v6487
    %v6558 = vunpack.c.l.b16 %v6488
    %v6559 = vunpack.c.l.b16 %v6489
    %v6560 = vunpack.c.l.b16 %v6490
    %v6561 = vunpack.c.l.b16 %v6491
    %v6562 = vunpack.c.l.b16 %v6492
    %v6563 = vunpack.c.l.b16 %v6493
    %v6564 = vunpack.c.l.b16 %v6494
    %v6565 = vpack.c.b16 %v6534, %v6533
    %v6566 = vpack.c.b16 %v6536, %v6535
    %v6567 = vpack.c.b16 %v6538, %v6537
    %v6568 = vpack.c.b16 %v6540, %v6539
    %v6569 = vpack.c.b16 %v6542, %v6541
    %v6570 = vpack.c.b16 %v6544, %v6543
    %v6571 = vpack.c.b16 %v6546, %v6545
    %v6572 = vpack.c.b16 %v6548, %v6547
    %v6573 = vpack.c.b16 %v6550, %v6549
    %v6574 = vpack.c.b16 %v6552, %v6551
    %v6575 = vpack.c.b16 %v6554, %v6553
    %v6576 = vpack.c.b16 %v6556, %v6555
    %v6577 = vpack.c.b16 %v6558, %v6557
    %v6578 = vpack.c.b16 %v6560, %v6559
    %v6579 = vpack.c.b16 %v6562, %v6561
    %v6580 = vpack.c.b16 %v6564, %v6563
    %6597 = vmatprep.subr.bf16.mxu0 0
    %6598 = vmatpush1.bf16.msra.mxu0 %v6565
    %6599 = vmatprep.subr.bf16.mxu0 0
    %6600 = vmatpush1.bf16.msra.mxu0 %v6566
    %6601 = vmatprep.subr.bf16.mxu0 0
    %6602 = vmatpush1.bf16.msra.mxu0 %v6567
    %6603 = vmatprep.subr.bf16.mxu0 0
    %6604 = vmatpush1.bf16.msra.mxu0 %v6568
    %6605 = vmatprep.subr.bf16.mxu0 0
    %6606 = vmatpush1.bf16.msra.mxu0 %v6569
    %6607 = vmatprep.subr.bf16.mxu0 0
    %6608 = vmatpush1.bf16.msra.mxu0 %v6570
    %6609 = vmatprep.subr.bf16.mxu0 0
    %6610 = vmatpush1.bf16.msra.mxu0 %v6571
    %6611 = vmatprep.subr.bf16.mxu0 0
    %6612 = vmatpush1.bf16.msra.mxu0 %v6572
    %6613 = vmatprep.subr.bf16.mxu0 0
    %6614 = vmatpush1.bf16.msra.mxu0 %v6573
    %6615 = vmatprep.subr.bf16.mxu0 0
    %6616 = vmatpush1.bf16.msra.mxu0 %v6574
    %6617 = vmatprep.subr.bf16.mxu0 0
    %6618 = vmatpush1.bf16.msra.mxu0 %v6575
    %6619 = vmatprep.subr.bf16.mxu0 0
    %6620 = vmatpush1.bf16.msra.mxu0 %v6576
    %6621 = vmatprep.subr.bf16.mxu0 0
    %6622 = vmatpush1.bf16.msra.mxu0 %v6577
    %6623 = vmatprep.subr.bf16.mxu0 0
    %6624 = vmatpush1.bf16.msra.mxu0 %v6578
    %6625 = vmatprep.subr.bf16.mxu0 0
    %6626 = vmatpush1.bf16.msra.mxu0 %v6579
    %6627 = vmatprep.subr.bf16.mxu0 0
    %6628 = vmatpush1.bf16.msra.mxu0 %v6580
    %6629 = vmatprep.mubr.bf16.mxu0 %v6456
    %6630 = vmatmul.mubr.bf16.gmra.mrb[0].mxu0 %v6455
    %v6631 = vpop.f32.mrb[0].mxu0
    %v6632 = vadd.f32 %v6499, %v6631
    %v6633 = vpop.f32.mrb[0].mxu0
    %v6634 = vpop.f32.mrb[0].mxu0
    %v6635 = vadd.f32 %v6499, %v6634
    %v6636 = vpop.f32.mrb[0].mxu0
    %6637 = vmatprep.mubr.bf16.mxu0 %v6458
    %6638 = vmatmul.mubr.bf16.gmra.mrb[0].mxu0 %v6457
    %v6639 = vpop.f32.mrb[0].mxu0
    %v6640 = vadd.f32 %v6499, %v6639
    %v6641 = vpop.f32.mrb[0].mxu0
    %v6642 = vpop.f32.mrb[0].mxu0
    %v6643 = vadd.f32 %v6499, %v6642
    %v6644 = vpop.f32.mrb[0].mxu0
    %6645 = vmatprep.mubr.bf16.mxu0 %v6460
    %6646 = vmatmul.mubr.bf16.gmra.mrb[0].mxu0 %v6459
    %v6647 = vpop.f32.mrb[0].mxu0
    %v6648 = vadd.f32 %v6499, %v6647
    %v6649 = vpop.f32.mrb[0].mxu0
    %v6650 = vpop.f32.mrb[0].mxu0
    %v6651 = vadd.f32 %v6499, %v6650
    %v6652 = vpop.f32.mrb[0].mxu0
    %6653 = vmatprep.mubr.bf16.mxu0 %v6462
    %6654 = vmatmul.mubr.bf16.gmra.mrb[0].mxu0 %v6461
    %v6655 = vpop.f32.mrb[0].mxu0
    %v6656 = vadd.f32 %v6499, %v6655
    %v6657 = vpop.f32.mrb[0].mxu0
    %v6658 = vpop.f32.mrb[0].mxu0
    %v6659 = vadd.f32 %v6499, %v6658
    %v6660 = vpop.f32.mrb[0].mxu0
    %6661 = vdwg.mxu0
    %v6662 = vadd.f32 %v6632, %v122
    %v6663 = vadd.f32 %v6635, %v123
    %v6664 = vadd.f32 %v6640, %v124
    %v6665 = vadd.f32 %v6643, %v125
    %v6666 = vadd.f32 %v6648, %v126
    %v6667 = vadd.f32 %v6651, %v127
    %v6668 = vadd.f32 %v6656, %v128
    %v6669 = vadd.f32 %v6659, %v129
    %6670 = vst [vmem:[#allocation13] sm:$0xff] %v6662
    %6671 = vst [vmem:[#allocation13 + $0x8] sm:$0xff] %v6663
    %6672 = vst [vmem:[#allocation13 + $0x10] sm:$0xff] %v6664
    %6673 = vst [vmem:[#allocation13 + $0x18] sm:$0xff] %v6665
    %6674 = vst [vmem:[#allocation13 + $0x20] sm:$0xff] %v6666
    %6675 = vst [vmem:[#allocation13 + $0x28] sm:$0xff] %v6667
    %6676 = vst [vmem:[#allocation13 + $0x30] sm:$0xff] %v6668
    %6677 = vst [vmem:[#allocation13 + $0x38] sm:$0xff] %v6669
    // Predicated region
    $region70: #{tpu_custom_call.1} parent=1 // pred_check
      _
    $region71: #{tpu_custom_call.1} parent=1 // pred_check_branch
      %6679 = sbr.rel (0) target = $region73
    $region72: #{tpu_custom_call.1} parent=1 // pred_region
      %s6681 = ssub.s32 1024, 1024
      %6682 = vsyncadd [#allocation4], %s6681
      %s6683 = sshll.u32 [#allocation13], 4
      %s6684 = int_to_ptr.vmem [resolvable:$true] %s6683
      %6689 = dma.vmem_to_hbm [thread:$0]  %s6684, 1024, %s11, [#allocation4], 128, 128, 8
    $region73: #{tpu_custom_call.1} parent=1 // pred_fallthru
      _
    // Predicated region
    $region74: #{tpu_custom_call.1} parent=1 // pred_check
      _
    $region75: #{tpu_custom_call.1} parent=1 // pred_check_branch
      %6691 = sbr.rel (0) target = $region77
    $region76: #{tpu_custom_call.1} parent=1 // pred_region
      %6692 = dma.done [#allocation4], 1024
    $region77: #{tpu_custom_call.1} parent=1 // pred_fallthru
      _
    %6693 = vsyncpa [#allocation3], 1
    %6694 = vsyncpa [#allocation6], 1
    %6695 = vsyncpa [#allocation9], 1
    %6696 = vsyncpa [#allocation12], 1
    %6697 = vsyncpa [#allocation4], 1

</llo_original>
